<compile_context>
chip_gen: v5e
topology: v5e:2x2
jax: 0.10.0
libtpu: 0.0.40
codegen_flags: <defaults>
</compile_context>

<pallas_src>
import jax
import jax.numpy as jnp
from jax.experimental import pallas as pl
from jax.experimental.pallas import tpu as pltpu


# ----------------------------------------------------------------------------
# Fused Pallas kernel: n_layers LSTM + fc -> relu -> fc2 head
# ----------------------------------------------------------------------------
def make_fused_kernel(n_layers, T, B_pad, H):
    """Builds the fused kernel for static (n_layers, T, B_pad, H).

    Ref layout (all VMEM, row-major, time folded into rows):
      x_ref            : (T*B_pad, F_PAD)  layer-0 input, time-major flattened
      per layer l      : w_ih_l (IN_l,4H), w_hh_l (H,4H), b_l (1,4H)  (b = b_ih+b_hh)
      h0_ref, c0_ref   : (L, B_pad, H)
      fc_w, fc_b       : (H, H), (1, H)
      fc2_w, fc2_b     : (H, OUT_PAD), (1, OUT_PAD)   (zero-padded to 128 lanes)
      out_ref          : (B_pad, OUT_PAD)
      hT_ref, cT_ref   : (L, B_pad, H)
      gx_ref (scratch) : (T*B_pad, 4H)     hoisted input-projection gates
      y_ref  (scratch) : (T*B_pad, H)      current layer's hidden sequence
    PyTorch gate order: i, f, g, o.
    """

    def kernel(*refs):
        x_ref = refs[0]
        idx = 1
        w_ih, w_hh, bias = [], [], []
        for _ in range(n_layers):
            w_ih.append(refs[idx])
            w_hh.append(refs[idx + 1])
            bias.append(refs[idx + 2])
            idx += 3
        h0_ref, c0_ref = refs[idx], refs[idx + 1]
        idx += 2
        fc_w_ref, fc_b_ref, fc2_w_ref, fc2_b_ref = refs[idx:idx + 4]
        idx += 4
        out_ref, hT_ref, cT_ref = refs[idx:idx + 3]
        idx += 3
        gx_ref, y_ref = refs[idx], refs[idx + 1]

        h_last = None
        for layer in range(n_layers):
            in_ref = x_ref if layer == 0 else y_ref
            is_last = layer == n_layers - 1

            # Hoisted input projection for ALL timesteps at once:
            # (T*B_pad, IN_l) @ (IN_l, 4H) + b   ->  gx scratch.
            # (Must complete before y_ref is overwritten by this layer below;
            #  ref effects are ordered by program order.)
            gx_ref[...] = (
                jnp.dot(in_ref[...], w_ih[layer][...],
                        preferred_element_type=jnp.float32)
                + bias[layer][...]
            )

            def step(t, carry, _layer=layer, _is_last=is_last):
                h, c = carry
                row = t * B_pad  # B_pad multiple of 8 -> sublane-aligned slices
                gates = (
                    gx_ref[pl.ds(row, B_pad), :]
                    + jnp.dot(h, w_hh[_layer][...],
                              preferred_element_type=jnp.float32)
                )  # (B_pad, 4H)
                i_g = jax.nn.sigmoid(gates[:, 0 * H:1 * H])
                f_g = jax.nn.sigmoid(gates[:, 1 * H:2 * H])
                g_g = jnp.tanh(gates[:, 2 * H:3 * H])
                o_g = jax.nn.sigmoid(gates[:, 3 * H:4 * H])
                c_new = f_g * c + i_g * g_g
                h_new = o_g * jnp.tanh(c_new)
                if not _is_last:
                    # Only interior layers need the full hidden sequence
                    # (it feeds the next layer's hoisted input projection).
                    y_ref[pl.ds(row, B_pad), :] = h_new
                return (h_new, c_new)

            h, c = jax.lax.fori_loop(
                0, T, step, (h0_ref[layer], c0_ref[layer]), unroll=True)
            hT_ref[layer] = h
            cT_ref[layer] = c
            if is_last:
                h_last = h  # == l_out[:, -1, :] (last timestep of last layer)

        # Head: fc -> relu -> fc2 on the last timestep of the last layer.
        z = (jnp.dot(h_last, fc_w_ref[...], preferred_element_type=jnp.float32)
             + fc_b_ref[...])
        z = jnp.maximum(z, 0.0)  # ReLU
        out_ref[...] = (
            jnp.dot(z, fc2_w_ref[...], preferred_element_type=jnp.float32)
            + fc2_b_ref[...]
        )

    return kernel


_VMEM = pl.BlockSpec(memory_space=pltpu.MemorySpace.VMEM)


def run_fused(params, x2d, h0, c0, T, B_pad):
    L = params['n_layers']
    H = params['n_hidden']
    OUT_PAD = params['fc2_w_pad'].shape[1]

    args = [x2d]
    for layer in range(L):
        args += [params['w_ih'][layer], params['w_hh'][layer], params['b'][layer]]
    args += [h0, c0, params['fc_w_t'], params['fc_b'],
             params['fc2_w_pad'], params['fc2_b_pad']]

    kernel = make_fused_kernel(L, T, B_pad, H)
    return pl.pallas_call(
        kernel,
        out_shape=(jax.ShapeDtypeStruct((B_pad, OUT_PAD), jnp.float32),
                   jax.ShapeDtypeStruct((L, B_pad, H), jnp.float32),
                   jax.ShapeDtypeStruct((L, B_pad, H), jnp.float32)),
        in_specs=[_VMEM] * len(args),
        out_specs=(_VMEM, _VMEM, _VMEM),
        scratch_shapes=[pltpu.VMEM((T * B_pad, 4 * H), jnp.float32),  # gx
                        pltpu.VMEM((T * B_pad, H), jnp.float32)],     # y
    )(*args)


# ----------------------------------------------------------------------------
# Parameter construction (deterministic, synthetic)
# ----------------------------------------------------------------------------
PRIM_EMBED_DIM = 9
SEC_EMBED_DIM = 4
NUM_PLAYERS = 10
MAIN_FEATURES = 146
N_FEATURE = MAIN_FEATURES + NUM_PLAYERS * (PRIM_EMBED_DIM + SEC_EMBED_DIM)  # 276
# Layer-0 input feature dim zero-padded to a lane-dense multiple of 128.
F_PAD = ((N_FEATURE + 127) // 128) * 128  # 384
# TODO(synk): enums.json is unavailable; fixed synthetic vocab sizes (len(enum)+2).
PRIM_VOCAB = 34
SEC_VOCAB = 18

# TODO(synk): on v6e/v7x, casting weights to bfloat16 (keeping f32 accumulation)
# halves weight VMEM/DMA; kept f32 here to match the PyTorch module's numerics.


def init_params(key, n_hidden=128, n_layers=3, out_feature=1):
    params = {'n_layers': n_layers, 'n_hidden': n_hidden,
              'out_feature': out_feature}
    keys = jax.random.split(key, 8 + 3 * n_layers)
    k = iter(keys)
    scale = 0.05
    params['prim_embed'] = scale * jax.random.normal(
        next(k), (PRIM_VOCAB, PRIM_EMBED_DIM), jnp.float32)
    params['sec_embed'] = scale * jax.random.normal(
        next(k), (SEC_VOCAB, SEC_EMBED_DIM), jnp.float32)

    w_ih, w_hh, bias = [], [], []
    for layer in range(n_layers):
        in_dim = N_FEATURE if layer == 0 else n_hidden
        w = scale * jax.random.normal(next(k), (in_dim, 4 * n_hidden), jnp.float32)
        if layer == 0:
            # Zero-pad K dim to F_PAD (matches zero-padded input features).
            w = jnp.pad(w, ((0, F_PAD - in_dim), (0, 0)))
        w_ih.append(w)
        w_hh.append(scale * jax.random.normal(next(k), (n_hidden, 4 * n_hidden), jnp.float32))
        bias.append(scale * jax.random.normal(next(k), (1, 4 * n_hidden), jnp.float32))
    params['w_ih'], params['w_hh'], params['b'] = w_ih, w_hh, bias

    # nn.Linear weights stored pre-transposed to (in, out).
    params['fc_w_t'] = scale * jax.random.normal(next(k), (n_hidden, n_hidden), jnp.float32)
    params['fc_b'] = scale * jax.random.normal(next(k), (1, n_hidden), jnp.float32)
    fc2_w_t = scale * jax.random.normal(next(k), (n_hidden, out_feature), jnp.float32)
    fc2_b = scale * jax.random.normal(next(k), (1, out_feature), jnp.float32)

    # Pad fc2 to a lane-dense (multiple-of-128) output width so the kernel's
    # final store is unmasked; extra columns are zero and sliced off outside.
    out_pad = max(128, ((out_feature + 127) // 128) * 128)
    params['fc2_w_pad'] = jnp.pad(fc2_w_t, ((0, 0), (0, out_pad - out_feature)))
    params['fc2_b_pad'] = jnp.pad(fc2_b, ((0, 0), (0, out_pad - out_feature)))
    return params


# ----------------------------------------------------------------------------
# Forward pass (matches CS2LSTM.forward, eval mode)
# ----------------------------------------------------------------------------
def cs2lstm_forward(params, x_main_data, x_prim_weap, x_sec_weap, hidden):
    B, T, _ = x_main_data.shape
    out_feature = params['out_feature']

    # Build features directly time-major (T, B, F): transpose the small index
    # arrays / main features, then gather + concat (no full-feature transpose
    # after the concat).
    prim_idx_tm = jnp.transpose(x_prim_weap, (1, 0, 2))            # (T,B,10)
    sec_idx_tm = jnp.transpose(x_sec_weap, (1, 0, 2))              # (T,B,10)
    prim_e = jnp.take(params['prim_embed'], prim_idx_tm, axis=0)   # (T,B,10,9)
    sec_e = jnp.take(params['sec_embed'], sec_idx_tm, axis=0)      # (T,B,10,4)
    combined = jnp.concatenate([prim_e, sec_e], axis=-1)           # (T,B,10,13)
    combined = combined.reshape(T, B, -1)                          # (T,B,130)
    x_main_tm = jnp.transpose(x_main_data, (1, 0, 2))              # (T,B,146)
    x_tm = jnp.concatenate([x_main_tm, combined], axis=-1)         # (T,B,276)
    # Zero-pad feature dim to a lane-dense multiple of 128 (w_ih[0] rows are
    # zero-padded to match, so results are unchanged).
    x_tm = jnp.pad(x_tm, ((0, 0), (0, 0), (0, F_PAD - N_FEATURE)))  # (T,B,384)

    # Pad batch to the f32 sublane granularity (8); padded rows are zeros and
    # are sliced off before returning.
    B_pad = max(8, ((B + 7) // 8) * 8)
    h0, c0 = hidden                                                # (L,B,H) each
    if B_pad != B:
        pad = B_pad - B
        x_tm = jnp.pad(x_tm, ((0, 0), (0, pad), (0, 0)))
        h0 = jnp.pad(h0, ((0, 0), (0, pad), (0, 0)))
        c0 = jnp.pad(c0, ((0, 0), (0, pad), (0, 0)))
    x2d = x_tm.reshape(T * B_pad, F_PAD)                           # (T*B_pad, 384)

    out_pad, hT, cT = run_fused(params, x2d, h0, c0, T, B_pad)

    output = out_pad[:B, :out_feature]                             # (B, out_feature)
    l_hidden = (hT[:, :B, :], cT[:, :B, :])                        # (L,B,H) each
    # TODO(synk): inter-layer / head dropout (training mode) not implemented;
    # eval-mode identity.
    return output, l_hidden


def init_hidden(batch_size, n_layers, n_hidden):
    return (jnp.zeros((n_layers, batch_size, n_hidden), jnp.float32),
            jnp.zeros((n_layers, batch_size, n_hidden), jnp.float32))


# ----------------------------------------------------------------------------
if __name__ == "__main__":
    key = jax.random.PRNGKey(0)
    k_param, k_main, k_prim, k_sec = jax.random.split(key, 4)

    B, T = 2, 8
    n_hidden, n_layers, out_feature = 128, 3, 1

    params = init_params(k_param, n_hidden=n_hidden, n_layers=n_layers,
                         out_feature=out_feature)

    x_main_data = jax.random.normal(k_main, (B, T, MAIN_FEATURES), jnp.float32)
    x_prim_weap = jax.random.randint(k_prim, (B, T, NUM_PLAYERS), 0, PRIM_VOCAB,
                                     dtype=jnp.int32)
    x_sec_weap = jax.random.randint(k_sec, (B, T, NUM_PLAYERS), 0, SEC_VOCAB,
                                    dtype=jnp.int32)
    hidden = init_hidden(B, n_layers, n_hidden)

    output, (h_n, c_n) = cs2lstm_forward(params, x_main_data, x_prim_weap,
                                         x_sec_weap, hidden)
    jax.block_until_ready((output, h_n, c_n))

    assert output.shape == (B, out_feature)
    assert h_n.shape == (n_layers, B, n_hidden)
    assert c_n.shape == (n_layers, B, n_hidden)
    print("KERNEL_OK")
</pallas_src>

<mosaic_0001>
module attributes {stable_mosaic.version = 11 : i64} {
  func.func @kernel(%arg0: memref<64x384xf32, #tpu.memory_space<vmem>>, %arg1: memref<384x512xf32, #tpu.memory_space<vmem>>, %arg2: memref<128x512xf32, #tpu.memory_space<vmem>>, %arg3: memref<1x512xf32, #tpu.memory_space<vmem>>, %arg4: memref<128x512xf32, #tpu.memory_space<vmem>>, %arg5: memref<128x512xf32, #tpu.memory_space<vmem>>, %arg6: memref<1x512xf32, #tpu.memory_space<vmem>>, %arg7: memref<128x512xf32, #tpu.memory_space<vmem>>, %arg8: memref<128x512xf32, #tpu.memory_space<vmem>>, %arg9: memref<1x512xf32, #tpu.memory_space<vmem>>, %arg10: memref<3x8x128xf32, #tpu.memory_space<vmem>>, %arg11: memref<3x8x128xf32, #tpu.memory_space<vmem>>, %arg12: memref<128x128xf32, #tpu.memory_space<vmem>>, %arg13: memref<1x128xf32, #tpu.memory_space<vmem>>, %arg14: memref<128x128xf32, #tpu.memory_space<vmem>>, %arg15: memref<1x128xf32, #tpu.memory_space<vmem>>, %arg16: memref<8x128xf32, #tpu.memory_space<vmem>>, %arg17: memref<3x8x128xf32, #tpu.memory_space<vmem>>, %arg18: memref<3x8x128xf32, #tpu.memory_space<vmem>>, %arg19: memref<64x512xf32, #tpu.memory_space<vmem>>, %arg20: memref<64x128xf32, #tpu.memory_space<vmem>>) attributes {dimension_semantics = [], scalar_prefetch = 0 : i64, scratch_operands = 2 : i64, tpu.core_type = #tpu.core_type<tc>} {
    %c0 = arith.constant 0 : index
    %c0_0 = arith.constant 0 : index
    %0 = vector.load %arg0[%c0, %c0_0] : memref<64x384xf32, #tpu.memory_space<vmem>>, vector<64x384xf32>
    %c0_1 = arith.constant 0 : index
    %c0_2 = arith.constant 0 : index
    %1 = vector.load %arg1[%c0_1, %c0_2] : memref<384x512xf32, #tpu.memory_space<vmem>>, vector<384x512xf32>
    %cst = arith.constant dense<0.000000e+00> : vector<64x512xf32>
    %2 = tpu.matmul %0, %1, %cst {dimension_numbers = #tpu.dot_dimension_numbers<[1], [0], [0], [1], [0, 0, 1, 1], [], []>} : vector<64x384xf32>, vector<384x512xf32>, vector<64x512xf32> -> vector<64x512xf32>
    %c0_3 = arith.constant 0 : index
    %c0_4 = arith.constant 0 : index
    %3 = vector.load %arg3[%c0_3, %c0_4] : memref<1x512xf32, #tpu.memory_space<vmem>>, vector<1x512xf32>
    %4 = vector.broadcast %3 : vector<1x512xf32> to vector<64x512xf32>
    %5 = arith.addf %2, %4 : vector<64x512xf32>
    %c0_5 = arith.constant 0 : index
    %c0_6 = arith.constant 0 : index
    %6 = vector.load %arg19[%c0_5, %c0_6] : memref<64x512xf32, #tpu.memory_space<vmem>>, vector<64x512xf32>
    tpu.vector_store %arg19[%c0_5, %c0_6], %5 {strides = array<i32>} : memref<64x512xf32, #tpu.memory_space<vmem>>, vector<64x512xf32>,
    %c0_7 = arith.constant 0 : index
    %c0_8 = arith.constant 0 : index
    %c0_9 = arith.constant 0 : index
    %7 = vector.load %arg10[%c0_7, %c0_8, %c0_9] : memref<3x8x128xf32, #tpu.memory_space<vmem>>, vector<1x8x128xf32>
    %8 = vector.shape_cast %7 : vector<1x8x128xf32> to vector<8x128xf32>
    %c0_10 = arith.constant 0 : index
    %c0_11 = arith.constant 0 : index
    %c0_12 = arith.constant 0 : index
    %9 = vector.load %arg11[%c0_10, %c0_11, %c0_12] : memref<3x8x128xf32, #tpu.memory_space<vmem>>, vector<1x8x128xf32>
    %10 = vector.shape_cast %9 : vector<1x8x128xf32> to vector<8x128xf32>
    %c0_i32 = arith.constant 0 : i32
    %c8_i32 = arith.constant 8 : i32
    %11 = arith.muli %c0_i32, %c8_i32 : i32
    %12 = arith.index_cast %11 : i32 to index
    %c0_13 = arith.constant 0 : index
    %13 = vector.load %arg19[%12, %c0_13] : memref<64x512xf32, #tpu.memory_space<vmem>>, vector<8x512xf32>
    %c0_14 = arith.constant 0 : index
    %c0_15 = arith.constant 0 : index
    %14 = vector.load %arg2[%c0_14, %c0_15] : memref<128x512xf32, #tpu.memory_space<vmem>>, vector<128x512xf32>
    %cst_16 = arith.constant dense<0.000000e+00> : vector<8x512xf32>
    %15 = tpu.matmul %8, %14, %cst_16 {dimension_numbers = #tpu.dot_dimension_numbers<[1], [0], [0], [1], [0, 0, 1, 1], [], []>} : vector<8x128xf32>, vector<128x512xf32>, vector<8x512xf32> -> vector<8x512xf32>
    %16 = arith.addf %13, %15 : vector<8x512xf32>
    %17 = vector.extract_strided_slice %16 {offsets = [0, 0], sizes = [8, 128], strides = [1, 1]} : vector<8x512xf32> to vector<8x128xf32>
    %18 = arith.negf %17 : vector<8x128xf32>
    %19 = math.exp %18 : vector<8x128xf32>
    %cst_17 = arith.constant 1.000000e+00 : f32
    %20 = vector.broadcast %cst_17 : f32 to vector<8x128xf32>
    %21 = arith.addf %20, %19 : vector<8x128xf32>
    %22 = arith.divf %20, %21 : vector<8x128xf32>
    %23 = vector.extract_strided_slice %16 {offsets = [0, 128], sizes = [8, 128], strides = [1, 1]} : vector<8x512xf32> to vector<8x128xf32>
    %24 = arith.negf %23 : vector<8x128xf32>
    %25 = math.exp %24 : vector<8x128xf32>
    %cst_18 = arith.constant 1.000000e+00 : f32
    %26 = vector.broadcast %cst_18 : f32 to vector<8x128xf32>
    %27 = arith.addf %26, %25 : vector<8x128xf32>
    %28 = arith.divf %26, %27 : vector<8x128xf32>
    %29 = vector.extract_strided_slice %16 {offsets = [0, 256], sizes = [8, 128], strides = [1, 1]} : vector<8x512xf32> to vector<8x128xf32>
    %30 = math.tanh %29 : vector<8x128xf32>
    %31 = vector.extract_strided_slice %16 {offsets = [0, 384], sizes = [8, 128], strides = [1, 1]} : vector<8x512xf32> to vector<8x128xf32>
    %32 = arith.negf %31 : vector<8x128xf32>
    %33 = math.exp %32 : vector<8x128xf32>
    %cst_19 = arith.constant 1.000000e+00 : f32
    %34 = vector.broadcast %cst_19 : f32 to vector<8x128xf32>
    %35 = arith.addf %34, %33 : vector<8x128xf32>
    %36 = arith.divf %34, %35 : vector<8x128xf32>
    %37 = arith.mulf %28, %10 : vector<8x128xf32>
    %38 = arith.mulf %22, %30 : vector<8x128xf32>
    %39 = arith.addf %37, %38 : vector<8x128xf32>
    %40 = math.tanh %39 : vector<8x128xf32>
    %41 = arith.mulf %36, %40 : vector<8x128xf32>
    %42 = arith.index_cast %11 : i32 to index
    %c0_20 = arith.constant 0 : index
    %43 = vector.load %arg20[%42, %c0_20] : memref<64x128xf32, #tpu.memory_space<vmem>>, vector<8x128xf32>
    tpu.vector_store %arg20[%42, %c0_20], %41 {strides = array<i32>} : memref<64x128xf32, #tpu.memory_space<vmem>>, vector<8x128xf32>,
    %c1_i32 = arith.constant 1 : i32
    %c8_i32_21 = arith.constant 8 : i32
    %44 = arith.muli %c1_i32, %c8_i32_21 : i32
    %45 = arith.index_cast %44 : i32 to index
    %c0_22 = arith.constant 0 : index
    %46 = vector.load %arg19[%45, %c0_22] : memref<64x512xf32, #tpu.memory_space<vmem>>, vector<8x512xf32>
    %c0_23 = arith.constant 0 : index
    %c0_24 = arith.constant 0 : index
    %47 = vector.load %arg2[%c0_23, %c0_24] : memref<128x512xf32, #tpu.memory_space<vmem>>, vector<128x512xf32>
    %cst_25 = arith.constant dense<0.000000e+00> : vector<8x512xf32>
    %48 = tpu.matmul %41, %47, %cst_25 {dimension_numbers = #tpu.dot_dimension_numbers<[1], [0], [0], [1], [0, 0, 1, 1], [], []>} : vector<8x128xf32>, vector<128x512xf32>, vector<8x512xf32> -> vector<8x512xf32>
    %49 = arith.addf %46, %48 : vector<8x512xf32>
    %50 = vector.extract_strided_slice %49 {offsets = [0, 0], sizes = [8, 128], strides = [1, 1]} : vector<8x512xf32> to vector<8x128xf32>
    %51 = arith.negf %50 : vector<8x128xf32>
    %52 = math.exp %51 : vector<8x128xf32>
    %cst_26 = arith.constant 1.000000e+00 : f32
    %53 = vector.broadcast %cst_26 : f32 to vector<8x128xf32>
    %54 = arith.addf %53, %52 : vector<8x128xf32>
    %55 = arith.divf %53, %54 : vector<8x128xf32>
    %56 = vector.extract_strided_slice %49 {offsets = [0, 128], sizes = [8, 128], strides = [1, 1]} : vector<8x512xf32> to vector<8x128xf32>
    %57 = arith.negf %56 : vector<8x128xf32>
    %58 = math.exp %57 : vector<8x128xf32>
    %cst_27 = arith.constant 1.000000e+00 : f32
    %59 = vector.broadcast %cst_27 : f32 to vector<8x128xf32>
    %60 = arith.addf %59, %58 : vector<8x128xf32>
    %61 = arith.divf %59, %60 : vector<8x128xf32>
    %62 = vector.extract_strided_slice %49 {offsets = [0, 256], sizes = [8, 128], strides = [1, 1]} : vector<8x512xf32> to vector<8x128xf32>
    %63 = math.tanh %62 : vector<8x128xf32>
    %64 = vector.extract_strided_slice %49 {offsets = [0, 384], sizes = [8, 128], strides = [1, 1]} : vector<8x512xf32> to vector<8x128xf32>
    %65 = arith.negf %64 : vector<8x128xf32>
    %66 = math.exp %65 : vector<8x128xf32>
    %cst_28 = arith.constant 1.000000e+00 : f32
    %67 = vector.broadcast %cst_28 : f32 to vector<8x128xf32>
    %68 = arith.addf %67, %66 : vector<8x128xf32>
    %69 = arith.divf %67, %68 : vector<8x128xf32>
    %70 = arith.mulf %61, %39 : vector<8x128xf32>
    %71 = arith.mulf %55, %63 : vector<8x128xf32>
    %72 = arith.addf %70, %71 : vector<8x128xf32>
    %73 = math.tanh %72 : vector<8x128xf32>
    %74 = arith.mulf %69, %73 : vector<8x128xf32>
    %75 = arith.index_cast %44 : i32 to index
    %c0_29 = arith.constant 0 : index
    %76 = vector.load %arg20[%75, %c0_29] : memref<64x128xf32, #tpu.memory_space<vmem>>, vector<8x128xf32>
    tpu.vector_store %arg20[%75, %c0_29], %74 {strides = array<i32>} : memref<64x128xf32, #tpu.memory_space<vmem>>, vector<8x128xf32>,
    %c2_i32 = arith.constant 2 : i32
    %c8_i32_30 = arith.constant 8 : i32
    %77 = arith.muli %c2_i32, %c8_i32_30 : i32
    %78 = arith.index_cast %77 : i32 to index
    %c0_31 = arith.constant 0 : index
    %79 = vector.load %arg19[%78, %c0_31] : memref<64x512xf32, #tpu.memory_space<vmem>>, vector<8x512xf32>
    %c0_32 = arith.constant 0 : index
    %c0_33 = arith.constant 0 : index
    %80 = vector.load %arg2[%c0_32, %c0_33] : memref<128x512xf32, #tpu.memory_space<vmem>>, vector<128x512xf32>
    %cst_34 = arith.constant dense<0.000000e+00> : vector<8x512xf32>
    %81 = tpu.matmul %74, %80, %cst_34 {dimension_numbers = #tpu.dot_dimension_numbers<[1], [0], [0], [1], [0, 0, 1, 1], [], []>} : vector<8x128xf32>, vector<128x512xf32>, vector<8x512xf32> -> vector<8x512xf32>
    %82 = arith.addf %79, %81 : vector<8x512xf32>
    %83 = vector.extract_strided_slice %82 {offsets = [0, 0], sizes = [8, 128], strides = [1, 1]} : vector<8x512xf32> to vector<8x128xf32>
    %84 = arith.negf %83 : vector<8x128xf32>
    %85 = math.exp %84 : vector<8x128xf32>
    %cst_35 = arith.constant 1.000000e+00 : f32
    %86 = vector.broadcast %cst_35 : f32 to vector<8x128xf32>
    %87 = arith.addf %86, %85 : vector<8x128xf32>
    %88 = arith.divf %86, %87 : vector<8x128xf32>
    %89 = vector.extract_strided_slice %82 {offsets = [0, 128], sizes = [8, 128], strides = [1, 1]} : vector<8x512xf32> to vector<8x128xf32>
    %90 = arith.negf %89 : vector<8x128xf32>
    %91 = math.exp %90 : vector<8x128xf32>
    %cst_36 = arith.constant 1.000000e+00 : f32
    %92 = vector.broadcast %cst_36 : f32 to vector<8x128xf32>
    %93 = arith.addf %92, %91 : vector<8x128xf32>
    %94 = arith.divf %92, %93 : vector<8x128xf32>
    %95 = vector.extract_strided_slice %82 {offsets = [0, 256], sizes = [8, 128], strides = [1, 1]} : vector<8x512xf32> to vector<8x128xf32>
    %96 = math.tanh %95 : vector<8x128xf32>
    %97 = vector.extract_strided_slice %82 {offsets = [0, 384], sizes = [8, 128], strides = [1, 1]} : vector<8x512xf32> to vector<8x128xf32>
    %98 = arith.negf %97 : vector<8x128xf32>
    %99 = math.exp %98 : vector<8x128xf32>
    %cst_37 = arith.constant 1.000000e+00 : f32
    %100 = vector.broadcast %cst_37 : f32 to vector<8x128xf32>
    %101 = arith.addf %100, %99 : vector<8x128xf32>
    %102 = arith.divf %100, %101 : vector<8x128xf32>
    %103 = arith.mulf %94, %72 : vector<8x128xf32>
    %104 = arith.mulf %88, %96 : vector<8x128xf32>
    %105 = arith.addf %103, %104 : vector<8x128xf32>
    %106 = math.tanh %105 : vector<8x128xf32>
    %107 = arith.mulf %102, %106 : vector<8x128xf32>
    %108 = arith.index_cast %77 : i32 to index
    %c0_38 = arith.constant 0 : index
    %109 = vector.load %arg20[%108, %c0_38] : memref<64x128xf32, #tpu.memory_space<vmem>>, vector<8x128xf32>
    tpu.vector_store %arg20[%108, %c0_38], %107 {strides = array<i32>} : memref<64x128xf32, #tpu.memory_space<vmem>>, vector<8x128xf32>,
    %c3_i32 = arith.constant 3 : i32
    %c8_i32_39 = arith.constant 8 : i32
    %110 = arith.muli %c3_i32, %c8_i32_39 : i32
    %111 = arith.index_cast %110 : i32 to index
    %c0_40 = arith.constant 0 : index
    %112 = vector.load %arg19[%111, %c0_40] : memref<64x512xf32, #tpu.memory_space<vmem>>, vector<8x512xf32>
    %c0_41 = arith.constant 0 : index
    %c0_42 = arith.constant 0 : index
    %113 = vector.load %arg2[%c0_41, %c0_42] : memref<128x512xf32, #tpu.memory_space<vmem>>, vector<128x512xf32>
    %cst_43 = arith.constant dense<0.000000e+00> : vector<8x512xf32>
    %114 = tpu.matmul %107, %113, %cst_43 {dimension_numbers = #tpu.dot_dimension_numbers<[1], [0], [0], [1], [0, 0, 1, 1], [], []>} : vector<8x128xf32>, vector<128x512xf32>, vector<8x512xf32> -> vector<8x512xf32>
    %115 = arith.addf %112, %114 : vector<8x512xf32>
    %116 = vector.extract_strided_slice %115 {offsets = [0, 0], sizes = [8, 128], strides = [1, 1]} : vector<8x512xf32> to vector<8x128xf32>
    %117 = arith.negf %116 : vector<8x128xf32>
    %118 = math.exp %117 : vector<8x128xf32>
    %cst_44 = arith.constant 1.000000e+00 : f32
    %119 = vector.broadcast %cst_44 : f32 to vector<8x128xf32>
    %120 = arith.addf %119, %118 : vector<8x128xf32>
    %121 = arith.divf %119, %120 : vector<8x128xf32>
    %122 = vector.extract_strided_slice %115 {offsets = [0, 128], sizes = [8, 128], strides = [1, 1]} : vector<8x512xf32> to vector<8x128xf32>
    %123 = arith.negf %122 : vector<8x128xf32>
    %124 = math.exp %123 : vector<8x128xf32>
    %cst_45 = arith.constant 1.000000e+00 : f32
    %125 = vector.broadcast %cst_45 : f32 to vector<8x128xf32>
    %126 = arith.addf %125, %124 : vector<8x128xf32>
    %127 = arith.divf %125, %126 : vector<8x128xf32>
    %128 = vector.extract_strided_slice %115 {offsets = [0, 256], sizes = [8, 128], strides = [1, 1]} : vector<8x512xf32> to vector<8x128xf32>
    %129 = math.tanh %128 : vector<8x128xf32>
    %130 = vector.extract_strided_slice %115 {offsets = [0, 384], sizes = [8, 128], strides = [1, 1]} : vector<8x512xf32> to vector<8x128xf32>
    %131 = arith.negf %130 : vector<8x128xf32>
    %132 = math.exp %131 : vector<8x128xf32>
    %cst_46 = arith.constant 1.000000e+00 : f32
    %133 = vector.broadcast %cst_46 : f32 to vector<8x128xf32>
    %134 = arith.addf %133, %132 : vector<8x128xf32>
    %135 = arith.divf %133, %134 : vector<8x128xf32>
    %136 = arith.mulf %127, %105 : vector<8x128xf32>
    %137 = arith.mulf %121, %129 : vector<8x128xf32>
    %138 = arith.addf %136, %137 : vector<8x128xf32>
    %139 = math.tanh %138 : vector<8x128xf32>
    %140 = arith.mulf %135, %139 : vector<8x128xf32>
    %141 = arith.index_cast %110 : i32 to index
    %c0_47 = arith.constant 0 : index
    %142 = vector.load %arg20[%141, %c0_47] : memref<64x128xf32, #tpu.memory_space<vmem>>, vector<8x128xf32>
    tpu.vector_store %arg20[%141, %c0_47], %140 {strides = array<i32>} : memref<64x128xf32, #tpu.memory_space<vmem>>, vector<8x128xf32>,
    %c4_i32 = arith.constant 4 : i32
    %c8_i32_48 = arith.constant 8 : i32
    %143 = arith.muli %c4_i32, %c8_i32_48 : i32
    %144 = arith.index_cast %143 : i32 to index
    %c0_49 = arith.constant 0 : index
    %145 = vector.load %arg19[%144, %c0_49] : memref<64x512xf32, #tpu.memory_space<vmem>>, vector<8x512xf32>
    %c0_50 = arith.constant 0 : index
    %c0_51 = arith.constant 0 : index
    %146 = vector.load %arg2[%c0_50, %c0_51] : memref<128x512xf32, #tpu.memory_space<vmem>>, vector<128x512xf32>
    %cst_52 = arith.constant dense<0.000000e+00> : vector<8x512xf32>
    %147 = tpu.matmul %140, %146, %cst_52 {dimension_numbers = #tpu.dot_dimension_numbers<[1], [0], [0], [1], [0, 0, 1, 1], [], []>} : vector<8x128xf32>, vector<128x512xf32>, vector<8x512xf32> -> vector<8x512xf32>
    %148 = arith.addf %145, %147 : vector<8x512xf32>
    %149 = vector.extract_strided_slice %148 {offsets = [0, 0], sizes = [8, 128], strides = [1, 1]} : vector<8x512xf32> to vector<8x128xf32>
    %150 = arith.negf %149 : vector<8x128xf32>
    %151 = math.exp %150 : vector<8x128xf32>
    %cst_53 = arith.constant 1.000000e+00 : f32
    %152 = vector.broadcast %cst_53 : f32 to vector<8x128xf32>
    %153 = arith.addf %152, %151 : vector<8x128xf32>
    %154 = arith.divf %152, %153 : vector<8x128xf32>
    %155 = vector.extract_strided_slice %148 {offsets = [0, 128], sizes = [8, 128], strides = [1, 1]} : vector<8x512xf32> to vector<8x128xf32>
    %156 = arith.negf %155 : vector<8x128xf32>
    %157 = math.exp %156 : vector<8x128xf32>
    %cst_54 = arith.constant 1.000000e+00 : f32
    %158 = vector.broadcast %cst_54 : f32 to vector<8x128xf32>
    %159 = arith.addf %158, %157 : vector<8x128xf32>
    %160 = arith.divf %158, %159 : vector<8x128xf32>
    %161 = vector.extract_strided_slice %148 {offsets = [0, 256], sizes = [8, 128], strides = [1, 1]} : vector<8x512xf32> to vector<8x128xf32>
    %162 = math.tanh %161 : vector<8x128xf32>
    %163 = vector.extract_strided_slice %148 {offsets = [0, 384], sizes = [8, 128], strides = [1, 1]} : vector<8x512xf32> to vector<8x128xf32>
    %164 = arith.negf %163 : vector<8x128xf32>
    %165 = math.exp %164 : vector<8x128xf32>
    %cst_55 = arith.constant 1.000000e+00 : f32
    %166 = vector.broadcast %cst_55 : f32 to vector<8x128xf32>
    %167 = arith.addf %166, %165 : vector<8x128xf32>
    %168 = arith.divf %166, %167 : vector<8x128xf32>
    %169 = arith.mulf %160, %138 : vector<8x128xf32>
    %170 = arith.mulf %154, %162 : vector<8x128xf32>
    %171 = arith.addf %169, %170 : vector<8x128xf32>
    %172 = math.tanh %171 : vector<8x128xf32>
    %173 = arith.mulf %168, %172 : vector<8x128xf32>
    %174 = arith.index_cast %143 : i32 to index
    %c0_56 = arith.constant 0 : index
    %175 = vector.load %arg20[%174, %c0_56] : memref<64x128xf32, #tpu.memory_space<vmem>>, vector<8x128xf32>
    tpu.vector_store %arg20[%174, %c0_56], %173 {strides = array<i32>} : memref<64x128xf32, #tpu.memory_space<vmem>>, vector<8x128xf32>,
    %c5_i32 = arith.constant 5 : i32
    %c8_i32_57 = arith.constant 8 : i32
    %176 = arith.muli %c5_i32, %c8_i32_57 : i32
    %177 = arith.index_cast %176 : i32 to index
    %c0_58 = arith.constant 0 : index
    %178 = vector.load %arg19[%177, %c0_58] : memref<64x512xf32, #tpu.memory_space<vmem>>, vector<8x512xf32>
    %c0_59 = arith.constant 0 : index
    %c0_60 = arith.constant 0 : index
    %179 = vector.load %arg2[%c0_59, %c0_60] : memref<128x512xf32, #tpu.memory_space<vmem>>, vector<128x512xf32>
    %cst_61 = arith.constant dense<0.000000e+00> : vector<8x512xf32>
    %180 = tpu.matmul %173, %179, %cst_61 {dimension_numbers = #tpu.dot_dimension_numbers<[1], [0], [0], [1], [0, 0, 1, 1], [], []>} : vector<8x128xf32>, vector<128x512xf32>, vector<8x512xf32> -> vector<8x512xf32>
    %181 = arith.addf %178, %180 : vector<8x512xf32>
    %182 = vector.extract_strided_slice %181 {offsets = [0, 0], sizes = [8, 128], strides = [1, 1]} : vector<8x512xf32> to vector<8x128xf32>
    %183 = arith.negf %182 : vector<8x128xf32>
    %184 = math.exp %183 : vector<8x128xf32>
    %cst_62 = arith.constant 1.000000e+00 : f32
    %185 = vector.broadcast %cst_62 : f32 to vector<8x128xf32>
    %186 = arith.addf %185, %184 : vector<8x128xf32>
    %187 = arith.divf %185, %186 : vector<8x128xf32>
    %188 = vector.extract_strided_slice %181 {offsets = [0, 128], sizes = [8, 128], strides = [1, 1]} : vector<8x512xf32> to vector<8x128xf32>
    %189 = arith.negf %188 : vector<8x128xf32>
    %190 = math.exp %189 : vector<8x128xf32>
    %cst_63 = arith.constant 1.000000e+00 : f32
    %191 = vector.broadcast %cst_63 : f32 to vector<8x128xf32>
    %192 = arith.addf %191, %190 : vector<8x128xf32>
    %193 = arith.divf %191, %192 : vector<8x128xf32>
    %194 = vector.extract_strided_slice %181 {offsets = [0, 256], sizes = [8, 128], strides = [1, 1]} : vector<8x512xf32> to vector<8x128xf32>
    %195 = math.tanh %194 : vector<8x128xf32>
    %196 = vector.extract_strided_slice %181 {offsets = [0, 384], sizes = [8, 128], strides = [1, 1]} : vector<8x512xf32> to vector<8x128xf32>
    %197 = arith.negf %196 : vector<8x128xf32>
    %198 = math.exp %197 : vector<8x128xf32>
    %cst_64 = arith.constant 1.000000e+00 : f32
    %199 = vector.broadcast %cst_64 : f32 to vector<8x128xf32>
    %200 = arith.addf %199, %198 : vector<8x128xf32>
    %201 = arith.divf %199, %200 : vector<8x128xf32>
    %202 = arith.mulf %193, %171 : vector<8x128xf32>
    %203 = arith.mulf %187, %195 : vector<8x128xf32>
    %204 = arith.addf %202, %203 : vector<8x128xf32>
    %205 = math.tanh %204 : vector<8x128xf32>
    %206 = arith.mulf %201, %205 : vector<8x128xf32>
    %207 = arith.index_cast %176 : i32 to index
    %c0_65 = arith.constant 0 : index
    %208 = vector.load %arg20[%207, %c0_65] : memref<64x128xf32, #tpu.memory_space<vmem>>, vector<8x128xf32>
    tpu.vector_store %arg20[%207, %c0_65], %206 {strides = array<i32>} : memref<64x128xf32, #tpu.memory_space<vmem>>, vector<8x128xf32>,
    %c6_i32 = arith.constant 6 : i32
    %c8_i32_66 = arith.constant 8 : i32
    %209 = arith.muli %c6_i32, %c8_i32_66 : i32
    %210 = arith.index_cast %209 : i32 to index
    %c0_67 = arith.constant 0 : index
    %211 = vector.load %arg19[%210, %c0_67] : memref<64x512xf32, #tpu.memory_space<vmem>>, vector<8x512xf32>
    %c0_68 = arith.constant 0 : index
    %c0_69 = arith.constant 0 : index
    %212 = vector.load %arg2[%c0_68, %c0_69] : memref<128x512xf32, #tpu.memory_space<vmem>>, vector<128x512xf32>
    %cst_70 = arith.constant dense<0.000000e+00> : vector<8x512xf32>
    %213 = tpu.matmul %206, %212, %cst_70 {dimension_numbers = #tpu.dot_dimension_numbers<[1], [0], [0], [1], [0, 0, 1, 1], [], []>} : vector<8x128xf32>, vector<128x512xf32>, vector<8x512xf32> -> vector<8x512xf32>
    %214 = arith.addf %211, %213 : vector<8x512xf32>
    %215 = vector.extract_strided_slice %214 {offsets = [0, 0], sizes = [8, 128], strides = [1, 1]} : vector<8x512xf32> to vector<8x128xf32>
    %216 = arith.negf %215 : vector<8x128xf32>
    %217 = math.exp %216 : vector<8x128xf32>
    %cst_71 = arith.constant 1.000000e+00 : f32
    %218 = vector.broadcast %cst_71 : f32 to vector<8x128xf32>
    %219 = arith.addf %218, %217 : vector<8x128xf32>
    %220 = arith.divf %218, %219 : vector<8x128xf32>
    %221 = vector.extract_strided_slice %214 {offsets = [0, 128], sizes = [8, 128], strides = [1, 1]} : vector<8x512xf32> to vector<8x128xf32>
    %222 = arith.negf %221 : vector<8x128xf32>
    %223 = math.exp %222 : vector<8x128xf32>
    %cst_72 = arith.constant 1.000000e+00 : f32
    %224 = vector.broadcast %cst_72 : f32 to vector<8x128xf32>
    %225 = arith.addf %224, %223 : vector<8x128xf32>
    %226 = arith.divf %224, %225 : vector<8x128xf32>
    %227 = vector.extract_strided_slice %214 {offsets = [0, 256], sizes = [8, 128], strides = [1, 1]} : vector<8x512xf32> to vector<8x128xf32>
    %228 = math.tanh %227 : vector<8x128xf32>
    %229 = vector.extract_strided_slice %214 {offsets = [0, 384], sizes = [8, 128], strides = [1, 1]} : vector<8x512xf32> to vector<8x128xf32>
    %230 = arith.negf %229 : vector<8x128xf32>
    %231 = math.exp %230 : vector<8x128xf32>
    %cst_73 = arith.constant 1.000000e+00 : f32
    %232 = vector.broadcast %cst_73 : f32 to vector<8x128xf32>
    %233 = arith.addf %232, %231 : vector<8x128xf32>
    %234 = arith.divf %232, %233 : vector<8x128xf32>
    %235 = arith.mulf %226, %204 : vector<8x128xf32>
    %236 = arith.mulf %220, %228 : vector<8x128xf32>
    %237 = arith.addf %235, %236 : vector<8x128xf32>
    %238 = math.tanh %237 : vector<8x128xf32>
    %239 = arith.mulf %234, %238 : vector<8x128xf32>
    %240 = arith.index_cast %209 : i32 to index
    %c0_74 = arith.constant 0 : index
    %241 = vector.load %arg20[%240, %c0_74] : memref<64x128xf32, #tpu.memory_space<vmem>>, vector<8x128xf32>
    tpu.vector_store %arg20[%240, %c0_74], %239 {strides = array<i32>} : memref<64x128xf32, #tpu.memory_space<vmem>>, vector<8x128xf32>,
    %c7_i32 = arith.constant 7 : i32
    %c8_i32_75 = arith.constant 8 : i32
    %242 = arith.muli %c7_i32, %c8_i32_75 : i32
    %243 = arith.index_cast %242 : i32 to index
    %c0_76 = arith.constant 0 : index
    %244 = vector.load %arg19[%243, %c0_76] : memref<64x512xf32, #tpu.memory_space<vmem>>, vector<8x512xf32>
    %c0_77 = arith.constant 0 : index
    %c0_78 = arith.constant 0 : index
    %245 = vector.load %arg2[%c0_77, %c0_78] : memref<128x512xf32, #tpu.memory_space<vmem>>, vector<128x512xf32>
    %cst_79 = arith.constant dense<0.000000e+00> : vector<8x512xf32>
    %246 = tpu.matmul %239, %245, %cst_79 {dimension_numbers = #tpu.dot_dimension_numbers<[1], [0], [0], [1], [0, 0, 1, 1], [], []>} : vector<8x128xf32>, vector<128x512xf32>, vector<8x512xf32> -> vector<8x512xf32>
    %247 = arith.addf %244, %246 : vector<8x512xf32>
    %248 = vector.extract_strided_slice %247 {offsets = [0, 0], sizes = [8, 128], strides = [1, 1]} : vector<8x512xf32> to vector<8x128xf32>
    %249 = arith.negf %248 : vector<8x128xf32>
    %250 = math.exp %249 : vector<8x128xf32>
    %cst_80 = arith.constant 1.000000e+00 : f32
    %251 = vector.broadcast %cst_80 : f32 to vector<8x128xf32>
    %252 = arith.addf %251, %250 : vector<8x128xf32>
    %253 = arith.divf %251, %252 : vector<8x128xf32>
    %254 = vector.extract_strided_slice %247 {offsets = [0, 128], sizes = [8, 128], strides = [1, 1]} : vector<8x512xf32> to vector<8x128xf32>
    %255 = arith.negf %254 : vector<8x128xf32>
    %256 = math.exp %255 : vector<8x128xf32>
    %cst_81 = arith.constant 1.000000e+00 : f32
    %257 = vector.broadcast %cst_81 : f32 to vector<8x128xf32>
    %258 = arith.addf %257, %256 : vector<8x128xf32>
    %259 = arith.divf %257, %258 : vector<8x128xf32>
    %260 = vector.extract_strided_slice %247 {offsets = [0, 256], sizes = [8, 128], strides = [1, 1]} : vector<8x512xf32> to vector<8x128xf32>
    %261 = math.tanh %260 : vector<8x128xf32>
    %262 = vector.extract_strided_slice %247 {offsets = [0, 384], sizes = [8, 128], strides = [1, 1]} : vector<8x512xf32> to vector<8x128xf32>
    %263 = arith.negf %262 : vector<8x128xf32>
    %264 = math.exp %263 : vector<8x128xf32>
    %cst_82 = arith.constant 1.000000e+00 : f32
    %265 = vector.broadcast %cst_82 : f32 to vector<8x128xf32>
    %266 = arith.addf %265, %264 : vector<8x128xf32>
    %267 = arith.divf %265, %266 : vector<8x128xf32>
    %268 = arith.mulf %259, %237 : vector<8x128xf32>
    %269 = arith.mulf %253, %261 : vector<8x128xf32>
    %270 = arith.addf %268, %269 : vector<8x128xf32>
    %271 = math.tanh %270 : vector<8x128xf32>
    %272 = arith.mulf %267, %271 : vector<8x128xf32>
    %273 = arith.index_cast %242 : i32 to index
    %c0_83 = arith.constant 0 : index
    %274 = vector.load %arg20[%273, %c0_83] : memref<64x128xf32, #tpu.memory_space<vmem>>, vector<8x128xf32>
    tpu.vector_store %arg20[%273, %c0_83], %272 {strides = array<i32>} : memref<64x128xf32, #tpu.memory_space<vmem>>, vector<8x128xf32>,
    %c8_i32_84 = arith.constant 8 : i32
    %c0_85 = arith.constant 0 : index
    %c0_86 = arith.constant 0 : index
    %c0_87 = arith.constant 0 : index
    %275 = vector.load %arg17[%c0_85, %c0_86, %c0_87] : memref<3x8x128xf32, #tpu.memory_space<vmem>>, vector<1x8x128xf32>
    %276 = vector.shape_cast %275 : vector<1x8x128xf32> to vector<8x128xf32>
    %277 = vector.shape_cast %272 : vector<8x128xf32> to vector<1x8x128xf32>
    tpu.vector_store %arg17[%c0_85, %c0_86, %c0_87], %277 {strides = array<i32>} : memref<3x8x128xf32, #tpu.memory_space<vmem>>, vector<1x8x128xf32>,
    %c0_88 = arith.constant 0 : index
    %c0_89 = arith.constant 0 : index
    %c0_90 = arith.constant 0 : index
    %278 = vector.load %arg18[%c0_88, %c0_89, %c0_90] : memref<3x8x128xf32, #tpu.memory_space<vmem>>, vector<1x8x128xf32>
    %279 = vector.shape_cast %278 : vector<1x8x128xf32> to vector<8x128xf32>
    %280 = vector.shape_cast %270 : vector<8x128xf32> to vector<1x8x128xf32>
    tpu.vector_store %arg18[%c0_88, %c0_89, %c0_90], %280 {strides = array<i32>} : memref<3x8x128xf32, #tpu.memory_space<vmem>>, vector<1x8x128xf32>,
    %c0_91 = arith.constant 0 : index
    %c0_92 = arith.constant 0 : index
    %281 = vector.load %arg20[%c0_91, %c0_92] : memref<64x128xf32, #tpu.memory_space<vmem>>, vector<64x128xf32>
    %c0_93 = arith.constant 0 : index
    %c0_94 = arith.constant 0 : index
    %282 = vector.load %arg4[%c0_93, %c0_94] : memref<128x512xf32, #tpu.memory_space<vmem>>, vector<128x512xf32>
    %cst_95 = arith.constant dense<0.000000e+00> : vector<64x512xf32>
    %283 = tpu.matmul %281, %282, %cst_95 {dimension_numbers = #tpu.dot_dimension_numbers<[1], [0], [0], [1], [0, 0, 1, 1], [], []>} : vector<64x128xf32>, vector<128x512xf32>, vector<64x512xf32> -> vector<64x512xf32>
    %c0_96 = arith.constant 0 : index
    %c0_97 = arith.constant 0 : index
    %284 = vector.load %arg6[%c0_96, %c0_97] : memref<1x512xf32, #tpu.memory_space<vmem>>, vector<1x512xf32>
    %285 = vector.broadcast %284 : vector<1x512xf32> to vector<64x512xf32>
    %286 = arith.addf %283, %285 : vector<64x512xf32>
    %c0_98 = arith.constant 0 : index
    %c0_99 = arith.constant 0 : index
    %287 = vector.load %arg19[%c0_98, %c0_99] : memref<64x512xf32, #tpu.memory_space<vmem>>, vector<64x512xf32>
    tpu.vector_store %arg19[%c0_98, %c0_99], %286 {strides = array<i32>} : memref<64x512xf32, #tpu.memory_space<vmem>>, vector<64x512xf32>,
    %c1 = arith.constant 1 : index
    %c0_100 = arith.constant 0 : index
    %c0_101 = arith.constant 0 : index
    %288 = vector.load %arg10[%c1, %c0_100, %c0_101] : memref<3x8x128xf32, #tpu.memory_space<vmem>>, vector<1x8x128xf32>
    %289 = vector.shape_cast %288 : vector<1x8x128xf32> to vector<8x128xf32>
    %c1_102 = arith.constant 1 : index
    %c0_103 = arith.constant 0 : index
    %c0_104 = arith.constant 0 : index
    %290 = vector.load %arg11[%c1_102, %c0_103, %c0_104] : memref<3x8x128xf32, #tpu.memory_space<vmem>>, vector<1x8x128xf32>
    %291 = vector.shape_cast %290 : vector<1x8x128xf32> to vector<8x128xf32>
    %c0_i32_105 = arith.constant 0 : i32
    %c8_i32_106 = arith.constant 8 : i32
    %292 = arith.muli %c0_i32_105, %c8_i32_106 : i32
    %293 = arith.index_cast %292 : i32 to index
    %c0_107 = arith.constant 0 : index
    %294 = vector.load %arg19[%293, %c0_107] : memref<64x512xf32, #tpu.memory_space<vmem>>, vector<8x512xf32>
    %c0_108 = arith.constant 0 : index
    %c0_109 = arith.constant 0 : index
    %295 = vector.load %arg5[%c0_108, %c0_109] : memref<128x512xf32, #tpu.memory_space<vmem>>, vector<128x512xf32>
    %cst_110 = arith.constant dense<0.000000e+00> : vector<8x512xf32>
    %296 = tpu.matmul %289, %295, %cst_110 {dimension_numbers = #tpu.dot_dimension_numbers<[1], [0], [0], [1], [0, 0, 1, 1], [], []>} : vector<8x128xf32>, vector<128x512xf32>, vector<8x512xf32> -> vector<8x512xf32>
    %297 = arith.addf %294, %296 : vector<8x512xf32>
    %298 = vector.extract_strided_slice %297 {offsets = [0, 0], sizes = [8, 128], strides = [1, 1]} : vector<8x512xf32> to vector<8x128xf32>
    %299 = arith.negf %298 : vector<8x128xf32>
    %300 = math.exp %299 : vector<8x128xf32>
    %cst_111 = arith.constant 1.000000e+00 : f32
    %301 = vector.broadcast %cst_111 : f32 to vector<8x128xf32>
    %302 = arith.addf %301, %300 : vector<8x128xf32>
    %303 = arith.divf %301, %302 : vector<8x128xf32>
    %304 = vector.extract_strided_slice %297 {offsets = [0, 128], sizes = [8, 128], strides = [1, 1]} : vector<8x512xf32> to vector<8x128xf32>
    %305 = arith.negf %304 : vector<8x128xf32>
    %306 = math.exp %305 : vector<8x128xf32>
    %cst_112 = arith.constant 1.000000e+00 : f32
    %307 = vector.broadcast %cst_112 : f32 to vector<8x128xf32>
    %308 = arith.addf %307, %306 : vector<8x128xf32>
    %309 = arith.divf %307, %308 : vector<8x128xf32>
    %310 = vector.extract_strided_slice %297 {offsets = [0, 256], sizes = [8, 128], strides = [1, 1]} : vector<8x512xf32> to vector<8x128xf32>
    %311 = math.tanh %310 : vector<8x128xf32>
    %312 = vector.extract_strided_slice %297 {offsets = [0, 384], sizes = [8, 128], strides = [1, 1]} : vector<8x512xf32> to vector<8x128xf32>
    %313 = arith.negf %312 : vector<8x128xf32>
    %314 = math.exp %313 : vector<8x128xf32>
    %cst_113 = arith.constant 1.000000e+00 : f32
    %315 = vector.broadcast %cst_113 : f32 to vector<8x128xf32>
    %316 = arith.addf %315, %314 : vector<8x128xf32>
    %317 = arith.divf %315, %316 : vector<8x128xf32>
    %318 = arith.mulf %309, %291 : vector<8x128xf32>
    %319 = arith.mulf %303, %311 : vector<8x128xf32>
    %320 = arith.addf %318, %319 : vector<8x128xf32>
    %321 = math.tanh %320 : vector<8x128xf32>
    %322 = arith.mulf %317, %321 : vector<8x128xf32>
    %323 = arith.index_cast %292 : i32 to index
    %c0_114 = arith.constant 0 : index
    %324 = vector.load %arg20[%323, %c0_114] : memref<64x128xf32, #tpu.memory_space<vmem>>, vector<8x128xf32>
    tpu.vector_store %arg20[%323, %c0_114], %322 {strides = array<i32>} : memref<64x128xf32, #tpu.memory_space<vmem>>, vector<8x128xf32>,
    %c1_i32_115 = arith.constant 1 : i32
    %c8_i32_116 = arith.constant 8 : i32
    %325 = arith.muli %c1_i32_115, %c8_i32_116 : i32
    %326 = arith.index_cast %325 : i32 to index
    %c0_117 = arith.constant 0 : index
    %327 = vector.load %arg19[%326, %c0_117] : memref<64x512xf32, #tpu.memory_space<vmem>>, vector<8x512xf32>
    %c0_118 = arith.constant 0 : index
    %c0_119 = arith.constant 0 : index
    %328 = vector.load %arg5[%c0_118, %c0_119] : memref<128x512xf32, #tpu.memory_space<vmem>>, vector<128x512xf32>
    %cst_120 = arith.constant dense<0.000000e+00> : vector<8x512xf32>
    %329 = tpu.matmul %322, %328, %cst_120 {dimension_numbers = #tpu.dot_dimension_numbers<[1], [0], [0], [1], [0, 0, 1, 1], [], []>} : vector<8x128xf32>, vector<128x512xf32>, vector<8x512xf32> -> vector<8x512xf32>
    %330 = arith.addf %327, %329 : vector<8x512xf32>
    %331 = vector.extract_strided_slice %330 {offsets = [0, 0], sizes = [8, 128], strides = [1, 1]} : vector<8x512xf32> to vector<8x128xf32>
    %332 = arith.negf %331 : vector<8x128xf32>
    %333 = math.exp %332 : vector<8x128xf32>
    %cst_121 = arith.constant 1.000000e+00 : f32
    %334 = vector.broadcast %cst_121 : f32 to vector<8x128xf32>
    %335 = arith.addf %334, %333 : vector<8x128xf32>
    %336 = arith.divf %334, %335 : vector<8x128xf32>
    %337 = vector.extract_strided_slice %330 {offsets = [0, 128], sizes = [8, 128], strides = [1, 1]} : vector<8x512xf32> to vector<8x128xf32>
    %338 = arith.negf %337 : vector<8x128xf32>
    %339 = math.exp %338 : vector<8x128xf32>
    %cst_122 = arith.constant 1.000000e+00 : f32
    %340 = vector.broadcast %cst_122 : f32 to vector<8x128xf32>
    %341 = arith.addf %340, %339 : vector<8x128xf32>
    %342 = arith.divf %340, %341 : vector<8x128xf32>
    %343 = vector.extract_strided_slice %330 {offsets = [0, 256], sizes = [8, 128], strides = [1, 1]} : vector<8x512xf32> to vector<8x128xf32>
    %344 = math.tanh %343 : vector<8x128xf32>
    %345 = vector.extract_strided_slice %330 {offsets = [0, 384], sizes = [8, 128], strides = [1, 1]} : vector<8x512xf32> to vector<8x128xf32>
    %346 = arith.negf %345 : vector<8x128xf32>
    %347 = math.exp %346 : vector<8x128xf32>
    %cst_123 = arith.constant 1.000000e+00 : f32
    %348 = vector.broadcast %cst_123 : f32 to vector<8x128xf32>
    %349 = arith.addf %348, %347 : vector<8x128xf32>
    %350 = arith.divf %348, %349 : vector<8x128xf32>
    %351 = arith.mulf %342, %320 : vector<8x128xf32>
    %352 = arith.mulf %336, %344 : vector<8x128xf32>
    %353 = arith.addf %351, %352 : vector<8x128xf32>
    %354 = math.tanh %353 : vector<8x128xf32>
    %355 = arith.mulf %350, %354 : vector<8x128xf32>
    %356 = arith.index_cast %325 : i32 to index
    %c0_124 = arith.constant 0 : index
    %357 = vector.load %arg20[%356, %c0_124] : memref<64x128xf32, #tpu.memory_space<vmem>>, vector<8x128xf32>
    tpu.vector_store %arg20[%356, %c0_124], %355 {strides = array<i32>} : memref<64x128xf32, #tpu.memory_space<vmem>>, vector<8x128xf32>,
    %c2_i32_125 = arith.constant 2 : i32
    %c8_i32_126 = arith.constant 8 : i32
    %358 = arith.muli %c2_i32_125, %c8_i32_126 : i32
    %359 = arith.index_cast %358 : i32 to index
    %c0_127 = arith.constant 0 : index
    %360 = vector.load %arg19[%359, %c0_127] : memref<64x512xf32, #tpu.memory_space<vmem>>, vector<8x512xf32>
    %c0_128 = arith.constant 0 : index
    %c0_129 = arith.constant 0 : index
    %361 = vector.load %arg5[%c0_128, %c0_129] : memref<128x512xf32, #tpu.memory_space<vmem>>, vector<128x512xf32>
    %cst_130 = arith.constant dense<0.000000e+00> : vector<8x512xf32>
    %362 = tpu.matmul %355, %361, %cst_130 {dimension_numbers = #tpu.dot_dimension_numbers<[1], [0], [0], [1], [0, 0, 1, 1], [], []>} : vector<8x128xf32>, vector<128x512xf32>, vector<8x512xf32> -> vector<8x512xf32>
    %363 = arith.addf %360, %362 : vector<8x512xf32>
    %364 = vector.extract_strided_slice %363 {offsets = [0, 0], sizes = [8, 128], strides = [1, 1]} : vector<8x512xf32> to vector<8x128xf32>
    %365 = arith.negf %364 : vector<8x128xf32>
    %366 = math.exp %365 : vector<8x128xf32>
    %cst_131 = arith.constant 1.000000e+00 : f32
    %367 = vector.broadcast %cst_131 : f32 to vector<8x128xf32>
    %368 = arith.addf %367, %366 : vector<8x128xf32>
    %369 = arith.divf %367, %368 : vector<8x128xf32>
    %370 = vector.extract_strided_slice %363 {offsets = [0, 128], sizes = [8, 128], strides = [1, 1]} : vector<8x512xf32> to vector<8x128xf32>
    %371 = arith.negf %370 : vector<8x128xf32>
    %372 = math.exp %371 : vector<8x128xf32>
    %cst_132 = arith.constant 1.000000e+00 : f32
    %373 = vector.broadcast %cst_132 : f32 to vector<8x128xf32>
    %374 = arith.addf %373, %372 : vector<8x128xf32>
    %375 = arith.divf %373, %374 : vector<8x128xf32>
    %376 = vector.extract_strided_slice %363 {offsets = [0, 256], sizes = [8, 128], strides = [1, 1]} : vector<8x512xf32> to vector<8x128xf32>
    %377 = math.tanh %376 : vector<8x128xf32>
    %378 = vector.extract_strided_slice %363 {offsets = [0, 384], sizes = [8, 128], strides = [1, 1]} : vector<8x512xf32> to vector<8x128xf32>
    %379 = arith.negf %378 : vector<8x128xf32>
    %380 = math.exp %379 : vector<8x128xf32>
    %cst_133 = arith.constant 1.000000e+00 : f32
    %381 = vector.broadcast %cst_133 : f32 to vector<8x128xf32>
    %382 = arith.addf %381, %380 : vector<8x128xf32>
    %383 = arith.divf %381, %382 : vector<8x128xf32>
    %384 = arith.mulf %375, %353 : vector<8x128xf32>
    %385 = arith.mulf %369, %377 : vector<8x128xf32>
    %386 = arith.addf %384, %385 : vector<8x128xf32>
    %387 = math.tanh %386 : vector<8x128xf32>
    %388 = arith.mulf %383, %387 : vector<8x128xf32>
    %389 = arith.index_cast %358 : i32 to index
    %c0_134 = arith.constant 0 : index
    %390 = vector.load %arg20[%389, %c0_134] : memref<64x128xf32, #tpu.memory_space<vmem>>, vector<8x128xf32>
    tpu.vector_store %arg20[%389, %c0_134], %388 {strides = array<i32>} : memref<64x128xf32, #tpu.memory_space<vmem>>, vector<8x128xf32>,
    %c3_i32_135 = arith.constant 3 : i32
    %c8_i32_136 = arith.constant 8 : i32
    %391 = arith.muli %c3_i32_135, %c8_i32_136 : i32
    %392 = arith.index_cast %391 : i32 to index
    %c0_137 = arith.constant 0 : index
    %393 = vector.load %arg19[%392, %c0_137] : memref<64x512xf32, #tpu.memory_space<vmem>>, vector<8x512xf32>
    %c0_138 = arith.constant 0 : index
    %c0_139 = arith.constant 0 : index
    %394 = vector.load %arg5[%c0_138, %c0_139] : memref<128x512xf32, #tpu.memory_space<vmem>>, vector<128x512xf32>
    %cst_140 = arith.constant dense<0.000000e+00> : vector<8x512xf32>
    %395 = tpu.matmul %388, %394, %cst_140 {dimension_numbers = #tpu.dot_dimension_numbers<[1], [0], [0], [1], [0, 0, 1, 1], [], []>} : vector<8x128xf32>, vector<128x512xf32>, vector<8x512xf32> -> vector<8x512xf32>
    %396 = arith.addf %393, %395 : vector<8x512xf32>
    %397 = vector.extract_strided_slice %396 {offsets = [0, 0], sizes = [8, 128], strides = [1, 1]} : vector<8x512xf32> to vector<8x128xf32>
    %398 = arith.negf %397 : vector<8x128xf32>
    %399 = math.exp %398 : vector<8x128xf32>
    %cst_141 = arith.constant 1.000000e+00 : f32
    %400 = vector.broadcast %cst_141 : f32 to vector<8x128xf32>
    %401 = arith.addf %400, %399 : vector<8x128xf32>
    %402 = arith.divf %400, %401 : vector<8x128xf32>
    %403 = vector.extract_strided_slice %396 {offsets = [0, 128], sizes = [8, 128], strides = [1, 1]} : vector<8x512xf32> to vector<8x128xf32>
    %404 = arith.negf %403 : vector<8x128xf32>
    %405 = math.exp %404 : vector<8x128xf32>
    %cst_142 = arith.constant 1.000000e+00 : f32
    %406 = vector.broadcast %cst_142 : f32 to vector<8x128xf32>
    %407 = arith.addf %406, %405 : vector<8x128xf32>
    %408 = arith.divf %406, %407 : vector<8x128xf32>
    %409 = vector.extract_strided_slice %396 {offsets = [0, 256], sizes = [8, 128], strides = [1, 1]} : vector<8x512xf32> to vector<8x128xf32>
    %410 = math.tanh %409 : vector<8x128xf32>
    %411 = vector.extract_strided_slice %396 {offsets = [0, 384], sizes = [8, 128], strides = [1, 1]} : vector<8x512xf32> to vector<8x128xf32>
    %412 = arith.negf %411 : vector<8x128xf32>
    %413 = math.exp %412 : vector<8x128xf32>
    %cst_143 = arith.constant 1.000000e+00 : f32
    %414 = vector.broadcast %cst_143 : f32 to vector<8x128xf32>
    %415 = arith.addf %414, %413 : vector<8x128xf32>
    %416 = arith.divf %414, %415 : vector<8x128xf32>
    %417 = arith.mulf %408, %386 : vector<8x128xf32>
    %418 = arith.mulf %402, %410 : vector<8x128xf32>
    %419 = arith.addf %417, %418 : vector<8x128xf32>
    %420 = math.tanh %419 : vector<8x128xf32>
    %421 = arith.mulf %416, %420 : vector<8x128xf32>
    %422 = arith.index_cast %391 : i32 to index
    %c0_144 = arith.constant 0 : index
    %423 = vector.load %arg20[%422, %c0_144] : memref<64x128xf32, #tpu.memory_space<vmem>>, vector<8x128xf32>
    tpu.vector_store %arg20[%422, %c0_144], %421 {strides = array<i32>} : memref<64x128xf32, #tpu.memory_space<vmem>>, vector<8x128xf32>,
    %c4_i32_145 = arith.constant 4 : i32
    %c8_i32_146 = arith.constant 8 : i32
    %424 = arith.muli %c4_i32_145, %c8_i32_146 : i32
    %425 = arith.index_cast %424 : i32 to index
    %c0_147 = arith.constant 0 : index
    %426 = vector.load %arg19[%425, %c0_147] : memref<64x512xf32, #tpu.memory_space<vmem>>, vector<8x512xf32>
    %c0_148 = arith.constant 0 : index
    %c0_149 = arith.constant 0 : index
    %427 = vector.load %arg5[%c0_148, %c0_149] : memref<128x512xf32, #tpu.memory_space<vmem>>, vector<128x512xf32>
    %cst_150 = arith.constant dense<0.000000e+00> : vector<8x512xf32>
    %428 = tpu.matmul %421, %427, %cst_150 {dimension_numbers = #tpu.dot_dimension_numbers<[1], [0], [0], [1], [0, 0, 1, 1], [], []>} : vector<8x128xf32>, vector<128x512xf32>, vector<8x512xf32> -> vector<8x512xf32>
    %429 = arith.addf %426, %428 : vector<8x512xf32>
    %430 = vector.extract_strided_slice %429 {offsets = [0, 0], sizes = [8, 128], strides = [1, 1]} : vector<8x512xf32> to vector<8x128xf32>
    %431 = arith.negf %430 : vector<8x128xf32>
    %432 = math.exp %431 : vector<8x128xf32>
    %cst_151 = arith.constant 1.000000e+00 : f32
    %433 = vector.broadcast %cst_151 : f32 to vector<8x128xf32>
    %434 = arith.addf %433, %432 : vector<8x128xf32>
    %435 = arith.divf %433, %434 : vector<8x128xf32>
    %436 = vector.extract_strided_slice %429 {offsets = [0, 128], sizes = [8, 128], strides = [1, 1]} : vector<8x512xf32> to vector<8x128xf32>
    %437 = arith.negf %436 : vector<8x128xf32>
    %438 = math.exp %437 : vector<8x128xf32>
    %cst_152 = arith.constant 1.000000e+00 : f32
    %439 = vector.broadcast %cst_152 : f32 to vector<8x128xf32>
    %440 = arith.addf %439, %438 : vector<8x128xf32>
    %441 = arith.divf %439, %440 : vector<8x128xf32>
    %442 = vector.extract_strided_slice %429 {offsets = [0, 256], sizes = [8, 128], strides = [1, 1]} : vector<8x512xf32> to vector<8x128xf32>
    %443 = math.tanh %442 : vector<8x128xf32>
    %444 = vector.extract_strided_slice %429 {offsets = [0, 384], sizes = [8, 128], strides = [1, 1]} : vector<8x512xf32> to vector<8x128xf32>
    %445 = arith.negf %444 : vector<8x128xf32>
    %446 = math.exp %445 : vector<8x128xf32>
    %cst_153 = arith.constant 1.000000e+00 : f32
    %447 = vector.broadcast %cst_153 : f32 to vector<8x128xf32>
    %448 = arith.addf %447, %446 : vector<8x128xf32>
    %449 = arith.divf %447, %448 : vector<8x128xf32>
    %450 = arith.mulf %441, %419 : vector<8x128xf32>
    %451 = arith.mulf %435, %443 : vector<8x128xf32>
    %452 = arith.addf %450, %451 : vector<8x128xf32>
    %453 = math.tanh %452 : vector<8x128xf32>
    %454 = arith.mulf %449, %453 : vector<8x128xf32>
    %455 = arith.index_cast %424 : i32 to index
    %c0_154 = arith.constant 0 : index
    %456 = vector.load %arg20[%455, %c0_154] : memref<64x128xf32, #tpu.memory_space<vmem>>, vector<8x128xf32>
    tpu.vector_store %arg20[%455, %c0_154], %454 {strides = array<i32>} : memref<64x128xf32, #tpu.memory_space<vmem>>, vector<8x128xf32>,
    %c5_i32_155 = arith.constant 5 : i32
    %c8_i32_156 = arith.constant 8 : i32
    %457 = arith.muli %c5_i32_155, %c8_i32_156 : i32
    %458 = arith.index_cast %457 : i32 to index
    %c0_157 = arith.constant 0 : index
    %459 = vector.load %arg19[%458, %c0_157] : memref<64x512xf32, #tpu.memory_space<vmem>>, vector<8x512xf32>
    %c0_158 = arith.constant 0 : index
    %c0_159 = arith.constant 0 : index
    %460 = vector.load %arg5[%c0_158, %c0_159] : memref<128x512xf32, #tpu.memory_space<vmem>>, vector<128x512xf32>
    %cst_160 = arith.constant dense<0.000000e+00> : vector<8x512xf32>
    %461 = tpu.matmul %454, %460, %cst_160 {dimension_numbers = #tpu.dot_dimension_numbers<[1], [0], [0], [1], [0, 0, 1, 1], [], []>} : vector<8x128xf32>, vector<128x512xf32>, vector<8x512xf32> -> vector<8x512xf32>
    %462 = arith.addf %459, %461 : vector<8x512xf32>
    %463 = vector.extract_strided_slice %462 {offsets = [0, 0], sizes = [8, 128], strides = [1, 1]} : vector<8x512xf32> to vector<8x128xf32>
    %464 = arith.negf %463 : vector<8x128xf32>
    %465 = math.exp %464 : vector<8x128xf32>
    %cst_161 = arith.constant 1.000000e+00 : f32
    %466 = vector.broadcast %cst_161 : f32 to vector<8x128xf32>
    %467 = arith.addf %466, %465 : vector<8x128xf32>
    %468 = arith.divf %466, %467 : vector<8x128xf32>
    %469 = vector.extract_strided_slice %462 {offsets = [0, 128], sizes = [8, 128], strides = [1, 1]} : vector<8x512xf32> to vector<8x128xf32>
    %470 = arith.negf %469 : vector<8x128xf32>
    %471 = math.exp %470 : vector<8x128xf32>
    %cst_162 = arith.constant 1.000000e+00 : f32
    %472 = vector.broadcast %cst_162 : f32 to vector<8x128xf32>
    %473 = arith.addf %472, %471 : vector<8x128xf32>
    %474 = arith.divf %472, %473 : vector<8x128xf32>
    %475 = vector.extract_strided_slice %462 {offsets = [0, 256], sizes = [8, 128], strides = [1, 1]} : vector<8x512xf32> to vector<8x128xf32>
    %476 = math.tanh %475 : vector<8x128xf32>
    %477 = vector.extract_strided_slice %462 {offsets = [0, 384], sizes = [8, 128], strides = [1, 1]} : vector<8x512xf32> to vector<8x128xf32>
    %478 = arith.negf %477 : vector<8x128xf32>
    %479 = math.exp %478 : vector<8x128xf32>
    %cst_163 = arith.constant 1.000000e+00 : f32
    %480 = vector.broadcast %cst_163 : f32 to vector<8x128xf32>
    %481 = arith.addf %480, %479 : vector<8x128xf32>
    %482 = arith.divf %480, %481 : vector<8x128xf32>
    %483 = arith.mulf %474, %452 : vector<8x128xf32>
    %484 = arith.mulf %468, %476 : vector<8x128xf32>
    %485 = arith.addf %483, %484 : vector<8x128xf32>
    %486 = math.tanh %485 : vector<8x128xf32>
    %487 = arith.mulf %482, %486 : vector<8x128xf32>
    %488 = arith.index_cast %457 : i32 to index
    %c0_164 = arith.constant 0 : index
    %489 = vector.load %arg20[%488, %c0_164] : memref<64x128xf32, #tpu.memory_space<vmem>>, vector<8x128xf32>
    tpu.vector_store %arg20[%488, %c0_164], %487 {strides = array<i32>} : memref<64x128xf32, #tpu.memory_space<vmem>>, vector<8x128xf32>,
    %c6_i32_165 = arith.constant 6 : i32
    %c8_i32_166 = arith.constant 8 : i32
    %490 = arith.muli %c6_i32_165, %c8_i32_166 : i32
    %491 = arith.index_cast %490 : i32 to index
    %c0_167 = arith.constant 0 : index
    %492 = vector.load %arg19[%491, %c0_167] : memref<64x512xf32, #tpu.memory_space<vmem>>, vector<8x512xf32>
    %c0_168 = arith.constant 0 : index
    %c0_169 = arith.constant 0 : index
    %493 = vector.load %arg5[%c0_168, %c0_169] : memref<128x512xf32, #tpu.memory_space<vmem>>, vector<128x512xf32>
    %cst_170 = arith.constant dense<0.000000e+00> : vector<8x512xf32>
    %494 = tpu.matmul %487, %493, %cst_170 {dimension_numbers = #tpu.dot_dimension_numbers<[1], [0], [0], [1], [0, 0, 1, 1], [], []>} : vector<8x128xf32>, vector<128x512xf32>, vector<8x512xf32> -> vector<8x512xf32>
    %495 = arith.addf %492, %494 : vector<8x512xf32>
    %496 = vector.extract_strided_slice %495 {offsets = [0, 0], sizes = [8, 128], strides = [1, 1]} : vector<8x512xf32> to vector<8x128xf32>
    %497 = arith.negf %496 : vector<8x128xf32>
    %498 = math.exp %497 : vector<8x128xf32>
    %cst_171 = arith.constant 1.000000e+00 : f32
    %499 = vector.broadcast %cst_171 : f32 to vector<8x128xf32>
    %500 = arith.addf %499, %498 : vector<8x128xf32>
    %501 = arith.divf %499, %500 : vector<8x128xf32>
    %502 = vector.extract_strided_slice %495 {offsets = [0, 128], sizes = [8, 128], strides = [1, 1]} : vector<8x512xf32> to vector<8x128xf32>
    %503 = arith.negf %502 : vector<8x128xf32>
    %504 = math.exp %503 : vector<8x128xf32>
    %cst_172 = arith.constant 1.000000e+00 : f32
    %505 = vector.broadcast %cst_172 : f32 to vector<8x128xf32>
    %506 = arith.addf %505, %504 : vector<8x128xf32>
    %507 = arith.divf %505, %506 : vector<8x128xf32>
    %508 = vector.extract_strided_slice %495 {offsets = [0, 256], sizes = [8, 128], strides = [1, 1]} : vector<8x512xf32> to vector<8x128xf32>
    %509 = math.tanh %508 : vector<8x128xf32>
    %510 = vector.extract_strided_slice %495 {offsets = [0, 384], sizes = [8, 128], strides = [1, 1]} : vector<8x512xf32> to vector<8x128xf32>
    %511 = arith.negf %510 : vector<8x128xf32>
    %512 = math.exp %511 : vector<8x128xf32>
    %cst_173 = arith.constant 1.000000e+00 : f32
    %513 = vector.broadcast %cst_173 : f32 to vector<8x128xf32>
    %514 = arith.addf %513, %512 : vector<8x128xf32>
    %515 = arith.divf %513, %514 : vector<8x128xf32>
    %516 = arith.mulf %507, %485 : vector<8x128xf32>
    %517 = arith.mulf %501, %509 : vector<8x128xf32>
    %518 = arith.addf %516, %517 : vector<8x128xf32>
    %519 = math.tanh %518 : vector<8x128xf32>
    %520 = arith.mulf %515, %519 : vector<8x128xf32>
    %521 = arith.index_cast %490 : i32 to index
    %c0_174 = arith.constant 0 : index
    %522 = vector.load %arg20[%521, %c0_174] : memref<64x128xf32, #tpu.memory_space<vmem>>, vector<8x128xf32>
    tpu.vector_store %arg20[%521, %c0_174], %520 {strides = array<i32>} : memref<64x128xf32, #tpu.memory_space<vmem>>, vector<8x128xf32>,
    %c7_i32_175 = arith.constant 7 : i32
    %c8_i32_176 = arith.constant 8 : i32
    %523 = arith.muli %c7_i32_175, %c8_i32_176 : i32
    %524 = arith.index_cast %523 : i32 to index
    %c0_177 = arith.constant 0 : index
    %525 = vector.load %arg19[%524, %c0_177] : memref<64x512xf32, #tpu.memory_space<vmem>>, vector<8x512xf32>
    %c0_178 = arith.constant 0 : index
    %c0_179 = arith.constant 0 : index
    %526 = vector.load %arg5[%c0_178, %c0_179] : memref<128x512xf32, #tpu.memory_space<vmem>>, vector<128x512xf32>
    %cst_180 = arith.constant dense<0.000000e+00> : vector<8x512xf32>
    %527 = tpu.matmul %520, %526, %cst_180 {dimension_numbers = #tpu.dot_dimension_numbers<[1], [0], [0], [1], [0, 0, 1, 1], [], []>} : vector<8x128xf32>, vector<128x512xf32>, vector<8x512xf32> -> vector<8x512xf32>
    %528 = arith.addf %525, %527 : vector<8x512xf32>
    %529 = vector.extract_strided_slice %528 {offsets = [0, 0], sizes = [8, 128], strides = [1, 1]} : vector<8x512xf32> to vector<8x128xf32>
    %530 = arith.negf %529 : vector<8x128xf32>
    %531 = math.exp %530 : vector<8x128xf32>
    %cst_181 = arith.constant 1.000000e+00 : f32
    %532 = vector.broadcast %cst_181 : f32 to vector<8x128xf32>
    %533 = arith.addf %532, %531 : vector<8x128xf32>
    %534 = arith.divf %532, %533 : vector<8x128xf32>
    %535 = vector.extract_strided_slice %528 {offsets = [0, 128], sizes = [8, 128], strides = [1, 1]} : vector<8x512xf32> to vector<8x128xf32>
    %536 = arith.negf %535 : vector<8x128xf32>
    %537 = math.exp %536 : vector<8x128xf32>
    %cst_182 = arith.constant 1.000000e+00 : f32
    %538 = vector.broadcast %cst_182 : f32 to vector<8x128xf32>
    %539 = arith.addf %538, %537 : vector<8x128xf32>
    %540 = arith.divf %538, %539 : vector<8x128xf32>
    %541 = vector.extract_strided_slice %528 {offsets = [0, 256], sizes = [8, 128], strides = [1, 1]} : vector<8x512xf32> to vector<8x128xf32>
    %542 = math.tanh %541 : vector<8x128xf32>
    %543 = vector.extract_strided_slice %528 {offsets = [0, 384], sizes = [8, 128], strides = [1, 1]} : vector<8x512xf32> to vector<8x128xf32>
    %544 = arith.negf %543 : vector<8x128xf32>
    %545 = math.exp %544 : vector<8x128xf32>
    %cst_183 = arith.constant 1.000000e+00 : f32
    %546 = vector.broadcast %cst_183 : f32 to vector<8x128xf32>
    %547 = arith.addf %546, %545 : vector<8x128xf32>
    %548 = arith.divf %546, %547 : vector<8x128xf32>
    %549 = arith.mulf %540, %518 : vector<8x128xf32>
    %550 = arith.mulf %534, %542 : vector<8x128xf32>
    %551 = arith.addf %549, %550 : vector<8x128xf32>
    %552 = math.tanh %551 : vector<8x128xf32>
    %553 = arith.mulf %548, %552 : vector<8x128xf32>
    %554 = arith.index_cast %523 : i32 to index
    %c0_184 = arith.constant 0 : index
    %555 = vector.load %arg20[%554, %c0_184] : memref<64x128xf32, #tpu.memory_space<vmem>>, vector<8x128xf32>
    tpu.vector_store %arg20[%554, %c0_184], %553 {strides = array<i32>} : memref<64x128xf32, #tpu.memory_space<vmem>>, vector<8x128xf32>,
    %c8_i32_185 = arith.constant 8 : i32
    %c1_186 = arith.constant 1 : index
    %c0_187 = arith.constant 0 : index
    %c0_188 = arith.constant 0 : index
    %556 = vector.load %arg17[%c1_186, %c0_187, %c0_188] : memref<3x8x128xf32, #tpu.memory_space<vmem>>, vector<1x8x128xf32>
    %557 = vector.shape_cast %556 : vector<1x8x128xf32> to vector<8x128xf32>
    %558 = vector.shape_cast %553 : vector<8x128xf32> to vector<1x8x128xf32>
    tpu.vector_store %arg17[%c1_186, %c0_187, %c0_188], %558 {strides = array<i32>} : memref<3x8x128xf32, #tpu.memory_space<vmem>>, vector<1x8x128xf32>,
    %c1_189 = arith.constant 1 : index
    %c0_190 = arith.constant 0 : index
    %c0_191 = arith.constant 0 : index
    %559 = vector.load %arg18[%c1_189, %c0_190, %c0_191] : memref<3x8x128xf32, #tpu.memory_space<vmem>>, vector<1x8x128xf32>
    %560 = vector.shape_cast %559 : vector<1x8x128xf32> to vector<8x128xf32>
    %561 = vector.shape_cast %551 : vector<8x128xf32> to vector<1x8x128xf32>
    tpu.vector_store %arg18[%c1_189, %c0_190, %c0_191], %561 {strides = array<i32>} : memref<3x8x128xf32, #tpu.memory_space<vmem>>, vector<1x8x128xf32>,
    %c0_192 = arith.constant 0 : index
    %c0_193 = arith.constant 0 : index
    %562 = vector.load %arg20[%c0_192, %c0_193] : memref<64x128xf32, #tpu.memory_space<vmem>>, vector<64x128xf32>
    %c0_194 = arith.constant 0 : index
    %c0_195 = arith.constant 0 : index
    %563 = vector.load %arg7[%c0_194, %c0_195] : memref<128x512xf32, #tpu.memory_space<vmem>>, vector<128x512xf32>
    %cst_196 = arith.constant dense<0.000000e+00> : vector<64x512xf32>
    %564 = tpu.matmul %562, %563, %cst_196 {dimension_numbers = #tpu.dot_dimension_numbers<[1], [0], [0], [1], [0, 0, 1, 1], [], []>} : vector<64x128xf32>, vector<128x512xf32>, vector<64x512xf32> -> vector<64x512xf32>
    %c0_197 = arith.constant 0 : index
    %c0_198 = arith.constant 0 : index
    %565 = vector.load %arg9[%c0_197, %c0_198] : memref<1x512xf32, #tpu.memory_space<vmem>>, vector<1x512xf32>
    %566 = vector.broadcast %565 : vector<1x512xf32> to vector<64x512xf32>
    %567 = arith.addf %564, %566 : vector<64x512xf32>
    %c0_199 = arith.constant 0 : index
    %c0_200 = arith.constant 0 : index
    %568 = vector.load %arg19[%c0_199, %c0_200] : memref<64x512xf32, #tpu.memory_space<vmem>>, vector<64x512xf32>
    tpu.vector_store %arg19[%c0_199, %c0_200], %567 {strides = array<i32>} : memref<64x512xf32, #tpu.memory_space<vmem>>, vector<64x512xf32>,
    %c2 = arith.constant 2 : index
    %c0_201 = arith.constant 0 : index
    %c0_202 = arith.constant 0 : index
    %569 = vector.load %arg10[%c2, %c0_201, %c0_202] : memref<3x8x128xf32, #tpu.memory_space<vmem>>, vector<1x8x128xf32>
    %570 = vector.shape_cast %569 : vector<1x8x128xf32> to vector<8x128xf32>
    %c2_203 = arith.constant 2 : index
    %c0_204 = arith.constant 0 : index
    %c0_205 = arith.constant 0 : index
    %571 = vector.load %arg11[%c2_203, %c0_204, %c0_205] : memref<3x8x128xf32, #tpu.memory_space<vmem>>, vector<1x8x128xf32>
    %572 = vector.shape_cast %571 : vector<1x8x128xf32> to vector<8x128xf32>
    %c0_i32_206 = arith.constant 0 : i32
    %c8_i32_207 = arith.constant 8 : i32
    %573 = arith.muli %c0_i32_206, %c8_i32_207 : i32
    %574 = arith.index_cast %573 : i32 to index
    %c0_208 = arith.constant 0 : index
    %575 = vector.load %arg19[%574, %c0_208] : memref<64x512xf32, #tpu.memory_space<vmem>>, vector<8x512xf32>
    %c0_209 = arith.constant 0 : index
    %c0_210 = arith.constant 0 : index
    %576 = vector.load %arg8[%c0_209, %c0_210] : memref<128x512xf32, #tpu.memory_space<vmem>>, vector<128x512xf32>
    %cst_211 = arith.constant dense<0.000000e+00> : vector<8x512xf32>
    %577 = tpu.matmul %570, %576, %cst_211 {dimension_numbers = #tpu.dot_dimension_numbers<[1], [0], [0], [1], [0, 0, 1, 1], [], []>} : vector<8x128xf32>, vector<128x512xf32>, vector<8x512xf32> -> vector<8x512xf32>
    %578 = arith.addf %575, %577 : vector<8x512xf32>
    %579 = vector.extract_strided_slice %578 {offsets = [0, 0], sizes = [8, 128], strides = [1, 1]} : vector<8x512xf32> to vector<8x128xf32>
    %580 = arith.negf %579 : vector<8x128xf32>
    %581 = math.exp %580 : vector<8x128xf32>
    %cst_212 = arith.constant 1.000000e+00 : f32
    %582 = vector.broadcast %cst_212 : f32 to vector<8x128xf32>
    %583 = arith.addf %582, %581 : vector<8x128xf32>
    %584 = arith.divf %582, %583 : vector<8x128xf32>
    %585 = vector.extract_strided_slice %578 {offsets = [0, 128], sizes = [8, 128], strides = [1, 1]} : vector<8x512xf32> to vector<8x128xf32>
    %586 = arith.negf %585 : vector<8x128xf32>
    %587 = math.exp %586 : vector<8x128xf32>
    %cst_213 = arith.constant 1.000000e+00 : f32
    %588 = vector.broadcast %cst_213 : f32 to vector<8x128xf32>
    %589 = arith.addf %588, %587 : vector<8x128xf32>
    %590 = arith.divf %588, %589 : vector<8x128xf32>
    %591 = vector.extract_strided_slice %578 {offsets = [0, 256], sizes = [8, 128], strides = [1, 1]} : vector<8x512xf32> to vector<8x128xf32>
    %592 = math.tanh %591 : vector<8x128xf32>
    %593 = vector.extract_strided_slice %578 {offsets = [0, 384], sizes = [8, 128], strides = [1, 1]} : vector<8x512xf32> to vector<8x128xf32>
    %594 = arith.negf %593 : vector<8x128xf32>
    %595 = math.exp %594 : vector<8x128xf32>
    %cst_214 = arith.constant 1.000000e+00 : f32
    %596 = vector.broadcast %cst_214 : f32 to vector<8x128xf32>
    %597 = arith.addf %596, %595 : vector<8x128xf32>
    %598 = arith.divf %596, %597 : vector<8x128xf32>
    %599 = arith.mulf %590, %572 : vector<8x128xf32>
    %600 = arith.mulf %584, %592 : vector<8x128xf32>
    %601 = arith.addf %599, %600 : vector<8x128xf32>
    %602 = math.tanh %601 : vector<8x128xf32>
    %603 = arith.mulf %598, %602 : vector<8x128xf32>
    %c1_i32_215 = arith.constant 1 : i32
    %c8_i32_216 = arith.constant 8 : i32
    %604 = arith.muli %c1_i32_215, %c8_i32_216 : i32
    %605 = arith.index_cast %604 : i32 to index
    %c0_217 = arith.constant 0 : index
    %606 = vector.load %arg19[%605, %c0_217] : memref<64x512xf32, #tpu.memory_space<vmem>>, vector<8x512xf32>
    %c0_218 = arith.constant 0 : index
    %c0_219 = arith.constant 0 : index
    %607 = vector.load %arg8[%c0_218, %c0_219] : memref<128x512xf32, #tpu.memory_space<vmem>>, vector<128x512xf32>
    %cst_220 = arith.constant dense<0.000000e+00> : vector<8x512xf32>
    %608 = tpu.matmul %603, %607, %cst_220 {dimension_numbers = #tpu.dot_dimension_numbers<[1], [0], [0], [1], [0, 0, 1, 1], [], []>} : vector<8x128xf32>, vector<128x512xf32>, vector<8x512xf32> -> vector<8x512xf32>
    %609 = arith.addf %606, %608 : vector<8x512xf32>
    %610 = vector.extract_strided_slice %609 {offsets = [0, 0], sizes = [8, 128], strides = [1, 1]} : vector<8x512xf32> to vector<8x128xf32>
    %611 = arith.negf %610 : vector<8x128xf32>
    %612 = math.exp %611 : vector<8x128xf32>
    %cst_221 = arith.constant 1.000000e+00 : f32
    %613 = vector.broadcast %cst_221 : f32 to vector<8x128xf32>
    %614 = arith.addf %613, %612 : vector<8x128xf32>
    %615 = arith.divf %613, %614 : vector<8x128xf32>
    %616 = vector.extract_strided_slice %609 {offsets = [0, 128], sizes = [8, 128], strides = [1, 1]} : vector<8x512xf32> to vector<8x128xf32>
    %617 = arith.negf %616 : vector<8x128xf32>
    %618 = math.exp %617 : vector<8x128xf32>
    %cst_222 = arith.constant 1.000000e+00 : f32
    %619 = vector.broadcast %cst_222 : f32 to vector<8x128xf32>
    %620 = arith.addf %619, %618 : vector<8x128xf32>
    %621 = arith.divf %619, %620 : vector<8x128xf32>
    %622 = vector.extract_strided_slice %609 {offsets = [0, 256], sizes = [8, 128], strides = [1, 1]} : vector<8x512xf32> to vector<8x128xf32>
    %623 = math.tanh %622 : vector<8x128xf32>
    %624 = vector.extract_strided_slice %609 {offsets = [0, 384], sizes = [8, 128], strides = [1, 1]} : vector<8x512xf32> to vector<8x128xf32>
    %625 = arith.negf %624 : vector<8x128xf32>
    %626 = math.exp %625 : vector<8x128xf32>
    %cst_223 = arith.constant 1.000000e+00 : f32
    %627 = vector.broadcast %cst_223 : f32 to vector<8x128xf32>
    %628 = arith.addf %627, %626 : vector<8x128xf32>
    %629 = arith.divf %627, %628 : vector<8x128xf32>
    %630 = arith.mulf %621, %601 : vector<8x128xf32>
    %631 = arith.mulf %615, %623 : vector<8x128xf32>
    %632 = arith.addf %630, %631 : vector<8x128xf32>
    %633 = math.tanh %632 : vector<8x128xf32>
    %634 = arith.mulf %629, %633 : vector<8x128xf32>
    %c2_i32_224 = arith.constant 2 : i32
    %c8_i32_225 = arith.constant 8 : i32
    %635 = arith.muli %c2_i32_224, %c8_i32_225 : i32
    %636 = arith.index_cast %635 : i32 to index
    %c0_226 = arith.constant 0 : index
    %637 = vector.load %arg19[%636, %c0_226] : memref<64x512xf32, #tpu.memory_space<vmem>>, vector<8x512xf32>
    %c0_227 = arith.constant 0 : index
    %c0_228 = arith.constant 0 : index
    %638 = vector.load %arg8[%c0_227, %c0_228] : memref<128x512xf32, #tpu.memory_space<vmem>>, vector<128x512xf32>
    %cst_229 = arith.constant dense<0.000000e+00> : vector<8x512xf32>
    %639 = tpu.matmul %634, %638, %cst_229 {dimension_numbers = #tpu.dot_dimension_numbers<[1], [0], [0], [1], [0, 0, 1, 1], [], []>} : vector<8x128xf32>, vector<128x512xf32>, vector<8x512xf32> -> vector<8x512xf32>
    %640 = arith.addf %637, %639 : vector<8x512xf32>
    %641 = vector.extract_strided_slice %640 {offsets = [0, 0], sizes = [8, 128], strides = [1, 1]} : vector<8x512xf32> to vector<8x128xf32>
    %642 = arith.negf %641 : vector<8x128xf32>
    %643 = math.exp %642 : vector<8x128xf32>
    %cst_230 = arith.constant 1.000000e+00 : f32
    %644 = vector.broadcast %cst_230 : f32 to vector<8x128xf32>
    %645 = arith.addf %644, %643 : vector<8x128xf32>
    %646 = arith.divf %644, %645 : vector<8x128xf32>
    %647 = vector.extract_strided_slice %640 {offsets = [0, 128], sizes = [8, 128], strides = [1, 1]} : vector<8x512xf32> to vector<8x128xf32>
    %648 = arith.negf %647 : vector<8x128xf32>
    %649 = math.exp %648 : vector<8x128xf32>
    %cst_231 = arith.constant 1.000000e+00 : f32
    %650 = vector.broadcast %cst_231 : f32 to vector<8x128xf32>
    %651 = arith.addf %650, %649 : vector<8x128xf32>
    %652 = arith.divf %650, %651 : vector<8x128xf32>
    %653 = vector.extract_strided_slice %640 {offsets = [0, 256], sizes = [8, 128], strides = [1, 1]} : vector<8x512xf32> to vector<8x128xf32>
    %654 = math.tanh %653 : vector<8x128xf32>
    %655 = vector.extract_strided_slice %640 {offsets = [0, 384], sizes = [8, 128], strides = [1, 1]} : vector<8x512xf32> to vector<8x128xf32>
    %656 = arith.negf %655 : vector<8x128xf32>
    %657 = math.exp %656 : vector<8x128xf32>
    %cst_232 = arith.constant 1.000000e+00 : f32
    %658 = vector.broadcast %cst_232 : f32 to vector<8x128xf32>
    %659 = arith.addf %658, %657 : vector<8x128xf32>
    %660 = arith.divf %658, %659 : vector<8x128xf32>
    %661 = arith.mulf %652, %632 : vector<8x128xf32>
    %662 = arith.mulf %646, %654 : vector<8x128xf32>
    %663 = arith.addf %661, %662 : vector<8x128xf32>
    %664 = math.tanh %663 : vector<8x128xf32>
    %665 = arith.mulf %660, %664 : vector<8x128xf32>
    %c3_i32_233 = arith.constant 3 : i32
    %c8_i32_234 = arith.constant 8 : i32
    %666 = arith.muli %c3_i32_233, %c8_i32_234 : i32
    %667 = arith.index_cast %666 : i32 to index
    %c0_235 = arith.constant 0 : index
    %668 = vector.load %arg19[%667, %c0_235] : memref<64x512xf32, #tpu.memory_space<vmem>>, vector<8x512xf32>
    %c0_236 = arith.constant 0 : index
    %c0_237 = arith.constant 0 : index
    %669 = vector.load %arg8[%c0_236, %c0_237] : memref<128x512xf32, #tpu.memory_space<vmem>>, vector<128x512xf32>
    %cst_238 = arith.constant dense<0.000000e+00> : vector<8x512xf32>
    %670 = tpu.matmul %665, %669, %cst_238 {dimension_numbers = #tpu.dot_dimension_numbers<[1], [0], [0], [1], [0, 0, 1, 1], [], []>} : vector<8x128xf32>, vector<128x512xf32>, vector<8x512xf32> -> vector<8x512xf32>
    %671 = arith.addf %668, %670 : vector<8x512xf32>
    %672 = vector.extract_strided_slice %671 {offsets = [0, 0], sizes = [8, 128], strides = [1, 1]} : vector<8x512xf32> to vector<8x128xf32>
    %673 = arith.negf %672 : vector<8x128xf32>
    %674 = math.exp %673 : vector<8x128xf32>
    %cst_239 = arith.constant 1.000000e+00 : f32
    %675 = vector.broadcast %cst_239 : f32 to vector<8x128xf32>
    %676 = arith.addf %675, %674 : vector<8x128xf32>
    %677 = arith.divf %675, %676 : vector<8x128xf32>
    %678 = vector.extract_strided_slice %671 {offsets = [0, 128], sizes = [8, 128], strides = [1, 1]} : vector<8x512xf32> to vector<8x128xf32>
    %679 = arith.negf %678 : vector<8x128xf32>
    %680 = math.exp %679 : vector<8x128xf32>
    %cst_240 = arith.constant 1.000000e+00 : f32
    %681 = vector.broadcast %cst_240 : f32 to vector<8x128xf32>
    %682 = arith.addf %681, %680 : vector<8x128xf32>
    %683 = arith.divf %681, %682 : vector<8x128xf32>
    %684 = vector.extract_strided_slice %671 {offsets = [0, 256], sizes = [8, 128], strides = [1, 1]} : vector<8x512xf32> to vector<8x128xf32>
    %685 = math.tanh %684 : vector<8x128xf32>
    %686 = vector.extract_strided_slice %671 {offsets = [0, 384], sizes = [8, 128], strides = [1, 1]} : vector<8x512xf32> to vector<8x128xf32>
    %687 = arith.negf %686 : vector<8x128xf32>
    %688 = math.exp %687 : vector<8x128xf32>
    %cst_241 = arith.constant 1.000000e+00 : f32
    %689 = vector.broadcast %cst_241 : f32 to vector<8x128xf32>
    %690 = arith.addf %689, %688 : vector<8x128xf32>
    %691 = arith.divf %689, %690 : vector<8x128xf32>
    %692 = arith.mulf %683, %663 : vector<8x128xf32>
    %693 = arith.mulf %677, %685 : vector<8x128xf32>
    %694 = arith.addf %692, %693 : vector<8x128xf32>
    %695 = math.tanh %694 : vector<8x128xf32>
    %696 = arith.mulf %691, %695 : vector<8x128xf32>
    %c4_i32_242 = arith.constant 4 : i32
    %c8_i32_243 = arith.constant 8 : i32
    %697 = arith.muli %c4_i32_242, %c8_i32_243 : i32
    %698 = arith.index_cast %697 : i32 to index
    %c0_244 = arith.constant 0 : index
    %699 = vector.load %arg19[%698, %c0_244] : memref<64x512xf32, #tpu.memory_space<vmem>>, vector<8x512xf32>
    %c0_245 = arith.constant 0 : index
    %c0_246 = arith.constant 0 : index
    %700 = vector.load %arg8[%c0_245, %c0_246] : memref<128x512xf32, #tpu.memory_space<vmem>>, vector<128x512xf32>
    %cst_247 = arith.constant dense<0.000000e+00> : vector<8x512xf32>
    %701 = tpu.matmul %696, %700, %cst_247 {dimension_numbers = #tpu.dot_dimension_numbers<[1], [0], [0], [1], [0, 0, 1, 1], [], []>} : vector<8x128xf32>, vector<128x512xf32>, vector<8x512xf32> -> vector<8x512xf32>
    %702 = arith.addf %699, %701 : vector<8x512xf32>
    %703 = vector.extract_strided_slice %702 {offsets = [0, 0], sizes = [8, 128], strides = [1, 1]} : vector<8x512xf32> to vector<8x128xf32>
    %704 = arith.negf %703 : vector<8x128xf32>
    %705 = math.exp %704 : vector<8x128xf32>
    %cst_248 = arith.constant 1.000000e+00 : f32
    %706 = vector.broadcast %cst_248 : f32 to vector<8x128xf32>
    %707 = arith.addf %706, %705 : vector<8x128xf32>
    %708 = arith.divf %706, %707 : vector<8x128xf32>
    %709 = vector.extract_strided_slice %702 {offsets = [0, 128], sizes = [8, 128], strides = [1, 1]} : vector<8x512xf32> to vector<8x128xf32>
    %710 = arith.negf %709 : vector<8x128xf32>
    %711 = math.exp %710 : vector<8x128xf32>
    %cst_249 = arith.constant 1.000000e+00 : f32
    %712 = vector.broadcast %cst_249 : f32 to vector<8x128xf32>
    %713 = arith.addf %712, %711 : vector<8x128xf32>
    %714 = arith.divf %712, %713 : vector<8x128xf32>
    %715 = vector.extract_strided_slice %702 {offsets = [0, 256], sizes = [8, 128], strides = [1, 1]} : vector<8x512xf32> to vector<8x128xf32>
    %716 = math.tanh %715 : vector<8x128xf32>
    %717 = vector.extract_strided_slice %702 {offsets = [0, 384], sizes = [8, 128], strides = [1, 1]} : vector<8x512xf32> to vector<8x128xf32>
    %718 = arith.negf %717 : vector<8x128xf32>
    %719 = math.exp %718 : vector<8x128xf32>
    %cst_250 = arith.constant 1.000000e+00 : f32
    %720 = vector.broadcast %cst_250 : f32 to vector<8x128xf32>
    %721 = arith.addf %720, %719 : vector<8x128xf32>
    %722 = arith.divf %720, %721 : vector<8x128xf32>
    %723 = arith.mulf %714, %694 : vector<8x128xf32>
    %724 = arith.mulf %708, %716 : vector<8x128xf32>
    %725 = arith.addf %723, %724 : vector<8x128xf32>
    %726 = math.tanh %725 : vector<8x128xf32>
    %727 = arith.mulf %722, %726 : vector<8x128xf32>
    %c5_i32_251 = arith.constant 5 : i32
    %c8_i32_252 = arith.constant 8 : i32
    %728 = arith.muli %c5_i32_251, %c8_i32_252 : i32
    %729 = arith.index_cast %728 : i32 to index
    %c0_253 = arith.constant 0 : index
    %730 = vector.load %arg19[%729, %c0_253] : memref<64x512xf32, #tpu.memory_space<vmem>>, vector<8x512xf32>
    %c0_254 = arith.constant 0 : index
    %c0_255 = arith.constant 0 : index
    %731 = vector.load %arg8[%c0_254, %c0_255] : memref<128x512xf32, #tpu.memory_space<vmem>>, vector<128x512xf32>
    %cst_256 = arith.constant dense<0.000000e+00> : vector<8x512xf32>
    %732 = tpu.matmul %727, %731, %cst_256 {dimension_numbers = #tpu.dot_dimension_numbers<[1], [0], [0], [1], [0, 0, 1, 1], [], []>} : vector<8x128xf32>, vector<128x512xf32>, vector<8x512xf32> -> vector<8x512xf32>
    %733 = arith.addf %730, %732 : vector<8x512xf32>
    %734 = vector.extract_strided_slice %733 {offsets = [0, 0], sizes = [8, 128], strides = [1, 1]} : vector<8x512xf32> to vector<8x128xf32>
    %735 = arith.negf %734 : vector<8x128xf32>
    %736 = math.exp %735 : vector<8x128xf32>
    %cst_257 = arith.constant 1.000000e+00 : f32
    %737 = vector.broadcast %cst_257 : f32 to vector<8x128xf32>
    %738 = arith.addf %737, %736 : vector<8x128xf32>
    %739 = arith.divf %737, %738 : vector<8x128xf32>
    %740 = vector.extract_strided_slice %733 {offsets = [0, 128], sizes = [8, 128], strides = [1, 1]} : vector<8x512xf32> to vector<8x128xf32>
    %741 = arith.negf %740 : vector<8x128xf32>
    %742 = math.exp %741 : vector<8x128xf32>
    %cst_258 = arith.constant 1.000000e+00 : f32
    %743 = vector.broadcast %cst_258 : f32 to vector<8x128xf32>
    %744 = arith.addf %743, %742 : vector<8x128xf32>
    %745 = arith.divf %743, %744 : vector<8x128xf32>
    %746 = vector.extract_strided_slice %733 {offsets = [0, 256], sizes = [8, 128], strides = [1, 1]} : vector<8x512xf32> to vector<8x128xf32>
    %747 = math.tanh %746 : vector<8x128xf32>
    %748 = vector.extract_strided_slice %733 {offsets = [0, 384], sizes = [8, 128], strides = [1, 1]} : vector<8x512xf32> to vector<8x128xf32>
    %749 = arith.negf %748 : vector<8x128xf32>
    %750 = math.exp %749 : vector<8x128xf32>
    %cst_259 = arith.constant 1.000000e+00 : f32
    %751 = vector.broadcast %cst_259 : f32 to vector<8x128xf32>
    %752 = arith.addf %751, %750 : vector<8x128xf32>
    %753 = arith.divf %751, %752 : vector<8x128xf32>
    %754 = arith.mulf %745, %725 : vector<8x128xf32>
    %755 = arith.mulf %739, %747 : vector<8x128xf32>
    %756 = arith.addf %754, %755 : vector<8x128xf32>
    %757 = math.tanh %756 : vector<8x128xf32>
    %758 = arith.mulf %753, %757 : vector<8x128xf32>
    %c6_i32_260 = arith.constant 6 : i32
    %c8_i32_261 = arith.constant 8 : i32
    %759 = arith.muli %c6_i32_260, %c8_i32_261 : i32
    %760 = arith.index_cast %759 : i32 to index
    %c0_262 = arith.constant 0 : index
    %761 = vector.load %arg19[%760, %c0_262] : memref<64x512xf32, #tpu.memory_space<vmem>>, vector<8x512xf32>
    %c0_263 = arith.constant 0 : index
    %c0_264 = arith.constant 0 : index
    %762 = vector.load %arg8[%c0_263, %c0_264] : memref<128x512xf32, #tpu.memory_space<vmem>>, vector<128x512xf32>
    %cst_265 = arith.constant dense<0.000000e+00> : vector<8x512xf32>
    %763 = tpu.matmul %758, %762, %cst_265 {dimension_numbers = #tpu.dot_dimension_numbers<[1], [0], [0], [1], [0, 0, 1, 1], [], []>} : vector<8x128xf32>, vector<128x512xf32>, vector<8x512xf32> -> vector<8x512xf32>
    %764 = arith.addf %761, %763 : vector<8x512xf32>
    %765 = vector.extract_strided_slice %764 {offsets = [0, 0], sizes = [8, 128], strides = [1, 1]} : vector<8x512xf32> to vector<8x128xf32>
    %766 = arith.negf %765 : vector<8x128xf32>
    %767 = math.exp %766 : vector<8x128xf32>
    %cst_266 = arith.constant 1.000000e+00 : f32
    %768 = vector.broadcast %cst_266 : f32 to vector<8x128xf32>
    %769 = arith.addf %768, %767 : vector<8x128xf32>
    %770 = arith.divf %768, %769 : vector<8x128xf32>
    %771 = vector.extract_strided_slice %764 {offsets = [0, 128], sizes = [8, 128], strides = [1, 1]} : vector<8x512xf32> to vector<8x128xf32>
    %772 = arith.negf %771 : vector<8x128xf32>
    %773 = math.exp %772 : vector<8x128xf32>
    %cst_267 = arith.constant 1.000000e+00 : f32
    %774 = vector.broadcast %cst_267 : f32 to vector<8x128xf32>
    %775 = arith.addf %774, %773 : vector<8x128xf32>
    %776 = arith.divf %774, %775 : vector<8x128xf32>
    %777 = vector.extract_strided_slice %764 {offsets = [0, 256], sizes = [8, 128], strides = [1, 1]} : vector<8x512xf32> to vector<8x128xf32>
    %778 = math.tanh %777 : vector<8x128xf32>
    %779 = vector.extract_strided_slice %764 {offsets = [0, 384], sizes = [8, 128], strides = [1, 1]} : vector<8x512xf32> to vector<8x128xf32>
    %780 = arith.negf %779 : vector<8x128xf32>
    %781 = math.exp %780 : vector<8x128xf32>
    %cst_268 = arith.constant 1.000000e+00 : f32
    %782 = vector.broadcast %cst_268 : f32 to vector<8x128xf32>
    %783 = arith.addf %782, %781 : vector<8x128xf32>
    %784 = arith.divf %782, %783 : vector<8x128xf32>
    %785 = arith.mulf %776, %756 : vector<8x128xf32>
    %786 = arith.mulf %770, %778 : vector<8x128xf32>
    %787 = arith.addf %785, %786 : vector<8x128xf32>
    %788 = math.tanh %787 : vector<8x128xf32>
    %789 = arith.mulf %784, %788 : vector<8x128xf32>
    %c7_i32_269 = arith.constant 7 : i32
    %c8_i32_270 = arith.constant 8 : i32
    %790 = arith.muli %c7_i32_269, %c8_i32_270 : i32
    %791 = arith.index_cast %790 : i32 to index
    %c0_271 = arith.constant 0 : index
    %792 = vector.load %arg19[%791, %c0_271] : memref<64x512xf32, #tpu.memory_space<vmem>>, vector<8x512xf32>
    %c0_272 = arith.constant 0 : index
    %c0_273 = arith.constant 0 : index
    %793 = vector.load %arg8[%c0_272, %c0_273] : memref<128x512xf32, #tpu.memory_space<vmem>>, vector<128x512xf32>
    %cst_274 = arith.constant dense<0.000000e+00> : vector<8x512xf32>
    %794 = tpu.matmul %789, %793, %cst_274 {dimension_numbers = #tpu.dot_dimension_numbers<[1], [0], [0], [1], [0, 0, 1, 1], [], []>} : vector<8x128xf32>, vector<128x512xf32>, vector<8x512xf32> -> vector<8x512xf32>
    %795 = arith.addf %792, %794 : vector<8x512xf32>
    %796 = vector.extract_strided_slice %795 {offsets = [0, 0], sizes = [8, 128], strides = [1, 1]} : vector<8x512xf32> to vector<8x128xf32>
    %797 = arith.negf %796 : vector<8x128xf32>
    %798 = math.exp %797 : vector<8x128xf32>
    %cst_275 = arith.constant 1.000000e+00 : f32
    %799 = vector.broadcast %cst_275 : f32 to vector<8x128xf32>
    %800 = arith.addf %799, %798 : vector<8x128xf32>
    %801 = arith.divf %799, %800 : vector<8x128xf32>
    %802 = vector.extract_strided_slice %795 {offsets = [0, 128], sizes = [8, 128], strides = [1, 1]} : vector<8x512xf32> to vector<8x128xf32>
    %803 = arith.negf %802 : vector<8x128xf32>
    %804 = math.exp %803 : vector<8x128xf32>
    %cst_276 = arith.constant 1.000000e+00 : f32
    %805 = vector.broadcast %cst_276 : f32 to vector<8x128xf32>
    %806 = arith.addf %805, %804 : vector<8x128xf32>
    %807 = arith.divf %805, %806 : vector<8x128xf32>
    %808 = vector.extract_strided_slice %795 {offsets = [0, 256], sizes = [8, 128], strides = [1, 1]} : vector<8x512xf32> to vector<8x128xf32>
    %809 = math.tanh %808 : vector<8x128xf32>
    %810 = vector.extract_strided_slice %795 {offsets = [0, 384], sizes = [8, 128], strides = [1, 1]} : vector<8x512xf32> to vector<8x128xf32>
    %811 = arith.negf %810 : vector<8x128xf32>
    %812 = math.exp %811 : vector<8x128xf32>
    %cst_277 = arith.constant 1.000000e+00 : f32
    %813 = vector.broadcast %cst_277 : f32 to vector<8x128xf32>
    %814 = arith.addf %813, %812 : vector<8x128xf32>
    %815 = arith.divf %813, %814 : vector<8x128xf32>
    %816 = arith.mulf %807, %787 : vector<8x128xf32>
    %817 = arith.mulf %801, %809 : vector<8x128xf32>
    %818 = arith.addf %816, %817 : vector<8x128xf32>
    %819 = math.tanh %818 : vector<8x128xf32>
    %820 = arith.mulf %815, %819 : vector<8x128xf32>
    %c8_i32_278 = arith.constant 8 : i32
    %c2_279 = arith.constant 2 : index
    %c0_280 = arith.constant 0 : index
    %c0_281 = arith.constant 0 : index
    %821 = vector.load %arg17[%c2_279, %c0_280, %c0_281] : memref<3x8x128xf32, #tpu.memory_space<vmem>>, vector<1x8x128xf32>
    %822 = vector.shape_cast %821 : vector<1x8x128xf32> to vector<8x128xf32>
    %823 = vector.shape_cast %820 : vector<8x128xf32> to vector<1x8x128xf32>
    tpu.vector_store %arg17[%c2_279, %c0_280, %c0_281], %823 {strides = array<i32>} : memref<3x8x128xf32, #tpu.memory_space<vmem>>, vector<1x8x128xf32>,
    %c2_282 = arith.constant 2 : index
    %c0_283 = arith.constant 0 : index
    %c0_284 = arith.constant 0 : index
    %824 = vector.load %arg18[%c2_282, %c0_283, %c0_284] : memref<3x8x128xf32, #tpu.memory_space<vmem>>, vector<1x8x128xf32>
    %825 = vector.shape_cast %824 : vector<1x8x128xf32> to vector<8x128xf32>
    %826 = vector.shape_cast %818 : vector<8x128xf32> to vector<1x8x128xf32>
    tpu.vector_store %arg18[%c2_282, %c0_283, %c0_284], %826 {strides = array<i32>} : memref<3x8x128xf32, #tpu.memory_space<vmem>>, vector<1x8x128xf32>,
    %c0_285 = arith.constant 0 : index
    %c0_286 = arith.constant 0 : index
    %827 = vector.load %arg12[%c0_285, %c0_286] : memref<128x128xf32, #tpu.memory_space<vmem>>, vector<128x128xf32>
    %cst_287 = arith.constant dense<0.000000e+00> : vector<8x128xf32>
    %828 = tpu.matmul %820, %827, %cst_287 {dimension_numbers = #tpu.dot_dimension_numbers<[1], [0], [0], [1], [0, 0, 1, 1], [], []>} : vector<8x128xf32>, vector<128x128xf32>, vector<8x128xf32> -> vector<8x128xf32>
    %c0_288 = arith.constant 0 : index
    %c0_289 = arith.constant 0 : index
    %829 = vector.load %arg13[%c0_288, %c0_289] : memref<1x128xf32, #tpu.memory_space<vmem>>, vector<1x128xf32>
    %830 = vector.broadcast %829 : vector<1x128xf32> to vector<8x128xf32>
    %831 = arith.addf %828, %830 : vector<8x128xf32>
    %cst_290 = arith.constant 0.000000e+00 : f32
    %832 = vector.broadcast %cst_290 : f32 to vector<8x128xf32>
    %833 = arith.maximumf %831, %832 : vector<8x128xf32>
    %c0_291 = arith.constant 0 : index
    %c0_292 = arith.constant 0 : index
    %834 = vector.load %arg14[%c0_291, %c0_292] : memref<128x128xf32, #tpu.memory_space<vmem>>, vector<128x128xf32>
    %cst_293 = arith.constant dense<0.000000e+00> : vector<8x128xf32>
    %835 = tpu.matmul %833, %834, %cst_293 {dimension_numbers = #tpu.dot_dimension_numbers<[1], [0], [0], [1], [0, 0, 1, 1], [], []>} : vector<8x128xf32>, vector<128x128xf32>, vector<8x128xf32> -> vector<8x128xf32>
    %c0_294 = arith.constant 0 : index
    %c0_295 = arith.constant 0 : index
    %836 = vector.load %arg15[%c0_294, %c0_295] : memref<1x128xf32, #tpu.memory_space<vmem>>, vector<1x128xf32>
    %837 = vector.broadcast %836 : vector<1x128xf32> to vector<8x128xf32>
    %838 = arith.addf %835, %837 : vector<8x128xf32>
    %c0_296 = arith.constant 0 : index
    %c0_297 = arith.constant 0 : index
    %839 = vector.load %arg16[%c0_296, %c0_297] : memref<8x128xf32, #tpu.memory_space<vmem>>, vector<8x128xf32>
    tpu.vector_store %arg16[%c0_296, %c0_297], %838 {strides = array<i32>} : memref<8x128xf32, #tpu.memory_space<vmem>>, vector<8x128xf32>,
    return
  }
}

</mosaic_0001>

<llo_original>
// kernel: tpu_custom_call.1
$region0: #{tpu_custom_call.1}
  #allocation0 [shape = 'u32[]', space=smem, size = 0x4, offset = 0x4, fixed_abs, tag = 'smem constant byte address 0x4 - core index']
  #allocation1 [shape = 'u32[72,128]{1,0:T(1,128)}', space=vmem, size = 0x9000, scoped, tag = 'internal scratch']
  #allocation2 [shape = 'f32[64,512]{1,0:T(8,128)}', space=vmem, size = 0x20000, scoped, tag = 'scratch operand']
  #allocation3 [shape = 'f32[64,128]{1,0:T(8,128)}', space=vmem, size = 0x8000, scoped, tag = 'scratch operand']
  %s0 = inlined_call_operand.hbm [shape: f32[64,384], index: 0, kind: input, shape index: {}]
  %s1 = inlined_call_operand.hbm [shape: f32[384,512], index: 1, kind: input, shape index: {}]
  %s2 = inlined_call_operand.hbm [shape: f32[128,512], index: 2, kind: input, shape index: {}]
  %s3 = inlined_call_operand.hbm [shape: f32[1,512], index: 3, kind: input, shape index: {}]
  %s4 = inlined_call_operand.hbm [shape: f32[128,512], index: 4, kind: input, shape index: {}]
  %s5 = inlined_call_operand.hbm [shape: f32[128,512], index: 5, kind: input, shape index: {}]
  %s6 = inlined_call_operand.vmem [shape: f32[1,512], index: 6, kind: input, shape index: {}]
  %s7 = inlined_call_operand.hbm [shape: f32[128,512], index: 7, kind: input, shape index: {}]
  %s8 = inlined_call_operand.hbm [shape: f32[128,512], index: 8, kind: input, shape index: {}]
  %s9 = inlined_call_operand.vmem [shape: f32[1,512], index: 9, kind: input, shape index: {}]
  %s10 = inlined_call_operand.hbm [shape: f32[3,8,128], index: 10, kind: input, shape index: {}]
  %s11 = inlined_call_operand.hbm [shape: f32[3,8,128], index: 11, kind: input, shape index: {}]
  %s12 = inlined_call_operand.hbm [shape: f32[128,128], index: 12, kind: input, shape index: {}]
  %s13 = inlined_call_operand.vmem [shape: f32[1,128], index: 13, kind: input, shape index: {}]
  %s14 = inlined_call_operand.hbm [shape: f32[128,128], index: 14, kind: input, shape index: {}]
  %s15 = inlined_call_operand.vmem [shape: f32[1,128], index: 15, kind: input, shape index: {}]
  %s16 = inlined_call_operand.hbm [shape: f32[8,128], index: 16, kind: output, shape index: {0}]
  %s17 = inlined_call_operand.hbm [shape: f32[3,8,128], index: 17, kind: output, shape index: {1}]
  %s18 = inlined_call_operand.hbm [shape: f32[3,8,128], index: 18, kind: output, shape index: {2}]
  %19 = xla_tuple %s16, %s17, %s18
  %s20 = sld [smem:[#allocation0]]
  $region138: #{tpu_custom_call.1} parent=0
    _
  %s22 = ssub.s32 1, %s20
  %s23 = scalar_select 0, %s22, %s20
  $region1: #{tpu_custom_call.1} parent=0
    #allocation4 [shape = 'u8[98304]{0}', space=vmem, size = 0x18000, scoped, tag = 'input window, operand 0, single buffered']
    #allocation5 [shape = 's32[1]{0}', space=sflag, size = 0x4, scoped, tag = 'scoped memory for tpu_custom_call.1']
    #allocation6 [shape = 's32[1]{0}', space=sflag, size = 0x4, scoped, tag = 'scoped memory for tpu_custom_call.1']
    #allocation7 [shape = 'u8[786432]{0}', space=vmem, size = 0xc0000, scoped, tag = 'input window, operand 1, single buffered']
    #allocation8 [shape = 's32[1]{0}', space=sflag, size = 0x4, scoped, tag = 'scoped memory for tpu_custom_call.1']
    #allocation9 [shape = 'u8[262144]{0}', space=vmem, size = 0x40000, scoped, tag = 'input window, operand 2, single buffered']
    #allocation10 [shape = 'u8[2048]{0}', space=vmem, size = 0x800, scoped, tag = 'input window, operand 3, single buffered']
    #allocation11 [shape = 's32[1]{0}', space=sflag, size = 0x4, scoped, tag = 'scoped memory for tpu_custom_call.1']
    #allocation12 [shape = 'u8[262144]{0}', space=vmem, size = 0x40000, scoped, tag = 'input window, operand 4, single buffered']
    #allocation13 [shape = 'u8[262144]{0}', space=vmem, size = 0x40000, scoped, tag = 'input window, operand 5, single buffered']
    #allocation14 [shape = 's32[1]{0}', space=sflag, size = 0x4, scoped, tag = 'scoped memory for tpu_custom_call.1']
    #allocation15 [shape = 'u8[262144]{0}', space=vmem, size = 0x40000, scoped, tag = 'input window, operand 7, single buffered']
    #allocation16 [shape = 'u8[262144]{0}', space=vmem, size = 0x40000, scoped, tag = 'input window, operand 8, single buffered']
    #allocation17 [shape = 's32[1]{0}', space=sflag, size = 0x4, scoped, tag = 'scoped memory for tpu_custom_call.1']
    #allocation18 [shape = 'u8[12288]{0}', space=vmem, size = 0x3000, scoped, tag = 'input window, operand 10, single buffered']
    #allocation19 [shape = 'u8[12288]{0}', space=vmem, size = 0x3000, scoped, tag = 'input window, operand 11, single buffered']
    #allocation20 [shape = 's32[1]{0}', space=sflag, size = 0x4, scoped, tag = 'scoped memory for tpu_custom_call.1']
    #allocation21 [shape = 'u8[65536]{0}', space=vmem, size = 0x10000, scoped, tag = 'input window, operand 12, single buffered']
    #allocation22 [shape = 'u8[65536]{0}', space=vmem, size = 0x10000, scoped, tag = 'input window, operand 14, single buffered']
    #allocation23 [shape = 's32[1]{0}', space=sflag, size = 0x4, scoped, tag = 'scoped memory for tpu_custom_call.1']
    #allocation24 [shape = 'u8[4096]{0}', space=vmem, size = 0x1000, scoped, tag = 'output window, operand 0, single buffered']
    #allocation25 [shape = 'u8[12288]{0}', space=vmem, size = 0x3000, scoped, tag = 'output window, operand 1, single buffered']
    #allocation26 [shape = 's32[1]{0}', space=sflag, size = 0x4, scoped, tag = 'scoped memory for tpu_custom_call.1']
    #allocation27 [shape = 'u8[12288]{0}', space=vmem, size = 0x3000, scoped, tag = 'output window, operand 2, single buffered']
    %24 = vsyncpa [#allocation5], 0
    %25 = vsyncpa [#allocation8], 0
    %26 = vsyncpa [#allocation11], 0
    %27 = vsyncpa [#allocation14], 0
    %28 = vsyncpa [#allocation17], 0
    %29 = vsyncpa [#allocation20], 0
    %30 = vsyncpa [#allocation23], 0
    %31 = vsyncpa [#allocation6], 0
    %32 = vsyncpa [#allocation26], 0
    // Predicated region
    $region2: #{tpu_custom_call.1} parent=1 // pred_check
      _
    $region3: #{tpu_custom_call.1} parent=1 // pred_check_branch
      %34 = sbr.rel (0) target = $region5
    $region4: #{tpu_custom_call.1} parent=1 // pred_region
      %36 = vsyncadd [#allocation5], 0
      %s37 = sshll.u32 %s0, 4
      %s38 = int_to_ptr.hbm [resolvable:$true] %s37
      %s39 = sshll.u32 [#allocation4], 4
      %s40 = int_to_ptr.vmem [resolvable:$true] %s39
      %45 = dma.hbm_to_vmem [thread:$0]  %s38, 3072, %s40, [#allocation5], 384, 384, 24
    $region5: #{tpu_custom_call.1} parent=1 // pred_fallthru
      _
    // Predicated region
    $region6: #{tpu_custom_call.1} parent=1 // pred_check
      _
    $region7: #{tpu_custom_call.1} parent=1 // pred_check_branch
      %47 = sbr.rel (0) target = $region9
    $region8: #{tpu_custom_call.1} parent=1 // pred_region
      %49 = vsyncadd [#allocation8], 0
      %s50 = sshll.u32 %s1, 4
      %s51 = int_to_ptr.hbm [resolvable:$true] %s50
      %s52 = sshll.u32 [#allocation7], 4
      %s53 = int_to_ptr.vmem [resolvable:$true] %s52
      %58 = dma.hbm_to_vmem [thread:$0]  %s51, 24576, %s53, [#allocation8], 512, 512, 32
    $region9: #{tpu_custom_call.1} parent=1 // pred_fallthru
      _
    // Predicated region
    $region10: #{tpu_custom_call.1} parent=1 // pred_check
      _
    $region11: #{tpu_custom_call.1} parent=1 // pred_check_branch
      %60 = sbr.rel (0) target = $region13
    $region12: #{tpu_custom_call.1} parent=1 // pred_region
      %62 = vsyncadd [#allocation8], 0
      %s63 = sshll.u32 %s2, 4
      %s64 = int_to_ptr.hbm [resolvable:$true] %s63
      %s65 = sshll.u32 [#allocation9], 4
      %s66 = int_to_ptr.vmem [resolvable:$true] %s65
      %71 = dma.hbm_to_vmem [thread:$0]  %s64, 8192, %s66, [#allocation8], 512, 512, 32
    $region13: #{tpu_custom_call.1} parent=1 // pred_fallthru
      _
    // Predicated region
    $region14: #{tpu_custom_call.1} parent=1 // pred_check
      _
    $region15: #{tpu_custom_call.1} parent=1 // pred_check_branch
      %73 = sbr.rel (0) target = $region17
    $region16: #{tpu_custom_call.1} parent=1 // pred_region
      %75 = vsyncadd [#allocation11], 0
      %s77 = sshll.u32 %s3, 4
      %s78 = int_to_ptr.hbm [resolvable:$true] %s77
      %s79 = sshll.u32 [#allocation10], 4
      %s80 = int_to_ptr.vmem [resolvable:$true] %s79
      %82 = dma.hbm_to_vmem [thread:$0]  %s78, 64, %s80, [#allocation11]
    $region17: #{tpu_custom_call.1} parent=1 // pred_fallthru
      _
    // Predicated region
    $region18: #{tpu_custom_call.1} parent=1 // pred_check
      _
    $region19: #{tpu_custom_call.1} parent=1 // pred_check_branch
      %84 = sbr.rel (0) target = $region21
    $region20: #{tpu_custom_call.1} parent=1 // pred_region
      %86 = vsyncadd [#allocation11], 0
      %s87 = sshll.u32 %s4, 4
      %s88 = int_to_ptr.hbm [resolvable:$true] %s87
      %s89 = sshll.u32 [#allocation12], 4
      %s90 = int_to_ptr.vmem [resolvable:$true] %s89
      %95 = dma.hbm_to_vmem [thread:$0]  %s88, 8192, %s90, [#allocation11], 512, 512, 32
    $region21: #{tpu_custom_call.1} parent=1 // pred_fallthru
      _
    // Predicated region
    $region22: #{tpu_custom_call.1} parent=1 // pred_check
      _
    $region23: #{tpu_custom_call.1} parent=1 // pred_check_branch
      %97 = sbr.rel (0) target = $region25
    $region24: #{tpu_custom_call.1} parent=1 // pred_region
      %99 = vsyncadd [#allocation14], 0
      %s100 = sshll.u32 %s5, 4
      %s101 = int_to_ptr.hbm [resolvable:$true] %s100
      %s102 = sshll.u32 [#allocation13], 4
      %s103 = int_to_ptr.vmem [resolvable:$true] %s102
      %108 = dma.hbm_to_vmem [thread:$0]  %s101, 8192, %s103, [#allocation14], 512, 512, 32
    $region25: #{tpu_custom_call.1} parent=1 // pred_fallthru
      _
    // Predicated region
    $region26: #{tpu_custom_call.1} parent=1 // pred_check
      _
    $region27: #{tpu_custom_call.1} parent=1 // pred_check_branch
      %110 = sbr.rel (0) target = $region29
    $region28: #{tpu_custom_call.1} parent=1 // pred_region
      _
    $region29: #{tpu_custom_call.1} parent=1 // pred_fallthru
      _
    // Predicated region
    $region30: #{tpu_custom_call.1} parent=1 // pred_check
      _
    $region31: #{tpu_custom_call.1} parent=1 // pred_check_branch
      %112 = sbr.rel (0) target = $region33
    $region32: #{tpu_custom_call.1} parent=1 // pred_region
      %114 = vsyncadd [#allocation14], 0
      %s115 = sshll.u32 %s7, 4
      %s116 = int_to_ptr.hbm [resolvable:$true] %s115
      %s117 = sshll.u32 [#allocation15], 4
      %s118 = int_to_ptr.vmem [resolvable:$true] %s117
      %123 = dma.hbm_to_vmem [thread:$0]  %s116, 8192, %s118, [#allocation14], 512, 512, 32
    $region33: #{tpu_custom_call.1} parent=1 // pred_fallthru
      _
    // Predicated region
    $region34: #{tpu_custom_call.1} parent=1 // pred_check
      _
    $region35: #{tpu_custom_call.1} parent=1 // pred_check_branch
      %125 = sbr.rel (0) target = $region37
    $region36: #{tpu_custom_call.1} parent=1 // pred_region
      %127 = vsyncadd [#allocation17], 0
      %s128 = sshll.u32 %s8, 4
      %s129 = int_to_ptr.hbm [resolvable:$true] %s128
      %s130 = sshll.u32 [#allocation16], 4
      %s131 = int_to_ptr.vmem [resolvable:$true] %s130
      %136 = dma.hbm_to_vmem [thread:$0]  %s129, 8192, %s131, [#allocation17], 512, 512, 32
    $region37: #{tpu_custom_call.1} parent=1 // pred_fallthru
      _
    // Predicated region
    $region38: #{tpu_custom_call.1} parent=1 // pred_check
      _
    $region39: #{tpu_custom_call.1} parent=1 // pred_check_branch
      %138 = sbr.rel (0) target = $region41
    $region40: #{tpu_custom_call.1} parent=1 // pred_region
      _
    $region41: #{tpu_custom_call.1} parent=1 // pred_fallthru
      _
    // Predicated region
    $region42: #{tpu_custom_call.1} parent=1 // pred_check
      _
    $region43: #{tpu_custom_call.1} parent=1 // pred_check_branch
      %140 = sbr.rel (0) target = $region45
    $region44: #{tpu_custom_call.1} parent=1 // pred_region
      %142 = vsyncadd [#allocation17], 0
      %s143 = sshll.u32 %s10, 4
      %s144 = int_to_ptr.hbm [resolvable:$true] %s143
      %s145 = sshll.u32 [#allocation18], 4
      %s146 = int_to_ptr.vmem [resolvable:$true] %s145
      %151 = dma.hbm_to_vmem [thread:$0]  %s144, 384, %s146, [#allocation17], 128, 128, 8
    $region45: #{tpu_custom_call.1} parent=1 // pred_fallthru
      _
    // Predicated region
    $region46: #{tpu_custom_call.1} parent=1 // pred_check
      _
    $region47: #{tpu_custom_call.1} parent=1 // pred_check_branch
      %153 = sbr.rel (0) target = $region49
    $region48: #{tpu_custom_call.1} parent=1 // pred_region
      %155 = vsyncadd [#allocation20], 0
      %s156 = sshll.u32 %s11, 4
      %s157 = int_to_ptr.hbm [resolvable:$true] %s156
      %s158 = sshll.u32 [#allocation19], 4
      %s159 = int_to_ptr.vmem [resolvable:$true] %s158
      %164 = dma.hbm_to_vmem [thread:$0]  %s157, 384, %s159, [#allocation20], 128, 128, 8
    $region49: #{tpu_custom_call.1} parent=1 // pred_fallthru
      _
    // Predicated region
    $region50: #{tpu_custom_call.1} parent=1 // pred_check
      _
    $region51: #{tpu_custom_call.1} parent=1 // pred_check_branch
      %166 = sbr.rel (0) target = $region53
    $region52: #{tpu_custom_call.1} parent=1 // pred_region
      %168 = vsyncadd [#allocation20], 0
      %s169 = sshll.u32 %s12, 4
      %s170 = int_to_ptr.hbm [resolvable:$true] %s169
      %s171 = sshll.u32 [#allocation21], 4
      %s172 = int_to_ptr.vmem [resolvable:$true] %s171
      %177 = dma.hbm_to_vmem [thread:$0]  %s170, 2048, %s172, [#allocation20], 128, 128, 8
    $region53: #{tpu_custom_call.1} parent=1 // pred_fallthru
      _
    // Predicated region
    $region54: #{tpu_custom_call.1} parent=1 // pred_check
      _
    $region55: #{tpu_custom_call.1} parent=1 // pred_check_branch
      %179 = sbr.rel (0) target = $region57
    $region56: #{tpu_custom_call.1} parent=1 // pred_region
      _
    $region57: #{tpu_custom_call.1} parent=1 // pred_fallthru
      _
    // Predicated region
    $region58: #{tpu_custom_call.1} parent=1 // pred_check
      _
    $region59: #{tpu_custom_call.1} parent=1 // pred_check_branch
      %181 = sbr.rel (0) target = $region61
    $region60: #{tpu_custom_call.1} parent=1 // pred_region
      %183 = vsyncadd [#allocation23], 0
      %s184 = sshll.u32 %s14, 4
      %s185 = int_to_ptr.hbm [resolvable:$true] %s184
      %s186 = sshll.u32 [#allocation22], 4
      %s187 = int_to_ptr.vmem [resolvable:$true] %s186
      %192 = dma.hbm_to_vmem [thread:$0]  %s185, 2048, %s187, [#allocation23], 128, 128, 8
    $region61: #{tpu_custom_call.1} parent=1 // pred_fallthru
      _
    // Predicated region
    $region62: #{tpu_custom_call.1} parent=1 // pred_check
      _
    $region63: #{tpu_custom_call.1} parent=1 // pred_check_branch
      %194 = sbr.rel (0) target = $region65
    $region64: #{tpu_custom_call.1} parent=1 // pred_region
      _
    $region65: #{tpu_custom_call.1} parent=1 // pred_fallthru
      _
    // Predicated region
    $region66: #{tpu_custom_call.1} parent=1 // pred_check
      _
    $region67: #{tpu_custom_call.1} parent=1 // pred_check_branch
      %196 = sbr.rel (0) target = $region69
    $region68: #{tpu_custom_call.1} parent=1 // pred_region
      %198 = dma.done [#allocation5], 3072
    $region69: #{tpu_custom_call.1} parent=1 // pred_fallthru
      _
    // Predicated region
    $region70: #{tpu_custom_call.1} parent=1 // pred_check
      _
    $region71: #{tpu_custom_call.1} parent=1 // pred_check_branch
      %200 = sbr.rel (0) target = $region73
    $region72: #{tpu_custom_call.1} parent=1 // pred_region
      %202 = dma.done [#allocation8], 24576
    $region73: #{tpu_custom_call.1} parent=1 // pred_fallthru
      _
    // Predicated region
    $region74: #{tpu_custom_call.1} parent=1 // pred_check
      _
    $region75: #{tpu_custom_call.1} parent=1 // pred_check_branch
      %204 = sbr.rel (0) target = $region77
    $region76: #{tpu_custom_call.1} parent=1 // pred_region
      %206 = dma.done [#allocation8], 8192
    $region77: #{tpu_custom_call.1} parent=1 // pred_fallthru
      _
    // Predicated region
    $region78: #{tpu_custom_call.1} parent=1 // pred_check
      _
    $region79: #{tpu_custom_call.1} parent=1 // pred_check_branch
      %208 = sbr.rel (0) target = $region81
    $region80: #{tpu_custom_call.1} parent=1 // pred_region
      %210 = dma.done [#allocation11], 64
    $region81: #{tpu_custom_call.1} parent=1 // pred_fallthru
      _
    // Predicated region
    $region82: #{tpu_custom_call.1} parent=1 // pred_check
      _
    $region83: #{tpu_custom_call.1} parent=1 // pred_check_branch
      %212 = sbr.rel (0) target = $region85
    $region84: #{tpu_custom_call.1} parent=1 // pred_region
      %214 = dma.done [#allocation11], 8192
    $region85: #{tpu_custom_call.1} parent=1 // pred_fallthru
      _
    // Predicated region
    $region86: #{tpu_custom_call.1} parent=1 // pred_check
      _
    $region87: #{tpu_custom_call.1} parent=1 // pred_check_branch
      %216 = sbr.rel (0) target = $region89
    $region88: #{tpu_custom_call.1} parent=1 // pred_region
      %218 = dma.done [#allocation14], 8192
    $region89: #{tpu_custom_call.1} parent=1 // pred_fallthru
      _
    // Predicated region
    $region90: #{tpu_custom_call.1} parent=1 // pred_check
      _
    $region91: #{tpu_custom_call.1} parent=1 // pred_check_branch
      %220 = sbr.rel (0) target = $region93
    $region92: #{tpu_custom_call.1} parent=1 // pred_region
      %222 = dma.done [#allocation14], 8192
    $region93: #{tpu_custom_call.1} parent=1 // pred_fallthru
      _
    // Predicated region
    $region94: #{tpu_custom_call.1} parent=1 // pred_check
      _
    $region95: #{tpu_custom_call.1} parent=1 // pred_check_branch
      %224 = sbr.rel (0) target = $region97
    $region96: #{tpu_custom_call.1} parent=1 // pred_region
      %226 = dma.done [#allocation17], 8192
    $region97: #{tpu_custom_call.1} parent=1 // pred_fallthru
      _
    // Predicated region
    $region98: #{tpu_custom_call.1} parent=1 // pred_check
      _
    $region99: #{tpu_custom_call.1} parent=1 // pred_check_branch
      %228 = sbr.rel (0) target = $region101
    $region100: #{tpu_custom_call.1} parent=1 // pred_region
      %230 = dma.done [#allocation17], 384
    $region101: #{tpu_custom_call.1} parent=1 // pred_fallthru
      _
    // Predicated region
    $region102: #{tpu_custom_call.1} parent=1 // pred_check
      _
    $region103: #{tpu_custom_call.1} parent=1 // pred_check_branch
      %232 = sbr.rel (0) target = $region105
    $region104: #{tpu_custom_call.1} parent=1 // pred_region
      %234 = dma.done [#allocation20], 384
    $region105: #{tpu_custom_call.1} parent=1 // pred_fallthru
      _
    // Predicated region
    $region106: #{tpu_custom_call.1} parent=1 // pred_check
      _
    $region107: #{tpu_custom_call.1} parent=1 // pred_check_branch
      %236 = sbr.rel (0) target = $region109
    $region108: #{tpu_custom_call.1} parent=1 // pred_region
      %238 = dma.done [#allocation20], 2048
    $region109: #{tpu_custom_call.1} parent=1 // pred_fallthru
      _
    // Predicated region
    $region110: #{tpu_custom_call.1} parent=1 // pred_check
      _
    $region111: #{tpu_custom_call.1} parent=1 // pred_check_branch
      %240 = sbr.rel (0) target = $region113
    $region112: #{tpu_custom_call.1} parent=1 // pred_region
      %242 = dma.done [#allocation23], 2048
    $region113: #{tpu_custom_call.1} parent=1 // pred_fallthru
      _
    %v243 = vld [vmem:[#allocation4] sm:$0xff]
    %v244 = vld [vmem:[#allocation4 + $0x8] sm:$0xff]
    %v245 = vld [vmem:[#allocation4 + $0x10] sm:$0xff]
    %v246 = vld [vmem:[#allocation4 + $0x18] sm:$0xff]
    %v247 = vld [vmem:[#allocation4 + $0x20] sm:$0xff]
    %v248 = vld [vmem:[#allocation4 + $0x28] sm:$0xff]
    %v249 = vld [vmem:[#allocation4 + $0x30] sm:$0xff]
    %v250 = vld [vmem:[#allocation4 + $0x38] sm:$0xff]
    %v251 = vld [vmem:[#allocation4 + $0x40] sm:$0xff]
    %v252 = vld [vmem:[#allocation4 + $0x48] sm:$0xff]
    %v253 = vld [vmem:[#allocation4 + $0x50] sm:$0xff]
    %v254 = vld [vmem:[#allocation4 + $0x58] sm:$0xff]
    %v255 = vld [vmem:[#allocation4 + $0x60] sm:$0xff]
    %v256 = vld [vmem:[#allocation4 + $0x68] sm:$0xff]
    %v257 = vld [vmem:[#allocation4 + $0x70] sm:$0xff]
    %v258 = vld [vmem:[#allocation4 + $0x78] sm:$0xff]
    %v259 = vld [vmem:[#allocation4 + $0x80] sm:$0xff]
    %v260 = vld [vmem:[#allocation4 + $0x88] sm:$0xff]
    %v261 = vld [vmem:[#allocation4 + $0x90] sm:$0xff]
    %v262 = vld [vmem:[#allocation4 + $0x98] sm:$0xff]
    %v263 = vld [vmem:[#allocation4 + $0xa0] sm:$0xff]
    %v264 = vld [vmem:[#allocation4 + $0xa8] sm:$0xff]
    %v265 = vld [vmem:[#allocation4 + $0xb0] sm:$0xff]
    %v266 = vld [vmem:[#allocation4 + $0xb8] sm:$0xff]
    %v267 = vld [vmem:[#allocation7] sm:$0xff]
    %v268 = vld [vmem:[#allocation7 + $0x8] sm:$0xff]
    %v269 = vld [vmem:[#allocation7 + $0x10] sm:$0xff]
    %v270 = vld [vmem:[#allocation7 + $0x18] sm:$0xff]
    %v271 = vld [vmem:[#allocation7 + $0x20] sm:$0xff]
    %v272 = vld [vmem:[#allocation7 + $0x28] sm:$0xff]
    %v273 = vld [vmem:[#allocation7 + $0x30] sm:$0xff]
    %v274 = vld [vmem:[#allocation7 + $0x38] sm:$0xff]
    %v275 = vld [vmem:[#allocation7 + $0x40] sm:$0xff]
    %v276 = vld [vmem:[#allocation7 + $0x48] sm:$0xff]
    %v277 = vld [vmem:[#allocation7 + $0x50] sm:$0xff]
    %v278 = vld [vmem:[#allocation7 + $0x58] sm:$0xff]
    %v279 = vld [vmem:[#allocation7 + $0x60] sm:$0xff]
    %v280 = vld [vmem:[#allocation7 + $0x68] sm:$0xff]
    %v281 = vld [vmem:[#allocation7 + $0x70] sm:$0xff]
    %v282 = vld [vmem:[#allocation7 + $0x78] sm:$0xff]
    %v283 = vld [vmem:[#allocation7 + $0x80] sm:$0xff]
    %v284 = vld [vmem:[#allocation7 + $0x88] sm:$0xff]
    %v285 = vld [vmem:[#allocation7 + $0x90] sm:$0xff]
    %v286 = vld [vmem:[#allocation7 + $0x98] sm:$0xff]
    %v287 = vld [vmem:[#allocation7 + $0xa0] sm:$0xff]
    %v288 = vld [vmem:[#allocation7 + $0xa8] sm:$0xff]
    %v289 = vld [vmem:[#allocation7 + $0xb0] sm:$0xff]
    %v290 = vld [vmem:[#allocation7 + $0xb8] sm:$0xff]
    %v291 = vld [vmem:[#allocation7 + $0xc0] sm:$0xff]
    %v292 = vld [vmem:[#allocation7 + $0xc8] sm:$0xff]
    %v293 = vld [vmem:[#allocation7 + $0xd0] sm:$0xff]
    %v294 = vld [vmem:[#allocation7 + $0xd8] sm:$0xff]
    %v295 = vld [vmem:[#allocation7 + $0xe0] sm:$0xff]
    %v296 = vld [vmem:[#allocation7 + $0xe8] sm:$0xff]
    %v297 = vld [vmem:[#allocation7 + $0xf0] sm:$0xff]
    %v298 = vld [vmem:[#allocation7 + $0xf8] sm:$0xff]
    %v299 = vld [vmem:[#allocation7 + $0x100] sm:$0xff]
    %v300 = vld [vmem:[#allocation7 + $0x108] sm:$0xff]
    %v301 = vld [vmem:[#allocation7 + $0x110] sm:$0xff]
    %v302 = vld [vmem:[#allocation7 + $0x118] sm:$0xff]
    %v303 = vld [vmem:[#allocation7 + $0x120] sm:$0xff]
    %v304 = vld [vmem:[#allocation7 + $0x128] sm:$0xff]
    %v305 = vld [vmem:[#allocation7 + $0x130] sm:$0xff]
    %v306 = vld [vmem:[#allocation7 + $0x138] sm:$0xff]
    %v307 = vld [vmem:[#allocation7 + $0x140] sm:$0xff]
    %v308 = vld [vmem:[#allocation7 + $0x148] sm:$0xff]
    %v309 = vld [vmem:[#allocation7 + $0x150] sm:$0xff]
    %v310 = vld [vmem:[#allocation7 + $0x158] sm:$0xff]
    %v311 = vld [vmem:[#allocation7 + $0x160] sm:$0xff]
    %v312 = vld [vmem:[#allocation7 + $0x168] sm:$0xff]
    %v313 = vld [vmem:[#allocation7 + $0x170] sm:$0xff]
    %v314 = vld [vmem:[#allocation7 + $0x178] sm:$0xff]
    %v315 = vld [vmem:[#allocation7 + $0x180] sm:$0xff]
    %v316 = vld [vmem:[#allocation7 + $0x188] sm:$0xff]
    %v317 = vld [vmem:[#allocation7 + $0x190] sm:$0xff]
    %v318 = vld [vmem:[#allocation7 + $0x198] sm:$0xff]
    %v319 = vld [vmem:[#allocation7 + $0x1a0] sm:$0xff]
    %v320 = vld [vmem:[#allocation7 + $0x1a8] sm:$0xff]
    %v321 = vld [vmem:[#allocation7 + $0x1b0] sm:$0xff]
    %v322 = vld [vmem:[#allocation7 + $0x1b8] sm:$0xff]
    %v323 = vld [vmem:[#allocation7 + $0x1c0] sm:$0xff]
    %v324 = vld [vmem:[#allocation7 + $0x1c8] sm:$0xff]
    %v325 = vld [vmem:[#allocation7 + $0x1d0] sm:$0xff]
    %v326 = vld [vmem:[#allocation7 + $0x1d8] sm:$0xff]
    %v327 = vld [vmem:[#allocation7 + $0x1e0] sm:$0xff]
    %v328 = vld [vmem:[#allocation7 + $0x1e8] sm:$0xff]
    %v329 = vld [vmem:[#allocation7 + $0x1f0] sm:$0xff]
    %v330 = vld [vmem:[#allocation7 + $0x1f8] sm:$0xff]
    %v331 = vld [vmem:[#allocation7 + $0x200] sm:$0xff]
    %v332 = vld [vmem:[#allocation7 + $0x208] sm:$0xff]
    %v333 = vld [vmem:[#allocation7 + $0x210] sm:$0xff]
    %v334 = vld [vmem:[#allocation7 + $0x218] sm:$0xff]
    %v335 = vld [vmem:[#allocation7 + $0x220] sm:$0xff]
    %v336 = vld [vmem:[#allocation7 + $0x228] sm:$0xff]
    %v337 = vld [vmem:[#allocation7 + $0x230] sm:$0xff]
    %v338 = vld [vmem:[#allocation7 + $0x238] sm:$0xff]
    %v339 = vld [vmem:[#allocation7 + $0x240] sm:$0xff]
    %v340 = vld [vmem:[#allocation7 + $0x248] sm:$0xff]
    %v341 = vld [vmem:[#allocation7 + $0x250] sm:$0xff]
    %v342 = vld [vmem:[#allocation7 + $0x258] sm:$0xff]
    %v343 = vld [vmem:[#allocation7 + $0x260] sm:$0xff]
    %v344 = vld [vmem:[#allocation7 + $0x268] sm:$0xff]
    %v345 = vld [vmem:[#allocation7 + $0x270] sm:$0xff]
    %v346 = vld [vmem:[#allocation7 + $0x278] sm:$0xff]
    %v347 = vld [vmem:[#allocation7 + $0x280] sm:$0xff]
    %v348 = vld [vmem:[#allocation7 + $0x288] sm:$0xff]
    %v349 = vld [vmem:[#allocation7 + $0x290] sm:$0xff]
    %v350 = vld [vmem:[#allocation7 + $0x298] sm:$0xff]
    %v351 = vld [vmem:[#allocation7 + $0x2a0] sm:$0xff]
    %v352 = vld [vmem:[#allocation7 + $0x2a8] sm:$0xff]
    %v353 = vld [vmem:[#allocation7 + $0x2b0] sm:$0xff]
    %v354 = vld [vmem:[#allocation7 + $0x2b8] sm:$0xff]
    %v355 = vld [vmem:[#allocation7 + $0x2c0] sm:$0xff]
    %v356 = vld [vmem:[#allocation7 + $0x2c8] sm:$0xff]
    %v357 = vld [vmem:[#allocation7 + $0x2d0] sm:$0xff]
    %v358 = vld [vmem:[#allocation7 + $0x2d8] sm:$0xff]
    %v359 = vld [vmem:[#allocation7 + $0x2e0] sm:$0xff]
    %v360 = vld [vmem:[#allocation7 + $0x2e8] sm:$0xff]
    %v361 = vld [vmem:[#allocation7 + $0x2f0] sm:$0xff]
    %v362 = vld [vmem:[#allocation7 + $0x2f8] sm:$0xff]
    %v363 = vld [vmem:[#allocation7 + $0x300] sm:$0xff]
    %v364 = vld [vmem:[#allocation7 + $0x308] sm:$0xff]
    %v365 = vld [vmem:[#allocation7 + $0x310] sm:$0xff]
    %v366 = vld [vmem:[#allocation7 + $0x318] sm:$0xff]
    %v367 = vld [vmem:[#allocation7 + $0x320] sm:$0xff]
    %v368 = vld [vmem:[#allocation7 + $0x328] sm:$0xff]
    %v369 = vld [vmem:[#allocation7 + $0x330] sm:$0xff]
    %v370 = vld [vmem:[#allocation7 + $0x338] sm:$0xff]
    %v371 = vld [vmem:[#allocation7 + $0x340] sm:$0xff]
    %v372 = vld [vmem:[#allocation7 + $0x348] sm:$0xff]
    %v373 = vld [vmem:[#allocation7 + $0x350] sm:$0xff]
    %v374 = vld [vmem:[#allocation7 + $0x358] sm:$0xff]
    %v375 = vld [vmem:[#allocation7 + $0x360] sm:$0xff]
    %v376 = vld [vmem:[#allocation7 + $0x368] sm:$0xff]
    %v377 = vld [vmem:[#allocation7 + $0x370] sm:$0xff]
    %v378 = vld [vmem:[#allocation7 + $0x378] sm:$0xff]
    %v379 = vld [vmem:[#allocation7 + $0x380] sm:$0xff]
    %v380 = vld [vmem:[#allocation7 + $0x388] sm:$0xff]
    %v381 = vld [vmem:[#allocation7 + $0x390] sm:$0xff]
    %v382 = vld [vmem:[#allocation7 + $0x398] sm:$0xff]
    %v383 = vld [vmem:[#allocation7 + $0x3a0] sm:$0xff]
    %v384 = vld [vmem:[#allocation7 + $0x3a8] sm:$0xff]
    %v385 = vld [vmem:[#allocation7 + $0x3b0] sm:$0xff]
    %v386 = vld [vmem:[#allocation7 + $0x3b8] sm:$0xff]
    %v387 = vld [vmem:[#allocation7 + $0x3c0] sm:$0xff]
    %v388 = vld [vmem:[#allocation7 + $0x3c8] sm:$0xff]
    %v389 = vld [vmem:[#allocation7 + $0x3d0] sm:$0xff]
    %v390 = vld [vmem:[#allocation7 + $0x3d8] sm:$0xff]
    %v391 = vld [vmem:[#allocation7 + $0x3e0] sm:$0xff]
    %v392 = vld [vmem:[#allocation7 + $0x3e8] sm:$0xff]
    %v393 = vld [vmem:[#allocation7 + $0x3f0] sm:$0xff]
    %v394 = vld [vmem:[#allocation7 + $0x3f8] sm:$0xff]
    %v395 = vld [vmem:[#allocation7 + $0x400] sm:$0xff]
    %v396 = vld [vmem:[#allocation7 + $0x408] sm:$0xff]
    %v397 = vld [vmem:[#allocation7 + $0x410] sm:$0xff]
    %v398 = vld [vmem:[#allocation7 + $0x418] sm:$0xff]
    %v399 = vld [vmem:[#allocation7 + $0x420] sm:$0xff]
    %v400 = vld [vmem:[#allocation7 + $0x428] sm:$0xff]
    %v401 = vld [vmem:[#allocation7 + $0x430] sm:$0xff]
    %v402 = vld [vmem:[#allocation7 + $0x438] sm:$0xff]
    %v403 = vld [vmem:[#allocation7 + $0x440] sm:$0xff]
    %v404 = vld [vmem:[#allocation7 + $0x448] sm:$0xff]
    %v405 = vld [vmem:[#allocation7 + $0x450] sm:$0xff]
    %v406 = vld [vmem:[#allocation7 + $0x458] sm:$0xff]
    %v407 = vld [vmem:[#allocation7 + $0x460] sm:$0xff]
    %v408 = vld [vmem:[#allocation7 + $0x468] sm:$0xff]
    %v409 = vld [vmem:[#allocation7 + $0x470] sm:$0xff]
    %v410 = vld [vmem:[#allocation7 + $0x478] sm:$0xff]
    %v411 = vld [vmem:[#allocation7 + $0x480] sm:$0xff]
    %v412 = vld [vmem:[#allocation7 + $0x488] sm:$0xff]
    %v413 = vld [vmem:[#allocation7 + $0x490] sm:$0xff]
    %v414 = vld [vmem:[#allocation7 + $0x498] sm:$0xff]
    %v415 = vld [vmem:[#allocation7 + $0x4a0] sm:$0xff]
    %v416 = vld [vmem:[#allocation7 + $0x4a8] sm:$0xff]
    %v417 = vld [vmem:[#allocation7 + $0x4b0] sm:$0xff]
    %v418 = vld [vmem:[#allocation7 + $0x4b8] sm:$0xff]
    %v419 = vld [vmem:[#allocation7 + $0x4c0] sm:$0xff]
    %v420 = vld [vmem:[#allocation7 + $0x4c8] sm:$0xff]
    %v421 = vld [vmem:[#allocation7 + $0x4d0] sm:$0xff]
    %v422 = vld [vmem:[#allocation7 + $0x4d8] sm:$0xff]
    %v423 = vld [vmem:[#allocation7 + $0x4e0] sm:$0xff]
    %v424 = vld [vmem:[#allocation7 + $0x4e8] sm:$0xff]
    %v425 = vld [vmem:[#allocation7 + $0x4f0] sm:$0xff]
    %v426 = vld [vmem:[#allocation7 + $0x4f8] sm:$0xff]
    %v427 = vld [vmem:[#allocation7 + $0x500] sm:$0xff]
    %v428 = vld [vmem:[#allocation7 + $0x508] sm:$0xff]
    %v429 = vld [vmem:[#allocation7 + $0x510] sm:$0xff]
    %v430 = vld [vmem:[#allocation7 + $0x518] sm:$0xff]
    %v431 = vld [vmem:[#allocation7 + $0x520] sm:$0xff]
    %v432 = vld [vmem:[#allocation7 + $0x528] sm:$0xff]
    %v433 = vld [vmem:[#allocation7 + $0x530] sm:$0xff]
    %v434 = vld [vmem:[#allocation7 + $0x538] sm:$0xff]
    %v435 = vld [vmem:[#allocation7 + $0x540] sm:$0xff]
    %v436 = vld [vmem:[#allocation7 + $0x548] sm:$0xff]
    %v437 = vld [vmem:[#allocation7 + $0x550] sm:$0xff]
    %v438 = vld [vmem:[#allocation7 + $0x558] sm:$0xff]
    %v439 = vld [vmem:[#allocation7 + $0x560] sm:$0xff]
    %v440 = vld [vmem:[#allocation7 + $0x568] sm:$0xff]
    %v441 = vld [vmem:[#allocation7 + $0x570] sm:$0xff]
    %v442 = vld [vmem:[#allocation7 + $0x578] sm:$0xff]
    %v443 = vld [vmem:[#allocation7 + $0x580] sm:$0xff]
    %v444 = vld [vmem:[#allocation7 + $0x588] sm:$0xff]
    %v445 = vld [vmem:[#allocation7 + $0x590] sm:$0xff]
    %v446 = vld [vmem:[#allocation7 + $0x598] sm:$0xff]
    %v447 = vld [vmem:[#allocation7 + $0x5a0] sm:$0xff]
    %v448 = vld [vmem:[#allocation7 + $0x5a8] sm:$0xff]
    %v449 = vld [vmem:[#allocation7 + $0x5b0] sm:$0xff]
    %v450 = vld [vmem:[#allocation7 + $0x5b8] sm:$0xff]
    %v451 = vld [vmem:[#allocation7 + $0x5c0] sm:$0xff]
    %v452 = vld [vmem:[#allocation7 + $0x5c8] sm:$0xff]
    %v453 = vld [vmem:[#allocation7 + $0x5d0] sm:$0xff]
    %v454 = vld [vmem:[#allocation7 + $0x5d8] sm:$0xff]
    %v455 = vld [vmem:[#allocation7 + $0x5e0] sm:$0xff]
    %v456 = vld [vmem:[#allocation7 + $0x5e8] sm:$0xff]
    %v457 = vld [vmem:[#allocation7 + $0x5f0] sm:$0xff]
    %v458 = vld [vmem:[#allocation7 + $0x5f8] sm:$0xff]
    %v459 = vld [vmem:[#allocation10] sm:$0xf]
    %v461 = vperm.slane %v459, 0
    %v462 = vperm.slane %v459, 1
    %v463 = vperm.slane %v459, 2
    %v464 = vperm.slane %v459, 3
    %469 = vmatpush.msra.mxu0 %v327
    %470 = vmatpush.msra.mxu0 %v323
    %471 = vmatpush.msra.mxu0 %v319
    %472 = vmatpush.msra.mxu0 %v315
    %473 = vmatpush.msra.mxu0 %v311
    %474 = vmatpush.msra.mxu0 %v307
    %475 = vmatpush.msra.mxu0 %v303
    %476 = vmatpush.msra.mxu0 %v299
    %477 = vmatpush.msra.mxu0 %v295
    %478 = vmatpush.msra.mxu0 %v291
    %479 = vmatpush.msra.mxu0 %v287
    %480 = vmatpush.msra.mxu0 %v283
    %481 = vmatpush.msra.mxu0 %v279
    %482 = vmatpush.msra.mxu0 %v275
    %483 = vmatpush.msra.mxu0 %v271
    %484 = vmatpush.msra.mxu0 %v267
    %485 = vmatmul.f32.gmra.mxu0 %v243
    %v486 = vpop.f32.mrf.mxu0
    %v487 = vadd.f32 %v461, %v486
    %488 = vmatmul.f32.gmra.mxu0 %v246
    %v489 = vpop.f32.mrf.mxu0
    %v490 = vadd.f32 %v461, %v489
    %491 = vmatmul.f32.gmra.mxu0 %v249
    %v492 = vpop.f32.mrf.mxu0
    %v493 = vadd.f32 %v461, %v492
    %494 = vmatmul.f32.gmra.mxu0 %v252
    %v495 = vpop.f32.mrf.mxu0
    %v496 = vadd.f32 %v461, %v495
    %497 = vmatmul.f32.gmra.mxu0 %v255
    %v498 = vpop.f32.mrf.mxu0
    %v499 = vadd.f32 %v461, %v498
    %500 = vmatmul.f32.gmra.mxu0 %v258
    %v501 = vpop.f32.mrf.mxu0
    %v502 = vadd.f32 %v461, %v501
    %503 = vmatmul.f32.gmra.mxu0 %v261
    %v504 = vpop.f32.mrf.mxu0
    %v505 = vadd.f32 %v461, %v504
    %506 = vmatmul.f32.gmra.mxu0 %v264
    %v507 = vpop.f32.mrf.mxu0
    %v508 = vadd.f32 %v461, %v507
    %509 = vdwg.mxu0
    %510 = vmatpush.msra.mxu0 %v391
    %511 = vmatpush.msra.mxu0 %v387
    %512 = vmatpush.msra.mxu0 %v383
    %513 = vmatpush.msra.mxu0 %v379
    %514 = vmatpush.msra.mxu0 %v375
    %515 = vmatpush.msra.mxu0 %v371
    %516 = vmatpush.msra.mxu0 %v367
    %517 = vmatpush.msra.mxu0 %v363
    %518 = vmatpush.msra.mxu0 %v359
    %519 = vmatpush.msra.mxu0 %v355
    %520 = vmatpush.msra.mxu0 %v351
    %521 = vmatpush.msra.mxu0 %v347
    %522 = vmatpush.msra.mxu0 %v343
    %523 = vmatpush.msra.mxu0 %v339
    %524 = vmatpush.msra.mxu0 %v335
    %525 = vmatpush.msra.mxu0 %v331
    %526 = vmatmul.f32.gmra.mxu0 %v244
    %v527 = vpop.f32.mrf.mxu0
    %v528 = vadd.f32 %v487, %v527
    %529 = vmatmul.f32.gmra.mxu0 %v247
    %v530 = vpop.f32.mrf.mxu0
    %v531 = vadd.f32 %v490, %v530
    %532 = vmatmul.f32.gmra.mxu0 %v250
    %v533 = vpop.f32.mrf.mxu0
    %v534 = vadd.f32 %v493, %v533
    %535 = vmatmul.f32.gmra.mxu0 %v253
    %v536 = vpop.f32.mrf.mxu0
    %v537 = vadd.f32 %v496, %v536
    %538 = vmatmul.f32.gmra.mxu0 %v256
    %v539 = vpop.f32.mrf.mxu0
    %v540 = vadd.f32 %v499, %v539
    %541 = vmatmul.f32.gmra.mxu0 %v259
    %v542 = vpop.f32.mrf.mxu0
    %v543 = vadd.f32 %v502, %v542
    %544 = vmatmul.f32.gmra.mxu0 %v262
    %v545 = vpop.f32.mrf.mxu0
    %v546 = vadd.f32 %v505, %v545
    %547 = vmatmul.f32.gmra.mxu0 %v265
    %v548 = vpop.f32.mrf.mxu0
    %v549 = vadd.f32 %v508, %v548
    %550 = vdwg.mxu0
    %551 = vmatpush.msra.mxu0 %v455
    %552 = vmatpush.msra.mxu0 %v451
    %553 = vmatpush.msra.mxu0 %v447
    %554 = vmatpush.msra.mxu0 %v443
    %555 = vmatpush.msra.mxu0 %v439
    %556 = vmatpush.msra.mxu0 %v435
    %557 = vmatpush.msra.mxu0 %v431
    %558 = vmatpush.msra.mxu0 %v427
    %559 = vmatpush.msra.mxu0 %v423
    %560 = vmatpush.msra.mxu0 %v419
    %561 = vmatpush.msra.mxu0 %v415
    %562 = vmatpush.msra.mxu0 %v411
    %563 = vmatpush.msra.mxu0 %v407
    %564 = vmatpush.msra.mxu0 %v403
    %565 = vmatpush.msra.mxu0 %v399
    %566 = vmatpush.msra.mxu0 %v395
    %567 = vmatmul.f32.gmra.mxu0 %v245
    %v568 = vpop.f32.mrf.mxu0
    %v569 = vadd.f32 %v528, %v568
    %570 = vmatmul.f32.gmra.mxu0 %v248
    %v571 = vpop.f32.mrf.mxu0
    %v572 = vadd.f32 %v531, %v571
    %573 = vmatmul.f32.gmra.mxu0 %v251
    %v574 = vpop.f32.mrf.mxu0
    %v575 = vadd.f32 %v534, %v574
    %576 = vmatmul.f32.gmra.mxu0 %v254
    %v577 = vpop.f32.mrf.mxu0
    %v578 = vadd.f32 %v537, %v577
    %579 = vmatmul.f32.gmra.mxu0 %v257
    %v580 = vpop.f32.mrf.mxu0
    %v581 = vadd.f32 %v540, %v580
    %582 = vmatmul.f32.gmra.mxu0 %v260
    %v583 = vpop.f32.mrf.mxu0
    %v584 = vadd.f32 %v543, %v583
    %585 = vmatmul.f32.gmra.mxu0 %v263
    %v586 = vpop.f32.mrf.mxu0
    %v587 = vadd.f32 %v546, %v586
    %588 = vmatmul.f32.gmra.mxu0 %v266
    %v589 = vpop.f32.mrf.mxu0
    %v590 = vadd.f32 %v549, %v589
    %591 = vdwg.mxu0
    %592 = vmatpush.msra.mxu0 %v328
    %593 = vmatpush.msra.mxu0 %v324
    %594 = vmatpush.msra.mxu0 %v320
    %595 = vmatpush.msra.mxu0 %v316
    %596 = vmatpush.msra.mxu0 %v312
    %597 = vmatpush.msra.mxu0 %v308
    %598 = vmatpush.msra.mxu0 %v304
    %599 = vmatpush.msra.mxu0 %v300
    %600 = vmatpush.msra.mxu0 %v296
    %601 = vmatpush.msra.mxu0 %v292
    %602 = vmatpush.msra.mxu0 %v288
    %603 = vmatpush.msra.mxu0 %v284
    %604 = vmatpush.msra.mxu0 %v280
    %605 = vmatpush.msra.mxu0 %v276
    %606 = vmatpush.msra.mxu0 %v272
    %607 = vmatpush.msra.mxu0 %v268
    %608 = vmatmul.f32.gmra.mxu0 %v243
    %v609 = vpop.f32.mrf.mxu0
    %v610 = vadd.f32 %v462, %v609
    %611 = vmatmul.f32.gmra.mxu0 %v246
    %v612 = vpop.f32.mrf.mxu0
    %v613 = vadd.f32 %v462, %v612
    %614 = vmatmul.f32.gmra.mxu0 %v249
    %v615 = vpop.f32.mrf.mxu0
    %v616 = vadd.f32 %v462, %v615
    %617 = vmatmul.f32.gmra.mxu0 %v252
    %v618 = vpop.f32.mrf.mxu0
    %v619 = vadd.f32 %v462, %v618
    %620 = vmatmul.f32.gmra.mxu0 %v255
    %v621 = vpop.f32.mrf.mxu0
    %v622 = vadd.f32 %v462, %v621
    %623 = vmatmul.f32.gmra.mxu0 %v258
    %v624 = vpop.f32.mrf.mxu0
    %v625 = vadd.f32 %v462, %v624
    %626 = vmatmul.f32.gmra.mxu0 %v261
    %v627 = vpop.f32.mrf.mxu0
    %v628 = vadd.f32 %v462, %v627
    %629 = vmatmul.f32.gmra.mxu0 %v264
    %v630 = vpop.f32.mrf.mxu0
    %v631 = vadd.f32 %v462, %v630
    %632 = vdwg.mxu0
    %633 = vmatpush.msra.mxu0 %v392
    %634 = vmatpush.msra.mxu0 %v388
    %635 = vmatpush.msra.mxu0 %v384
    %636 = vmatpush.msra.mxu0 %v380
    %637 = vmatpush.msra.mxu0 %v376
    %638 = vmatpush.msra.mxu0 %v372
    %639 = vmatpush.msra.mxu0 %v368
    %640 = vmatpush.msra.mxu0 %v364
    %641 = vmatpush.msra.mxu0 %v360
    %642 = vmatpush.msra.mxu0 %v356
    %643 = vmatpush.msra.mxu0 %v352
    %644 = vmatpush.msra.mxu0 %v348
    %645 = vmatpush.msra.mxu0 %v344
    %646 = vmatpush.msra.mxu0 %v340
    %647 = vmatpush.msra.mxu0 %v336
    %648 = vmatpush.msra.mxu0 %v332
    %649 = vmatmul.f32.gmra.mxu0 %v244
    %v650 = vpop.f32.mrf.mxu0
    %v651 = vadd.f32 %v610, %v650
    %652 = vmatmul.f32.gmra.mxu0 %v247
    %v653 = vpop.f32.mrf.mxu0
    %v654 = vadd.f32 %v613, %v653
    %655 = vmatmul.f32.gmra.mxu0 %v250
    %v656 = vpop.f32.mrf.mxu0
    %v657 = vadd.f32 %v616, %v656
    %658 = vmatmul.f32.gmra.mxu0 %v253
    %v659 = vpop.f32.mrf.mxu0
    %v660 = vadd.f32 %v619, %v659
    %661 = vmatmul.f32.gmra.mxu0 %v256
    %v662 = vpop.f32.mrf.mxu0
    %v663 = vadd.f32 %v622, %v662
    %664 = vmatmul.f32.gmra.mxu0 %v259
    %v665 = vpop.f32.mrf.mxu0
    %v666 = vadd.f32 %v625, %v665
    %667 = vmatmul.f32.gmra.mxu0 %v262
    %v668 = vpop.f32.mrf.mxu0
    %v669 = vadd.f32 %v628, %v668
    %670 = vmatmul.f32.gmra.mxu0 %v265
    %v671 = vpop.f32.mrf.mxu0
    %v672 = vadd.f32 %v631, %v671
    %673 = vdwg.mxu0
    %674 = vmatpush.msra.mxu0 %v456
    %675 = vmatpush.msra.mxu0 %v452
    %676 = vmatpush.msra.mxu0 %v448
    %677 = vmatpush.msra.mxu0 %v444
    %678 = vmatpush.msra.mxu0 %v440
    %679 = vmatpush.msra.mxu0 %v436
    %680 = vmatpush.msra.mxu0 %v432
    %681 = vmatpush.msra.mxu0 %v428
    %682 = vmatpush.msra.mxu0 %v424
    %683 = vmatpush.msra.mxu0 %v420
    %684 = vmatpush.msra.mxu0 %v416
    %685 = vmatpush.msra.mxu0 %v412
    %686 = vmatpush.msra.mxu0 %v408
    %687 = vmatpush.msra.mxu0 %v404
    %688 = vmatpush.msra.mxu0 %v400
    %689 = vmatpush.msra.mxu0 %v396
    %690 = vmatmul.f32.gmra.mxu0 %v245
    %v691 = vpop.f32.mrf.mxu0
    %v692 = vadd.f32 %v651, %v691
    %693 = vmatmul.f32.gmra.mxu0 %v248
    %v694 = vpop.f32.mrf.mxu0
    %v695 = vadd.f32 %v654, %v694
    %696 = vmatmul.f32.gmra.mxu0 %v251
    %v697 = vpop.f32.mrf.mxu0
    %v698 = vadd.f32 %v657, %v697
    %699 = vmatmul.f32.gmra.mxu0 %v254
    %v700 = vpop.f32.mrf.mxu0
    %v701 = vadd.f32 %v660, %v700
    %702 = vmatmul.f32.gmra.mxu0 %v257
    %v703 = vpop.f32.mrf.mxu0
    %v704 = vadd.f32 %v663, %v703
    %705 = vmatmul.f32.gmra.mxu0 %v260
    %v706 = vpop.f32.mrf.mxu0
    %v707 = vadd.f32 %v666, %v706
    %708 = vmatmul.f32.gmra.mxu0 %v263
    %v709 = vpop.f32.mrf.mxu0
    %v710 = vadd.f32 %v669, %v709
    %711 = vmatmul.f32.gmra.mxu0 %v266
    %v712 = vpop.f32.mrf.mxu0
    %v713 = vadd.f32 %v672, %v712
    %714 = vdwg.mxu0
    %715 = vmatpush.msra.mxu0 %v329
    %716 = vmatpush.msra.mxu0 %v325
    %717 = vmatpush.msra.mxu0 %v321
    %718 = vmatpush.msra.mxu0 %v317
    %719 = vmatpush.msra.mxu0 %v313
    %720 = vmatpush.msra.mxu0 %v309
    %721 = vmatpush.msra.mxu0 %v305
    %722 = vmatpush.msra.mxu0 %v301
    %723 = vmatpush.msra.mxu0 %v297
    %724 = vmatpush.msra.mxu0 %v293
    %725 = vmatpush.msra.mxu0 %v289
    %726 = vmatpush.msra.mxu0 %v285
    %727 = vmatpush.msra.mxu0 %v281
    %728 = vmatpush.msra.mxu0 %v277
    %729 = vmatpush.msra.mxu0 %v273
    %730 = vmatpush.msra.mxu0 %v269
    %731 = vmatmul.f32.gmra.mxu0 %v243
    %v732 = vpop.f32.mrf.mxu0
    %v733 = vadd.f32 %v463, %v732
    %734 = vmatmul.f32.gmra.mxu0 %v246
    %v735 = vpop.f32.mrf.mxu0
    %v736 = vadd.f32 %v463, %v735
    %737 = vmatmul.f32.gmra.mxu0 %v249
    %v738 = vpop.f32.mrf.mxu0
    %v739 = vadd.f32 %v463, %v738
    %740 = vmatmul.f32.gmra.mxu0 %v252
    %v741 = vpop.f32.mrf.mxu0
    %v742 = vadd.f32 %v463, %v741
    %743 = vmatmul.f32.gmra.mxu0 %v255
    %v744 = vpop.f32.mrf.mxu0
    %v745 = vadd.f32 %v463, %v744
    %746 = vmatmul.f32.gmra.mxu0 %v258
    %v747 = vpop.f32.mrf.mxu0
    %v748 = vadd.f32 %v463, %v747
    %749 = vmatmul.f32.gmra.mxu0 %v261
    %v750 = vpop.f32.mrf.mxu0
    %v751 = vadd.f32 %v463, %v750
    %752 = vmatmul.f32.gmra.mxu0 %v264
    %v753 = vpop.f32.mrf.mxu0
    %v754 = vadd.f32 %v463, %v753
    %755 = vdwg.mxu0
    %756 = vmatpush.msra.mxu0 %v393
    %757 = vmatpush.msra.mxu0 %v389
    %758 = vmatpush.msra.mxu0 %v385
    %759 = vmatpush.msra.mxu0 %v381
    %760 = vmatpush.msra.mxu0 %v377
    %761 = vmatpush.msra.mxu0 %v373
    %762 = vmatpush.msra.mxu0 %v369
    %763 = vmatpush.msra.mxu0 %v365
    %764 = vmatpush.msra.mxu0 %v361
    %765 = vmatpush.msra.mxu0 %v357
    %766 = vmatpush.msra.mxu0 %v353
    %767 = vmatpush.msra.mxu0 %v349
    %768 = vmatpush.msra.mxu0 %v345
    %769 = vmatpush.msra.mxu0 %v341
    %770 = vmatpush.msra.mxu0 %v337
    %771 = vmatpush.msra.mxu0 %v333
    %772 = vmatmul.f32.gmra.mxu0 %v244
    %v773 = vpop.f32.mrf.mxu0
    %v774 = vadd.f32 %v733, %v773
    %775 = vmatmul.f32.gmra.mxu0 %v247
    %v776 = vpop.f32.mrf.mxu0
    %v777 = vadd.f32 %v736, %v776
    %778 = vmatmul.f32.gmra.mxu0 %v250
    %v779 = vpop.f32.mrf.mxu0
    %v780 = vadd.f32 %v739, %v779
    %781 = vmatmul.f32.gmra.mxu0 %v253
    %v782 = vpop.f32.mrf.mxu0
    %v783 = vadd.f32 %v742, %v782
    %784 = vmatmul.f32.gmra.mxu0 %v256
    %v785 = vpop.f32.mrf.mxu0
    %v786 = vadd.f32 %v745, %v785
    %787 = vmatmul.f32.gmra.mxu0 %v259
    %v788 = vpop.f32.mrf.mxu0
    %v789 = vadd.f32 %v748, %v788
    %790 = vmatmul.f32.gmra.mxu0 %v262
    %v791 = vpop.f32.mrf.mxu0
    %v792 = vadd.f32 %v751, %v791
    %793 = vmatmul.f32.gmra.mxu0 %v265
    %v794 = vpop.f32.mrf.mxu0
    %v795 = vadd.f32 %v754, %v794
    %796 = vdwg.mxu0
    %797 = vmatpush.msra.mxu0 %v457
    %798 = vmatpush.msra.mxu0 %v453
    %799 = vmatpush.msra.mxu0 %v449
    %800 = vmatpush.msra.mxu0 %v445
    %801 = vmatpush.msra.mxu0 %v441
    %802 = vmatpush.msra.mxu0 %v437
    %803 = vmatpush.msra.mxu0 %v433
    %804 = vmatpush.msra.mxu0 %v429
    %805 = vmatpush.msra.mxu0 %v425
    %806 = vmatpush.msra.mxu0 %v421
    %807 = vmatpush.msra.mxu0 %v417
    %808 = vmatpush.msra.mxu0 %v413
    %809 = vmatpush.msra.mxu0 %v409
    %810 = vmatpush.msra.mxu0 %v405
    %811 = vmatpush.msra.mxu0 %v401
    %812 = vmatpush.msra.mxu0 %v397
    %813 = vmatmul.f32.gmra.mxu0 %v245
    %v814 = vpop.f32.mrf.mxu0
    %v815 = vadd.f32 %v774, %v814
    %816 = vmatmul.f32.gmra.mxu0 %v248
    %v817 = vpop.f32.mrf.mxu0
    %v818 = vadd.f32 %v777, %v817
    %819 = vmatmul.f32.gmra.mxu0 %v251
    %v820 = vpop.f32.mrf.mxu0
    %v821 = vadd.f32 %v780, %v820
    %822 = vmatmul.f32.gmra.mxu0 %v254
    %v823 = vpop.f32.mrf.mxu0
    %v824 = vadd.f32 %v783, %v823
    %825 = vmatmul.f32.gmra.mxu0 %v257
    %v826 = vpop.f32.mrf.mxu0
    %v827 = vadd.f32 %v786, %v826
    %828 = vmatmul.f32.gmra.mxu0 %v260
    %v829 = vpop.f32.mrf.mxu0
    %v830 = vadd.f32 %v789, %v829
    %831 = vmatmul.f32.gmra.mxu0 %v263
    %v832 = vpop.f32.mrf.mxu0
    %v833 = vadd.f32 %v792, %v832
    %834 = vmatmul.f32.gmra.mxu0 %v266
    %v835 = vpop.f32.mrf.mxu0
    %v836 = vadd.f32 %v795, %v835
    %837 = vdwg.mxu0
    %838 = vmatpush.msra.mxu0 %v330
    %839 = vmatpush.msra.mxu0 %v326
    %840 = vmatpush.msra.mxu0 %v322
    %841 = vmatpush.msra.mxu0 %v318
    %842 = vmatpush.msra.mxu0 %v314
    %843 = vmatpush.msra.mxu0 %v310
    %844 = vmatpush.msra.mxu0 %v306
    %845 = vmatpush.msra.mxu0 %v302
    %846 = vmatpush.msra.mxu0 %v298
    %847 = vmatpush.msra.mxu0 %v294
    %848 = vmatpush.msra.mxu0 %v290
    %849 = vmatpush.msra.mxu0 %v286
    %850 = vmatpush.msra.mxu0 %v282
    %851 = vmatpush.msra.mxu0 %v278
    %852 = vmatpush.msra.mxu0 %v274
    %853 = vmatpush.msra.mxu0 %v270
    %854 = vmatmul.f32.gmra.mxu0 %v243
    %v855 = vpop.f32.mrf.mxu0
    %v856 = vadd.f32 %v464, %v855
    %857 = vmatmul.f32.gmra.mxu0 %v246
    %v858 = vpop.f32.mrf.mxu0
    %v859 = vadd.f32 %v464, %v858
    %860 = vmatmul.f32.gmra.mxu0 %v249
    %v861 = vpop.f32.mrf.mxu0
    %v862 = vadd.f32 %v464, %v861
    %863 = vmatmul.f32.gmra.mxu0 %v252
    %v864 = vpop.f32.mrf.mxu0
    %v865 = vadd.f32 %v464, %v864
    %866 = vmatmul.f32.gmra.mxu0 %v255
    %v867 = vpop.f32.mrf.mxu0
    %v868 = vadd.f32 %v464, %v867
    %869 = vmatmul.f32.gmra.mxu0 %v258
    %v870 = vpop.f32.mrf.mxu0
    %v871 = vadd.f32 %v464, %v870
    %872 = vmatmul.f32.gmra.mxu0 %v261
    %v873 = vpop.f32.mrf.mxu0
    %v874 = vadd.f32 %v464, %v873
    %875 = vmatmul.f32.gmra.mxu0 %v264
    %v876 = vpop.f32.mrf.mxu0
    %v877 = vadd.f32 %v464, %v876
    %878 = vdwg.mxu0
    %879 = vmatpush.msra.mxu0 %v394
    %880 = vmatpush.msra.mxu0 %v390
    %881 = vmatpush.msra.mxu0 %v386
    %882 = vmatpush.msra.mxu0 %v382
    %883 = vmatpush.msra.mxu0 %v378
    %884 = vmatpush.msra.mxu0 %v374
    %885 = vmatpush.msra.mxu0 %v370
    %886 = vmatpush.msra.mxu0 %v366
    %887 = vmatpush.msra.mxu0 %v362
    %888 = vmatpush.msra.mxu0 %v358
    %889 = vmatpush.msra.mxu0 %v354
    %890 = vmatpush.msra.mxu0 %v350
    %891 = vmatpush.msra.mxu0 %v346
    %892 = vmatpush.msra.mxu0 %v342
    %893 = vmatpush.msra.mxu0 %v338
    %894 = vmatpush.msra.mxu0 %v334
    %895 = vmatmul.f32.gmra.mxu0 %v244
    %v896 = vpop.f32.mrf.mxu0
    %v897 = vadd.f32 %v856, %v896
    %898 = vmatmul.f32.gmra.mxu0 %v247
    %v899 = vpop.f32.mrf.mxu0
    %v900 = vadd.f32 %v859, %v899
    %901 = vmatmul.f32.gmra.mxu0 %v250
    %v902 = vpop.f32.mrf.mxu0
    %v903 = vadd.f32 %v862, %v902
    %904 = vmatmul.f32.gmra.mxu0 %v253
    %v905 = vpop.f32.mrf.mxu0
    %v906 = vadd.f32 %v865, %v905
    %907 = vmatmul.f32.gmra.mxu0 %v256
    %v908 = vpop.f32.mrf.mxu0
    %v909 = vadd.f32 %v868, %v908
    %910 = vmatmul.f32.gmra.mxu0 %v259
    %v911 = vpop.f32.mrf.mxu0
    %v912 = vadd.f32 %v871, %v911
    %913 = vmatmul.f32.gmra.mxu0 %v262
    %v914 = vpop.f32.mrf.mxu0
    %v915 = vadd.f32 %v874, %v914
    %916 = vmatmul.f32.gmra.mxu0 %v265
    %v917 = vpop.f32.mrf.mxu0
    %v918 = vadd.f32 %v877, %v917
    %919 = vdwg.mxu0
    %920 = vmatpush.msra.mxu0 %v458
    %921 = vmatpush.msra.mxu0 %v454
    %922 = vmatpush.msra.mxu0 %v450
    %923 = vmatpush.msra.mxu0 %v446
    %924 = vmatpush.msra.mxu0 %v442
    %925 = vmatpush.msra.mxu0 %v438
    %926 = vmatpush.msra.mxu0 %v434
    %927 = vmatpush.msra.mxu0 %v430
    %928 = vmatpush.msra.mxu0 %v426
    %929 = vmatpush.msra.mxu0 %v422
    %930 = vmatpush.msra.mxu0 %v418
    %931 = vmatpush.msra.mxu0 %v414
    %932 = vmatpush.msra.mxu0 %v410
    %933 = vmatpush.msra.mxu0 %v406
    %934 = vmatpush.msra.mxu0 %v402
    %935 = vmatpush.msra.mxu0 %v398
    %936 = vmatmul.f32.gmra.mxu0 %v245
    %v937 = vpop.f32.mrf.mxu0
    %v938 = vadd.f32 %v897, %v937
    %939 = vmatmul.f32.gmra.mxu0 %v248
    %v940 = vpop.f32.mrf.mxu0
    %v941 = vadd.f32 %v900, %v940
    %942 = vmatmul.f32.gmra.mxu0 %v251
    %v943 = vpop.f32.mrf.mxu0
    %v944 = vadd.f32 %v903, %v943
    %945 = vmatmul.f32.gmra.mxu0 %v254
    %v946 = vpop.f32.mrf.mxu0
    %v947 = vadd.f32 %v906, %v946
    %948 = vmatmul.f32.gmra.mxu0 %v257
    %v949 = vpop.f32.mrf.mxu0
    %v950 = vadd.f32 %v909, %v949
    %951 = vmatmul.f32.gmra.mxu0 %v260
    %v952 = vpop.f32.mrf.mxu0
    %v953 = vadd.f32 %v912, %v952
    %954 = vmatmul.f32.gmra.mxu0 %v263
    %v955 = vpop.f32.mrf.mxu0
    %v956 = vadd.f32 %v915, %v955
    %957 = vmatmul.f32.gmra.mxu0 %v266
    %v958 = vpop.f32.mrf.mxu0
    %v959 = vadd.f32 %v918, %v958
    %960 = vdwg.mxu0
    %961 = vst [vmem:[#allocation2] sm:$0xff] %v569
    %962 = vst [vmem:[#allocation2 + $0x8] sm:$0xff] %v692
    %963 = vst [vmem:[#allocation2 + $0x10] sm:$0xff] %v815
    %964 = vst [vmem:[#allocation2 + $0x18] sm:$0xff] %v938
    %965 = vst [vmem:[#allocation2 + $0x20] sm:$0xff] %v572
    %966 = vst [vmem:[#allocation2 + $0x28] sm:$0xff] %v695
    %967 = vst [vmem:[#allocation2 + $0x30] sm:$0xff] %v818
    %968 = vst [vmem:[#allocation2 + $0x38] sm:$0xff] %v941
    %969 = vst [vmem:[#allocation2 + $0x40] sm:$0xff] %v575
    %970 = vst [vmem:[#allocation2 + $0x48] sm:$0xff] %v698
    %971 = vst [vmem:[#allocation2 + $0x50] sm:$0xff] %v821
    %972 = vst [vmem:[#allocation2 + $0x58] sm:$0xff] %v944
    %973 = vst [vmem:[#allocation2 + $0x60] sm:$0xff] %v578
    %974 = vst [vmem:[#allocation2 + $0x68] sm:$0xff] %v701
    %975 = vst [vmem:[#allocation2 + $0x70] sm:$0xff] %v824
    %976 = vst [vmem:[#allocation2 + $0x78] sm:$0xff] %v947
    %977 = vst [vmem:[#allocation2 + $0x80] sm:$0xff] %v581
    %978 = vst [vmem:[#allocation2 + $0x88] sm:$0xff] %v704
    %979 = vst [vmem:[#allocation2 + $0x90] sm:$0xff] %v827
    %980 = vst [vmem:[#allocation2 + $0x98] sm:$0xff] %v950
    %981 = vst [vmem:[#allocation2 + $0xa0] sm:$0xff] %v584
    %982 = vst [vmem:[#allocation2 + $0xa8] sm:$0xff] %v707
    %983 = vst [vmem:[#allocation2 + $0xb0] sm:$0xff] %v830
    %984 = vst [vmem:[#allocation2 + $0xb8] sm:$0xff] %v953
    %985 = vst [vmem:[#allocation2 + $0xc0] sm:$0xff] %v587
    %986 = vst [vmem:[#allocation2 + $0xc8] sm:$0xff] %v710
    %987 = vst [vmem:[#allocation2 + $0xd0] sm:$0xff] %v833
    %988 = vst [vmem:[#allocation2 + $0xd8] sm:$0xff] %v956
    %989 = vst [vmem:[#allocation2 + $0xe0] sm:$0xff] %v590
    %990 = vst [vmem:[#allocation2 + $0xe8] sm:$0xff] %v713
    %991 = vst [vmem:[#allocation2 + $0xf0] sm:$0xff] %v836
    %992 = vst [vmem:[#allocation2 + $0xf8] sm:$0xff] %v959
    %v993 = vld [vmem:[#allocation18] sm:$0xff]
    %v994 = vld [vmem:[#allocation19] sm:$0xff]
    %v995 = vld [vmem:[#allocation2] sm:$0xff]
    %v996 = vld [vmem:[#allocation2 + $0x8] sm:$0xff]
    %v997 = vld [vmem:[#allocation2 + $0x10] sm:$0xff]
    %v998 = vld [vmem:[#allocation2 + $0x18] sm:$0xff]
    %v999 = vld [vmem:[#allocation9] sm:$0xff]
    %v1000 = vld [vmem:[#allocation9 + $0x8] sm:$0xff]
    %v1001 = vld [vmem:[#allocation9 + $0x10] sm:$0xff]
    %v1002 = vld [vmem:[#allocation9 + $0x18] sm:$0xff]
    %v1003 = vld [vmem:[#allocation9 + $0x20] sm:$0xff]
    %v1004 = vld [vmem:[#allocation9 + $0x28] sm:$0xff]
    %v1005 = vld [vmem:[#allocation9 + $0x30] sm:$0xff]
    %v1006 = vld [vmem:[#allocation9 + $0x38] sm:$0xff]
    %v1007 = vld [vmem:[#allocation9 + $0x40] sm:$0xff]
    %v1008 = vld [vmem:[#allocation9 + $0x48] sm:$0xff]
    %v1009 = vld [vmem:[#allocation9 + $0x50] sm:$0xff]
    %v1010 = vld [vmem:[#allocation9 + $0x58] sm:$0xff]
    %v1011 = vld [vmem:[#allocation9 + $0x60] sm:$0xff]
    %v1012 = vld [vmem:[#allocation9 + $0x68] sm:$0xff]
    %v1013 = vld [vmem:[#allocation9 + $0x70] sm:$0xff]
    %v1014 = vld [vmem:[#allocation9 + $0x78] sm:$0xff]
    %v1015 = vld [vmem:[#allocation9 + $0x80] sm:$0xff]
    %v1016 = vld [vmem:[#allocation9 + $0x88] sm:$0xff]
    %v1017 = vld [vmem:[#allocation9 + $0x90] sm:$0xff]
    %v1018 = vld [vmem:[#allocation9 + $0x98] sm:$0xff]
    %v1019 = vld [vmem:[#allocation9 + $0xa0] sm:$0xff]
    %v1020 = vld [vmem:[#allocation9 + $0xa8] sm:$0xff]
    %v1021 = vld [vmem:[#allocation9 + $0xb0] sm:$0xff]
    %v1022 = vld [vmem:[#allocation9 + $0xb8] sm:$0xff]
    %v1023 = vld [vmem:[#allocation9 + $0xc0] sm:$0xff]
    %v1024 = vld [vmem:[#allocation9 + $0xc8] sm:$0xff]
    %v1025 = vld [vmem:[#allocation9 + $0xd0] sm:$0xff]
    %v1026 = vld [vmem:[#allocation9 + $0xd8] sm:$0xff]
    %v1027 = vld [vmem:[#allocation9 + $0xe0] sm:$0xff]
    %v1028 = vld [vmem:[#allocation9 + $0xe8] sm:$0xff]
    %v1029 = vld [vmem:[#allocation9 + $0xf0] sm:$0xff]
    %v1030 = vld [vmem:[#allocation9 + $0xf8] sm:$0xff]
    %v1031 = vld [vmem:[#allocation9 + $0x100] sm:$0xff]
    %v1032 = vld [vmem:[#allocation9 + $0x108] sm:$0xff]
    %v1033 = vld [vmem:[#allocation9 + $0x110] sm:$0xff]
    %v1034 = vld [vmem:[#allocation9 + $0x118] sm:$0xff]
    %v1035 = vld [vmem:[#allocation9 + $0x120] sm:$0xff]
    %v1036 = vld [vmem:[#allocation9 + $0x128] sm:$0xff]
    %v1037 = vld [vmem:[#allocation9 + $0x130] sm:$0xff]
    %v1038 = vld [vmem:[#allocation9 + $0x138] sm:$0xff]
    %v1039 = vld [vmem:[#allocation9 + $0x140] sm:$0xff]
    %v1040 = vld [vmem:[#allocation9 + $0x148] sm:$0xff]
    %v1041 = vld [vmem:[#allocation9 + $0x150] sm:$0xff]
    %v1042 = vld [vmem:[#allocation9 + $0x158] sm:$0xff]
    %v1043 = vld [vmem:[#allocation9 + $0x160] sm:$0xff]
    %v1044 = vld [vmem:[#allocation9 + $0x168] sm:$0xff]
    %v1045 = vld [vmem:[#allocation9 + $0x170] sm:$0xff]
    %v1046 = vld [vmem:[#allocation9 + $0x178] sm:$0xff]
    %v1047 = vld [vmem:[#allocation9 + $0x180] sm:$0xff]
    %v1048 = vld [vmem:[#allocation9 + $0x188] sm:$0xff]
    %v1049 = vld [vmem:[#allocation9 + $0x190] sm:$0xff]
    %v1050 = vld [vmem:[#allocation9 + $0x198] sm:$0xff]
    %v1051 = vld [vmem:[#allocation9 + $0x1a0] sm:$0xff]
    %v1052 = vld [vmem:[#allocation9 + $0x1a8] sm:$0xff]
    %v1053 = vld [vmem:[#allocation9 + $0x1b0] sm:$0xff]
    %v1054 = vld [vmem:[#allocation9 + $0x1b8] sm:$0xff]
    %v1055 = vld [vmem:[#allocation9 + $0x1c0] sm:$0xff]
    %v1056 = vld [vmem:[#allocation9 + $0x1c8] sm:$0xff]
    %v1057 = vld [vmem:[#allocation9 + $0x1d0] sm:$0xff]
    %v1058 = vld [vmem:[#allocation9 + $0x1d8] sm:$0xff]
    %v1059 = vld [vmem:[#allocation9 + $0x1e0] sm:$0xff]
    %v1060 = vld [vmem:[#allocation9 + $0x1e8] sm:$0xff]
    %v1061 = vld [vmem:[#allocation9 + $0x1f0] sm:$0xff]
    %v1062 = vld [vmem:[#allocation9 + $0x1f8] sm:$0xff]
    %1063 = vmatpush.msra.mxu0 %v1059
    %1064 = vmatpush.msra.mxu0 %v1055
    %1065 = vmatpush.msra.mxu0 %v1051
    %1066 = vmatpush.msra.mxu0 %v1047
    %1067 = vmatpush.msra.mxu0 %v1043
    %1068 = vmatpush.msra.mxu0 %v1039
    %1069 = vmatpush.msra.mxu0 %v1035
    %1070 = vmatpush.msra.mxu0 %v1031
    %1071 = vmatpush.msra.mxu0 %v1027
    %1072 = vmatpush.msra.mxu0 %v1023
    %1073 = vmatpush.msra.mxu0 %v1019
    %1074 = vmatpush.msra.mxu0 %v1015
    %1075 = vmatpush.msra.mxu0 %v1011
    %1076 = vmatpush.msra.mxu0 %v1007
    %1077 = vmatpush.msra.mxu0 %v1003
    %1078 = vmatpush.msra.mxu0 %v999
    %1079 = vmatmul.f32.gmra.mxu0 %v993
    %v1080 = vpop.f32.mrf.mxu0
    %v1081 = vadd.f32 0.0, %v1080
    %1082 = vdwg.mxu0
    %1083 = vmatpush.msra.mxu0 %v1060
    %1084 = vmatpush.msra.mxu0 %v1056
    %1085 = vmatpush.msra.mxu0 %v1052
    %1086 = vmatpush.msra.mxu0 %v1048
    %1087 = vmatpush.msra.mxu0 %v1044
    %1088 = vmatpush.msra.mxu0 %v1040
    %1089 = vmatpush.msra.mxu0 %v1036
    %1090 = vmatpush.msra.mxu0 %v1032
    %1091 = vmatpush.msra.mxu0 %v1028
    %1092 = vmatpush.msra.mxu0 %v1024
    %1093 = vmatpush.msra.mxu0 %v1020
    %1094 = vmatpush.msra.mxu0 %v1016
    %1095 = vmatpush.msra.mxu0 %v1012
    %1096 = vmatpush.msra.mxu0 %v1008
    %1097 = vmatpush.msra.mxu0 %v1004
    %1098 = vmatpush.msra.mxu0 %v1000
    %1099 = vmatmul.f32.gmra.mxu0 %v993
    %v1100 = vpop.f32.mrf.mxu0
    %v1101 = vadd.f32 0.0, %v1100
    %1102 = vdwg.mxu0
    %1103 = vmatpush.msra.mxu0 %v1061
    %1104 = vmatpush.msra.mxu0 %v1057
    %1105 = vmatpush.msra.mxu0 %v1053
    %1106 = vmatpush.msra.mxu0 %v1049
    %1107 = vmatpush.msra.mxu0 %v1045
    %1108 = vmatpush.msra.mxu0 %v1041
    %1109 = vmatpush.msra.mxu0 %v1037
    %1110 = vmatpush.msra.mxu0 %v1033
    %1111 = vmatpush.msra.mxu0 %v1029
    %1112 = vmatpush.msra.mxu0 %v1025
    %1113 = vmatpush.msra.mxu0 %v1021
    %1114 = vmatpush.msra.mxu0 %v1017
    %1115 = vmatpush.msra.mxu0 %v1013
    %1116 = vmatpush.msra.mxu0 %v1009
    %1117 = vmatpush.msra.mxu0 %v1005
    %1118 = vmatpush.msra.mxu0 %v1001
    %1119 = vmatmul.f32.gmra.mxu0 %v993
    %v1120 = vpop.f32.mrf.mxu0
    %v1121 = vadd.f32 0.0, %v1120
    %1122 = vdwg.mxu0
    %1123 = vmatpush.msra.mxu0 %v1062
    %1124 = vmatpush.msra.mxu0 %v1058
    %1125 = vmatpush.msra.mxu0 %v1054
    %1126 = vmatpush.msra.mxu0 %v1050
    %1127 = vmatpush.msra.mxu0 %v1046
    %1128 = vmatpush.msra.mxu0 %v1042
    %1129 = vmatpush.msra.mxu0 %v1038
    %1130 = vmatpush.msra.mxu0 %v1034
    %1131 = vmatpush.msra.mxu0 %v1030
    %1132 = vmatpush.msra.mxu0 %v1026
    %1133 = vmatpush.msra.mxu0 %v1022
    %1134 = vmatpush.msra.mxu0 %v1018
    %1135 = vmatpush.msra.mxu0 %v1014
    %1136 = vmatpush.msra.mxu0 %v1010
    %1137 = vmatpush.msra.mxu0 %v1006
    %1138 = vmatpush.msra.mxu0 %v1002
    %1139 = vmatmul.f32.gmra.mxu0 %v993
    %v1140 = vpop.f32.mrf.mxu0
    %v1141 = vadd.f32 0.0, %v1140
    %1142 = vdwg.mxu0
    %v1143 = vadd.f32 %v995, %v1081
    %v1144 = vadd.f32 %v996, %v1101
    %v1145 = vadd.f32 %v997, %v1121
    %v1146 = vadd.f32 %v998, %v1141
    %v1147 = vxor.u32 %v1143, 2147483648
    %v1148 = vmul.f32 %v1147, 1.442695
    %v1149 = vpow.pop %v1148
    %v1150 = vadd.f32 %v1149, 1.0
    %v1151 = vrcp.pop %v1150
    %v1152 = vmul.f32 %v1150, %v1151
    %v1153 = vsub.f32 1.0, %v1152
    %v1154 = vmul.f32 %v1151, %v1153
    %v1155 = vadd.f32 %v1151, %v1154
    %vm1156 = vweird.f32 %v1150
    %vm1157 = vweird.f32 %v1151
    %vm1158 = vmor %vm1156, %vm1157
    %v1159 = vsel %vm1158, %v1151, %v1155
    %v1160 = vand.u32 2147483647, %v1150
    %vm1161 = vcmp.eq.f32.partialorder %v1160, 8.507059e+37
    %v1162 = vand.u32 %v1150, 2147483648
    %v1163 = vor.u32 1.1754944e-38, %v1162
    %v1164 = vsel %vm1161, %v1163, %v1159
    %v1165 = vmul.f32 1.0, %v1164
    %v1166 = vxor.u32 %v1144, 2147483648
    %v1167 = vmul.f32 %v1166, 1.442695
    %v1168 = vpow.pop %v1167
    %v1169 = vadd.f32 %v1168, 1.0
    %v1170 = vrcp.pop %v1169
    %v1171 = vmul.f32 %v1169, %v1170
    %v1172 = vsub.f32 1.0, %v1171
    %v1173 = vmul.f32 %v1170, %v1172
    %v1174 = vadd.f32 %v1170, %v1173
    %vm1175 = vweird.f32 %v1169
    %vm1176 = vweird.f32 %v1170
    %vm1177 = vmor %vm1175, %vm1176
    %v1178 = vsel %vm1177, %v1170, %v1174
    %v1179 = vand.u32 2147483647, %v1169
    %vm1180 = vcmp.eq.f32.partialorder %v1179, 8.507059e+37
    %v1181 = vand.u32 %v1169, 2147483648
    %v1182 = vor.u32 1.1754944e-38, %v1181
    %v1183 = vsel %vm1180, %v1182, %v1178
    %v1184 = vmul.f32 1.0, %v1183
    %v1185 = vtanh.pop %v1145
    %v1186 = vxor.u32 %v1146, 2147483648
    %v1187 = vmul.f32 %v1186, 1.442695
    %v1188 = vpow.pop %v1187
    %v1189 = vadd.f32 %v1188, 1.0
    %v1190 = vrcp.pop %v1189
    %v1191 = vmul.f32 %v1189, %v1190
    %v1192 = vsub.f32 1.0, %v1191
    %v1193 = vmul.f32 %v1190, %v1192
    %v1194 = vadd.f32 %v1190, %v1193
    %vm1195 = vweird.f32 %v1189
    %vm1196 = vweird.f32 %v1190
    %vm1197 = vmor %vm1195, %vm1196
    %v1198 = vsel %vm1197, %v1190, %v1194
    %v1199 = vand.u32 2147483647, %v1189
    %vm1200 = vcmp.eq.f32.partialorder %v1199, 8.507059e+37
    %v1201 = vand.u32 %v1189, 2147483648
    %v1202 = vor.u32 1.1754944e-38, %v1201
    %v1203 = vsel %vm1200, %v1202, %v1198
    %v1204 = vmul.f32 1.0, %v1203
    %v1205 = vmul.f32 %v1184, %v994
    %v1206 = vmul.f32 %v1165, %v1185
    %v1207 = vadd.f32 %v1205, %v1206
    %v1208 = vtanh.pop %v1207
    %v1209 = vmul.f32 %v1204, %v1208
    %1210 = vst [vmem:[#allocation3] sm:$0xff] %v1209
    %v1211 = vld [vmem:[#allocation2 + $0x20] sm:$0xff]
    %v1212 = vld [vmem:[#allocation2 + $0x28] sm:$0xff]
    %v1213 = vld [vmem:[#allocation2 + $0x30] sm:$0xff]
    %v1214 = vld [vmem:[#allocation2 + $0x38] sm:$0xff]
    %v1215 = vld [vmem:[#allocation9] sm:$0xff]
    %v1216 = vld [vmem:[#allocation9 + $0x8] sm:$0xff]
    %v1217 = vld [vmem:[#allocation9 + $0x10] sm:$0xff]
    %v1218 = vld [vmem:[#allocation9 + $0x18] sm:$0xff]
    %v1219 = vld [vmem:[#allocation9 + $0x20] sm:$0xff]
    %v1220 = vld [vmem:[#allocation9 + $0x28] sm:$0xff]
    %v1221 = vld [vmem:[#allocation9 + $0x30] sm:$0xff]
    %v1222 = vld [vmem:[#allocation9 + $0x38] sm:$0xff]
    %v1223 = vld [vmem:[#allocation9 + $0x40] sm:$0xff]
    %v1224 = vld [vmem:[#allocation9 + $0x48] sm:$0xff]
    %v1225 = vld [vmem:[#allocation9 + $0x50] sm:$0xff]
    %v1226 = vld [vmem:[#allocation9 + $0x58] sm:$0xff]
    %v1227 = vld [vmem:[#allocation9 + $0x60] sm:$0xff]
    %v1228 = vld [vmem:[#allocation9 + $0x68] sm:$0xff]
    %v1229 = vld [vmem:[#allocation9 + $0x70] sm:$0xff]
    %v1230 = vld [vmem:[#allocation9 + $0x78] sm:$0xff]
    %v1231 = vld [vmem:[#allocation9 + $0x80] sm:$0xff]
    %v1232 = vld [vmem:[#allocation9 + $0x88] sm:$0xff]
    %v1233 = vld [vmem:[#allocation9 + $0x90] sm:$0xff]
    %v1234 = vld [vmem:[#allocation9 + $0x98] sm:$0xff]
    %v1235 = vld [vmem:[#allocation9 + $0xa0] sm:$0xff]
    %v1236 = vld [vmem:[#allocation9 + $0xa8] sm:$0xff]
    %v1237 = vld [vmem:[#allocation9 + $0xb0] sm:$0xff]
    %v1238 = vld [vmem:[#allocation9 + $0xb8] sm:$0xff]
    %v1239 = vld [vmem:[#allocation9 + $0xc0] sm:$0xff]
    %v1240 = vld [vmem:[#allocation9 + $0xc8] sm:$0xff]
    %v1241 = vld [vmem:[#allocation9 + $0xd0] sm:$0xff]
    %v1242 = vld [vmem:[#allocation9 + $0xd8] sm:$0xff]
    %v1243 = vld [vmem:[#allocation9 + $0xe0] sm:$0xff]
    %v1244 = vld [vmem:[#allocation9 + $0xe8] sm:$0xff]
    %v1245 = vld [vmem:[#allocation9 + $0xf0] sm:$0xff]
    %v1246 = vld [vmem:[#allocation9 + $0xf8] sm:$0xff]
    %v1247 = vld [vmem:[#allocation9 + $0x100] sm:$0xff]
    %v1248 = vld [vmem:[#allocation9 + $0x108] sm:$0xff]
    %v1249 = vld [vmem:[#allocation9 + $0x110] sm:$0xff]
    %v1250 = vld [vmem:[#allocation9 + $0x118] sm:$0xff]
    %v1251 = vld [vmem:[#allocation9 + $0x120] sm:$0xff]
    %v1252 = vld [vmem:[#allocation9 + $0x128] sm:$0xff]
    %v1253 = vld [vmem:[#allocation9 + $0x130] sm:$0xff]
    %v1254 = vld [vmem:[#allocation9 + $0x138] sm:$0xff]
    %v1255 = vld [vmem:[#allocation9 + $0x140] sm:$0xff]
    %v1256 = vld [vmem:[#allocation9 + $0x148] sm:$0xff]
    %v1257 = vld [vmem:[#allocation9 + $0x150] sm:$0xff]
    %v1258 = vld [vmem:[#allocation9 + $0x158] sm:$0xff]
    %v1259 = vld [vmem:[#allocation9 + $0x160] sm:$0xff]
    %v1260 = vld [vmem:[#allocation9 + $0x168] sm:$0xff]
    %v1261 = vld [vmem:[#allocation9 + $0x170] sm:$0xff]
    %v1262 = vld [vmem:[#allocation9 + $0x178] sm:$0xff]
    %v1263 = vld [vmem:[#allocation9 + $0x180] sm:$0xff]
    %v1264 = vld [vmem:[#allocation9 + $0x188] sm:$0xff]
    %v1265 = vld [vmem:[#allocation9 + $0x190] sm:$0xff]
    %v1266 = vld [vmem:[#allocation9 + $0x198] sm:$0xff]
    %v1267 = vld [vmem:[#allocation9 + $0x1a0] sm:$0xff]
    %v1268 = vld [vmem:[#allocation9 + $0x1a8] sm:$0xff]
    %v1269 = vld [vmem:[#allocation9 + $0x1b0] sm:$0xff]
    %v1270 = vld [vmem:[#allocation9 + $0x1b8] sm:$0xff]
    %v1271 = vld [vmem:[#allocation9 + $0x1c0] sm:$0xff]
    %v1272 = vld [vmem:[#allocation9 + $0x1c8] sm:$0xff]
    %v1273 = vld [vmem:[#allocation9 + $0x1d0] sm:$0xff]
    %v1274 = vld [vmem:[#allocation9 + $0x1d8] sm:$0xff]
    %v1275 = vld [vmem:[#allocation9 + $0x1e0] sm:$0xff]
    %v1276 = vld [vmem:[#allocation9 + $0x1e8] sm:$0xff]
    %v1277 = vld [vmem:[#allocation9 + $0x1f0] sm:$0xff]
    %v1278 = vld [vmem:[#allocation9 + $0x1f8] sm:$0xff]
    %1279 = vmatpush.msra.mxu0 %v1275
    %1280 = vmatpush.msra.mxu0 %v1271
    %1281 = vmatpush.msra.mxu0 %v1267
    %1282 = vmatpush.msra.mxu0 %v1263
    %1283 = vmatpush.msra.mxu0 %v1259
    %1284 = vmatpush.msra.mxu0 %v1255
    %1285 = vmatpush.msra.mxu0 %v1251
    %1286 = vmatpush.msra.mxu0 %v1247
    %1287 = vmatpush.msra.mxu0 %v1243
    %1288 = vmatpush.msra.mxu0 %v1239
    %1289 = vmatpush.msra.mxu0 %v1235
    %1290 = vmatpush.msra.mxu0 %v1231
    %1291 = vmatpush.msra.mxu0 %v1227
    %1292 = vmatpush.msra.mxu0 %v1223
    %1293 = vmatpush.msra.mxu0 %v1219
    %1294 = vmatpush.msra.mxu0 %v1215
    %1295 = vmatmul.f32.gmra.mxu0 %v1209
    %v1296 = vpop.f32.mrf.mxu0
    %v1297 = vadd.f32 0.0, %v1296
    %1298 = vdwg.mxu0
    %1299 = vmatpush.msra.mxu0 %v1276
    %1300 = vmatpush.msra.mxu0 %v1272
    %1301 = vmatpush.msra.mxu0 %v1268
    %1302 = vmatpush.msra.mxu0 %v1264
    %1303 = vmatpush.msra.mxu0 %v1260
    %1304 = vmatpush.msra.mxu0 %v1256
    %1305 = vmatpush.msra.mxu0 %v1252
    %1306 = vmatpush.msra.mxu0 %v1248
    %1307 = vmatpush.msra.mxu0 %v1244
    %1308 = vmatpush.msra.mxu0 %v1240
    %1309 = vmatpush.msra.mxu0 %v1236
    %1310 = vmatpush.msra.mxu0 %v1232
    %1311 = vmatpush.msra.mxu0 %v1228
    %1312 = vmatpush.msra.mxu0 %v1224
    %1313 = vmatpush.msra.mxu0 %v1220
    %1314 = vmatpush.msra.mxu0 %v1216
    %1315 = vmatmul.f32.gmra.mxu0 %v1209
    %v1316 = vpop.f32.mrf.mxu0
    %v1317 = vadd.f32 0.0, %v1316
    %1318 = vdwg.mxu0
    %1319 = vmatpush.msra.mxu0 %v1277
    %1320 = vmatpush.msra.mxu0 %v1273
    %1321 = vmatpush.msra.mxu0 %v1269
    %1322 = vmatpush.msra.mxu0 %v1265
    %1323 = vmatpush.msra.mxu0 %v1261
    %1324 = vmatpush.msra.mxu0 %v1257
    %1325 = vmatpush.msra.mxu0 %v1253
    %1326 = vmatpush.msra.mxu0 %v1249
    %1327 = vmatpush.msra.mxu0 %v1245
    %1328 = vmatpush.msra.mxu0 %v1241
    %1329 = vmatpush.msra.mxu0 %v1237
    %1330 = vmatpush.msra.mxu0 %v1233
    %1331 = vmatpush.msra.mxu0 %v1229
    %1332 = vmatpush.msra.mxu0 %v1225
    %1333 = vmatpush.msra.mxu0 %v1221
    %1334 = vmatpush.msra.mxu0 %v1217
    %1335 = vmatmul.f32.gmra.mxu0 %v1209
    %v1336 = vpop.f32.mrf.mxu0
    %v1337 = vadd.f32 0.0, %v1336
    %1338 = vdwg.mxu0
    %1339 = vmatpush.msra.mxu0 %v1278
    %1340 = vmatpush.msra.mxu0 %v1274
    %1341 = vmatpush.msra.mxu0 %v1270
    %1342 = vmatpush.msra.mxu0 %v1266
    %1343 = vmatpush.msra.mxu0 %v1262
    %1344 = vmatpush.msra.mxu0 %v1258
    %1345 = vmatpush.msra.mxu0 %v1254
    %1346 = vmatpush.msra.mxu0 %v1250
    %1347 = vmatpush.msra.mxu0 %v1246
    %1348 = vmatpush.msra.mxu0 %v1242
    %1349 = vmatpush.msra.mxu0 %v1238
    %1350 = vmatpush.msra.mxu0 %v1234
    %1351 = vmatpush.msra.mxu0 %v1230
    %1352 = vmatpush.msra.mxu0 %v1226
    %1353 = vmatpush.msra.mxu0 %v1222
    %1354 = vmatpush.msra.mxu0 %v1218
    %1355 = vmatmul.f32.gmra.mxu0 %v1209
    %v1356 = vpop.f32.mrf.mxu0
    %v1357 = vadd.f32 0.0, %v1356
    %1358 = vdwg.mxu0
    %v1359 = vadd.f32 %v1211, %v1297
    %v1360 = vadd.f32 %v1212, %v1317
    %v1361 = vadd.f32 %v1213, %v1337
    %v1362 = vadd.f32 %v1214, %v1357
    %v1363 = vxor.u32 %v1359, 2147483648
    %v1364 = vmul.f32 %v1363, 1.442695
    %v1365 = vpow.pop %v1364
    %v1366 = vadd.f32 %v1365, 1.0
    %v1367 = vrcp.pop %v1366
    %v1368 = vmul.f32 %v1366, %v1367
    %v1369 = vsub.f32 1.0, %v1368
    %v1370 = vmul.f32 %v1367, %v1369
    %v1371 = vadd.f32 %v1367, %v1370
    %vm1372 = vweird.f32 %v1366
    %vm1373 = vweird.f32 %v1367
    %vm1374 = vmor %vm1372, %vm1373
    %v1375 = vsel %vm1374, %v1367, %v1371
    %v1376 = vand.u32 2147483647, %v1366
    %vm1377 = vcmp.eq.f32.partialorder %v1376, 8.507059e+37
    %v1378 = vand.u32 %v1366, 2147483648
    %v1379 = vor.u32 1.1754944e-38, %v1378
    %v1380 = vsel %vm1377, %v1379, %v1375
    %v1381 = vmul.f32 1.0, %v1380
    %v1382 = vxor.u32 %v1360, 2147483648
    %v1383 = vmul.f32 %v1382, 1.442695
    %v1384 = vpow.pop %v1383
    %v1385 = vadd.f32 %v1384, 1.0
    %v1386 = vrcp.pop %v1385
    %v1387 = vmul.f32 %v1385, %v1386
    %v1388 = vsub.f32 1.0, %v1387
    %v1389 = vmul.f32 %v1386, %v1388
    %v1390 = vadd.f32 %v1386, %v1389
    %vm1391 = vweird.f32 %v1385
    %vm1392 = vweird.f32 %v1386
    %vm1393 = vmor %vm1391, %vm1392
    %v1394 = vsel %vm1393, %v1386, %v1390
    %v1395 = vand.u32 2147483647, %v1385
    %vm1396 = vcmp.eq.f32.partialorder %v1395, 8.507059e+37
    %v1397 = vand.u32 %v1385, 2147483648
    %v1398 = vor.u32 1.1754944e-38, %v1397
    %v1399 = vsel %vm1396, %v1398, %v1394
    %v1400 = vmul.f32 1.0, %v1399
    %v1401 = vtanh.pop %v1361
    %v1402 = vxor.u32 %v1362, 2147483648
    %v1403 = vmul.f32 %v1402, 1.442695
    %v1404 = vpow.pop %v1403
    %v1405 = vadd.f32 %v1404, 1.0
    %v1406 = vrcp.pop %v1405
    %v1407 = vmul.f32 %v1405, %v1406
    %v1408 = vsub.f32 1.0, %v1407
    %v1409 = vmul.f32 %v1406, %v1408
    %v1410 = vadd.f32 %v1406, %v1409
    %vm1411 = vweird.f32 %v1405
    %vm1412 = vweird.f32 %v1406
    %vm1413 = vmor %vm1411, %vm1412
    %v1414 = vsel %vm1413, %v1406, %v1410
    %v1415 = vand.u32 2147483647, %v1405
    %vm1416 = vcmp.eq.f32.partialorder %v1415, 8.507059e+37
    %v1417 = vand.u32 %v1405, 2147483648
    %v1418 = vor.u32 1.1754944e-38, %v1417
    %v1419 = vsel %vm1416, %v1418, %v1414
    %v1420 = vmul.f32 1.0, %v1419
    %v1421 = vmul.f32 %v1400, %v1207
    %v1422 = vmul.f32 %v1381, %v1401
    %v1423 = vadd.f32 %v1421, %v1422
    %v1424 = vtanh.pop %v1423
    %v1425 = vmul.f32 %v1420, %v1424
    %1426 = vst [vmem:[#allocation3 + $0x8] sm:$0xff] %v1425
    %v1427 = vld [vmem:[#allocation2 + $0x40] sm:$0xff]
    %v1428 = vld [vmem:[#allocation2 + $0x48] sm:$0xff]
    %v1429 = vld [vmem:[#allocation2 + $0x50] sm:$0xff]
    %v1430 = vld [vmem:[#allocation2 + $0x58] sm:$0xff]
    %v1431 = vld [vmem:[#allocation9] sm:$0xff]
    %v1432 = vld [vmem:[#allocation9 + $0x8] sm:$0xff]
    %v1433 = vld [vmem:[#allocation9 + $0x10] sm:$0xff]
    %v1434 = vld [vmem:[#allocation9 + $0x18] sm:$0xff]
    %v1435 = vld [vmem:[#allocation9 + $0x20] sm:$0xff]
    %v1436 = vld [vmem:[#allocation9 + $0x28] sm:$0xff]
    %v1437 = vld [vmem:[#allocation9 + $0x30] sm:$0xff]
    %v1438 = vld [vmem:[#allocation9 + $0x38] sm:$0xff]
    %v1439 = vld [vmem:[#allocation9 + $0x40] sm:$0xff]
    %v1440 = vld [vmem:[#allocation9 + $0x48] sm:$0xff]
    %v1441 = vld [vmem:[#allocation9 + $0x50] sm:$0xff]
    %v1442 = vld [vmem:[#allocation9 + $0x58] sm:$0xff]
    %v1443 = vld [vmem:[#allocation9 + $0x60] sm:$0xff]
    %v1444 = vld [vmem:[#allocation9 + $0x68] sm:$0xff]
    %v1445 = vld [vmem:[#allocation9 + $0x70] sm:$0xff]
    %v1446 = vld [vmem:[#allocation9 + $0x78] sm:$0xff]
    %v1447 = vld [vmem:[#allocation9 + $0x80] sm:$0xff]
    %v1448 = vld [vmem:[#allocation9 + $0x88] sm:$0xff]
    %v1449 = vld [vmem:[#allocation9 + $0x90] sm:$0xff]
    %v1450 = vld [vmem:[#allocation9 + $0x98] sm:$0xff]
    %v1451 = vld [vmem:[#allocation9 + $0xa0] sm:$0xff]
    %v1452 = vld [vmem:[#allocation9 + $0xa8] sm:$0xff]
    %v1453 = vld [vmem:[#allocation9 + $0xb0] sm:$0xff]
    %v1454 = vld [vmem:[#allocation9 + $0xb8] sm:$0xff]
    %v1455 = vld [vmem:[#allocation9 + $0xc0] sm:$0xff]
    %v1456 = vld [vmem:[#allocation9 + $0xc8] sm:$0xff]
    %v1457 = vld [vmem:[#allocation9 + $0xd0] sm:$0xff]
    %v1458 = vld [vmem:[#allocation9 + $0xd8] sm:$0xff]
    %v1459 = vld [vmem:[#allocation9 + $0xe0] sm:$0xff]
    %v1460 = vld [vmem:[#allocation9 + $0xe8] sm:$0xff]
    %v1461 = vld [vmem:[#allocation9 + $0xf0] sm:$0xff]
    %v1462 = vld [vmem:[#allocation9 + $0xf8] sm:$0xff]
    %v1463 = vld [vmem:[#allocation9 + $0x100] sm:$0xff]
    %v1464 = vld [vmem:[#allocation9 + $0x108] sm:$0xff]
    %v1465 = vld [vmem:[#allocation9 + $0x110] sm:$0xff]
    %v1466 = vld [vmem:[#allocation9 + $0x118] sm:$0xff]
    %v1467 = vld [vmem:[#allocation9 + $0x120] sm:$0xff]
    %v1468 = vld [vmem:[#allocation9 + $0x128] sm:$0xff]
    %v1469 = vld [vmem:[#allocation9 + $0x130] sm:$0xff]
    %v1470 = vld [vmem:[#allocation9 + $0x138] sm:$0xff]
    %v1471 = vld [vmem:[#allocation9 + $0x140] sm:$0xff]
    %v1472 = vld [vmem:[#allocation9 + $0x148] sm:$0xff]
    %v1473 = vld [vmem:[#allocation9 + $0x150] sm:$0xff]
    %v1474 = vld [vmem:[#allocation9 + $0x158] sm:$0xff]
    %v1475 = vld [vmem:[#allocation9 + $0x160] sm:$0xff]
    %v1476 = vld [vmem:[#allocation9 + $0x168] sm:$0xff]
    %v1477 = vld [vmem:[#allocation9 + $0x170] sm:$0xff]
    %v1478 = vld [vmem:[#allocation9 + $0x178] sm:$0xff]
    %v1479 = vld [vmem:[#allocation9 + $0x180] sm:$0xff]
    %v1480 = vld [vmem:[#allocation9 + $0x188] sm:$0xff]
    %v1481 = vld [vmem:[#allocation9 + $0x190] sm:$0xff]
    %v1482 = vld [vmem:[#allocation9 + $0x198] sm:$0xff]
    %v1483 = vld [vmem:[#allocation9 + $0x1a0] sm:$0xff]
    %v1484 = vld [vmem:[#allocation9 + $0x1a8] sm:$0xff]
    %v1485 = vld [vmem:[#allocation9 + $0x1b0] sm:$0xff]
    %v1486 = vld [vmem:[#allocation9 + $0x1b8] sm:$0xff]
    %v1487 = vld [vmem:[#allocation9 + $0x1c0] sm:$0xff]
    %v1488 = vld [vmem:[#allocation9 + $0x1c8] sm:$0xff]
    %v1489 = vld [vmem:[#allocation9 + $0x1d0] sm:$0xff]
    %v1490 = vld [vmem:[#allocation9 + $0x1d8] sm:$0xff]
    %v1491 = vld [vmem:[#allocation9 + $0x1e0] sm:$0xff]
    %v1492 = vld [vmem:[#allocation9 + $0x1e8] sm:$0xff]
    %v1493 = vld [vmem:[#allocation9 + $0x1f0] sm:$0xff]
    %v1494 = vld [vmem:[#allocation9 + $0x1f8] sm:$0xff]
    %1495 = vmatpush.msra.mxu0 %v1491
    %1496 = vmatpush.msra.mxu0 %v1487
    %1497 = vmatpush.msra.mxu0 %v1483
    %1498 = vmatpush.msra.mxu0 %v1479
    %1499 = vmatpush.msra.mxu0 %v1475
    %1500 = vmatpush.msra.mxu0 %v1471
    %1501 = vmatpush.msra.mxu0 %v1467
    %1502 = vmatpush.msra.mxu0 %v1463
    %1503 = vmatpush.msra.mxu0 %v1459
    %1504 = vmatpush.msra.mxu0 %v1455
    %1505 = vmatpush.msra.mxu0 %v1451
    %1506 = vmatpush.msra.mxu0 %v1447
    %1507 = vmatpush.msra.mxu0 %v1443
    %1508 = vmatpush.msra.mxu0 %v1439
    %1509 = vmatpush.msra.mxu0 %v1435
    %1510 = vmatpush.msra.mxu0 %v1431
    %1511 = vmatmul.f32.gmra.mxu0 %v1425
    %v1512 = vpop.f32.mrf.mxu0
    %v1513 = vadd.f32 0.0, %v1512
    %1514 = vdwg.mxu0
    %1515 = vmatpush.msra.mxu0 %v1492
    %1516 = vmatpush.msra.mxu0 %v1488
    %1517 = vmatpush.msra.mxu0 %v1484
    %1518 = vmatpush.msra.mxu0 %v1480
    %1519 = vmatpush.msra.mxu0 %v1476
    %1520 = vmatpush.msra.mxu0 %v1472
    %1521 = vmatpush.msra.mxu0 %v1468
    %1522 = vmatpush.msra.mxu0 %v1464
    %1523 = vmatpush.msra.mxu0 %v1460
    %1524 = vmatpush.msra.mxu0 %v1456
    %1525 = vmatpush.msra.mxu0 %v1452
    %1526 = vmatpush.msra.mxu0 %v1448
    %1527 = vmatpush.msra.mxu0 %v1444
    %1528 = vmatpush.msra.mxu0 %v1440
    %1529 = vmatpush.msra.mxu0 %v1436
    %1530 = vmatpush.msra.mxu0 %v1432
    %1531 = vmatmul.f32.gmra.mxu0 %v1425
    %v1532 = vpop.f32.mrf.mxu0
    %v1533 = vadd.f32 0.0, %v1532
    %1534 = vdwg.mxu0
    %1535 = vmatpush.msra.mxu0 %v1493
    %1536 = vmatpush.msra.mxu0 %v1489
    %1537 = vmatpush.msra.mxu0 %v1485
    %1538 = vmatpush.msra.mxu0 %v1481
    %1539 = vmatpush.msra.mxu0 %v1477
    %1540 = vmatpush.msra.mxu0 %v1473
    %1541 = vmatpush.msra.mxu0 %v1469
    %1542 = vmatpush.msra.mxu0 %v1465
    %1543 = vmatpush.msra.mxu0 %v1461
    %1544 = vmatpush.msra.mxu0 %v1457
    %1545 = vmatpush.msra.mxu0 %v1453
    %1546 = vmatpush.msra.mxu0 %v1449
    %1547 = vmatpush.msra.mxu0 %v1445
    %1548 = vmatpush.msra.mxu0 %v1441
    %1549 = vmatpush.msra.mxu0 %v1437
    %1550 = vmatpush.msra.mxu0 %v1433
    %1551 = vmatmul.f32.gmra.mxu0 %v1425
    %v1552 = vpop.f32.mrf.mxu0
    %v1553 = vadd.f32 0.0, %v1552
    %1554 = vdwg.mxu0
    %1555 = vmatpush.msra.mxu0 %v1494
    %1556 = vmatpush.msra.mxu0 %v1490
    %1557 = vmatpush.msra.mxu0 %v1486
    %1558 = vmatpush.msra.mxu0 %v1482
    %1559 = vmatpush.msra.mxu0 %v1478
    %1560 = vmatpush.msra.mxu0 %v1474
    %1561 = vmatpush.msra.mxu0 %v1470
    %1562 = vmatpush.msra.mxu0 %v1466
    %1563 = vmatpush.msra.mxu0 %v1462
    %1564 = vmatpush.msra.mxu0 %v1458
    %1565 = vmatpush.msra.mxu0 %v1454
    %1566 = vmatpush.msra.mxu0 %v1450
    %1567 = vmatpush.msra.mxu0 %v1446
    %1568 = vmatpush.msra.mxu0 %v1442
    %1569 = vmatpush.msra.mxu0 %v1438
    %1570 = vmatpush.msra.mxu0 %v1434
    %1571 = vmatmul.f32.gmra.mxu0 %v1425
    %v1572 = vpop.f32.mrf.mxu0
    %v1573 = vadd.f32 0.0, %v1572
    %1574 = vdwg.mxu0
    %v1575 = vadd.f32 %v1427, %v1513
    %v1576 = vadd.f32 %v1428, %v1533
    %v1577 = vadd.f32 %v1429, %v1553
    %v1578 = vadd.f32 %v1430, %v1573
    %v1579 = vxor.u32 %v1575, 2147483648
    %v1580 = vmul.f32 %v1579, 1.442695
    %v1581 = vpow.pop %v1580
    %v1582 = vadd.f32 %v1581, 1.0
    %v1583 = vrcp.pop %v1582
    %v1584 = vmul.f32 %v1582, %v1583
    %v1585 = vsub.f32 1.0, %v1584
    %v1586 = vmul.f32 %v1583, %v1585
    %v1587 = vadd.f32 %v1583, %v1586
    %vm1588 = vweird.f32 %v1582
    %vm1589 = vweird.f32 %v1583
    %vm1590 = vmor %vm1588, %vm1589
    %v1591 = vsel %vm1590, %v1583, %v1587
    %v1592 = vand.u32 2147483647, %v1582
    %vm1593 = vcmp.eq.f32.partialorder %v1592, 8.507059e+37
    %v1594 = vand.u32 %v1582, 2147483648
    %v1595 = vor.u32 1.1754944e-38, %v1594
    %v1596 = vsel %vm1593, %v1595, %v1591
    %v1597 = vmul.f32 1.0, %v1596
    %v1598 = vxor.u32 %v1576, 2147483648
    %v1599 = vmul.f32 %v1598, 1.442695
    %v1600 = vpow.pop %v1599
    %v1601 = vadd.f32 %v1600, 1.0
    %v1602 = vrcp.pop %v1601
    %v1603 = vmul.f32 %v1601, %v1602
    %v1604 = vsub.f32 1.0, %v1603
    %v1605 = vmul.f32 %v1602, %v1604
    %v1606 = vadd.f32 %v1602, %v1605
    %vm1607 = vweird.f32 %v1601
    %vm1608 = vweird.f32 %v1602
    %vm1609 = vmor %vm1607, %vm1608
    %v1610 = vsel %vm1609, %v1602, %v1606
    %v1611 = vand.u32 2147483647, %v1601
    %vm1612 = vcmp.eq.f32.partialorder %v1611, 8.507059e+37
    %v1613 = vand.u32 %v1601, 2147483648
    %v1614 = vor.u32 1.1754944e-38, %v1613
    %v1615 = vsel %vm1612, %v1614, %v1610
    %v1616 = vmul.f32 1.0, %v1615
    %v1617 = vtanh.pop %v1577
    %v1618 = vxor.u32 %v1578, 2147483648
    %v1619 = vmul.f32 %v1618, 1.442695
    %v1620 = vpow.pop %v1619
    %v1621 = vadd.f32 %v1620, 1.0
    %v1622 = vrcp.pop %v1621
    %v1623 = vmul.f32 %v1621, %v1622
    %v1624 = vsub.f32 1.0, %v1623
    %v1625 = vmul.f32 %v1622, %v1624
    %v1626 = vadd.f32 %v1622, %v1625
    %vm1627 = vweird.f32 %v1621
    %vm1628 = vweird.f32 %v1622
    %vm1629 = vmor %vm1627, %vm1628
    %v1630 = vsel %vm1629, %v1622, %v1626
    %v1631 = vand.u32 2147483647, %v1621
    %vm1632 = vcmp.eq.f32.partialorder %v1631, 8.507059e+37
    %v1633 = vand.u32 %v1621, 2147483648
    %v1634 = vor.u32 1.1754944e-38, %v1633
    %v1635 = vsel %vm1632, %v1634, %v1630
    %v1636 = vmul.f32 1.0, %v1635
    %v1637 = vmul.f32 %v1616, %v1423
    %v1638 = vmul.f32 %v1597, %v1617
    %v1639 = vadd.f32 %v1637, %v1638
    %v1640 = vtanh.pop %v1639
    %v1641 = vmul.f32 %v1636, %v1640
    %1642 = vst [vmem:[#allocation3 + $0x10] sm:$0xff] %v1641
    %v1643 = vld [vmem:[#allocation2 + $0x60] sm:$0xff]
    %v1644 = vld [vmem:[#allocation2 + $0x68] sm:$0xff]
    %v1645 = vld [vmem:[#allocation2 + $0x70] sm:$0xff]
    %v1646 = vld [vmem:[#allocation2 + $0x78] sm:$0xff]
    %v1647 = vld [vmem:[#allocation9] sm:$0xff]
    %v1648 = vld [vmem:[#allocation9 + $0x8] sm:$0xff]
    %v1649 = vld [vmem:[#allocation9 + $0x10] sm:$0xff]
    %v1650 = vld [vmem:[#allocation9 + $0x18] sm:$0xff]
    %v1651 = vld [vmem:[#allocation9 + $0x20] sm:$0xff]
    %v1652 = vld [vmem:[#allocation9 + $0x28] sm:$0xff]
    %v1653 = vld [vmem:[#allocation9 + $0x30] sm:$0xff]
    %v1654 = vld [vmem:[#allocation9 + $0x38] sm:$0xff]
    %v1655 = vld [vmem:[#allocation9 + $0x40] sm:$0xff]
    %v1656 = vld [vmem:[#allocation9 + $0x48] sm:$0xff]
    %v1657 = vld [vmem:[#allocation9 + $0x50] sm:$0xff]
    %v1658 = vld [vmem:[#allocation9 + $0x58] sm:$0xff]
    %v1659 = vld [vmem:[#allocation9 + $0x60] sm:$0xff]
    %v1660 = vld [vmem:[#allocation9 + $0x68] sm:$0xff]
    %v1661 = vld [vmem:[#allocation9 + $0x70] sm:$0xff]
    %v1662 = vld [vmem:[#allocation9 + $0x78] sm:$0xff]
    %v1663 = vld [vmem:[#allocation9 + $0x80] sm:$0xff]
    %v1664 = vld [vmem:[#allocation9 + $0x88] sm:$0xff]
    %v1665 = vld [vmem:[#allocation9 + $0x90] sm:$0xff]
    %v1666 = vld [vmem:[#allocation9 + $0x98] sm:$0xff]
    %v1667 = vld [vmem:[#allocation9 + $0xa0] sm:$0xff]
    %v1668 = vld [vmem:[#allocation9 + $0xa8] sm:$0xff]
    %v1669 = vld [vmem:[#allocation9 + $0xb0] sm:$0xff]
    %v1670 = vld [vmem:[#allocation9 + $0xb8] sm:$0xff]
    %v1671 = vld [vmem:[#allocation9 + $0xc0] sm:$0xff]
    %v1672 = vld [vmem:[#allocation9 + $0xc8] sm:$0xff]
    %v1673 = vld [vmem:[#allocation9 + $0xd0] sm:$0xff]
    %v1674 = vld [vmem:[#allocation9 + $0xd8] sm:$0xff]
    %v1675 = vld [vmem:[#allocation9 + $0xe0] sm:$0xff]
    %v1676 = vld [vmem:[#allocation9 + $0xe8] sm:$0xff]
    %v1677 = vld [vmem:[#allocation9 + $0xf0] sm:$0xff]
    %v1678 = vld [vmem:[#allocation9 + $0xf8] sm:$0xff]
    %v1679 = vld [vmem:[#allocation9 + $0x100] sm:$0xff]
    %v1680 = vld [vmem:[#allocation9 + $0x108] sm:$0xff]
    %v1681 = vld [vmem:[#allocation9 + $0x110] sm:$0xff]
    %v1682 = vld [vmem:[#allocation9 + $0x118] sm:$0xff]
    %v1683 = vld [vmem:[#allocation9 + $0x120] sm:$0xff]
    %v1684 = vld [vmem:[#allocation9 + $0x128] sm:$0xff]
    %v1685 = vld [vmem:[#allocation9 + $0x130] sm:$0xff]
    %v1686 = vld [vmem:[#allocation9 + $0x138] sm:$0xff]
    %v1687 = vld [vmem:[#allocation9 + $0x140] sm:$0xff]
    %v1688 = vld [vmem:[#allocation9 + $0x148] sm:$0xff]
    %v1689 = vld [vmem:[#allocation9 + $0x150] sm:$0xff]
    %v1690 = vld [vmem:[#allocation9 + $0x158] sm:$0xff]
    %v1691 = vld [vmem:[#allocation9 + $0x160] sm:$0xff]
    %v1692 = vld [vmem:[#allocation9 + $0x168] sm:$0xff]
    %v1693 = vld [vmem:[#allocation9 + $0x170] sm:$0xff]
    %v1694 = vld [vmem:[#allocation9 + $0x178] sm:$0xff]
    %v1695 = vld [vmem:[#allocation9 + $0x180] sm:$0xff]
    %v1696 = vld [vmem:[#allocation9 + $0x188] sm:$0xff]
    %v1697 = vld [vmem:[#allocation9 + $0x190] sm:$0xff]
    %v1698 = vld [vmem:[#allocation9 + $0x198] sm:$0xff]
    %v1699 = vld [vmem:[#allocation9 + $0x1a0] sm:$0xff]
    %v1700 = vld [vmem:[#allocation9 + $0x1a8] sm:$0xff]
    %v1701 = vld [vmem:[#allocation9 + $0x1b0] sm:$0xff]
    %v1702 = vld [vmem:[#allocation9 + $0x1b8] sm:$0xff]
    %v1703 = vld [vmem:[#allocation9 + $0x1c0] sm:$0xff]
    %v1704 = vld [vmem:[#allocation9 + $0x1c8] sm:$0xff]
    %v1705 = vld [vmem:[#allocation9 + $0x1d0] sm:$0xff]
    %v1706 = vld [vmem:[#allocation9 + $0x1d8] sm:$0xff]
    %v1707 = vld [vmem:[#allocation9 + $0x1e0] sm:$0xff]
    %v1708 = vld [vmem:[#allocation9 + $0x1e8] sm:$0xff]
    %v1709 = vld [vmem:[#allocation9 + $0x1f0] sm:$0xff]
    %v1710 = vld [vmem:[#allocation9 + $0x1f8] sm:$0xff]
    %1711 = vmatpush.msra.mxu0 %v1707
    %1712 = vmatpush.msra.mxu0 %v1703
    %1713 = vmatpush.msra.mxu0 %v1699
    %1714 = vmatpush.msra.mxu0 %v1695
    %1715 = vmatpush.msra.mxu0 %v1691
    %1716 = vmatpush.msra.mxu0 %v1687
    %1717 = vmatpush.msra.mxu0 %v1683
    %1718 = vmatpush.msra.mxu0 %v1679
    %1719 = vmatpush.msra.mxu0 %v1675
    %1720 = vmatpush.msra.mxu0 %v1671
    %1721 = vmatpush.msra.mxu0 %v1667
    %1722 = vmatpush.msra.mxu0 %v1663
    %1723 = vmatpush.msra.mxu0 %v1659
    %1724 = vmatpush.msra.mxu0 %v1655
    %1725 = vmatpush.msra.mxu0 %v1651
    %1726 = vmatpush.msra.mxu0 %v1647
    %1727 = vmatmul.f32.gmra.mxu0 %v1641
    %v1728 = vpop.f32.mrf.mxu0
    %v1729 = vadd.f32 0.0, %v1728
    %1730 = vdwg.mxu0
    %1731 = vmatpush.msra.mxu0 %v1708
    %1732 = vmatpush.msra.mxu0 %v1704
    %1733 = vmatpush.msra.mxu0 %v1700
    %1734 = vmatpush.msra.mxu0 %v1696
    %1735 = vmatpush.msra.mxu0 %v1692
    %1736 = vmatpush.msra.mxu0 %v1688
    %1737 = vmatpush.msra.mxu0 %v1684
    %1738 = vmatpush.msra.mxu0 %v1680
    %1739 = vmatpush.msra.mxu0 %v1676
    %1740 = vmatpush.msra.mxu0 %v1672
    %1741 = vmatpush.msra.mxu0 %v1668
    %1742 = vmatpush.msra.mxu0 %v1664
    %1743 = vmatpush.msra.mxu0 %v1660
    %1744 = vmatpush.msra.mxu0 %v1656
    %1745 = vmatpush.msra.mxu0 %v1652
    %1746 = vmatpush.msra.mxu0 %v1648
    %1747 = vmatmul.f32.gmra.mxu0 %v1641
    %v1748 = vpop.f32.mrf.mxu0
    %v1749 = vadd.f32 0.0, %v1748
    %1750 = vdwg.mxu0
    %1751 = vmatpush.msra.mxu0 %v1709
    %1752 = vmatpush.msra.mxu0 %v1705
    %1753 = vmatpush.msra.mxu0 %v1701
    %1754 = vmatpush.msra.mxu0 %v1697
    %1755 = vmatpush.msra.mxu0 %v1693
    %1756 = vmatpush.msra.mxu0 %v1689
    %1757 = vmatpush.msra.mxu0 %v1685
    %1758 = vmatpush.msra.mxu0 %v1681
    %1759 = vmatpush.msra.mxu0 %v1677
    %1760 = vmatpush.msra.mxu0 %v1673
    %1761 = vmatpush.msra.mxu0 %v1669
    %1762 = vmatpush.msra.mxu0 %v1665
    %1763 = vmatpush.msra.mxu0 %v1661
    %1764 = vmatpush.msra.mxu0 %v1657
    %1765 = vmatpush.msra.mxu0 %v1653
    %1766 = vmatpush.msra.mxu0 %v1649
    %1767 = vmatmul.f32.gmra.mxu0 %v1641
    %v1768 = vpop.f32.mrf.mxu0
    %v1769 = vadd.f32 0.0, %v1768
    %1770 = vdwg.mxu0
    %1771 = vmatpush.msra.mxu0 %v1710
    %1772 = vmatpush.msra.mxu0 %v1706
    %1773 = vmatpush.msra.mxu0 %v1702
    %1774 = vmatpush.msra.mxu0 %v1698
    %1775 = vmatpush.msra.mxu0 %v1694
    %1776 = vmatpush.msra.mxu0 %v1690
    %1777 = vmatpush.msra.mxu0 %v1686
    %1778 = vmatpush.msra.mxu0 %v1682
    %1779 = vmatpush.msra.mxu0 %v1678
    %1780 = vmatpush.msra.mxu0 %v1674
    %1781 = vmatpush.msra.mxu0 %v1670
    %1782 = vmatpush.msra.mxu0 %v1666
    %1783 = vmatpush.msra.mxu0 %v1662
    %1784 = vmatpush.msra.mxu0 %v1658
    %1785 = vmatpush.msra.mxu0 %v1654
    %1786 = vmatpush.msra.mxu0 %v1650
    %1787 = vmatmul.f32.gmra.mxu0 %v1641
    %v1788 = vpop.f32.mrf.mxu0
    %v1789 = vadd.f32 0.0, %v1788
    %1790 = vdwg.mxu0
    %v1791 = vadd.f32 %v1643, %v1729
    %v1792 = vadd.f32 %v1644, %v1749
    %v1793 = vadd.f32 %v1645, %v1769
    %v1794 = vadd.f32 %v1646, %v1789
    %v1795 = vxor.u32 %v1791, 2147483648
    %v1796 = vmul.f32 %v1795, 1.442695
    %v1797 = vpow.pop %v1796
    %v1798 = vadd.f32 %v1797, 1.0
    %v1799 = vrcp.pop %v1798
    %v1800 = vmul.f32 %v1798, %v1799
    %v1801 = vsub.f32 1.0, %v1800
    %v1802 = vmul.f32 %v1799, %v1801
    %v1803 = vadd.f32 %v1799, %v1802
    %vm1804 = vweird.f32 %v1798
    %vm1805 = vweird.f32 %v1799
    %vm1806 = vmor %vm1804, %vm1805
    %v1807 = vsel %vm1806, %v1799, %v1803
    %v1808 = vand.u32 2147483647, %v1798
    %vm1809 = vcmp.eq.f32.partialorder %v1808, 8.507059e+37
    %v1810 = vand.u32 %v1798, 2147483648
    %v1811 = vor.u32 1.1754944e-38, %v1810
    %v1812 = vsel %vm1809, %v1811, %v1807
    %v1813 = vmul.f32 1.0, %v1812
    %v1814 = vxor.u32 %v1792, 2147483648
    %v1815 = vmul.f32 %v1814, 1.442695
    %v1816 = vpow.pop %v1815
    %v1817 = vadd.f32 %v1816, 1.0
    %v1818 = vrcp.pop %v1817
    %v1819 = vmul.f32 %v1817, %v1818
    %v1820 = vsub.f32 1.0, %v1819
    %v1821 = vmul.f32 %v1818, %v1820
    %v1822 = vadd.f32 %v1818, %v1821
    %vm1823 = vweird.f32 %v1817
    %vm1824 = vweird.f32 %v1818
    %vm1825 = vmor %vm1823, %vm1824
    %v1826 = vsel %vm1825, %v1818, %v1822
    %v1827 = vand.u32 2147483647, %v1817
    %vm1828 = vcmp.eq.f32.partialorder %v1827, 8.507059e+37
    %v1829 = vand.u32 %v1817, 2147483648
    %v1830 = vor.u32 1.1754944e-38, %v1829
    %v1831 = vsel %vm1828, %v1830, %v1826
    %v1832 = vmul.f32 1.0, %v1831
    %v1833 = vtanh.pop %v1793
    %v1834 = vxor.u32 %v1794, 2147483648
    %v1835 = vmul.f32 %v1834, 1.442695
    %v1836 = vpow.pop %v1835
    %v1837 = vadd.f32 %v1836, 1.0
    %v1838 = vrcp.pop %v1837
    %v1839 = vmul.f32 %v1837, %v1838
    %v1840 = vsub.f32 1.0, %v1839
    %v1841 = vmul.f32 %v1838, %v1840
    %v1842 = vadd.f32 %v1838, %v1841
    %vm1843 = vweird.f32 %v1837
    %vm1844 = vweird.f32 %v1838
    %vm1845 = vmor %vm1843, %vm1844
    %v1846 = vsel %vm1845, %v1838, %v1842
    %v1847 = vand.u32 2147483647, %v1837
    %vm1848 = vcmp.eq.f32.partialorder %v1847, 8.507059e+37
    %v1849 = vand.u32 %v1837, 2147483648
    %v1850 = vor.u32 1.1754944e-38, %v1849
    %v1851 = vsel %vm1848, %v1850, %v1846
    %v1852 = vmul.f32 1.0, %v1851
    %v1853 = vmul.f32 %v1832, %v1639
    %v1854 = vmul.f32 %v1813, %v1833
    %v1855 = vadd.f32 %v1853, %v1854
    %v1856 = vtanh.pop %v1855
    %v1857 = vmul.f32 %v1852, %v1856
    %1858 = vst [vmem:[#allocation3 + $0x18] sm:$0xff] %v1857
    %v1859 = vld [vmem:[#allocation2 + $0x80] sm:$0xff]
    %v1860 = vld [vmem:[#allocation2 + $0x88] sm:$0xff]
    %v1861 = vld [vmem:[#allocation2 + $0x90] sm:$0xff]
    %v1862 = vld [vmem:[#allocation2 + $0x98] sm:$0xff]
    %v1863 = vld [vmem:[#allocation9] sm:$0xff]
    %v1864 = vld [vmem:[#allocation9 + $0x8] sm:$0xff]
    %v1865 = vld [vmem:[#allocation9 + $0x10] sm:$0xff]
    %v1866 = vld [vmem:[#allocation9 + $0x18] sm:$0xff]
    %v1867 = vld [vmem:[#allocation9 + $0x20] sm:$0xff]
    %v1868 = vld [vmem:[#allocation9 + $0x28] sm:$0xff]
    %v1869 = vld [vmem:[#allocation9 + $0x30] sm:$0xff]
    %v1870 = vld [vmem:[#allocation9 + $0x38] sm:$0xff]
    %v1871 = vld [vmem:[#allocation9 + $0x40] sm:$0xff]
    %v1872 = vld [vmem:[#allocation9 + $0x48] sm:$0xff]
    %v1873 = vld [vmem:[#allocation9 + $0x50] sm:$0xff]
    %v1874 = vld [vmem:[#allocation9 + $0x58] sm:$0xff]
    %v1875 = vld [vmem:[#allocation9 + $0x60] sm:$0xff]
    %v1876 = vld [vmem:[#allocation9 + $0x68] sm:$0xff]
    %v1877 = vld [vmem:[#allocation9 + $0x70] sm:$0xff]
    %v1878 = vld [vmem:[#allocation9 + $0x78] sm:$0xff]
    %v1879 = vld [vmem:[#allocation9 + $0x80] sm:$0xff]
    %v1880 = vld [vmem:[#allocation9 + $0x88] sm:$0xff]
    %v1881 = vld [vmem:[#allocation9 + $0x90] sm:$0xff]
    %v1882 = vld [vmem:[#allocation9 + $0x98] sm:$0xff]
    %v1883 = vld [vmem:[#allocation9 + $0xa0] sm:$0xff]
    %v1884 = vld [vmem:[#allocation9 + $0xa8] sm:$0xff]
    %v1885 = vld [vmem:[#allocation9 + $0xb0] sm:$0xff]
    %v1886 = vld [vmem:[#allocation9 + $0xb8] sm:$0xff]
    %v1887 = vld [vmem:[#allocation9 + $0xc0] sm:$0xff]
    %v1888 = vld [vmem:[#allocation9 + $0xc8] sm:$0xff]
    %v1889 = vld [vmem:[#allocation9 + $0xd0] sm:$0xff]
    %v1890 = vld [vmem:[#allocation9 + $0xd8] sm:$0xff]
    %v1891 = vld [vmem:[#allocation9 + $0xe0] sm:$0xff]
    %v1892 = vld [vmem:[#allocation9 + $0xe8] sm:$0xff]
    %v1893 = vld [vmem:[#allocation9 + $0xf0] sm:$0xff]
    %v1894 = vld [vmem:[#allocation9 + $0xf8] sm:$0xff]
    %v1895 = vld [vmem:[#allocation9 + $0x100] sm:$0xff]
    %v1896 = vld [vmem:[#allocation9 + $0x108] sm:$0xff]
    %v1897 = vld [vmem:[#allocation9 + $0x110] sm:$0xff]
    %v1898 = vld [vmem:[#allocation9 + $0x118] sm:$0xff]
    %v1899 = vld [vmem:[#allocation9 + $0x120] sm:$0xff]
    %v1900 = vld [vmem:[#allocation9 + $0x128] sm:$0xff]
    %v1901 = vld [vmem:[#allocation9 + $0x130] sm:$0xff]
    %v1902 = vld [vmem:[#allocation9 + $0x138] sm:$0xff]
    %v1903 = vld [vmem:[#allocation9 + $0x140] sm:$0xff]
    %v1904 = vld [vmem:[#allocation9 + $0x148] sm:$0xff]
    %v1905 = vld [vmem:[#allocation9 + $0x150] sm:$0xff]
    %v1906 = vld [vmem:[#allocation9 + $0x158] sm:$0xff]
    %v1907 = vld [vmem:[#allocation9 + $0x160] sm:$0xff]
    %v1908 = vld [vmem:[#allocation9 + $0x168] sm:$0xff]
    %v1909 = vld [vmem:[#allocation9 + $0x170] sm:$0xff]
    %v1910 = vld [vmem:[#allocation9 + $0x178] sm:$0xff]
    %v1911 = vld [vmem:[#allocation9 + $0x180] sm:$0xff]
    %v1912 = vld [vmem:[#allocation9 + $0x188] sm:$0xff]
    %v1913 = vld [vmem:[#allocation9 + $0x190] sm:$0xff]
    %v1914 = vld [vmem:[#allocation9 + $0x198] sm:$0xff]
    %v1915 = vld [vmem:[#allocation9 + $0x1a0] sm:$0xff]
    %v1916 = vld [vmem:[#allocation9 + $0x1a8] sm:$0xff]
    %v1917 = vld [vmem:[#allocation9 + $0x1b0] sm:$0xff]
    %v1918 = vld [vmem:[#allocation9 + $0x1b8] sm:$0xff]
    %v1919 = vld [vmem:[#allocation9 + $0x1c0] sm:$0xff]
    %v1920 = vld [vmem:[#allocation9 + $0x1c8] sm:$0xff]
    %v1921 = vld [vmem:[#allocation9 + $0x1d0] sm:$0xff]
    %v1922 = vld [vmem:[#allocation9 + $0x1d8] sm:$0xff]
    %v1923 = vld [vmem:[#allocation9 + $0x1e0] sm:$0xff]
    %v1924 = vld [vmem:[#allocation9 + $0x1e8] sm:$0xff]
    %v1925 = vld [vmem:[#allocation9 + $0x1f0] sm:$0xff]
    %v1926 = vld [vmem:[#allocation9 + $0x1f8] sm:$0xff]
    %1927 = vmatpush.msra.mxu0 %v1923
    %1928 = vmatpush.msra.mxu0 %v1919
    %1929 = vmatpush.msra.mxu0 %v1915
    %1930 = vmatpush.msra.mxu0 %v1911
    %1931 = vmatpush.msra.mxu0 %v1907
    %1932 = vmatpush.msra.mxu0 %v1903
    %1933 = vmatpush.msra.mxu0 %v1899
    %1934 = vmatpush.msra.mxu0 %v1895
    %1935 = vmatpush.msra.mxu0 %v1891
    %1936 = vmatpush.msra.mxu0 %v1887
    %1937 = vmatpush.msra.mxu0 %v1883
    %1938 = vmatpush.msra.mxu0 %v1879
    %1939 = vmatpush.msra.mxu0 %v1875
    %1940 = vmatpush.msra.mxu0 %v1871
    %1941 = vmatpush.msra.mxu0 %v1867
    %1942 = vmatpush.msra.mxu0 %v1863
    %1943 = vmatmul.f32.gmra.mxu0 %v1857
    %v1944 = vpop.f32.mrf.mxu0
    %v1945 = vadd.f32 0.0, %v1944
    %1946 = vdwg.mxu0
    %1947 = vmatpush.msra.mxu0 %v1924
    %1948 = vmatpush.msra.mxu0 %v1920
    %1949 = vmatpush.msra.mxu0 %v1916
    %1950 = vmatpush.msra.mxu0 %v1912
    %1951 = vmatpush.msra.mxu0 %v1908
    %1952 = vmatpush.msra.mxu0 %v1904
    %1953 = vmatpush.msra.mxu0 %v1900
    %1954 = vmatpush.msra.mxu0 %v1896
    %1955 = vmatpush.msra.mxu0 %v1892
    %1956 = vmatpush.msra.mxu0 %v1888
    %1957 = vmatpush.msra.mxu0 %v1884
    %1958 = vmatpush.msra.mxu0 %v1880
    %1959 = vmatpush.msra.mxu0 %v1876
    %1960 = vmatpush.msra.mxu0 %v1872
    %1961 = vmatpush.msra.mxu0 %v1868
    %1962 = vmatpush.msra.mxu0 %v1864
    %1963 = vmatmul.f32.gmra.mxu0 %v1857
    %v1964 = vpop.f32.mrf.mxu0
    %v1965 = vadd.f32 0.0, %v1964
    %1966 = vdwg.mxu0
    %1967 = vmatpush.msra.mxu0 %v1925
    %1968 = vmatpush.msra.mxu0 %v1921
    %1969 = vmatpush.msra.mxu0 %v1917
    %1970 = vmatpush.msra.mxu0 %v1913
    %1971 = vmatpush.msra.mxu0 %v1909
    %1972 = vmatpush.msra.mxu0 %v1905
    %1973 = vmatpush.msra.mxu0 %v1901
    %1974 = vmatpush.msra.mxu0 %v1897
    %1975 = vmatpush.msra.mxu0 %v1893
    %1976 = vmatpush.msra.mxu0 %v1889
    %1977 = vmatpush.msra.mxu0 %v1885
    %1978 = vmatpush.msra.mxu0 %v1881
    %1979 = vmatpush.msra.mxu0 %v1877
    %1980 = vmatpush.msra.mxu0 %v1873
    %1981 = vmatpush.msra.mxu0 %v1869
    %1982 = vmatpush.msra.mxu0 %v1865
    %1983 = vmatmul.f32.gmra.mxu0 %v1857
    %v1984 = vpop.f32.mrf.mxu0
    %v1985 = vadd.f32 0.0, %v1984
    %1986 = vdwg.mxu0
    %1987 = vmatpush.msra.mxu0 %v1926
    %1988 = vmatpush.msra.mxu0 %v1922
    %1989 = vmatpush.msra.mxu0 %v1918
    %1990 = vmatpush.msra.mxu0 %v1914
    %1991 = vmatpush.msra.mxu0 %v1910
    %1992 = vmatpush.msra.mxu0 %v1906
    %1993 = vmatpush.msra.mxu0 %v1902
    %1994 = vmatpush.msra.mxu0 %v1898
    %1995 = vmatpush.msra.mxu0 %v1894
    %1996 = vmatpush.msra.mxu0 %v1890
    %1997 = vmatpush.msra.mxu0 %v1886
    %1998 = vmatpush.msra.mxu0 %v1882
    %1999 = vmatpush.msra.mxu0 %v1878
    %2000 = vmatpush.msra.mxu0 %v1874
    %2001 = vmatpush.msra.mxu0 %v1870
    %2002 = vmatpush.msra.mxu0 %v1866
    %2003 = vmatmul.f32.gmra.mxu0 %v1857
    %v2004 = vpop.f32.mrf.mxu0
    %v2005 = vadd.f32 0.0, %v2004
    %2006 = vdwg.mxu0
    %v2007 = vadd.f32 %v1859, %v1945
    %v2008 = vadd.f32 %v1860, %v1965
    %v2009 = vadd.f32 %v1861, %v1985
    %v2010 = vadd.f32 %v1862, %v2005
    %v2011 = vxor.u32 %v2007, 2147483648
    %v2012 = vmul.f32 %v2011, 1.442695
    %v2013 = vpow.pop %v2012
    %v2014 = vadd.f32 %v2013, 1.0
    %v2015 = vrcp.pop %v2014
    %v2016 = vmul.f32 %v2014, %v2015
    %v2017 = vsub.f32 1.0, %v2016
    %v2018 = vmul.f32 %v2015, %v2017
    %v2019 = vadd.f32 %v2015, %v2018
    %vm2020 = vweird.f32 %v2014
    %vm2021 = vweird.f32 %v2015
    %vm2022 = vmor %vm2020, %vm2021
    %v2023 = vsel %vm2022, %v2015, %v2019
    %v2024 = vand.u32 2147483647, %v2014
    %vm2025 = vcmp.eq.f32.partialorder %v2024, 8.507059e+37
    %v2026 = vand.u32 %v2014, 2147483648
    %v2027 = vor.u32 1.1754944e-38, %v2026
    %v2028 = vsel %vm2025, %v2027, %v2023
    %v2029 = vmul.f32 1.0, %v2028
    %v2030 = vxor.u32 %v2008, 2147483648
    %v2031 = vmul.f32 %v2030, 1.442695
    %v2032 = vpow.pop %v2031
    %v2033 = vadd.f32 %v2032, 1.0
    %v2034 = vrcp.pop %v2033
    %v2035 = vmul.f32 %v2033, %v2034
    %v2036 = vsub.f32 1.0, %v2035
    %v2037 = vmul.f32 %v2034, %v2036
    %v2038 = vadd.f32 %v2034, %v2037
    %vm2039 = vweird.f32 %v2033
    %vm2040 = vweird.f32 %v2034
    %vm2041 = vmor %vm2039, %vm2040
    %v2042 = vsel %vm2041, %v2034, %v2038
    %v2043 = vand.u32 2147483647, %v2033
    %vm2044 = vcmp.eq.f32.partialorder %v2043, 8.507059e+37
    %v2045 = vand.u32 %v2033, 2147483648
    %v2046 = vor.u32 1.1754944e-38, %v2045
    %v2047 = vsel %vm2044, %v2046, %v2042
    %v2048 = vmul.f32 1.0, %v2047
    %v2049 = vtanh.pop %v2009
    %v2050 = vxor.u32 %v2010, 2147483648
    %v2051 = vmul.f32 %v2050, 1.442695
    %v2052 = vpow.pop %v2051
    %v2053 = vadd.f32 %v2052, 1.0
    %v2054 = vrcp.pop %v2053
    %v2055 = vmul.f32 %v2053, %v2054
    %v2056 = vsub.f32 1.0, %v2055
    %v2057 = vmul.f32 %v2054, %v2056
    %v2058 = vadd.f32 %v2054, %v2057
    %vm2059 = vweird.f32 %v2053
    %vm2060 = vweird.f32 %v2054
    %vm2061 = vmor %vm2059, %vm2060
    %v2062 = vsel %vm2061, %v2054, %v2058
    %v2063 = vand.u32 2147483647, %v2053
    %vm2064 = vcmp.eq.f32.partialorder %v2063, 8.507059e+37
    %v2065 = vand.u32 %v2053, 2147483648
    %v2066 = vor.u32 1.1754944e-38, %v2065
    %v2067 = vsel %vm2064, %v2066, %v2062
    %v2068 = vmul.f32 1.0, %v2067
    %v2069 = vmul.f32 %v2048, %v1855
    %v2070 = vmul.f32 %v2029, %v2049
    %v2071 = vadd.f32 %v2069, %v2070
    %v2072 = vtanh.pop %v2071
    %v2073 = vmul.f32 %v2068, %v2072
    %2074 = vst [vmem:[#allocation3 + $0x20] sm:$0xff] %v2073
    %v2075 = vld [vmem:[#allocation2 + $0xa0] sm:$0xff]
    %v2076 = vld [vmem:[#allocation2 + $0xa8] sm:$0xff]
    %v2077 = vld [vmem:[#allocation2 + $0xb0] sm:$0xff]
    %v2078 = vld [vmem:[#allocation2 + $0xb8] sm:$0xff]
    %v2079 = vld [vmem:[#allocation9] sm:$0xff]
    %v2080 = vld [vmem:[#allocation9 + $0x8] sm:$0xff]
    %v2081 = vld [vmem:[#allocation9 + $0x10] sm:$0xff]
    %v2082 = vld [vmem:[#allocation9 + $0x18] sm:$0xff]
    %v2083 = vld [vmem:[#allocation9 + $0x20] sm:$0xff]
    %v2084 = vld [vmem:[#allocation9 + $0x28] sm:$0xff]
    %v2085 = vld [vmem:[#allocation9 + $0x30] sm:$0xff]
    %v2086 = vld [vmem:[#allocation9 + $0x38] sm:$0xff]
    %v2087 = vld [vmem:[#allocation9 + $0x40] sm:$0xff]
    %v2088 = vld [vmem:[#allocation9 + $0x48] sm:$0xff]
    %v2089 = vld [vmem:[#allocation9 + $0x50] sm:$0xff]
    %v2090 = vld [vmem:[#allocation9 + $0x58] sm:$0xff]
    %v2091 = vld [vmem:[#allocation9 + $0x60] sm:$0xff]
    %v2092 = vld [vmem:[#allocation9 + $0x68] sm:$0xff]
    %v2093 = vld [vmem:[#allocation9 + $0x70] sm:$0xff]
    %v2094 = vld [vmem:[#allocation9 + $0x78] sm:$0xff]
    %v2095 = vld [vmem:[#allocation9 + $0x80] sm:$0xff]
    %v2096 = vld [vmem:[#allocation9 + $0x88] sm:$0xff]
    %v2097 = vld [vmem:[#allocation9 + $0x90] sm:$0xff]
    %v2098 = vld [vmem:[#allocation9 + $0x98] sm:$0xff]
    %v2099 = vld [vmem:[#allocation9 + $0xa0] sm:$0xff]
    %v2100 = vld [vmem:[#allocation9 + $0xa8] sm:$0xff]
    %v2101 = vld [vmem:[#allocation9 + $0xb0] sm:$0xff]
    %v2102 = vld [vmem:[#allocation9 + $0xb8] sm:$0xff]
    %v2103 = vld [vmem:[#allocation9 + $0xc0] sm:$0xff]
    %v2104 = vld [vmem:[#allocation9 + $0xc8] sm:$0xff]
    %v2105 = vld [vmem:[#allocation9 + $0xd0] sm:$0xff]
    %v2106 = vld [vmem:[#allocation9 + $0xd8] sm:$0xff]
    %v2107 = vld [vmem:[#allocation9 + $0xe0] sm:$0xff]
    %v2108 = vld [vmem:[#allocation9 + $0xe8] sm:$0xff]
    %v2109 = vld [vmem:[#allocation9 + $0xf0] sm:$0xff]
    %v2110 = vld [vmem:[#allocation9 + $0xf8] sm:$0xff]
    %v2111 = vld [vmem:[#allocation9 + $0x100] sm:$0xff]
    %v2112 = vld [vmem:[#allocation9 + $0x108] sm:$0xff]
    %v2113 = vld [vmem:[#allocation9 + $0x110] sm:$0xff]
    %v2114 = vld [vmem:[#allocation9 + $0x118] sm:$0xff]
    %v2115 = vld [vmem:[#allocation9 + $0x120] sm:$0xff]
    %v2116 = vld [vmem:[#allocation9 + $0x128] sm:$0xff]
    %v2117 = vld [vmem:[#allocation9 + $0x130] sm:$0xff]
    %v2118 = vld [vmem:[#allocation9 + $0x138] sm:$0xff]
    %v2119 = vld [vmem:[#allocation9 + $0x140] sm:$0xff]
    %v2120 = vld [vmem:[#allocation9 + $0x148] sm:$0xff]
    %v2121 = vld [vmem:[#allocation9 + $0x150] sm:$0xff]
    %v2122 = vld [vmem:[#allocation9 + $0x158] sm:$0xff]
    %v2123 = vld [vmem:[#allocation9 + $0x160] sm:$0xff]
    %v2124 = vld [vmem:[#allocation9 + $0x168] sm:$0xff]
    %v2125 = vld [vmem:[#allocation9 + $0x170] sm:$0xff]
    %v2126 = vld [vmem:[#allocation9 + $0x178] sm:$0xff]
    %v2127 = vld [vmem:[#allocation9 + $0x180] sm:$0xff]
    %v2128 = vld [vmem:[#allocation9 + $0x188] sm:$0xff]
    %v2129 = vld [vmem:[#allocation9 + $0x190] sm:$0xff]
    %v2130 = vld [vmem:[#allocation9 + $0x198] sm:$0xff]
    %v2131 = vld [vmem:[#allocation9 + $0x1a0] sm:$0xff]
    %v2132 = vld [vmem:[#allocation9 + $0x1a8] sm:$0xff]
    %v2133 = vld [vmem:[#allocation9 + $0x1b0] sm:$0xff]
    %v2134 = vld [vmem:[#allocation9 + $0x1b8] sm:$0xff]
    %v2135 = vld [vmem:[#allocation9 + $0x1c0] sm:$0xff]
    %v2136 = vld [vmem:[#allocation9 + $0x1c8] sm:$0xff]
    %v2137 = vld [vmem:[#allocation9 + $0x1d0] sm:$0xff]
    %v2138 = vld [vmem:[#allocation9 + $0x1d8] sm:$0xff]
    %v2139 = vld [vmem:[#allocation9 + $0x1e0] sm:$0xff]
    %v2140 = vld [vmem:[#allocation9 + $0x1e8] sm:$0xff]
    %v2141 = vld [vmem:[#allocation9 + $0x1f0] sm:$0xff]
    %v2142 = vld [vmem:[#allocation9 + $0x1f8] sm:$0xff]
    %2143 = vmatpush.msra.mxu0 %v2139
    %2144 = vmatpush.msra.mxu0 %v2135
    %2145 = vmatpush.msra.mxu0 %v2131
    %2146 = vmatpush.msra.mxu0 %v2127
    %2147 = vmatpush.msra.mxu0 %v2123
    %2148 = vmatpush.msra.mxu0 %v2119
    %2149 = vmatpush.msra.mxu0 %v2115
    %2150 = vmatpush.msra.mxu0 %v2111
    %2151 = vmatpush.msra.mxu0 %v2107
    %2152 = vmatpush.msra.mxu0 %v2103
    %2153 = vmatpush.msra.mxu0 %v2099
    %2154 = vmatpush.msra.mxu0 %v2095
    %2155 = vmatpush.msra.mxu0 %v2091
    %2156 = vmatpush.msra.mxu0 %v2087
    %2157 = vmatpush.msra.mxu0 %v2083
    %2158 = vmatpush.msra.mxu0 %v2079
    %2159 = vmatmul.f32.gmra.mxu0 %v2073
    %v2160 = vpop.f32.mrf.mxu0
    %v2161 = vadd.f32 0.0, %v2160
    %2162 = vdwg.mxu0
    %2163 = vmatpush.msra.mxu0 %v2140
    %2164 = vmatpush.msra.mxu0 %v2136
    %2165 = vmatpush.msra.mxu0 %v2132
    %2166 = vmatpush.msra.mxu0 %v2128
    %2167 = vmatpush.msra.mxu0 %v2124
    %2168 = vmatpush.msra.mxu0 %v2120
    %2169 = vmatpush.msra.mxu0 %v2116
    %2170 = vmatpush.msra.mxu0 %v2112
    %2171 = vmatpush.msra.mxu0 %v2108
    %2172 = vmatpush.msra.mxu0 %v2104
    %2173 = vmatpush.msra.mxu0 %v2100
    %2174 = vmatpush.msra.mxu0 %v2096
    %2175 = vmatpush.msra.mxu0 %v2092
    %2176 = vmatpush.msra.mxu0 %v2088
    %2177 = vmatpush.msra.mxu0 %v2084
    %2178 = vmatpush.msra.mxu0 %v2080
    %2179 = vmatmul.f32.gmra.mxu0 %v2073
    %v2180 = vpop.f32.mrf.mxu0
    %v2181 = vadd.f32 0.0, %v2180
    %2182 = vdwg.mxu0
    %2183 = vmatpush.msra.mxu0 %v2141
    %2184 = vmatpush.msra.mxu0 %v2137
    %2185 = vmatpush.msra.mxu0 %v2133
    %2186 = vmatpush.msra.mxu0 %v2129
    %2187 = vmatpush.msra.mxu0 %v2125
    %2188 = vmatpush.msra.mxu0 %v2121
    %2189 = vmatpush.msra.mxu0 %v2117
    %2190 = vmatpush.msra.mxu0 %v2113
    %2191 = vmatpush.msra.mxu0 %v2109
    %2192 = vmatpush.msra.mxu0 %v2105
    %2193 = vmatpush.msra.mxu0 %v2101
    %2194 = vmatpush.msra.mxu0 %v2097
    %2195 = vmatpush.msra.mxu0 %v2093
    %2196 = vmatpush.msra.mxu0 %v2089
    %2197 = vmatpush.msra.mxu0 %v2085
    %2198 = vmatpush.msra.mxu0 %v2081
    %2199 = vmatmul.f32.gmra.mxu0 %v2073
    %v2200 = vpop.f32.mrf.mxu0
    %v2201 = vadd.f32 0.0, %v2200
    %2202 = vdwg.mxu0
    %2203 = vmatpush.msra.mxu0 %v2142
    %2204 = vmatpush.msra.mxu0 %v2138
    %2205 = vmatpush.msra.mxu0 %v2134
    %2206 = vmatpush.msra.mxu0 %v2130
    %2207 = vmatpush.msra.mxu0 %v2126
    %2208 = vmatpush.msra.mxu0 %v2122
    %2209 = vmatpush.msra.mxu0 %v2118
    %2210 = vmatpush.msra.mxu0 %v2114
    %2211 = vmatpush.msra.mxu0 %v2110
    %2212 = vmatpush.msra.mxu0 %v2106
    %2213 = vmatpush.msra.mxu0 %v2102
    %2214 = vmatpush.msra.mxu0 %v2098
    %2215 = vmatpush.msra.mxu0 %v2094
    %2216 = vmatpush.msra.mxu0 %v2090
    %2217 = vmatpush.msra.mxu0 %v2086
    %2218 = vmatpush.msra.mxu0 %v2082
    %2219 = vmatmul.f32.gmra.mxu0 %v2073
    %v2220 = vpop.f32.mrf.mxu0
    %v2221 = vadd.f32 0.0, %v2220
    %2222 = vdwg.mxu0
    %v2223 = vadd.f32 %v2075, %v2161
    %v2224 = vadd.f32 %v2076, %v2181
    %v2225 = vadd.f32 %v2077, %v2201
    %v2226 = vadd.f32 %v2078, %v2221
    %v2227 = vxor.u32 %v2223, 2147483648
    %v2228 = vmul.f32 %v2227, 1.442695
    %v2229 = vpow.pop %v2228
    %v2230 = vadd.f32 %v2229, 1.0
    %v2231 = vrcp.pop %v2230
    %v2232 = vmul.f32 %v2230, %v2231
    %v2233 = vsub.f32 1.0, %v2232
    %v2234 = vmul.f32 %v2231, %v2233
    %v2235 = vadd.f32 %v2231, %v2234
    %vm2236 = vweird.f32 %v2230
    %vm2237 = vweird.f32 %v2231
    %vm2238 = vmor %vm2236, %vm2237
    %v2239 = vsel %vm2238, %v2231, %v2235
    %v2240 = vand.u32 2147483647, %v2230
    %vm2241 = vcmp.eq.f32.partialorder %v2240, 8.507059e+37
    %v2242 = vand.u32 %v2230, 2147483648
    %v2243 = vor.u32 1.1754944e-38, %v2242
    %v2244 = vsel %vm2241, %v2243, %v2239
    %v2245 = vmul.f32 1.0, %v2244
    %v2246 = vxor.u32 %v2224, 2147483648
    %v2247 = vmul.f32 %v2246, 1.442695
    %v2248 = vpow.pop %v2247
    %v2249 = vadd.f32 %v2248, 1.0
    %v2250 = vrcp.pop %v2249
    %v2251 = vmul.f32 %v2249, %v2250
    %v2252 = vsub.f32 1.0, %v2251
    %v2253 = vmul.f32 %v2250, %v2252
    %v2254 = vadd.f32 %v2250, %v2253
    %vm2255 = vweird.f32 %v2249
    %vm2256 = vweird.f32 %v2250
    %vm2257 = vmor %vm2255, %vm2256
    %v2258 = vsel %vm2257, %v2250, %v2254
    %v2259 = vand.u32 2147483647, %v2249
    %vm2260 = vcmp.eq.f32.partialorder %v2259, 8.507059e+37
    %v2261 = vand.u32 %v2249, 2147483648
    %v2262 = vor.u32 1.1754944e-38, %v2261
    %v2263 = vsel %vm2260, %v2262, %v2258
    %v2264 = vmul.f32 1.0, %v2263
    %v2265 = vtanh.pop %v2225
    %v2266 = vxor.u32 %v2226, 2147483648
    %v2267 = vmul.f32 %v2266, 1.442695
    %v2268 = vpow.pop %v2267
    %v2269 = vadd.f32 %v2268, 1.0
    %v2270 = vrcp.pop %v2269
    %v2271 = vmul.f32 %v2269, %v2270
    %v2272 = vsub.f32 1.0, %v2271
    %v2273 = vmul.f32 %v2270, %v2272
    %v2274 = vadd.f32 %v2270, %v2273
    %vm2275 = vweird.f32 %v2269
    %vm2276 = vweird.f32 %v2270
    %vm2277 = vmor %vm2275, %vm2276
    %v2278 = vsel %vm2277, %v2270, %v2274
    %v2279 = vand.u32 2147483647, %v2269
    %vm2280 = vcmp.eq.f32.partialorder %v2279, 8.507059e+37
    %v2281 = vand.u32 %v2269, 2147483648
    %v2282 = vor.u32 1.1754944e-38, %v2281
    %v2283 = vsel %vm2280, %v2282, %v2278
    %v2284 = vmul.f32 1.0, %v2283
    %v2285 = vmul.f32 %v2264, %v2071
    %v2286 = vmul.f32 %v2245, %v2265
    %v2287 = vadd.f32 %v2285, %v2286
    %v2288 = vtanh.pop %v2287
    %v2289 = vmul.f32 %v2284, %v2288
    %2290 = vst [vmem:[#allocation3 + $0x28] sm:$0xff] %v2289
    %v2291 = vld [vmem:[#allocation2 + $0xc0] sm:$0xff]
    %v2292 = vld [vmem:[#allocation2 + $0xc8] sm:$0xff]
    %v2293 = vld [vmem:[#allocation2 + $0xd0] sm:$0xff]
    %v2294 = vld [vmem:[#allocation2 + $0xd8] sm:$0xff]
    %v2295 = vld [vmem:[#allocation9] sm:$0xff]
    %v2296 = vld [vmem:[#allocation9 + $0x8] sm:$0xff]
    %v2297 = vld [vmem:[#allocation9 + $0x10] sm:$0xff]
    %v2298 = vld [vmem:[#allocation9 + $0x18] sm:$0xff]
    %v2299 = vld [vmem:[#allocation9 + $0x20] sm:$0xff]
    %v2300 = vld [vmem:[#allocation9 + $0x28] sm:$0xff]
    %v2301 = vld [vmem:[#allocation9 + $0x30] sm:$0xff]
    %v2302 = vld [vmem:[#allocation9 + $0x38] sm:$0xff]
    %v2303 = vld [vmem:[#allocation9 + $0x40] sm:$0xff]
    %v2304 = vld [vmem:[#allocation9 + $0x48] sm:$0xff]
    %v2305 = vld [vmem:[#allocation9 + $0x50] sm:$0xff]
    %v2306 = vld [vmem:[#allocation9 + $0x58] sm:$0xff]
    %v2307 = vld [vmem:[#allocation9 + $0x60] sm:$0xff]
    %v2308 = vld [vmem:[#allocation9 + $0x68] sm:$0xff]
    %v2309 = vld [vmem:[#allocation9 + $0x70] sm:$0xff]
    %v2310 = vld [vmem:[#allocation9 + $0x78] sm:$0xff]
    %v2311 = vld [vmem:[#allocation9 + $0x80] sm:$0xff]
    %v2312 = vld [vmem:[#allocation9 + $0x88] sm:$0xff]
    %v2313 = vld [vmem:[#allocation9 + $0x90] sm:$0xff]
    %v2314 = vld [vmem:[#allocation9 + $0x98] sm:$0xff]
    %v2315 = vld [vmem:[#allocation9 + $0xa0] sm:$0xff]
    %v2316 = vld [vmem:[#allocation9 + $0xa8] sm:$0xff]
    %v2317 = vld [vmem:[#allocation9 + $0xb0] sm:$0xff]
    %v2318 = vld [vmem:[#allocation9 + $0xb8] sm:$0xff]
    %v2319 = vld [vmem:[#allocation9 + $0xc0] sm:$0xff]
    %v2320 = vld [vmem:[#allocation9 + $0xc8] sm:$0xff]
    %v2321 = vld [vmem:[#allocation9 + $0xd0] sm:$0xff]
    %v2322 = vld [vmem:[#allocation9 + $0xd8] sm:$0xff]
    %v2323 = vld [vmem:[#allocation9 + $0xe0] sm:$0xff]
    %v2324 = vld [vmem:[#allocation9 + $0xe8] sm:$0xff]
    %v2325 = vld [vmem:[#allocation9 + $0xf0] sm:$0xff]
    %v2326 = vld [vmem:[#allocation9 + $0xf8] sm:$0xff]
    %v2327 = vld [vmem:[#allocation9 + $0x100] sm:$0xff]
    %v2328 = vld [vmem:[#allocation9 + $0x108] sm:$0xff]
    %v2329 = vld [vmem:[#allocation9 + $0x110] sm:$0xff]
    %v2330 = vld [vmem:[#allocation9 + $0x118] sm:$0xff]
    %v2331 = vld [vmem:[#allocation9 + $0x120] sm:$0xff]
    %v2332 = vld [vmem:[#allocation9 + $0x128] sm:$0xff]
    %v2333 = vld [vmem:[#allocation9 + $0x130] sm:$0xff]
    %v2334 = vld [vmem:[#allocation9 + $0x138] sm:$0xff]
    %v2335 = vld [vmem:[#allocation9 + $0x140] sm:$0xff]
    %v2336 = vld [vmem:[#allocation9 + $0x148] sm:$0xff]
    %v2337 = vld [vmem:[#allocation9 + $0x150] sm:$0xff]
    %v2338 = vld [vmem:[#allocation9 + $0x158] sm:$0xff]
    %v2339 = vld [vmem:[#allocation9 + $0x160] sm:$0xff]
    %v2340 = vld [vmem:[#allocation9 + $0x168] sm:$0xff]
    %v2341 = vld [vmem:[#allocation9 + $0x170] sm:$0xff]
    %v2342 = vld [vmem:[#allocation9 + $0x178] sm:$0xff]
    %v2343 = vld [vmem:[#allocation9 + $0x180] sm:$0xff]
    %v2344 = vld [vmem:[#allocation9 + $0x188] sm:$0xff]
    %v2345 = vld [vmem:[#allocation9 + $0x190] sm:$0xff]
    %v2346 = vld [vmem:[#allocation9 + $0x198] sm:$0xff]
    %v2347 = vld [vmem:[#allocation9 + $0x1a0] sm:$0xff]
    %v2348 = vld [vmem:[#allocation9 + $0x1a8] sm:$0xff]
    %v2349 = vld [vmem:[#allocation9 + $0x1b0] sm:$0xff]
    %v2350 = vld [vmem:[#allocation9 + $0x1b8] sm:$0xff]
    %v2351 = vld [vmem:[#allocation9 + $0x1c0] sm:$0xff]
    %v2352 = vld [vmem:[#allocation9 + $0x1c8] sm:$0xff]
    %v2353 = vld [vmem:[#allocation9 + $0x1d0] sm:$0xff]
    %v2354 = vld [vmem:[#allocation9 + $0x1d8] sm:$0xff]
    %v2355 = vld [vmem:[#allocation9 + $0x1e0] sm:$0xff]
    %v2356 = vld [vmem:[#allocation9 + $0x1e8] sm:$0xff]
    %v2357 = vld [vmem:[#allocation9 + $0x1f0] sm:$0xff]
    %v2358 = vld [vmem:[#allocation9 + $0x1f8] sm:$0xff]
    %2359 = vmatpush.msra.mxu0 %v2355
    %2360 = vmatpush.msra.mxu0 %v2351
    %2361 = vmatpush.msra.mxu0 %v2347
    %2362 = vmatpush.msra.mxu0 %v2343
    %2363 = vmatpush.msra.mxu0 %v2339
    %2364 = vmatpush.msra.mxu0 %v2335
    %2365 = vmatpush.msra.mxu0 %v2331
    %2366 = vmatpush.msra.mxu0 %v2327
    %2367 = vmatpush.msra.mxu0 %v2323
    %2368 = vmatpush.msra.mxu0 %v2319
    %2369 = vmatpush.msra.mxu0 %v2315
    %2370 = vmatpush.msra.mxu0 %v2311
    %2371 = vmatpush.msra.mxu0 %v2307
    %2372 = vmatpush.msra.mxu0 %v2303
    %2373 = vmatpush.msra.mxu0 %v2299
    %2374 = vmatpush.msra.mxu0 %v2295
    %2375 = vmatmul.f32.gmra.mxu0 %v2289
    %v2376 = vpop.f32.mrf.mxu0
    %v2377 = vadd.f32 0.0, %v2376
    %2378 = vdwg.mxu0
    %2379 = vmatpush.msra.mxu0 %v2356
    %2380 = vmatpush.msra.mxu0 %v2352
    %2381 = vmatpush.msra.mxu0 %v2348
    %2382 = vmatpush.msra.mxu0 %v2344
    %2383 = vmatpush.msra.mxu0 %v2340
    %2384 = vmatpush.msra.mxu0 %v2336
    %2385 = vmatpush.msra.mxu0 %v2332
    %2386 = vmatpush.msra.mxu0 %v2328
    %2387 = vmatpush.msra.mxu0 %v2324
    %2388 = vmatpush.msra.mxu0 %v2320
    %2389 = vmatpush.msra.mxu0 %v2316
    %2390 = vmatpush.msra.mxu0 %v2312
    %2391 = vmatpush.msra.mxu0 %v2308
    %2392 = vmatpush.msra.mxu0 %v2304
    %2393 = vmatpush.msra.mxu0 %v2300
    %2394 = vmatpush.msra.mxu0 %v2296
    %2395 = vmatmul.f32.gmra.mxu0 %v2289
    %v2396 = vpop.f32.mrf.mxu0
    %v2397 = vadd.f32 0.0, %v2396
    %2398 = vdwg.mxu0
    %2399 = vmatpush.msra.mxu0 %v2357
    %2400 = vmatpush.msra.mxu0 %v2353
    %2401 = vmatpush.msra.mxu0 %v2349
    %2402 = vmatpush.msra.mxu0 %v2345
    %2403 = vmatpush.msra.mxu0 %v2341
    %2404 = vmatpush.msra.mxu0 %v2337
    %2405 = vmatpush.msra.mxu0 %v2333
    %2406 = vmatpush.msra.mxu0 %v2329
    %2407 = vmatpush.msra.mxu0 %v2325
    %2408 = vmatpush.msra.mxu0 %v2321
    %2409 = vmatpush.msra.mxu0 %v2317
    %2410 = vmatpush.msra.mxu0 %v2313
    %2411 = vmatpush.msra.mxu0 %v2309
    %2412 = vmatpush.msra.mxu0 %v2305
    %2413 = vmatpush.msra.mxu0 %v2301
    %2414 = vmatpush.msra.mxu0 %v2297
    %2415 = vmatmul.f32.gmra.mxu0 %v2289
    %v2416 = vpop.f32.mrf.mxu0
    %v2417 = vadd.f32 0.0, %v2416
    %2418 = vdwg.mxu0
    %2419 = vmatpush.msra.mxu0 %v2358
    %2420 = vmatpush.msra.mxu0 %v2354
    %2421 = vmatpush.msra.mxu0 %v2350
    %2422 = vmatpush.msra.mxu0 %v2346
    %2423 = vmatpush.msra.mxu0 %v2342
    %2424 = vmatpush.msra.mxu0 %v2338
    %2425 = vmatpush.msra.mxu0 %v2334
    %2426 = vmatpush.msra.mxu0 %v2330
    %2427 = vmatpush.msra.mxu0 %v2326
    %2428 = vmatpush.msra.mxu0 %v2322
    %2429 = vmatpush.msra.mxu0 %v2318
    %2430 = vmatpush.msra.mxu0 %v2314
    %2431 = vmatpush.msra.mxu0 %v2310
    %2432 = vmatpush.msra.mxu0 %v2306
    %2433 = vmatpush.msra.mxu0 %v2302
    %2434 = vmatpush.msra.mxu0 %v2298
    %2435 = vmatmul.f32.gmra.mxu0 %v2289
    %v2436 = vpop.f32.mrf.mxu0
    %v2437 = vadd.f32 0.0, %v2436
    %2438 = vdwg.mxu0
    %v2439 = vadd.f32 %v2291, %v2377
    %v2440 = vadd.f32 %v2292, %v2397
    %v2441 = vadd.f32 %v2293, %v2417
    %v2442 = vadd.f32 %v2294, %v2437
    %v2443 = vxor.u32 %v2439, 2147483648
    %v2444 = vmul.f32 %v2443, 1.442695
    %v2445 = vpow.pop %v2444
    %v2446 = vadd.f32 %v2445, 1.0
    %v2447 = vrcp.pop %v2446
    %v2448 = vmul.f32 %v2446, %v2447
    %v2449 = vsub.f32 1.0, %v2448
    %v2450 = vmul.f32 %v2447, %v2449
    %v2451 = vadd.f32 %v2447, %v2450
    %vm2452 = vweird.f32 %v2446
    %vm2453 = vweird.f32 %v2447
    %vm2454 = vmor %vm2452, %vm2453
    %v2455 = vsel %vm2454, %v2447, %v2451
    %v2456 = vand.u32 2147483647, %v2446
    %vm2457 = vcmp.eq.f32.partialorder %v2456, 8.507059e+37
    %v2458 = vand.u32 %v2446, 2147483648
    %v2459 = vor.u32 1.1754944e-38, %v2458
    %v2460 = vsel %vm2457, %v2459, %v2455
    %v2461 = vmul.f32 1.0, %v2460
    %v2462 = vxor.u32 %v2440, 2147483648
    %v2463 = vmul.f32 %v2462, 1.442695
    %v2464 = vpow.pop %v2463
    %v2465 = vadd.f32 %v2464, 1.0
    %v2466 = vrcp.pop %v2465
    %v2467 = vmul.f32 %v2465, %v2466
    %v2468 = vsub.f32 1.0, %v2467
    %v2469 = vmul.f32 %v2466, %v2468
    %v2470 = vadd.f32 %v2466, %v2469
    %vm2471 = vweird.f32 %v2465
    %vm2472 = vweird.f32 %v2466
    %vm2473 = vmor %vm2471, %vm2472
    %v2474 = vsel %vm2473, %v2466, %v2470
    %v2475 = vand.u32 2147483647, %v2465
    %vm2476 = vcmp.eq.f32.partialorder %v2475, 8.507059e+37
    %v2477 = vand.u32 %v2465, 2147483648
    %v2478 = vor.u32 1.1754944e-38, %v2477
    %v2479 = vsel %vm2476, %v2478, %v2474
    %v2480 = vmul.f32 1.0, %v2479
    %v2481 = vtanh.pop %v2441
    %v2482 = vxor.u32 %v2442, 2147483648
    %v2483 = vmul.f32 %v2482, 1.442695
    %v2484 = vpow.pop %v2483
    %v2485 = vadd.f32 %v2484, 1.0
    %v2486 = vrcp.pop %v2485
    %v2487 = vmul.f32 %v2485, %v2486
    %v2488 = vsub.f32 1.0, %v2487
    %v2489 = vmul.f32 %v2486, %v2488
    %v2490 = vadd.f32 %v2486, %v2489
    %vm2491 = vweird.f32 %v2485
    %vm2492 = vweird.f32 %v2486
    %vm2493 = vmor %vm2491, %vm2492
    %v2494 = vsel %vm2493, %v2486, %v2490
    %v2495 = vand.u32 2147483647, %v2485
    %vm2496 = vcmp.eq.f32.partialorder %v2495, 8.507059e+37
    %v2497 = vand.u32 %v2485, 2147483648
    %v2498 = vor.u32 1.1754944e-38, %v2497
    %v2499 = vsel %vm2496, %v2498, %v2494
    %v2500 = vmul.f32 1.0, %v2499
    %v2501 = vmul.f32 %v2480, %v2287
    %v2502 = vmul.f32 %v2461, %v2481
    %v2503 = vadd.f32 %v2501, %v2502
    %v2504 = vtanh.pop %v2503
    %v2505 = vmul.f32 %v2500, %v2504
    %2506 = vst [vmem:[#allocation3 + $0x30] sm:$0xff] %v2505
    %v2507 = vld [vmem:[#allocation2 + $0xe0] sm:$0xff]
    %v2508 = vld [vmem:[#allocation2 + $0xe8] sm:$0xff]
    %v2509 = vld [vmem:[#allocation2 + $0xf0] sm:$0xff]
    %v2510 = vld [vmem:[#allocation2 + $0xf8] sm:$0xff]
    %v2511 = vld [vmem:[#allocation9] sm:$0xff]
    %v2512 = vld [vmem:[#allocation9 + $0x8] sm:$0xff]
    %v2513 = vld [vmem:[#allocation9 + $0x10] sm:$0xff]
    %v2514 = vld [vmem:[#allocation9 + $0x18] sm:$0xff]
    %v2515 = vld [vmem:[#allocation9 + $0x20] sm:$0xff]
    %v2516 = vld [vmem:[#allocation9 + $0x28] sm:$0xff]
    %v2517 = vld [vmem:[#allocation9 + $0x30] sm:$0xff]
    %v2518 = vld [vmem:[#allocation9 + $0x38] sm:$0xff]
    %v2519 = vld [vmem:[#allocation9 + $0x40] sm:$0xff]
    %v2520 = vld [vmem:[#allocation9 + $0x48] sm:$0xff]
    %v2521 = vld [vmem:[#allocation9 + $0x50] sm:$0xff]
    %v2522 = vld [vmem:[#allocation9 + $0x58] sm:$0xff]
    %v2523 = vld [vmem:[#allocation9 + $0x60] sm:$0xff]
    %v2524 = vld [vmem:[#allocation9 + $0x68] sm:$0xff]
    %v2525 = vld [vmem:[#allocation9 + $0x70] sm:$0xff]
    %v2526 = vld [vmem:[#allocation9 + $0x78] sm:$0xff]
    %v2527 = vld [vmem:[#allocation9 + $0x80] sm:$0xff]
    %v2528 = vld [vmem:[#allocation9 + $0x88] sm:$0xff]
    %v2529 = vld [vmem:[#allocation9 + $0x90] sm:$0xff]
    %v2530 = vld [vmem:[#allocation9 + $0x98] sm:$0xff]
    %v2531 = vld [vmem:[#allocation9 + $0xa0] sm:$0xff]
    %v2532 = vld [vmem:[#allocation9 + $0xa8] sm:$0xff]
    %v2533 = vld [vmem:[#allocation9 + $0xb0] sm:$0xff]
    %v2534 = vld [vmem:[#allocation9 + $0xb8] sm:$0xff]
    %v2535 = vld [vmem:[#allocation9 + $0xc0] sm:$0xff]
    %v2536 = vld [vmem:[#allocation9 + $0xc8] sm:$0xff]
    %v2537 = vld [vmem:[#allocation9 + $0xd0] sm:$0xff]
    %v2538 = vld [vmem:[#allocation9 + $0xd8] sm:$0xff]
    %v2539 = vld [vmem:[#allocation9 + $0xe0] sm:$0xff]
    %v2540 = vld [vmem:[#allocation9 + $0xe8] sm:$0xff]
    %v2541 = vld [vmem:[#allocation9 + $0xf0] sm:$0xff]
    %v2542 = vld [vmem:[#allocation9 + $0xf8] sm:$0xff]
    %v2543 = vld [vmem:[#allocation9 + $0x100] sm:$0xff]
    %v2544 = vld [vmem:[#allocation9 + $0x108] sm:$0xff]
    %v2545 = vld [vmem:[#allocation9 + $0x110] sm:$0xff]
    %v2546 = vld [vmem:[#allocation9 + $0x118] sm:$0xff]
    %v2547 = vld [vmem:[#allocation9 + $0x120] sm:$0xff]
    %v2548 = vld [vmem:[#allocation9 + $0x128] sm:$0xff]
    %v2549 = vld [vmem:[#allocation9 + $0x130] sm:$0xff]
    %v2550 = vld [vmem:[#allocation9 + $0x138] sm:$0xff]
    %v2551 = vld [vmem:[#allocation9 + $0x140] sm:$0xff]
    %v2552 = vld [vmem:[#allocation9 + $0x148] sm:$0xff]
    %v2553 = vld [vmem:[#allocation9 + $0x150] sm:$0xff]
    %v2554 = vld [vmem:[#allocation9 + $0x158] sm:$0xff]
    %v2555 = vld [vmem:[#allocation9 + $0x160] sm:$0xff]
    %v2556 = vld [vmem:[#allocation9 + $0x168] sm:$0xff]
    %v2557 = vld [vmem:[#allocation9 + $0x170] sm:$0xff]
    %v2558 = vld [vmem:[#allocation9 + $0x178] sm:$0xff]
    %v2559 = vld [vmem:[#allocation9 + $0x180] sm:$0xff]
    %v2560 = vld [vmem:[#allocation9 + $0x188] sm:$0xff]
    %v2561 = vld [vmem:[#allocation9 + $0x190] sm:$0xff]
    %v2562 = vld [vmem:[#allocation9 + $0x198] sm:$0xff]
    %v2563 = vld [vmem:[#allocation9 + $0x1a0] sm:$0xff]
    %v2564 = vld [vmem:[#allocation9 + $0x1a8] sm:$0xff]
    %v2565 = vld [vmem:[#allocation9 + $0x1b0] sm:$0xff]
    %v2566 = vld [vmem:[#allocation9 + $0x1b8] sm:$0xff]
    %v2567 = vld [vmem:[#allocation9 + $0x1c0] sm:$0xff]
    %v2568 = vld [vmem:[#allocation9 + $0x1c8] sm:$0xff]
    %v2569 = vld [vmem:[#allocation9 + $0x1d0] sm:$0xff]
    %v2570 = vld [vmem:[#allocation9 + $0x1d8] sm:$0xff]
    %v2571 = vld [vmem:[#allocation9 + $0x1e0] sm:$0xff]
    %v2572 = vld [vmem:[#allocation9 + $0x1e8] sm:$0xff]
    %v2573 = vld [vmem:[#allocation9 + $0x1f0] sm:$0xff]
    %v2574 = vld [vmem:[#allocation9 + $0x1f8] sm:$0xff]
    %2575 = vmatpush.msra.mxu0 %v2571
    %2576 = vmatpush.msra.mxu0 %v2567
    %2577 = vmatpush.msra.mxu0 %v2563
    %2578 = vmatpush.msra.mxu0 %v2559
    %2579 = vmatpush.msra.mxu0 %v2555
    %2580 = vmatpush.msra.mxu0 %v2551
    %2581 = vmatpush.msra.mxu0 %v2547
    %2582 = vmatpush.msra.mxu0 %v2543
    %2583 = vmatpush.msra.mxu0 %v2539
    %2584 = vmatpush.msra.mxu0 %v2535
    %2585 = vmatpush.msra.mxu0 %v2531
    %2586 = vmatpush.msra.mxu0 %v2527
    %2587 = vmatpush.msra.mxu0 %v2523
    %2588 = vmatpush.msra.mxu0 %v2519
    %2589 = vmatpush.msra.mxu0 %v2515
    %2590 = vmatpush.msra.mxu0 %v2511
    %2591 = vmatmul.f32.gmra.mxu0 %v2505
    %v2592 = vpop.f32.mrf.mxu0
    %v2593 = vadd.f32 0.0, %v2592
    %2594 = vdwg.mxu0
    %2595 = vmatpush.msra.mxu0 %v2572
    %2596 = vmatpush.msra.mxu0 %v2568
    %2597 = vmatpush.msra.mxu0 %v2564
    %2598 = vmatpush.msra.mxu0 %v2560
    %2599 = vmatpush.msra.mxu0 %v2556
    %2600 = vmatpush.msra.mxu0 %v2552
    %2601 = vmatpush.msra.mxu0 %v2548
    %2602 = vmatpush.msra.mxu0 %v2544
    %2603 = vmatpush.msra.mxu0 %v2540
    %2604 = vmatpush.msra.mxu0 %v2536
    %2605 = vmatpush.msra.mxu0 %v2532
    %2606 = vmatpush.msra.mxu0 %v2528
    %2607 = vmatpush.msra.mxu0 %v2524
    %2608 = vmatpush.msra.mxu0 %v2520
    %2609 = vmatpush.msra.mxu0 %v2516
    %2610 = vmatpush.msra.mxu0 %v2512
    %2611 = vmatmul.f32.gmra.mxu0 %v2505
    %v2612 = vpop.f32.mrf.mxu0
    %v2613 = vadd.f32 0.0, %v2612
    %2614 = vdwg.mxu0
    %2615 = vmatpush.msra.mxu0 %v2573
    %2616 = vmatpush.msra.mxu0 %v2569
    %2617 = vmatpush.msra.mxu0 %v2565
    %2618 = vmatpush.msra.mxu0 %v2561
    %2619 = vmatpush.msra.mxu0 %v2557
    %2620 = vmatpush.msra.mxu0 %v2553
    %2621 = vmatpush.msra.mxu0 %v2549
    %2622 = vmatpush.msra.mxu0 %v2545
    %2623 = vmatpush.msra.mxu0 %v2541
    %2624 = vmatpush.msra.mxu0 %v2537
    %2625 = vmatpush.msra.mxu0 %v2533
    %2626 = vmatpush.msra.mxu0 %v2529
    %2627 = vmatpush.msra.mxu0 %v2525
    %2628 = vmatpush.msra.mxu0 %v2521
    %2629 = vmatpush.msra.mxu0 %v2517
    %2630 = vmatpush.msra.mxu0 %v2513
    %2631 = vmatmul.f32.gmra.mxu0 %v2505
    %v2632 = vpop.f32.mrf.mxu0
    %v2633 = vadd.f32 0.0, %v2632
    %2634 = vdwg.mxu0
    %2635 = vmatpush.msra.mxu0 %v2574
    %2636 = vmatpush.msra.mxu0 %v2570
    %2637 = vmatpush.msra.mxu0 %v2566
    %2638 = vmatpush.msra.mxu0 %v2562
    %2639 = vmatpush.msra.mxu0 %v2558
    %2640 = vmatpush.msra.mxu0 %v2554
    %2641 = vmatpush.msra.mxu0 %v2550
    %2642 = vmatpush.msra.mxu0 %v2546
    %2643 = vmatpush.msra.mxu0 %v2542
    %2644 = vmatpush.msra.mxu0 %v2538
    %2645 = vmatpush.msra.mxu0 %v2534
    %2646 = vmatpush.msra.mxu0 %v2530
    %2647 = vmatpush.msra.mxu0 %v2526
    %2648 = vmatpush.msra.mxu0 %v2522
    %2649 = vmatpush.msra.mxu0 %v2518
    %2650 = vmatpush.msra.mxu0 %v2514
    %2651 = vmatmul.f32.gmra.mxu0 %v2505
    %v2652 = vpop.f32.mrf.mxu0
    %v2653 = vadd.f32 0.0, %v2652
    %2654 = vdwg.mxu0
    %v2655 = vadd.f32 %v2507, %v2593
    %v2656 = vadd.f32 %v2508, %v2613
    %v2657 = vadd.f32 %v2509, %v2633
    %v2658 = vadd.f32 %v2510, %v2653
    %v2659 = vxor.u32 %v2655, 2147483648
    %v2660 = vmul.f32 %v2659, 1.442695
    %v2661 = vpow.pop %v2660
    %v2662 = vadd.f32 %v2661, 1.0
    %v2663 = vrcp.pop %v2662
    %v2664 = vmul.f32 %v2662, %v2663
    %v2665 = vsub.f32 1.0, %v2664
    %v2666 = vmul.f32 %v2663, %v2665
    %v2667 = vadd.f32 %v2663, %v2666
    %vm2668 = vweird.f32 %v2662
    %vm2669 = vweird.f32 %v2663
    %vm2670 = vmor %vm2668, %vm2669
    %v2671 = vsel %vm2670, %v2663, %v2667
    %v2672 = vand.u32 2147483647, %v2662
    %vm2673 = vcmp.eq.f32.partialorder %v2672, 8.507059e+37
    %v2674 = vand.u32 %v2662, 2147483648
    %v2675 = vor.u32 1.1754944e-38, %v2674
    %v2676 = vsel %vm2673, %v2675, %v2671
    %v2677 = vmul.f32 1.0, %v2676
    %v2678 = vxor.u32 %v2656, 2147483648
    %v2679 = vmul.f32 %v2678, 1.442695
    %v2680 = vpow.pop %v2679
    %v2681 = vadd.f32 %v2680, 1.0
    %v2682 = vrcp.pop %v2681
    %v2683 = vmul.f32 %v2681, %v2682
    %v2684 = vsub.f32 1.0, %v2683
    %v2685 = vmul.f32 %v2682, %v2684
    %v2686 = vadd.f32 %v2682, %v2685
    %vm2687 = vweird.f32 %v2681
    %vm2688 = vweird.f32 %v2682
    %vm2689 = vmor %vm2687, %vm2688
    %v2690 = vsel %vm2689, %v2682, %v2686
    %v2691 = vand.u32 2147483647, %v2681
    %vm2692 = vcmp.eq.f32.partialorder %v2691, 8.507059e+37
    %v2693 = vand.u32 %v2681, 2147483648
    %v2694 = vor.u32 1.1754944e-38, %v2693
    %v2695 = vsel %vm2692, %v2694, %v2690
    %v2696 = vmul.f32 1.0, %v2695
    %v2697 = vtanh.pop %v2657
    %v2698 = vxor.u32 %v2658, 2147483648
    %v2699 = vmul.f32 %v2698, 1.442695
    %v2700 = vpow.pop %v2699
    %v2701 = vadd.f32 %v2700, 1.0
    %v2702 = vrcp.pop %v2701
    %v2703 = vmul.f32 %v2701, %v2702
    %v2704 = vsub.f32 1.0, %v2703
    %v2705 = vmul.f32 %v2702, %v2704
    %v2706 = vadd.f32 %v2702, %v2705
    %vm2707 = vweird.f32 %v2701
    %vm2708 = vweird.f32 %v2702
    %vm2709 = vmor %vm2707, %vm2708
    %v2710 = vsel %vm2709, %v2702, %v2706
    %v2711 = vand.u32 2147483647, %v2701
    %vm2712 = vcmp.eq.f32.partialorder %v2711, 8.507059e+37
    %v2713 = vand.u32 %v2701, 2147483648
    %v2714 = vor.u32 1.1754944e-38, %v2713
    %v2715 = vsel %vm2712, %v2714, %v2710
    %v2716 = vmul.f32 1.0, %v2715
    %v2717 = vmul.f32 %v2696, %v2503
    %v2718 = vmul.f32 %v2677, %v2697
    %v2719 = vadd.f32 %v2717, %v2718
    %v2720 = vtanh.pop %v2719
    %v2721 = vmul.f32 %v2716, %v2720
    %2722 = vst [vmem:[#allocation3 + $0x38] sm:$0xff] %v2721
    %2723 = vst [vmem:[#allocation25] sm:$0xff] %v2721
    %2724 = vst [vmem:[#allocation27] sm:$0xff] %v2719
    %v2725 = vld [vmem:[#allocation3] sm:$0xff]
    %v2726 = vld [vmem:[#allocation3 + $0x8] sm:$0xff]
    %v2727 = vld [vmem:[#allocation3 + $0x10] sm:$0xff]
    %v2728 = vld [vmem:[#allocation3 + $0x18] sm:$0xff]
    %v2729 = vld [vmem:[#allocation3 + $0x20] sm:$0xff]
    %v2730 = vld [vmem:[#allocation3 + $0x28] sm:$0xff]
    %v2731 = vld [vmem:[#allocation3 + $0x30] sm:$0xff]
    %v2732 = vld [vmem:[#allocation3 + $0x38] sm:$0xff]
    %v2733 = vld [vmem:[#allocation12] sm:$0xff]
    %v2734 = vld [vmem:[#allocation12 + $0x8] sm:$0xff]
    %v2735 = vld [vmem:[#allocation12 + $0x10] sm:$0xff]
    %v2736 = vld [vmem:[#allocation12 + $0x18] sm:$0xff]
    %v2737 = vld [vmem:[#allocation12 + $0x20] sm:$0xff]
    %v2738 = vld [vmem:[#allocation12 + $0x28] sm:$0xff]
    %v2739 = vld [vmem:[#allocation12 + $0x30] sm:$0xff]
    %v2740 = vld [vmem:[#allocation12 + $0x38] sm:$0xff]
    %v2741 = vld [vmem:[#allocation12 + $0x40] sm:$0xff]
    %v2742 = vld [vmem:[#allocation12 + $0x48] sm:$0xff]
    %v2743 = vld [vmem:[#allocation12 + $0x50] sm:$0xff]
    %v2744 = vld [vmem:[#allocation12 + $0x58] sm:$0xff]
    %v2745 = vld [vmem:[#allocation12 + $0x60] sm:$0xff]
    %v2746 = vld [vmem:[#allocation12 + $0x68] sm:$0xff]
    %v2747 = vld [vmem:[#allocation12 + $0x70] sm:$0xff]
    %v2748 = vld [vmem:[#allocation12 + $0x78] sm:$0xff]
    %v2749 = vld [vmem:[#allocation12 + $0x80] sm:$0xff]
    %v2750 = vld [vmem:[#allocation12 + $0x88] sm:$0xff]
    %v2751 = vld [vmem:[#allocation12 + $0x90] sm:$0xff]
    %v2752 = vld [vmem:[#allocation12 + $0x98] sm:$0xff]
    %v2753 = vld [vmem:[#allocation12 + $0xa0] sm:$0xff]
    %v2754 = vld [vmem:[#allocation12 + $0xa8] sm:$0xff]
    %v2755 = vld [vmem:[#allocation12 + $0xb0] sm:$0xff]
    %v2756 = vld [vmem:[#allocation12 + $0xb8] sm:$0xff]
    %v2757 = vld [vmem:[#allocation12 + $0xc0] sm:$0xff]
    %v2758 = vld [vmem:[#allocation12 + $0xc8] sm:$0xff]
    %v2759 = vld [vmem:[#allocation12 + $0xd0] sm:$0xff]
    %v2760 = vld [vmem:[#allocation12 + $0xd8] sm:$0xff]
    %v2761 = vld [vmem:[#allocation12 + $0xe0] sm:$0xff]
    %v2762 = vld [vmem:[#allocation12 + $0xe8] sm:$0xff]
    %v2763 = vld [vmem:[#allocation12 + $0xf0] sm:$0xff]
    %v2764 = vld [vmem:[#allocation12 + $0xf8] sm:$0xff]
    %v2765 = vld [vmem:[#allocation12 + $0x100] sm:$0xff]
    %v2766 = vld [vmem:[#allocation12 + $0x108] sm:$0xff]
    %v2767 = vld [vmem:[#allocation12 + $0x110] sm:$0xff]
    %v2768 = vld [vmem:[#allocation12 + $0x118] sm:$0xff]
    %v2769 = vld [vmem:[#allocation12 + $0x120] sm:$0xff]
    %v2770 = vld [vmem:[#allocation12 + $0x128] sm:$0xff]
    %v2771 = vld [vmem:[#allocation12 + $0x130] sm:$0xff]
    %v2772 = vld [vmem:[#allocation12 + $0x138] sm:$0xff]
    %v2773 = vld [vmem:[#allocation12 + $0x140] sm:$0xff]
    %v2774 = vld [vmem:[#allocation12 + $0x148] sm:$0xff]
    %v2775 = vld [vmem:[#allocation12 + $0x150] sm:$0xff]
    %v2776 = vld [vmem:[#allocation12 + $0x158] sm:$0xff]
    %v2777 = vld [vmem:[#allocation12 + $0x160] sm:$0xff]
    %v2778 = vld [vmem:[#allocation12 + $0x168] sm:$0xff]
    %v2779 = vld [vmem:[#allocation12 + $0x170] sm:$0xff]
    %v2780 = vld [vmem:[#allocation12 + $0x178] sm:$0xff]
    %v2781 = vld [vmem:[#allocation12 + $0x180] sm:$0xff]
    %v2782 = vld [vmem:[#allocation12 + $0x188] sm:$0xff]
    %v2783 = vld [vmem:[#allocation12 + $0x190] sm:$0xff]
    %v2784 = vld [vmem:[#allocation12 + $0x198] sm:$0xff]
    %v2785 = vld [vmem:[#allocation12 + $0x1a0] sm:$0xff]
    %v2786 = vld [vmem:[#allocation12 + $0x1a8] sm:$0xff]
    %v2787 = vld [vmem:[#allocation12 + $0x1b0] sm:$0xff]
    %v2788 = vld [vmem:[#allocation12 + $0x1b8] sm:$0xff]
    %v2789 = vld [vmem:[#allocation12 + $0x1c0] sm:$0xff]
    %v2790 = vld [vmem:[#allocation12 + $0x1c8] sm:$0xff]
    %v2791 = vld [vmem:[#allocation12 + $0x1d0] sm:$0xff]
    %v2792 = vld [vmem:[#allocation12 + $0x1d8] sm:$0xff]
    %v2793 = vld [vmem:[#allocation12 + $0x1e0] sm:$0xff]
    %v2794 = vld [vmem:[#allocation12 + $0x1e8] sm:$0xff]
    %v2795 = vld [vmem:[#allocation12 + $0x1f0] sm:$0xff]
    %v2796 = vld [vmem:[#allocation12 + $0x1f8] sm:$0xff]
    %v2797 = vld [vmem:[%s6] sm:$0xf]
    %v2799 = vperm.slane %v2797, 0
    %v2800 = vperm.slane %v2797, 1
    %v2801 = vperm.slane %v2797, 2
    %v2802 = vperm.slane %v2797, 3
    %2807 = vmatpush.msra.mxu0 %v2793
    %2808 = vmatpush.msra.mxu0 %v2789
    %2809 = vmatpush.msra.mxu0 %v2785
    %2810 = vmatpush.msra.mxu0 %v2781
    %2811 = vmatpush.msra.mxu0 %v2777
    %2812 = vmatpush.msra.mxu0 %v2773
    %2813 = vmatpush.msra.mxu0 %v2769
    %2814 = vmatpush.msra.mxu0 %v2765
    %2815 = vmatpush.msra.mxu0 %v2761
    %2816 = vmatpush.msra.mxu0 %v2757
    %2817 = vmatpush.msra.mxu0 %v2753
    %2818 = vmatpush.msra.mxu0 %v2749
    %2819 = vmatpush.msra.mxu0 %v2745
    %2820 = vmatpush.msra.mxu0 %v2741
    %2821 = vmatpush.msra.mxu0 %v2737
    %2822 = vmatpush.msra.mxu0 %v2733
    %2823 = vmatmul.f32.gmra.mxu0 %v2725
    %v2824 = vpop.f32.mrf.mxu0
    %v2825 = vadd.f32 %v2799, %v2824
    %2826 = vmatmul.f32.gmra.mxu0 %v2726
    %v2827 = vpop.f32.mrf.mxu0
    %v2828 = vadd.f32 %v2799, %v2827
    %2829 = vmatmul.f32.gmra.mxu0 %v2727
    %v2830 = vpop.f32.mrf.mxu0
    %v2831 = vadd.f32 %v2799, %v2830
    %2832 = vmatmul.f32.gmra.mxu0 %v2728
    %v2833 = vpop.f32.mrf.mxu0
    %v2834 = vadd.f32 %v2799, %v2833
    %2835 = vmatmul.f32.gmra.mxu0 %v2729
    %v2836 = vpop.f32.mrf.mxu0
    %v2837 = vadd.f32 %v2799, %v2836
    %2838 = vmatmul.f32.gmra.mxu0 %v2730
    %v2839 = vpop.f32.mrf.mxu0
    %v2840 = vadd.f32 %v2799, %v2839
    %2841 = vmatmul.f32.gmra.mxu0 %v2731
    %v2842 = vpop.f32.mrf.mxu0
    %v2843 = vadd.f32 %v2799, %v2842
    %2844 = vmatmul.f32.gmra.mxu0 %v2732
    %v2845 = vpop.f32.mrf.mxu0
    %v2846 = vadd.f32 %v2799, %v2845
    %2847 = vdwg.mxu0
    %2848 = vmatpush.msra.mxu0 %v2794
    %2849 = vmatpush.msra.mxu0 %v2790
    %2850 = vmatpush.msra.mxu0 %v2786
    %2851 = vmatpush.msra.mxu0 %v2782
    %2852 = vmatpush.msra.mxu0 %v2778
    %2853 = vmatpush.msra.mxu0 %v2774
    %2854 = vmatpush.msra.mxu0 %v2770
    %2855 = vmatpush.msra.mxu0 %v2766
    %2856 = vmatpush.msra.mxu0 %v2762
    %2857 = vmatpush.msra.mxu0 %v2758
    %2858 = vmatpush.msra.mxu0 %v2754
    %2859 = vmatpush.msra.mxu0 %v2750
    %2860 = vmatpush.msra.mxu0 %v2746
    %2861 = vmatpush.msra.mxu0 %v2742
    %2862 = vmatpush.msra.mxu0 %v2738
    %2863 = vmatpush.msra.mxu0 %v2734
    %2864 = vmatmul.f32.gmra.mxu0 %v2725
    %v2865 = vpop.f32.mrf.mxu0
    %v2866 = vadd.f32 %v2800, %v2865
    %2867 = vmatmul.f32.gmra.mxu0 %v2726
    %v2868 = vpop.f32.mrf.mxu0
    %v2869 = vadd.f32 %v2800, %v2868
    %2870 = vmatmul.f32.gmra.mxu0 %v2727
    %v2871 = vpop.f32.mrf.mxu0
    %v2872 = vadd.f32 %v2800, %v2871
    %2873 = vmatmul.f32.gmra.mxu0 %v2728
    %v2874 = vpop.f32.mrf.mxu0
    %v2875 = vadd.f32 %v2800, %v2874
    %2876 = vmatmul.f32.gmra.mxu0 %v2729
    %v2877 = vpop.f32.mrf.mxu0
    %v2878 = vadd.f32 %v2800, %v2877
    %2879 = vmatmul.f32.gmra.mxu0 %v2730
    %v2880 = vpop.f32.mrf.mxu0
    %v2881 = vadd.f32 %v2800, %v2880
    %2882 = vmatmul.f32.gmra.mxu0 %v2731
    %v2883 = vpop.f32.mrf.mxu0
    %v2884 = vadd.f32 %v2800, %v2883
    %2885 = vmatmul.f32.gmra.mxu0 %v2732
    %v2886 = vpop.f32.mrf.mxu0
    %v2887 = vadd.f32 %v2800, %v2886
    %2888 = vdwg.mxu0
    %2889 = vmatpush.msra.mxu0 %v2795
    %2890 = vmatpush.msra.mxu0 %v2791
    %2891 = vmatpush.msra.mxu0 %v2787
    %2892 = vmatpush.msra.mxu0 %v2783
    %2893 = vmatpush.msra.mxu0 %v2779
    %2894 = vmatpush.msra.mxu0 %v2775
    %2895 = vmatpush.msra.mxu0 %v2771
    %2896 = vmatpush.msra.mxu0 %v2767
    %2897 = vmatpush.msra.mxu0 %v2763
    %2898 = vmatpush.msra.mxu0 %v2759
    %2899 = vmatpush.msra.mxu0 %v2755
    %2900 = vmatpush.msra.mxu0 %v2751
    %2901 = vmatpush.msra.mxu0 %v2747
    %2902 = vmatpush.msra.mxu0 %v2743
    %2903 = vmatpush.msra.mxu0 %v2739
    %2904 = vmatpush.msra.mxu0 %v2735
    %2905 = vmatmul.f32.gmra.mxu0 %v2725
    %v2906 = vpop.f32.mrf.mxu0
    %v2907 = vadd.f32 %v2801, %v2906
    %2908 = vmatmul.f32.gmra.mxu0 %v2726
    %v2909 = vpop.f32.mrf.mxu0
    %v2910 = vadd.f32 %v2801, %v2909
    %2911 = vmatmul.f32.gmra.mxu0 %v2727
    %v2912 = vpop.f32.mrf.mxu0
    %v2913 = vadd.f32 %v2801, %v2912
    %2914 = vmatmul.f32.gmra.mxu0 %v2728
    %v2915 = vpop.f32.mrf.mxu0
    %v2916 = vadd.f32 %v2801, %v2915
    %2917 = vmatmul.f32.gmra.mxu0 %v2729
    %v2918 = vpop.f32.mrf.mxu0
    %v2919 = vadd.f32 %v2801, %v2918
    %2920 = vmatmul.f32.gmra.mxu0 %v2730
    %v2921 = vpop.f32.mrf.mxu0
    %v2922 = vadd.f32 %v2801, %v2921
    %2923 = vmatmul.f32.gmra.mxu0 %v2731
    %v2924 = vpop.f32.mrf.mxu0
    %v2925 = vadd.f32 %v2801, %v2924
    %2926 = vmatmul.f32.gmra.mxu0 %v2732
    %v2927 = vpop.f32.mrf.mxu0
    %v2928 = vadd.f32 %v2801, %v2927
    %2929 = vdwg.mxu0
    %2930 = vmatpush.msra.mxu0 %v2796
    %2931 = vmatpush.msra.mxu0 %v2792
    %2932 = vmatpush.msra.mxu0 %v2788
    %2933 = vmatpush.msra.mxu0 %v2784
    %2934 = vmatpush.msra.mxu0 %v2780
    %2935 = vmatpush.msra.mxu0 %v2776
    %2936 = vmatpush.msra.mxu0 %v2772
    %2937 = vmatpush.msra.mxu0 %v2768
    %2938 = vmatpush.msra.mxu0 %v2764
    %2939 = vmatpush.msra.mxu0 %v2760
    %2940 = vmatpush.msra.mxu0 %v2756
    %2941 = vmatpush.msra.mxu0 %v2752
    %2942 = vmatpush.msra.mxu0 %v2748
    %2943 = vmatpush.msra.mxu0 %v2744
    %2944 = vmatpush.msra.mxu0 %v2740
    %2945 = vmatpush.msra.mxu0 %v2736
    %2946 = vmatmul.f32.gmra.mxu0 %v2725
    %v2947 = vpop.f32.mrf.mxu0
    %v2948 = vadd.f32 %v2802, %v2947
    %2949 = vmatmul.f32.gmra.mxu0 %v2726
    %v2950 = vpop.f32.mrf.mxu0
    %v2951 = vadd.f32 %v2802, %v2950
    %2952 = vmatmul.f32.gmra.mxu0 %v2727
    %v2953 = vpop.f32.mrf.mxu0
    %v2954 = vadd.f32 %v2802, %v2953
    %2955 = vmatmul.f32.gmra.mxu0 %v2728
    %v2956 = vpop.f32.mrf.mxu0
    %v2957 = vadd.f32 %v2802, %v2956
    %2958 = vmatmul.f32.gmra.mxu0 %v2729
    %v2959 = vpop.f32.mrf.mxu0
    %v2960 = vadd.f32 %v2802, %v2959
    %2961 = vmatmul.f32.gmra.mxu0 %v2730
    %v2962 = vpop.f32.mrf.mxu0
    %v2963 = vadd.f32 %v2802, %v2962
    %2964 = vmatmul.f32.gmra.mxu0 %v2731
    %v2965 = vpop.f32.mrf.mxu0
    %v2966 = vadd.f32 %v2802, %v2965
    %2967 = vmatmul.f32.gmra.mxu0 %v2732
    %v2968 = vpop.f32.mrf.mxu0
    %v2969 = vadd.f32 %v2802, %v2968
    %2970 = vdwg.mxu0
    %2971 = vst [vmem:[#allocation2] sm:$0xff] %v2825
    %2972 = vst [vmem:[#allocation2 + $0x8] sm:$0xff] %v2866
    %2973 = vst [vmem:[#allocation2 + $0x10] sm:$0xff] %v2907
    %2974 = vst [vmem:[#allocation2 + $0x18] sm:$0xff] %v2948
    %2975 = vst [vmem:[#allocation2 + $0x20] sm:$0xff] %v2828
    %2976 = vst [vmem:[#allocation2 + $0x28] sm:$0xff] %v2869
    %2977 = vst [vmem:[#allocation2 + $0x30] sm:$0xff] %v2910
    %2978 = vst [vmem:[#allocation2 + $0x38] sm:$0xff] %v2951
    %2979 = vst [vmem:[#allocation2 + $0x40] sm:$0xff] %v2831
    %2980 = vst [vmem:[#allocation2 + $0x48] sm:$0xff] %v2872
    %2981 = vst [vmem:[#allocation2 + $0x50] sm:$0xff] %v2913
    %2982 = vst [vmem:[#allocation2 + $0x58] sm:$0xff] %v2954
    %2983 = vst [vmem:[#allocation2 + $0x60] sm:$0xff] %v2834
    %2984 = vst [vmem:[#allocation2 + $0x68] sm:$0xff] %v2875
    %2985 = vst [vmem:[#allocation2 + $0x70] sm:$0xff] %v2916
    %2986 = vst [vmem:[#allocation2 + $0x78] sm:$0xff] %v2957
    %2987 = vst [vmem:[#allocation2 + $0x80] sm:$0xff] %v2837
    %2988 = vst [vmem:[#allocation2 + $0x88] sm:$0xff] %v2878
    %2989 = vst [vmem:[#allocation2 + $0x90] sm:$0xff] %v2919
    %2990 = vst [vmem:[#allocation2 + $0x98] sm:$0xff] %v2960
    %2991 = vst [vmem:[#allocation2 + $0xa0] sm:$0xff] %v2840
    %2992 = vst [vmem:[#allocation2 + $0xa8] sm:$0xff] %v2881
    %2993 = vst [vmem:[#allocation2 + $0xb0] sm:$0xff] %v2922
    %2994 = vst [vmem:[#allocation2 + $0xb8] sm:$0xff] %v2963
    %2995 = vst [vmem:[#allocation2 + $0xc0] sm:$0xff] %v2843
    %2996 = vst [vmem:[#allocation2 + $0xc8] sm:$0xff] %v2884
    %2997 = vst [vmem:[#allocation2 + $0xd0] sm:$0xff] %v2925
    %2998 = vst [vmem:[#allocation2 + $0xd8] sm:$0xff] %v2966
    %2999 = vst [vmem:[#allocation2 + $0xe0] sm:$0xff] %v2846
    %3000 = vst [vmem:[#allocation2 + $0xe8] sm:$0xff] %v2887
    %3001 = vst [vmem:[#allocation2 + $0xf0] sm:$0xff] %v2928
    %3002 = vst [vmem:[#allocation2 + $0xf8] sm:$0xff] %v2969
    %s3003 = scalar_lea.vmem [#allocation18], 8
    %v3004 = vld [vmem:[%s3003] sm:$0xff]
    %s3005 = scalar_lea.vmem [#allocation19], 8
    %v3006 = vld [vmem:[%s3005] sm:$0xff]
    %v3007 = vld [vmem:[#allocation2] sm:$0xff]
    %v3008 = vld [vmem:[#allocation2 + $0x8] sm:$0xff]
    %v3009 = vld [vmem:[#allocation2 + $0x10] sm:$0xff]
    %v3010 = vld [vmem:[#allocation2 + $0x18] sm:$0xff]
    %v3011 = vld [vmem:[#allocation13] sm:$0xff]
    %v3012 = vld [vmem:[#allocation13 + $0x8] sm:$0xff]
    %v3013 = vld [vmem:[#allocation13 + $0x10] sm:$0xff]
    %v3014 = vld [vmem:[#allocation13 + $0x18] sm:$0xff]
    %v3015 = vld [vmem:[#allocation13 + $0x20] sm:$0xff]
    %v3016 = vld [vmem:[#allocation13 + $0x28] sm:$0xff]
    %v3017 = vld [vmem:[#allocation13 + $0x30] sm:$0xff]
    %v3018 = vld [vmem:[#allocation13 + $0x38] sm:$0xff]
    %v3019 = vld [vmem:[#allocation13 + $0x40] sm:$0xff]
    %v3020 = vld [vmem:[#allocation13 + $0x48] sm:$0xff]
    %v3021 = vld [vmem:[#allocation13 + $0x50] sm:$0xff]
    %v3022 = vld [vmem:[#allocation13 + $0x58] sm:$0xff]
    %v3023 = vld [vmem:[#allocation13 + $0x60] sm:$0xff]
    %v3024 = vld [vmem:[#allocation13 + $0x68] sm:$0xff]
    %v3025 = vld [vmem:[#allocation13 + $0x70] sm:$0xff]
    %v3026 = vld [vmem:[#allocation13 + $0x78] sm:$0xff]
    %v3027 = vld [vmem:[#allocation13 + $0x80] sm:$0xff]
    %v3028 = vld [vmem:[#allocation13 + $0x88] sm:$0xff]
    %v3029 = vld [vmem:[#allocation13 + $0x90] sm:$0xff]
    %v3030 = vld [vmem:[#allocation13 + $0x98] sm:$0xff]
    %v3031 = vld [vmem:[#allocation13 + $0xa0] sm:$0xff]
    %v3032 = vld [vmem:[#allocation13 + $0xa8] sm:$0xff]
    %v3033 = vld [vmem:[#allocation13 + $0xb0] sm:$0xff]
    %v3034 = vld [vmem:[#allocation13 + $0xb8] sm:$0xff]
    %v3035 = vld [vmem:[#allocation13 + $0xc0] sm:$0xff]
    %v3036 = vld [vmem:[#allocation13 + $0xc8] sm:$0xff]
    %v3037 = vld [vmem:[#allocation13 + $0xd0] sm:$0xff]
    %v3038 = vld [vmem:[#allocation13 + $0xd8] sm:$0xff]
    %v3039 = vld [vmem:[#allocation13 + $0xe0] sm:$0xff]
    %v3040 = vld [vmem:[#allocation13 + $0xe8] sm:$0xff]
    %v3041 = vld [vmem:[#allocation13 + $0xf0] sm:$0xff]
    %v3042 = vld [vmem:[#allocation13 + $0xf8] sm:$0xff]
    %v3043 = vld [vmem:[#allocation13 + $0x100] sm:$0xff]
    %v3044 = vld [vmem:[#allocation13 + $0x108] sm:$0xff]
    %v3045 = vld [vmem:[#allocation13 + $0x110] sm:$0xff]
    %v3046 = vld [vmem:[#allocation13 + $0x118] sm:$0xff]
    %v3047 = vld [vmem:[#allocation13 + $0x120] sm:$0xff]
    %v3048 = vld [vmem:[#allocation13 + $0x128] sm:$0xff]
    %v3049 = vld [vmem:[#allocation13 + $0x130] sm:$0xff]
    %v3050 = vld [vmem:[#allocation13 + $0x138] sm:$0xff]
    %v3051 = vld [vmem:[#allocation13 + $0x140] sm:$0xff]
    %v3052 = vld [vmem:[#allocation13 + $0x148] sm:$0xff]
    %v3053 = vld [vmem:[#allocation13 + $0x150] sm:$0xff]
    %v3054 = vld [vmem:[#allocation13 + $0x158] sm:$0xff]
    %v3055 = vld [vmem:[#allocation13 + $0x160] sm:$0xff]
    %v3056 = vld [vmem:[#allocation13 + $0x168] sm:$0xff]
    %v3057 = vld [vmem:[#allocation13 + $0x170] sm:$0xff]
    %v3058 = vld [vmem:[#allocation13 + $0x178] sm:$0xff]
    %v3059 = vld [vmem:[#allocation13 + $0x180] sm:$0xff]
    %v3060 = vld [vmem:[#allocation13 + $0x188] sm:$0xff]
    %v3061 = vld [vmem:[#allocation13 + $0x190] sm:$0xff]
    %v3062 = vld [vmem:[#allocation13 + $0x198] sm:$0xff]
    %v3063 = vld [vmem:[#allocation13 + $0x1a0] sm:$0xff]
    %v3064 = vld [vmem:[#allocation13 + $0x1a8] sm:$0xff]
    %v3065 = vld [vmem:[#allocation13 + $0x1b0] sm:$0xff]
    %v3066 = vld [vmem:[#allocation13 + $0x1b8] sm:$0xff]
    %v3067 = vld [vmem:[#allocation13 + $0x1c0] sm:$0xff]
    %v3068 = vld [vmem:[#allocation13 + $0x1c8] sm:$0xff]
    %v3069 = vld [vmem:[#allocation13 + $0x1d0] sm:$0xff]
    %v3070 = vld [vmem:[#allocation13 + $0x1d8] sm:$0xff]
    %v3071 = vld [vmem:[#allocation13 + $0x1e0] sm:$0xff]
    %v3072 = vld [vmem:[#allocation13 + $0x1e8] sm:$0xff]
    %v3073 = vld [vmem:[#allocation13 + $0x1f0] sm:$0xff]
    %v3074 = vld [vmem:[#allocation13 + $0x1f8] sm:$0xff]
    %3075 = vmatpush.msra.mxu0 %v3071
    %3076 = vmatpush.msra.mxu0 %v3067
    %3077 = vmatpush.msra.mxu0 %v3063
    %3078 = vmatpush.msra.mxu0 %v3059
    %3079 = vmatpush.msra.mxu0 %v3055
    %3080 = vmatpush.msra.mxu0 %v3051
    %3081 = vmatpush.msra.mxu0 %v3047
    %3082 = vmatpush.msra.mxu0 %v3043
    %3083 = vmatpush.msra.mxu0 %v3039
    %3084 = vmatpush.msra.mxu0 %v3035
    %3085 = vmatpush.msra.mxu0 %v3031
    %3086 = vmatpush.msra.mxu0 %v3027
    %3087 = vmatpush.msra.mxu0 %v3023
    %3088 = vmatpush.msra.mxu0 %v3019
    %3089 = vmatpush.msra.mxu0 %v3015
    %3090 = vmatpush.msra.mxu0 %v3011
    %3091 = vmatmul.f32.gmra.mxu0 %v3004
    %v3092 = vpop.f32.mrf.mxu0
    %v3093 = vadd.f32 0.0, %v3092
    %3094 = vdwg.mxu0
    %3095 = vmatpush.msra.mxu0 %v3072
    %3096 = vmatpush.msra.mxu0 %v3068
    %3097 = vmatpush.msra.mxu0 %v3064
    %3098 = vmatpush.msra.mxu0 %v3060
    %3099 = vmatpush.msra.mxu0 %v3056
    %3100 = vmatpush.msra.mxu0 %v3052
    %3101 = vmatpush.msra.mxu0 %v3048
    %3102 = vmatpush.msra.mxu0 %v3044
    %3103 = vmatpush.msra.mxu0 %v3040
    %3104 = vmatpush.msra.mxu0 %v3036
    %3105 = vmatpush.msra.mxu0 %v3032
    %3106 = vmatpush.msra.mxu0 %v3028
    %3107 = vmatpush.msra.mxu0 %v3024
    %3108 = vmatpush.msra.mxu0 %v3020
    %3109 = vmatpush.msra.mxu0 %v3016
    %3110 = vmatpush.msra.mxu0 %v3012
    %3111 = vmatmul.f32.gmra.mxu0 %v3004
    %v3112 = vpop.f32.mrf.mxu0
    %v3113 = vadd.f32 0.0, %v3112
    %3114 = vdwg.mxu0
    %3115 = vmatpush.msra.mxu0 %v3073
    %3116 = vmatpush.msra.mxu0 %v3069
    %3117 = vmatpush.msra.mxu0 %v3065
    %3118 = vmatpush.msra.mxu0 %v3061
    %3119 = vmatpush.msra.mxu0 %v3057
    %3120 = vmatpush.msra.mxu0 %v3053
    %3121 = vmatpush.msra.mxu0 %v3049
    %3122 = vmatpush.msra.mxu0 %v3045
    %3123 = vmatpush.msra.mxu0 %v3041
    %3124 = vmatpush.msra.mxu0 %v3037
    %3125 = vmatpush.msra.mxu0 %v3033
    %3126 = vmatpush.msra.mxu0 %v3029
    %3127 = vmatpush.msra.mxu0 %v3025
    %3128 = vmatpush.msra.mxu0 %v3021
    %3129 = vmatpush.msra.mxu0 %v3017
    %3130 = vmatpush.msra.mxu0 %v3013
    %3131 = vmatmul.f32.gmra.mxu0 %v3004
    %v3132 = vpop.f32.mrf.mxu0
    %v3133 = vadd.f32 0.0, %v3132
    %3134 = vdwg.mxu0
    %3135 = vmatpush.msra.mxu0 %v3074
    %3136 = vmatpush.msra.mxu0 %v3070
    %3137 = vmatpush.msra.mxu0 %v3066
    %3138 = vmatpush.msra.mxu0 %v3062
    %3139 = vmatpush.msra.mxu0 %v3058
    %3140 = vmatpush.msra.mxu0 %v3054
    %3141 = vmatpush.msra.mxu0 %v3050
    %3142 = vmatpush.msra.mxu0 %v3046
    %3143 = vmatpush.msra.mxu0 %v3042
    %3144 = vmatpush.msra.mxu0 %v3038
    %3145 = vmatpush.msra.mxu0 %v3034
    %3146 = vmatpush.msra.mxu0 %v3030
    %3147 = vmatpush.msra.mxu0 %v3026
    %3148 = vmatpush.msra.mxu0 %v3022
    %3149 = vmatpush.msra.mxu0 %v3018
    %3150 = vmatpush.msra.mxu0 %v3014
    %3151 = vmatmul.f32.gmra.mxu0 %v3004
    %v3152 = vpop.f32.mrf.mxu0
    %v3153 = vadd.f32 0.0, %v3152
    %3154 = vdwg.mxu0
    %v3155 = vadd.f32 %v3007, %v3093
    %v3156 = vadd.f32 %v3008, %v3113
    %v3157 = vadd.f32 %v3009, %v3133
    %v3158 = vadd.f32 %v3010, %v3153
    %v3159 = vxor.u32 %v3155, 2147483648
    %v3160 = vmul.f32 %v3159, 1.442695
    %v3161 = vpow.pop %v3160
    %v3162 = vadd.f32 %v3161, 1.0
    %v3163 = vrcp.pop %v3162
    %v3164 = vmul.f32 %v3162, %v3163
    %v3165 = vsub.f32 1.0, %v3164
    %v3166 = vmul.f32 %v3163, %v3165
    %v3167 = vadd.f32 %v3163, %v3166
    %vm3168 = vweird.f32 %v3162
    %vm3169 = vweird.f32 %v3163
    %vm3170 = vmor %vm3168, %vm3169
    %v3171 = vsel %vm3170, %v3163, %v3167
    %v3172 = vand.u32 2147483647, %v3162
    %vm3173 = vcmp.eq.f32.partialorder %v3172, 8.507059e+37
    %v3174 = vand.u32 %v3162, 2147483648
    %v3175 = vor.u32 1.1754944e-38, %v3174
    %v3176 = vsel %vm3173, %v3175, %v3171
    %v3177 = vmul.f32 1.0, %v3176
    %v3178 = vxor.u32 %v3156, 2147483648
    %v3179 = vmul.f32 %v3178, 1.442695
    %v3180 = vpow.pop %v3179
    %v3181 = vadd.f32 %v3180, 1.0
    %v3182 = vrcp.pop %v3181
    %v3183 = vmul.f32 %v3181, %v3182
    %v3184 = vsub.f32 1.0, %v3183
    %v3185 = vmul.f32 %v3182, %v3184
    %v3186 = vadd.f32 %v3182, %v3185
    %vm3187 = vweird.f32 %v3181
    %vm3188 = vweird.f32 %v3182
    %vm3189 = vmor %vm3187, %vm3188
    %v3190 = vsel %vm3189, %v3182, %v3186
    %v3191 = vand.u32 2147483647, %v3181
    %vm3192 = vcmp.eq.f32.partialorder %v3191, 8.507059e+37
    %v3193 = vand.u32 %v3181, 2147483648
    %v3194 = vor.u32 1.1754944e-38, %v3193
    %v3195 = vsel %vm3192, %v3194, %v3190
    %v3196 = vmul.f32 1.0, %v3195
    %v3197 = vtanh.pop %v3157
    %v3198 = vxor.u32 %v3158, 2147483648
    %v3199 = vmul.f32 %v3198, 1.442695
    %v3200 = vpow.pop %v3199
    %v3201 = vadd.f32 %v3200, 1.0
    %v3202 = vrcp.pop %v3201
    %v3203 = vmul.f32 %v3201, %v3202
    %v3204 = vsub.f32 1.0, %v3203
    %v3205 = vmul.f32 %v3202, %v3204
    %v3206 = vadd.f32 %v3202, %v3205
    %vm3207 = vweird.f32 %v3201
    %vm3208 = vweird.f32 %v3202
    %vm3209 = vmor %vm3207, %vm3208
    %v3210 = vsel %vm3209, %v3202, %v3206
    %v3211 = vand.u32 2147483647, %v3201
    %vm3212 = vcmp.eq.f32.partialorder %v3211, 8.507059e+37
    %v3213 = vand.u32 %v3201, 2147483648
    %v3214 = vor.u32 1.1754944e-38, %v3213
    %v3215 = vsel %vm3212, %v3214, %v3210
    %v3216 = vmul.f32 1.0, %v3215
    %v3217 = vmul.f32 %v3196, %v3006
    %v3218 = vmul.f32 %v3177, %v3197
    %v3219 = vadd.f32 %v3217, %v3218
    %v3220 = vtanh.pop %v3219
    %v3221 = vmul.f32 %v3216, %v3220
    %3222 = vst [vmem:[#allocation3] sm:$0xff] %v3221
    %v3223 = vld [vmem:[#allocation2 + $0x20] sm:$0xff]
    %v3224 = vld [vmem:[#allocation2 + $0x28] sm:$0xff]
    %v3225 = vld [vmem:[#allocation2 + $0x30] sm:$0xff]
    %v3226 = vld [vmem:[#allocation2 + $0x38] sm:$0xff]
    %v3227 = vld [vmem:[#allocation13] sm:$0xff]
    %v3228 = vld [vmem:[#allocation13 + $0x8] sm:$0xff]
    %v3229 = vld [vmem:[#allocation13 + $0x10] sm:$0xff]
    %v3230 = vld [vmem:[#allocation13 + $0x18] sm:$0xff]
    %v3231 = vld [vmem:[#allocation13 + $0x20] sm:$0xff]
    %v3232 = vld [vmem:[#allocation13 + $0x28] sm:$0xff]
    %v3233 = vld [vmem:[#allocation13 + $0x30] sm:$0xff]
    %v3234 = vld [vmem:[#allocation13 + $0x38] sm:$0xff]
    %v3235 = vld [vmem:[#allocation13 + $0x40] sm:$0xff]
    %v3236 = vld [vmem:[#allocation13 + $0x48] sm:$0xff]
    %v3237 = vld [vmem:[#allocation13 + $0x50] sm:$0xff]
    %v3238 = vld [vmem:[#allocation13 + $0x58] sm:$0xff]
    %v3239 = vld [vmem:[#allocation13 + $0x60] sm:$0xff]
    %v3240 = vld [vmem:[#allocation13 + $0x68] sm:$0xff]
    %v3241 = vld [vmem:[#allocation13 + $0x70] sm:$0xff]
    %v3242 = vld [vmem:[#allocation13 + $0x78] sm:$0xff]
    %v3243 = vld [vmem:[#allocation13 + $0x80] sm:$0xff]
    %v3244 = vld [vmem:[#allocation13 + $0x88] sm:$0xff]
    %v3245 = vld [vmem:[#allocation13 + $0x90] sm:$0xff]
    %v3246 = vld [vmem:[#allocation13 + $0x98] sm:$0xff]
    %v3247 = vld [vmem:[#allocation13 + $0xa0] sm:$0xff]
    %v3248 = vld [vmem:[#allocation13 + $0xa8] sm:$0xff]
    %v3249 = vld [vmem:[#allocation13 + $0xb0] sm:$0xff]
    %v3250 = vld [vmem:[#allocation13 + $0xb8] sm:$0xff]
    %v3251 = vld [vmem:[#allocation13 + $0xc0] sm:$0xff]
    %v3252 = vld [vmem:[#allocation13 + $0xc8] sm:$0xff]
    %v3253 = vld [vmem:[#allocation13 + $0xd0] sm:$0xff]
    %v3254 = vld [vmem:[#allocation13 + $0xd8] sm:$0xff]
    %v3255 = vld [vmem:[#allocation13 + $0xe0] sm:$0xff]
    %v3256 = vld [vmem:[#allocation13 + $0xe8] sm:$0xff]
    %v3257 = vld [vmem:[#allocation13 + $0xf0] sm:$0xff]
    %v3258 = vld [vmem:[#allocation13 + $0xf8] sm:$0xff]
    %v3259 = vld [vmem:[#allocation13 + $0x100] sm:$0xff]
    %v3260 = vld [vmem:[#allocation13 + $0x108] sm:$0xff]
    %v3261 = vld [vmem:[#allocation13 + $0x110] sm:$0xff]
    %v3262 = vld [vmem:[#allocation13 + $0x118] sm:$0xff]
    %v3263 = vld [vmem:[#allocation13 + $0x120] sm:$0xff]
    %v3264 = vld [vmem:[#allocation13 + $0x128] sm:$0xff]
    %v3265 = vld [vmem:[#allocation13 + $0x130] sm:$0xff]
    %v3266 = vld [vmem:[#allocation13 + $0x138] sm:$0xff]
    %v3267 = vld [vmem:[#allocation13 + $0x140] sm:$0xff]
    %v3268 = vld [vmem:[#allocation13 + $0x148] sm:$0xff]
    %v3269 = vld [vmem:[#allocation13 + $0x150] sm:$0xff]
    %v3270 = vld [vmem:[#allocation13 + $0x158] sm:$0xff]
    %v3271 = vld [vmem:[#allocation13 + $0x160] sm:$0xff]
    %v3272 = vld [vmem:[#allocation13 + $0x168] sm:$0xff]
    %v3273 = vld [vmem:[#allocation13 + $0x170] sm:$0xff]
    %v3274 = vld [vmem:[#allocation13 + $0x178] sm:$0xff]
    %v3275 = vld [vmem:[#allocation13 + $0x180] sm:$0xff]
    %v3276 = vld [vmem:[#allocation13 + $0x188] sm:$0xff]
    %v3277 = vld [vmem:[#allocation13 + $0x190] sm:$0xff]
    %v3278 = vld [vmem:[#allocation13 + $0x198] sm:$0xff]
    %v3279 = vld [vmem:[#allocation13 + $0x1a0] sm:$0xff]
    %v3280 = vld [vmem:[#allocation13 + $0x1a8] sm:$0xff]
    %v3281 = vld [vmem:[#allocation13 + $0x1b0] sm:$0xff]
    %v3282 = vld [vmem:[#allocation13 + $0x1b8] sm:$0xff]
    %v3283 = vld [vmem:[#allocation13 + $0x1c0] sm:$0xff]
    %v3284 = vld [vmem:[#allocation13 + $0x1c8] sm:$0xff]
    %v3285 = vld [vmem:[#allocation13 + $0x1d0] sm:$0xff]
    %v3286 = vld [vmem:[#allocation13 + $0x1d8] sm:$0xff]
    %v3287 = vld [vmem:[#allocation13 + $0x1e0] sm:$0xff]
    %v3288 = vld [vmem:[#allocation13 + $0x1e8] sm:$0xff]
    %v3289 = vld [vmem:[#allocation13 + $0x1f0] sm:$0xff]
    %v3290 = vld [vmem:[#allocation13 + $0x1f8] sm:$0xff]
    %3291 = vmatpush.msra.mxu0 %v3287
    %3292 = vmatpush.msra.mxu0 %v3283
    %3293 = vmatpush.msra.mxu0 %v3279
    %3294 = vmatpush.msra.mxu0 %v3275
    %3295 = vmatpush.msra.mxu0 %v3271
    %3296 = vmatpush.msra.mxu0 %v3267
    %3297 = vmatpush.msra.mxu0 %v3263
    %3298 = vmatpush.msra.mxu0 %v3259
    %3299 = vmatpush.msra.mxu0 %v3255
    %3300 = vmatpush.msra.mxu0 %v3251
    %3301 = vmatpush.msra.mxu0 %v3247
    %3302 = vmatpush.msra.mxu0 %v3243
    %3303 = vmatpush.msra.mxu0 %v3239
    %3304 = vmatpush.msra.mxu0 %v3235
    %3305 = vmatpush.msra.mxu0 %v3231
    %3306 = vmatpush.msra.mxu0 %v3227
    %3307 = vmatmul.f32.gmra.mxu0 %v3221
    %v3308 = vpop.f32.mrf.mxu0
    %v3309 = vadd.f32 0.0, %v3308
    %3310 = vdwg.mxu0
    %3311 = vmatpush.msra.mxu0 %v3288
    %3312 = vmatpush.msra.mxu0 %v3284
    %3313 = vmatpush.msra.mxu0 %v3280
    %3314 = vmatpush.msra.mxu0 %v3276
    %3315 = vmatpush.msra.mxu0 %v3272
    %3316 = vmatpush.msra.mxu0 %v3268
    %3317 = vmatpush.msra.mxu0 %v3264
    %3318 = vmatpush.msra.mxu0 %v3260
    %3319 = vmatpush.msra.mxu0 %v3256
    %3320 = vmatpush.msra.mxu0 %v3252
    %3321 = vmatpush.msra.mxu0 %v3248
    %3322 = vmatpush.msra.mxu0 %v3244
    %3323 = vmatpush.msra.mxu0 %v3240
    %3324 = vmatpush.msra.mxu0 %v3236
    %3325 = vmatpush.msra.mxu0 %v3232
    %3326 = vmatpush.msra.mxu0 %v3228
    %3327 = vmatmul.f32.gmra.mxu0 %v3221
    %v3328 = vpop.f32.mrf.mxu0
    %v3329 = vadd.f32 0.0, %v3328
    %3330 = vdwg.mxu0
    %3331 = vmatpush.msra.mxu0 %v3289
    %3332 = vmatpush.msra.mxu0 %v3285
    %3333 = vmatpush.msra.mxu0 %v3281
    %3334 = vmatpush.msra.mxu0 %v3277
    %3335 = vmatpush.msra.mxu0 %v3273
    %3336 = vmatpush.msra.mxu0 %v3269
    %3337 = vmatpush.msra.mxu0 %v3265
    %3338 = vmatpush.msra.mxu0 %v3261
    %3339 = vmatpush.msra.mxu0 %v3257
    %3340 = vmatpush.msra.mxu0 %v3253
    %3341 = vmatpush.msra.mxu0 %v3249
    %3342 = vmatpush.msra.mxu0 %v3245
    %3343 = vmatpush.msra.mxu0 %v3241
    %3344 = vmatpush.msra.mxu0 %v3237
    %3345 = vmatpush.msra.mxu0 %v3233
    %3346 = vmatpush.msra.mxu0 %v3229
    %3347 = vmatmul.f32.gmra.mxu0 %v3221
    %v3348 = vpop.f32.mrf.mxu0
    %v3349 = vadd.f32 0.0, %v3348
    %3350 = vdwg.mxu0
    %3351 = vmatpush.msra.mxu0 %v3290
    %3352 = vmatpush.msra.mxu0 %v3286
    %3353 = vmatpush.msra.mxu0 %v3282
    %3354 = vmatpush.msra.mxu0 %v3278
    %3355 = vmatpush.msra.mxu0 %v3274
    %3356 = vmatpush.msra.mxu0 %v3270
    %3357 = vmatpush.msra.mxu0 %v3266
    %3358 = vmatpush.msra.mxu0 %v3262
    %3359 = vmatpush.msra.mxu0 %v3258
    %3360 = vmatpush.msra.mxu0 %v3254
    %3361 = vmatpush.msra.mxu0 %v3250
    %3362 = vmatpush.msra.mxu0 %v3246
    %3363 = vmatpush.msra.mxu0 %v3242
    %3364 = vmatpush.msra.mxu0 %v3238
    %3365 = vmatpush.msra.mxu0 %v3234
    %3366 = vmatpush.msra.mxu0 %v3230
    %3367 = vmatmul.f32.gmra.mxu0 %v3221
    %v3368 = vpop.f32.mrf.mxu0
    %v3369 = vadd.f32 0.0, %v3368
    %3370 = vdwg.mxu0
    %v3371 = vadd.f32 %v3223, %v3309
    %v3372 = vadd.f32 %v3224, %v3329
    %v3373 = vadd.f32 %v3225, %v3349
    %v3374 = vadd.f32 %v3226, %v3369
    %v3375 = vxor.u32 %v3371, 2147483648
    %v3376 = vmul.f32 %v3375, 1.442695
    %v3377 = vpow.pop %v3376
    %v3378 = vadd.f32 %v3377, 1.0
    %v3379 = vrcp.pop %v3378
    %v3380 = vmul.f32 %v3378, %v3379
    %v3381 = vsub.f32 1.0, %v3380
    %v3382 = vmul.f32 %v3379, %v3381
    %v3383 = vadd.f32 %v3379, %v3382
    %vm3384 = vweird.f32 %v3378
    %vm3385 = vweird.f32 %v3379
    %vm3386 = vmor %vm3384, %vm3385
    %v3387 = vsel %vm3386, %v3379, %v3383
    %v3388 = vand.u32 2147483647, %v3378
    %vm3389 = vcmp.eq.f32.partialorder %v3388, 8.507059e+37
    %v3390 = vand.u32 %v3378, 2147483648
    %v3391 = vor.u32 1.1754944e-38, %v3390
    %v3392 = vsel %vm3389, %v3391, %v3387
    %v3393 = vmul.f32 1.0, %v3392
    %v3394 = vxor.u32 %v3372, 2147483648
    %v3395 = vmul.f32 %v3394, 1.442695
    %v3396 = vpow.pop %v3395
    %v3397 = vadd.f32 %v3396, 1.0
    %v3398 = vrcp.pop %v3397
    %v3399 = vmul.f32 %v3397, %v3398
    %v3400 = vsub.f32 1.0, %v3399
    %v3401 = vmul.f32 %v3398, %v3400
    %v3402 = vadd.f32 %v3398, %v3401
    %vm3403 = vweird.f32 %v3397
    %vm3404 = vweird.f32 %v3398
    %vm3405 = vmor %vm3403, %vm3404
    %v3406 = vsel %vm3405, %v3398, %v3402
    %v3407 = vand.u32 2147483647, %v3397
    %vm3408 = vcmp.eq.f32.partialorder %v3407, 8.507059e+37
    %v3409 = vand.u32 %v3397, 2147483648
    %v3410 = vor.u32 1.1754944e-38, %v3409
    %v3411 = vsel %vm3408, %v3410, %v3406
    %v3412 = vmul.f32 1.0, %v3411
    %v3413 = vtanh.pop %v3373
    %v3414 = vxor.u32 %v3374, 2147483648
    %v3415 = vmul.f32 %v3414, 1.442695
    %v3416 = vpow.pop %v3415
    %v3417 = vadd.f32 %v3416, 1.0
    %v3418 = vrcp.pop %v3417
    %v3419 = vmul.f32 %v3417, %v3418
    %v3420 = vsub.f32 1.0, %v3419
    %v3421 = vmul.f32 %v3418, %v3420
    %v3422 = vadd.f32 %v3418, %v3421
    %vm3423 = vweird.f32 %v3417
    %vm3424 = vweird.f32 %v3418
    %vm3425 = vmor %vm3423, %vm3424
    %v3426 = vsel %vm3425, %v3418, %v3422
    %v3427 = vand.u32 2147483647, %v3417
    %vm3428 = vcmp.eq.f32.partialorder %v3427, 8.507059e+37
    %v3429 = vand.u32 %v3417, 2147483648
    %v3430 = vor.u32 1.1754944e-38, %v3429
    %v3431 = vsel %vm3428, %v3430, %v3426
    %v3432 = vmul.f32 1.0, %v3431
    %v3433 = vmul.f32 %v3412, %v3219
    %v3434 = vmul.f32 %v3393, %v3413
    %v3435 = vadd.f32 %v3433, %v3434
    %v3436 = vtanh.pop %v3435
    %v3437 = vmul.f32 %v3432, %v3436
    %3438 = vst [vmem:[#allocation3 + $0x8] sm:$0xff] %v3437
    %v3439 = vld [vmem:[#allocation2 + $0x40] sm:$0xff]
    %v3440 = vld [vmem:[#allocation2 + $0x48] sm:$0xff]
    %v3441 = vld [vmem:[#allocation2 + $0x50] sm:$0xff]
    %v3442 = vld [vmem:[#allocation2 + $0x58] sm:$0xff]
    %v3443 = vld [vmem:[#allocation13] sm:$0xff]
    %v3444 = vld [vmem:[#allocation13 + $0x8] sm:$0xff]
    %v3445 = vld [vmem:[#allocation13 + $0x10] sm:$0xff]
    %v3446 = vld [vmem:[#allocation13 + $0x18] sm:$0xff]
    %v3447 = vld [vmem:[#allocation13 + $0x20] sm:$0xff]
    %v3448 = vld [vmem:[#allocation13 + $0x28] sm:$0xff]
    %v3449 = vld [vmem:[#allocation13 + $0x30] sm:$0xff]
    %v3450 = vld [vmem:[#allocation13 + $0x38] sm:$0xff]
    %v3451 = vld [vmem:[#allocation13 + $0x40] sm:$0xff]
    %v3452 = vld [vmem:[#allocation13 + $0x48] sm:$0xff]
    %v3453 = vld [vmem:[#allocation13 + $0x50] sm:$0xff]
    %v3454 = vld [vmem:[#allocation13 + $0x58] sm:$0xff]
    %v3455 = vld [vmem:[#allocation13 + $0x60] sm:$0xff]
    %v3456 = vld [vmem:[#allocation13 + $0x68] sm:$0xff]
    %v3457 = vld [vmem:[#allocation13 + $0x70] sm:$0xff]
    %v3458 = vld [vmem:[#allocation13 + $0x78] sm:$0xff]
    %v3459 = vld [vmem:[#allocation13 + $0x80] sm:$0xff]
    %v3460 = vld [vmem:[#allocation13 + $0x88] sm:$0xff]
    %v3461 = vld [vmem:[#allocation13 + $0x90] sm:$0xff]
    %v3462 = vld [vmem:[#allocation13 + $0x98] sm:$0xff]
    %v3463 = vld [vmem:[#allocation13 + $0xa0] sm:$0xff]
    %v3464 = vld [vmem:[#allocation13 + $0xa8] sm:$0xff]
    %v3465 = vld [vmem:[#allocation13 + $0xb0] sm:$0xff]
    %v3466 = vld [vmem:[#allocation13 + $0xb8] sm:$0xff]
    %v3467 = vld [vmem:[#allocation13 + $0xc0] sm:$0xff]
    %v3468 = vld [vmem:[#allocation13 + $0xc8] sm:$0xff]
    %v3469 = vld [vmem:[#allocation13 + $0xd0] sm:$0xff]
    %v3470 = vld [vmem:[#allocation13 + $0xd8] sm:$0xff]
    %v3471 = vld [vmem:[#allocation13 + $0xe0] sm:$0xff]
    %v3472 = vld [vmem:[#allocation13 + $0xe8] sm:$0xff]
    %v3473 = vld [vmem:[#allocation13 + $0xf0] sm:$0xff]
    %v3474 = vld [vmem:[#allocation13 + $0xf8] sm:$0xff]
    %v3475 = vld [vmem:[#allocation13 + $0x100] sm:$0xff]
    %v3476 = vld [vmem:[#allocation13 + $0x108] sm:$0xff]
    %v3477 = vld [vmem:[#allocation13 + $0x110] sm:$0xff]
    %v3478 = vld [vmem:[#allocation13 + $0x118] sm:$0xff]
    %v3479 = vld [vmem:[#allocation13 + $0x120] sm:$0xff]
    %v3480 = vld [vmem:[#allocation13 + $0x128] sm:$0xff]
    %v3481 = vld [vmem:[#allocation13 + $0x130] sm:$0xff]
    %v3482 = vld [vmem:[#allocation13 + $0x138] sm:$0xff]
    %v3483 = vld [vmem:[#allocation13 + $0x140] sm:$0xff]
    %v3484 = vld [vmem:[#allocation13 + $0x148] sm:$0xff]
    %v3485 = vld [vmem:[#allocation13 + $0x150] sm:$0xff]
    %v3486 = vld [vmem:[#allocation13 + $0x158] sm:$0xff]
    %v3487 = vld [vmem:[#allocation13 + $0x160] sm:$0xff]
    %v3488 = vld [vmem:[#allocation13 + $0x168] sm:$0xff]
    %v3489 = vld [vmem:[#allocation13 + $0x170] sm:$0xff]
    %v3490 = vld [vmem:[#allocation13 + $0x178] sm:$0xff]
    %v3491 = vld [vmem:[#allocation13 + $0x180] sm:$0xff]
    %v3492 = vld [vmem:[#allocation13 + $0x188] sm:$0xff]
    %v3493 = vld [vmem:[#allocation13 + $0x190] sm:$0xff]
    %v3494 = vld [vmem:[#allocation13 + $0x198] sm:$0xff]
    %v3495 = vld [vmem:[#allocation13 + $0x1a0] sm:$0xff]
    %v3496 = vld [vmem:[#allocation13 + $0x1a8] sm:$0xff]
    %v3497 = vld [vmem:[#allocation13 + $0x1b0] sm:$0xff]
    %v3498 = vld [vmem:[#allocation13 + $0x1b8] sm:$0xff]
    %v3499 = vld [vmem:[#allocation13 + $0x1c0] sm:$0xff]
    %v3500 = vld [vmem:[#allocation13 + $0x1c8] sm:$0xff]
    %v3501 = vld [vmem:[#allocation13 + $0x1d0] sm:$0xff]
    %v3502 = vld [vmem:[#allocation13 + $0x1d8] sm:$0xff]
    %v3503 = vld [vmem:[#allocation13 + $0x1e0] sm:$0xff]
    %v3504 = vld [vmem:[#allocation13 + $0x1e8] sm:$0xff]
    %v3505 = vld [vmem:[#allocation13 + $0x1f0] sm:$0xff]
    %v3506 = vld [vmem:[#allocation13 + $0x1f8] sm:$0xff]
    %3507 = vmatpush.msra.mxu0 %v3503
    %3508 = vmatpush.msra.mxu0 %v3499
    %3509 = vmatpush.msra.mxu0 %v3495
    %3510 = vmatpush.msra.mxu0 %v3491
    %3511 = vmatpush.msra.mxu0 %v3487
    %3512 = vmatpush.msra.mxu0 %v3483
    %3513 = vmatpush.msra.mxu0 %v3479
    %3514 = vmatpush.msra.mxu0 %v3475
    %3515 = vmatpush.msra.mxu0 %v3471
    %3516 = vmatpush.msra.mxu0 %v3467
    %3517 = vmatpush.msra.mxu0 %v3463
    %3518 = vmatpush.msra.mxu0 %v3459
    %3519 = vmatpush.msra.mxu0 %v3455
    %3520 = vmatpush.msra.mxu0 %v3451
    %3521 = vmatpush.msra.mxu0 %v3447
    %3522 = vmatpush.msra.mxu0 %v3443
    %3523 = vmatmul.f32.gmra.mxu0 %v3437
    %v3524 = vpop.f32.mrf.mxu0
    %v3525 = vadd.f32 0.0, %v3524
    %3526 = vdwg.mxu0
    %3527 = vmatpush.msra.mxu0 %v3504
    %3528 = vmatpush.msra.mxu0 %v3500
    %3529 = vmatpush.msra.mxu0 %v3496
    %3530 = vmatpush.msra.mxu0 %v3492
    %3531 = vmatpush.msra.mxu0 %v3488
    %3532 = vmatpush.msra.mxu0 %v3484
    %3533 = vmatpush.msra.mxu0 %v3480
    %3534 = vmatpush.msra.mxu0 %v3476
    %3535 = vmatpush.msra.mxu0 %v3472
    %3536 = vmatpush.msra.mxu0 %v3468
    %3537 = vmatpush.msra.mxu0 %v3464
    %3538 = vmatpush.msra.mxu0 %v3460
    %3539 = vmatpush.msra.mxu0 %v3456
    %3540 = vmatpush.msra.mxu0 %v3452
    %3541 = vmatpush.msra.mxu0 %v3448
    %3542 = vmatpush.msra.mxu0 %v3444
    %3543 = vmatmul.f32.gmra.mxu0 %v3437
    %v3544 = vpop.f32.mrf.mxu0
    %v3545 = vadd.f32 0.0, %v3544
    %3546 = vdwg.mxu0
    %3547 = vmatpush.msra.mxu0 %v3505
    %3548 = vmatpush.msra.mxu0 %v3501
    %3549 = vmatpush.msra.mxu0 %v3497
    %3550 = vmatpush.msra.mxu0 %v3493
    %3551 = vmatpush.msra.mxu0 %v3489
    %3552 = vmatpush.msra.mxu0 %v3485
    %3553 = vmatpush.msra.mxu0 %v3481
    %3554 = vmatpush.msra.mxu0 %v3477
    %3555 = vmatpush.msra.mxu0 %v3473
    %3556 = vmatpush.msra.mxu0 %v3469
    %3557 = vmatpush.msra.mxu0 %v3465
    %3558 = vmatpush.msra.mxu0 %v3461
    %3559 = vmatpush.msra.mxu0 %v3457
    %3560 = vmatpush.msra.mxu0 %v3453
    %3561 = vmatpush.msra.mxu0 %v3449
    %3562 = vmatpush.msra.mxu0 %v3445
    %3563 = vmatmul.f32.gmra.mxu0 %v3437
    %v3564 = vpop.f32.mrf.mxu0
    %v3565 = vadd.f32 0.0, %v3564
    %3566 = vdwg.mxu0
    %3567 = vmatpush.msra.mxu0 %v3506
    %3568 = vmatpush.msra.mxu0 %v3502
    %3569 = vmatpush.msra.mxu0 %v3498
    %3570 = vmatpush.msra.mxu0 %v3494
    %3571 = vmatpush.msra.mxu0 %v3490
    %3572 = vmatpush.msra.mxu0 %v3486
    %3573 = vmatpush.msra.mxu0 %v3482
    %3574 = vmatpush.msra.mxu0 %v3478
    %3575 = vmatpush.msra.mxu0 %v3474
    %3576 = vmatpush.msra.mxu0 %v3470
    %3577 = vmatpush.msra.mxu0 %v3466
    %3578 = vmatpush.msra.mxu0 %v3462
    %3579 = vmatpush.msra.mxu0 %v3458
    %3580 = vmatpush.msra.mxu0 %v3454
    %3581 = vmatpush.msra.mxu0 %v3450
    %3582 = vmatpush.msra.mxu0 %v3446
    %3583 = vmatmul.f32.gmra.mxu0 %v3437
    %v3584 = vpop.f32.mrf.mxu0
    %v3585 = vadd.f32 0.0, %v3584
    %3586 = vdwg.mxu0
    %v3587 = vadd.f32 %v3439, %v3525
    %v3588 = vadd.f32 %v3440, %v3545
    %v3589 = vadd.f32 %v3441, %v3565
    %v3590 = vadd.f32 %v3442, %v3585
    %v3591 = vxor.u32 %v3587, 2147483648
    %v3592 = vmul.f32 %v3591, 1.442695
    %v3593 = vpow.pop %v3592
    %v3594 = vadd.f32 %v3593, 1.0
    %v3595 = vrcp.pop %v3594
    %v3596 = vmul.f32 %v3594, %v3595
    %v3597 = vsub.f32 1.0, %v3596
    %v3598 = vmul.f32 %v3595, %v3597
    %v3599 = vadd.f32 %v3595, %v3598
    %vm3600 = vweird.f32 %v3594
    %vm3601 = vweird.f32 %v3595
    %vm3602 = vmor %vm3600, %vm3601
    %v3603 = vsel %vm3602, %v3595, %v3599
    %v3604 = vand.u32 2147483647, %v3594
    %vm3605 = vcmp.eq.f32.partialorder %v3604, 8.507059e+37
    %v3606 = vand.u32 %v3594, 2147483648
    %v3607 = vor.u32 1.1754944e-38, %v3606
    %v3608 = vsel %vm3605, %v3607, %v3603
    %v3609 = vmul.f32 1.0, %v3608
    %v3610 = vxor.u32 %v3588, 2147483648
    %v3611 = vmul.f32 %v3610, 1.442695
    %v3612 = vpow.pop %v3611
    %v3613 = vadd.f32 %v3612, 1.0
    %v3614 = vrcp.pop %v3613
    %v3615 = vmul.f32 %v3613, %v3614
    %v3616 = vsub.f32 1.0, %v3615
    %v3617 = vmul.f32 %v3614, %v3616
    %v3618 = vadd.f32 %v3614, %v3617
    %vm3619 = vweird.f32 %v3613
    %vm3620 = vweird.f32 %v3614
    %vm3621 = vmor %vm3619, %vm3620
    %v3622 = vsel %vm3621, %v3614, %v3618
    %v3623 = vand.u32 2147483647, %v3613
    %vm3624 = vcmp.eq.f32.partialorder %v3623, 8.507059e+37
    %v3625 = vand.u32 %v3613, 2147483648
    %v3626 = vor.u32 1.1754944e-38, %v3625
    %v3627 = vsel %vm3624, %v3626, %v3622
    %v3628 = vmul.f32 1.0, %v3627
    %v3629 = vtanh.pop %v3589
    %v3630 = vxor.u32 %v3590, 2147483648
    %v3631 = vmul.f32 %v3630, 1.442695
    %v3632 = vpow.pop %v3631
    %v3633 = vadd.f32 %v3632, 1.0
    %v3634 = vrcp.pop %v3633
    %v3635 = vmul.f32 %v3633, %v3634
    %v3636 = vsub.f32 1.0, %v3635
    %v3637 = vmul.f32 %v3634, %v3636
    %v3638 = vadd.f32 %v3634, %v3637
    %vm3639 = vweird.f32 %v3633
    %vm3640 = vweird.f32 %v3634
    %vm3641 = vmor %vm3639, %vm3640
    %v3642 = vsel %vm3641, %v3634, %v3638
    %v3643 = vand.u32 2147483647, %v3633
    %vm3644 = vcmp.eq.f32.partialorder %v3643, 8.507059e+37
    %v3645 = vand.u32 %v3633, 2147483648
    %v3646 = vor.u32 1.1754944e-38, %v3645
    %v3647 = vsel %vm3644, %v3646, %v3642
    %v3648 = vmul.f32 1.0, %v3647
    %v3649 = vmul.f32 %v3628, %v3435
    %v3650 = vmul.f32 %v3609, %v3629
    %v3651 = vadd.f32 %v3649, %v3650
    %v3652 = vtanh.pop %v3651
    %v3653 = vmul.f32 %v3648, %v3652
    %3654 = vst [vmem:[#allocation3 + $0x10] sm:$0xff] %v3653
    %v3655 = vld [vmem:[#allocation2 + $0x60] sm:$0xff]
    %v3656 = vld [vmem:[#allocation2 + $0x68] sm:$0xff]
    %v3657 = vld [vmem:[#allocation2 + $0x70] sm:$0xff]
    %v3658 = vld [vmem:[#allocation2 + $0x78] sm:$0xff]
    %v3659 = vld [vmem:[#allocation13] sm:$0xff]
    %v3660 = vld [vmem:[#allocation13 + $0x8] sm:$0xff]
    %v3661 = vld [vmem:[#allocation13 + $0x10] sm:$0xff]
    %v3662 = vld [vmem:[#allocation13 + $0x18] sm:$0xff]
    %v3663 = vld [vmem:[#allocation13 + $0x20] sm:$0xff]
    %v3664 = vld [vmem:[#allocation13 + $0x28] sm:$0xff]
    %v3665 = vld [vmem:[#allocation13 + $0x30] sm:$0xff]
    %v3666 = vld [vmem:[#allocation13 + $0x38] sm:$0xff]
    %v3667 = vld [vmem:[#allocation13 + $0x40] sm:$0xff]
    %v3668 = vld [vmem:[#allocation13 + $0x48] sm:$0xff]
    %v3669 = vld [vmem:[#allocation13 + $0x50] sm:$0xff]
    %v3670 = vld [vmem:[#allocation13 + $0x58] sm:$0xff]
    %v3671 = vld [vmem:[#allocation13 + $0x60] sm:$0xff]
    %v3672 = vld [vmem:[#allocation13 + $0x68] sm:$0xff]
    %v3673 = vld [vmem:[#allocation13 + $0x70] sm:$0xff]
    %v3674 = vld [vmem:[#allocation13 + $0x78] sm:$0xff]
    %v3675 = vld [vmem:[#allocation13 + $0x80] sm:$0xff]
    %v3676 = vld [vmem:[#allocation13 + $0x88] sm:$0xff]
    %v3677 = vld [vmem:[#allocation13 + $0x90] sm:$0xff]
    %v3678 = vld [vmem:[#allocation13 + $0x98] sm:$0xff]
    %v3679 = vld [vmem:[#allocation13 + $0xa0] sm:$0xff]
    %v3680 = vld [vmem:[#allocation13 + $0xa8] sm:$0xff]
    %v3681 = vld [vmem:[#allocation13 + $0xb0] sm:$0xff]
    %v3682 = vld [vmem:[#allocation13 + $0xb8] sm:$0xff]
    %v3683 = vld [vmem:[#allocation13 + $0xc0] sm:$0xff]
    %v3684 = vld [vmem:[#allocation13 + $0xc8] sm:$0xff]
    %v3685 = vld [vmem:[#allocation13 + $0xd0] sm:$0xff]
    %v3686 = vld [vmem:[#allocation13 + $0xd8] sm:$0xff]
    %v3687 = vld [vmem:[#allocation13 + $0xe0] sm:$0xff]
    %v3688 = vld [vmem:[#allocation13 + $0xe8] sm:$0xff]
    %v3689 = vld [vmem:[#allocation13 + $0xf0] sm:$0xff]
    %v3690 = vld [vmem:[#allocation13 + $0xf8] sm:$0xff]
    %v3691 = vld [vmem:[#allocation13 + $0x100] sm:$0xff]
    %v3692 = vld [vmem:[#allocation13 + $0x108] sm:$0xff]
    %v3693 = vld [vmem:[#allocation13 + $0x110] sm:$0xff]
    %v3694 = vld [vmem:[#allocation13 + $0x118] sm:$0xff]
    %v3695 = vld [vmem:[#allocation13 + $0x120] sm:$0xff]
    %v3696 = vld [vmem:[#allocation13 + $0x128] sm:$0xff]
    %v3697 = vld [vmem:[#allocation13 + $0x130] sm:$0xff]
    %v3698 = vld [vmem:[#allocation13 + $0x138] sm:$0xff]
    %v3699 = vld [vmem:[#allocation13 + $0x140] sm:$0xff]
    %v3700 = vld [vmem:[#allocation13 + $0x148] sm:$0xff]
    %v3701 = vld [vmem:[#allocation13 + $0x150] sm:$0xff]
    %v3702 = vld [vmem:[#allocation13 + $0x158] sm:$0xff]
    %v3703 = vld [vmem:[#allocation13 + $0x160] sm:$0xff]
    %v3704 = vld [vmem:[#allocation13 + $0x168] sm:$0xff]
    %v3705 = vld [vmem:[#allocation13 + $0x170] sm:$0xff]
    %v3706 = vld [vmem:[#allocation13 + $0x178] sm:$0xff]
    %v3707 = vld [vmem:[#allocation13 + $0x180] sm:$0xff]
    %v3708 = vld [vmem:[#allocation13 + $0x188] sm:$0xff]
    %v3709 = vld [vmem:[#allocation13 + $0x190] sm:$0xff]
    %v3710 = vld [vmem:[#allocation13 + $0x198] sm:$0xff]
    %v3711 = vld [vmem:[#allocation13 + $0x1a0] sm:$0xff]
    %v3712 = vld [vmem:[#allocation13 + $0x1a8] sm:$0xff]
    %v3713 = vld [vmem:[#allocation13 + $0x1b0] sm:$0xff]
    %v3714 = vld [vmem:[#allocation13 + $0x1b8] sm:$0xff]
    %v3715 = vld [vmem:[#allocation13 + $0x1c0] sm:$0xff]
    %v3716 = vld [vmem:[#allocation13 + $0x1c8] sm:$0xff]
    %v3717 = vld [vmem:[#allocation13 + $0x1d0] sm:$0xff]
    %v3718 = vld [vmem:[#allocation13 + $0x1d8] sm:$0xff]
    %v3719 = vld [vmem:[#allocation13 + $0x1e0] sm:$0xff]
    %v3720 = vld [vmem:[#allocation13 + $0x1e8] sm:$0xff]
    %v3721 = vld [vmem:[#allocation13 + $0x1f0] sm:$0xff]
    %v3722 = vld [vmem:[#allocation13 + $0x1f8] sm:$0xff]
    %3723 = vmatpush.msra.mxu0 %v3719
    %3724 = vmatpush.msra.mxu0 %v3715
    %3725 = vmatpush.msra.mxu0 %v3711
    %3726 = vmatpush.msra.mxu0 %v3707
    %3727 = vmatpush.msra.mxu0 %v3703
    %3728 = vmatpush.msra.mxu0 %v3699
    %3729 = vmatpush.msra.mxu0 %v3695
    %3730 = vmatpush.msra.mxu0 %v3691
    %3731 = vmatpush.msra.mxu0 %v3687
    %3732 = vmatpush.msra.mxu0 %v3683
    %3733 = vmatpush.msra.mxu0 %v3679
    %3734 = vmatpush.msra.mxu0 %v3675
    %3735 = vmatpush.msra.mxu0 %v3671
    %3736 = vmatpush.msra.mxu0 %v3667
    %3737 = vmatpush.msra.mxu0 %v3663
    %3738 = vmatpush.msra.mxu0 %v3659
    %3739 = vmatmul.f32.gmra.mxu0 %v3653
    %v3740 = vpop.f32.mrf.mxu0
    %v3741 = vadd.f32 0.0, %v3740
    %3742 = vdwg.mxu0
    %3743 = vmatpush.msra.mxu0 %v3720
    %3744 = vmatpush.msra.mxu0 %v3716
    %3745 = vmatpush.msra.mxu0 %v3712
    %3746 = vmatpush.msra.mxu0 %v3708
    %3747 = vmatpush.msra.mxu0 %v3704
    %3748 = vmatpush.msra.mxu0 %v3700
    %3749 = vmatpush.msra.mxu0 %v3696
    %3750 = vmatpush.msra.mxu0 %v3692
    %3751 = vmatpush.msra.mxu0 %v3688
    %3752 = vmatpush.msra.mxu0 %v3684
    %3753 = vmatpush.msra.mxu0 %v3680
    %3754 = vmatpush.msra.mxu0 %v3676
    %3755 = vmatpush.msra.mxu0 %v3672
    %3756 = vmatpush.msra.mxu0 %v3668
    %3757 = vmatpush.msra.mxu0 %v3664
    %3758 = vmatpush.msra.mxu0 %v3660
    %3759 = vmatmul.f32.gmra.mxu0 %v3653
    %v3760 = vpop.f32.mrf.mxu0
    %v3761 = vadd.f32 0.0, %v3760
    %3762 = vdwg.mxu0
    %3763 = vmatpush.msra.mxu0 %v3721
    %3764 = vmatpush.msra.mxu0 %v3717
    %3765 = vmatpush.msra.mxu0 %v3713
    %3766 = vmatpush.msra.mxu0 %v3709
    %3767 = vmatpush.msra.mxu0 %v3705
    %3768 = vmatpush.msra.mxu0 %v3701
    %3769 = vmatpush.msra.mxu0 %v3697
    %3770 = vmatpush.msra.mxu0 %v3693
    %3771 = vmatpush.msra.mxu0 %v3689
    %3772 = vmatpush.msra.mxu0 %v3685
    %3773 = vmatpush.msra.mxu0 %v3681
    %3774 = vmatpush.msra.mxu0 %v3677
    %3775 = vmatpush.msra.mxu0 %v3673
    %3776 = vmatpush.msra.mxu0 %v3669
    %3777 = vmatpush.msra.mxu0 %v3665
    %3778 = vmatpush.msra.mxu0 %v3661
    %3779 = vmatmul.f32.gmra.mxu0 %v3653
    %v3780 = vpop.f32.mrf.mxu0
    %v3781 = vadd.f32 0.0, %v3780
    %3782 = vdwg.mxu0
    %3783 = vmatpush.msra.mxu0 %v3722
    %3784 = vmatpush.msra.mxu0 %v3718
    %3785 = vmatpush.msra.mxu0 %v3714
    %3786 = vmatpush.msra.mxu0 %v3710
    %3787 = vmatpush.msra.mxu0 %v3706
    %3788 = vmatpush.msra.mxu0 %v3702
    %3789 = vmatpush.msra.mxu0 %v3698
    %3790 = vmatpush.msra.mxu0 %v3694
    %3791 = vmatpush.msra.mxu0 %v3690
    %3792 = vmatpush.msra.mxu0 %v3686
    %3793 = vmatpush.msra.mxu0 %v3682
    %3794 = vmatpush.msra.mxu0 %v3678
    %3795 = vmatpush.msra.mxu0 %v3674
    %3796 = vmatpush.msra.mxu0 %v3670
    %3797 = vmatpush.msra.mxu0 %v3666
    %3798 = vmatpush.msra.mxu0 %v3662
    %3799 = vmatmul.f32.gmra.mxu0 %v3653
    %v3800 = vpop.f32.mrf.mxu0
    %v3801 = vadd.f32 0.0, %v3800
    %3802 = vdwg.mxu0
    %v3803 = vadd.f32 %v3655, %v3741
    %v3804 = vadd.f32 %v3656, %v3761
    %v3805 = vadd.f32 %v3657, %v3781
    %v3806 = vadd.f32 %v3658, %v3801
    %v3807 = vxor.u32 %v3803, 2147483648
    %v3808 = vmul.f32 %v3807, 1.442695
    %v3809 = vpow.pop %v3808
    %v3810 = vadd.f32 %v3809, 1.0
    %v3811 = vrcp.pop %v3810
    %v3812 = vmul.f32 %v3810, %v3811
    %v3813 = vsub.f32 1.0, %v3812
    %v3814 = vmul.f32 %v3811, %v3813
    %v3815 = vadd.f32 %v3811, %v3814
    %vm3816 = vweird.f32 %v3810
    %vm3817 = vweird.f32 %v3811
    %vm3818 = vmor %vm3816, %vm3817
    %v3819 = vsel %vm3818, %v3811, %v3815
    %v3820 = vand.u32 2147483647, %v3810
    %vm3821 = vcmp.eq.f32.partialorder %v3820, 8.507059e+37
    %v3822 = vand.u32 %v3810, 2147483648
    %v3823 = vor.u32 1.1754944e-38, %v3822
    %v3824 = vsel %vm3821, %v3823, %v3819
    %v3825 = vmul.f32 1.0, %v3824
    %v3826 = vxor.u32 %v3804, 2147483648
    %v3827 = vmul.f32 %v3826, 1.442695
    %v3828 = vpow.pop %v3827
    %v3829 = vadd.f32 %v3828, 1.0
    %v3830 = vrcp.pop %v3829
    %v3831 = vmul.f32 %v3829, %v3830
    %v3832 = vsub.f32 1.0, %v3831
    %v3833 = vmul.f32 %v3830, %v3832
    %v3834 = vadd.f32 %v3830, %v3833
    %vm3835 = vweird.f32 %v3829
    %vm3836 = vweird.f32 %v3830
    %vm3837 = vmor %vm3835, %vm3836
    %v3838 = vsel %vm3837, %v3830, %v3834
    %v3839 = vand.u32 2147483647, %v3829
    %vm3840 = vcmp.eq.f32.partialorder %v3839, 8.507059e+37
    %v3841 = vand.u32 %v3829, 2147483648
    %v3842 = vor.u32 1.1754944e-38, %v3841
    %v3843 = vsel %vm3840, %v3842, %v3838
    %v3844 = vmul.f32 1.0, %v3843
    %v3845 = vtanh.pop %v3805
    %v3846 = vxor.u32 %v3806, 2147483648
    %v3847 = vmul.f32 %v3846, 1.442695
    %v3848 = vpow.pop %v3847
    %v3849 = vadd.f32 %v3848, 1.0
    %v3850 = vrcp.pop %v3849
    %v3851 = vmul.f32 %v3849, %v3850
    %v3852 = vsub.f32 1.0, %v3851
    %v3853 = vmul.f32 %v3850, %v3852
    %v3854 = vadd.f32 %v3850, %v3853
    %vm3855 = vweird.f32 %v3849
    %vm3856 = vweird.f32 %v3850
    %vm3857 = vmor %vm3855, %vm3856
    %v3858 = vsel %vm3857, %v3850, %v3854
    %v3859 = vand.u32 2147483647, %v3849
    %vm3860 = vcmp.eq.f32.partialorder %v3859, 8.507059e+37
    %v3861 = vand.u32 %v3849, 2147483648
    %v3862 = vor.u32 1.1754944e-38, %v3861
    %v3863 = vsel %vm3860, %v3862, %v3858
    %v3864 = vmul.f32 1.0, %v3863
    %v3865 = vmul.f32 %v3844, %v3651
    %v3866 = vmul.f32 %v3825, %v3845
    %v3867 = vadd.f32 %v3865, %v3866
    %v3868 = vtanh.pop %v3867
    %v3869 = vmul.f32 %v3864, %v3868
    %3870 = vst [vmem:[#allocation3 + $0x18] sm:$0xff] %v3869
    %v3871 = vld [vmem:[#allocation2 + $0x80] sm:$0xff]
    %v3872 = vld [vmem:[#allocation2 + $0x88] sm:$0xff]
    %v3873 = vld [vmem:[#allocation2 + $0x90] sm:$0xff]
    %v3874 = vld [vmem:[#allocation2 + $0x98] sm:$0xff]
    %v3875 = vld [vmem:[#allocation13] sm:$0xff]
    %v3876 = vld [vmem:[#allocation13 + $0x8] sm:$0xff]
    %v3877 = vld [vmem:[#allocation13 + $0x10] sm:$0xff]
    %v3878 = vld [vmem:[#allocation13 + $0x18] sm:$0xff]
    %v3879 = vld [vmem:[#allocation13 + $0x20] sm:$0xff]
    %v3880 = vld [vmem:[#allocation13 + $0x28] sm:$0xff]
    %v3881 = vld [vmem:[#allocation13 + $0x30] sm:$0xff]
    %v3882 = vld [vmem:[#allocation13 + $0x38] sm:$0xff]
    %v3883 = vld [vmem:[#allocation13 + $0x40] sm:$0xff]
    %v3884 = vld [vmem:[#allocation13 + $0x48] sm:$0xff]
    %v3885 = vld [vmem:[#allocation13 + $0x50] sm:$0xff]
    %v3886 = vld [vmem:[#allocation13 + $0x58] sm:$0xff]
    %v3887 = vld [vmem:[#allocation13 + $0x60] sm:$0xff]
    %v3888 = vld [vmem:[#allocation13 + $0x68] sm:$0xff]
    %v3889 = vld [vmem:[#allocation13 + $0x70] sm:$0xff]
    %v3890 = vld [vmem:[#allocation13 + $0x78] sm:$0xff]
    %v3891 = vld [vmem:[#allocation13 + $0x80] sm:$0xff]
    %v3892 = vld [vmem:[#allocation13 + $0x88] sm:$0xff]
    %v3893 = vld [vmem:[#allocation13 + $0x90] sm:$0xff]
    %v3894 = vld [vmem:[#allocation13 + $0x98] sm:$0xff]
    %v3895 = vld [vmem:[#allocation13 + $0xa0] sm:$0xff]
    %v3896 = vld [vmem:[#allocation13 + $0xa8] sm:$0xff]
    %v3897 = vld [vmem:[#allocation13 + $0xb0] sm:$0xff]
    %v3898 = vld [vmem:[#allocation13 + $0xb8] sm:$0xff]
    %v3899 = vld [vmem:[#allocation13 + $0xc0] sm:$0xff]
    %v3900 = vld [vmem:[#allocation13 + $0xc8] sm:$0xff]
    %v3901 = vld [vmem:[#allocation13 + $0xd0] sm:$0xff]
    %v3902 = vld [vmem:[#allocation13 + $0xd8] sm:$0xff]
    %v3903 = vld [vmem:[#allocation13 + $0xe0] sm:$0xff]
    %v3904 = vld [vmem:[#allocation13 + $0xe8] sm:$0xff]
    %v3905 = vld [vmem:[#allocation13 + $0xf0] sm:$0xff]
    %v3906 = vld [vmem:[#allocation13 + $0xf8] sm:$0xff]
    %v3907 = vld [vmem:[#allocation13 + $0x100] sm:$0xff]
    %v3908 = vld [vmem:[#allocation13 + $0x108] sm:$0xff]
    %v3909 = vld [vmem:[#allocation13 + $0x110] sm:$0xff]
    %v3910 = vld [vmem:[#allocation13 + $0x118] sm:$0xff]
    %v3911 = vld [vmem:[#allocation13 + $0x120] sm:$0xff]
    %v3912 = vld [vmem:[#allocation13 + $0x128] sm:$0xff]
    %v3913 = vld [vmem:[#allocation13 + $0x130] sm:$0xff]
    %v3914 = vld [vmem:[#allocation13 + $0x138] sm:$0xff]
    %v3915 = vld [vmem:[#allocation13 + $0x140] sm:$0xff]
    %v3916 = vld [vmem:[#allocation13 + $0x148] sm:$0xff]
    %v3917 = vld [vmem:[#allocation13 + $0x150] sm:$0xff]
    %v3918 = vld [vmem:[#allocation13 + $0x158] sm:$0xff]
    %v3919 = vld [vmem:[#allocation13 + $0x160] sm:$0xff]
    %v3920 = vld [vmem:[#allocation13 + $0x168] sm:$0xff]
    %v3921 = vld [vmem:[#allocation13 + $0x170] sm:$0xff]
    %v3922 = vld [vmem:[#allocation13 + $0x178] sm:$0xff]
    %v3923 = vld [vmem:[#allocation13 + $0x180] sm:$0xff]
    %v3924 = vld [vmem:[#allocation13 + $0x188] sm:$0xff]
    %v3925 = vld [vmem:[#allocation13 + $0x190] sm:$0xff]
    %v3926 = vld [vmem:[#allocation13 + $0x198] sm:$0xff]
    %v3927 = vld [vmem:[#allocation13 + $0x1a0] sm:$0xff]
    %v3928 = vld [vmem:[#allocation13 + $0x1a8] sm:$0xff]
    %v3929 = vld [vmem:[#allocation13 + $0x1b0] sm:$0xff]
    %v3930 = vld [vmem:[#allocation13 + $0x1b8] sm:$0xff]
    %v3931 = vld [vmem:[#allocation13 + $0x1c0] sm:$0xff]
    %v3932 = vld [vmem:[#allocation13 + $0x1c8] sm:$0xff]
    %v3933 = vld [vmem:[#allocation13 + $0x1d0] sm:$0xff]
    %v3934 = vld [vmem:[#allocation13 + $0x1d8] sm:$0xff]
    %v3935 = vld [vmem:[#allocation13 + $0x1e0] sm:$0xff]
    %v3936 = vld [vmem:[#allocation13 + $0x1e8] sm:$0xff]
    %v3937 = vld [vmem:[#allocation13 + $0x1f0] sm:$0xff]
    %v3938 = vld [vmem:[#allocation13 + $0x1f8] sm:$0xff]
    %3939 = vmatpush.msra.mxu0 %v3935
    %3940 = vmatpush.msra.mxu0 %v3931
    %3941 = vmatpush.msra.mxu0 %v3927
    %3942 = vmatpush.msra.mxu0 %v3923
    %3943 = vmatpush.msra.mxu0 %v3919
    %3944 = vmatpush.msra.mxu0 %v3915
    %3945 = vmatpush.msra.mxu0 %v3911
    %3946 = vmatpush.msra.mxu0 %v3907
    %3947 = vmatpush.msra.mxu0 %v3903
    %3948 = vmatpush.msra.mxu0 %v3899
    %3949 = vmatpush.msra.mxu0 %v3895
    %3950 = vmatpush.msra.mxu0 %v3891
    %3951 = vmatpush.msra.mxu0 %v3887
    %3952 = vmatpush.msra.mxu0 %v3883
    %3953 = vmatpush.msra.mxu0 %v3879
    %3954 = vmatpush.msra.mxu0 %v3875
    %3955 = vmatmul.f32.gmra.mxu0 %v3869
    %v3956 = vpop.f32.mrf.mxu0
    %v3957 = vadd.f32 0.0, %v3956
    %3958 = vdwg.mxu0
    %3959 = vmatpush.msra.mxu0 %v3936
    %3960 = vmatpush.msra.mxu0 %v3932
    %3961 = vmatpush.msra.mxu0 %v3928
    %3962 = vmatpush.msra.mxu0 %v3924
    %3963 = vmatpush.msra.mxu0 %v3920
    %3964 = vmatpush.msra.mxu0 %v3916
    %3965 = vmatpush.msra.mxu0 %v3912
    %3966 = vmatpush.msra.mxu0 %v3908
    %3967 = vmatpush.msra.mxu0 %v3904
    %3968 = vmatpush.msra.mxu0 %v3900
    %3969 = vmatpush.msra.mxu0 %v3896
    %3970 = vmatpush.msra.mxu0 %v3892
    %3971 = vmatpush.msra.mxu0 %v3888
    %3972 = vmatpush.msra.mxu0 %v3884
    %3973 = vmatpush.msra.mxu0 %v3880
    %3974 = vmatpush.msra.mxu0 %v3876
    %3975 = vmatmul.f32.gmra.mxu0 %v3869
    %v3976 = vpop.f32.mrf.mxu0
    %v3977 = vadd.f32 0.0, %v3976
    %3978 = vdwg.mxu0
    %3979 = vmatpush.msra.mxu0 %v3937
    %3980 = vmatpush.msra.mxu0 %v3933
    %3981 = vmatpush.msra.mxu0 %v3929
    %3982 = vmatpush.msra.mxu0 %v3925
    %3983 = vmatpush.msra.mxu0 %v3921
    %3984 = vmatpush.msra.mxu0 %v3917
    %3985 = vmatpush.msra.mxu0 %v3913
    %3986 = vmatpush.msra.mxu0 %v3909
    %3987 = vmatpush.msra.mxu0 %v3905
    %3988 = vmatpush.msra.mxu0 %v3901
    %3989 = vmatpush.msra.mxu0 %v3897
    %3990 = vmatpush.msra.mxu0 %v3893
    %3991 = vmatpush.msra.mxu0 %v3889
    %3992 = vmatpush.msra.mxu0 %v3885
    %3993 = vmatpush.msra.mxu0 %v3881
    %3994 = vmatpush.msra.mxu0 %v3877
    %3995 = vmatmul.f32.gmra.mxu0 %v3869
    %v3996 = vpop.f32.mrf.mxu0
    %v3997 = vadd.f32 0.0, %v3996
    %3998 = vdwg.mxu0
    %3999 = vmatpush.msra.mxu0 %v3938
    %4000 = vmatpush.msra.mxu0 %v3934
    %4001 = vmatpush.msra.mxu0 %v3930
    %4002 = vmatpush.msra.mxu0 %v3926
    %4003 = vmatpush.msra.mxu0 %v3922
    %4004 = vmatpush.msra.mxu0 %v3918
    %4005 = vmatpush.msra.mxu0 %v3914
    %4006 = vmatpush.msra.mxu0 %v3910
    %4007 = vmatpush.msra.mxu0 %v3906
    %4008 = vmatpush.msra.mxu0 %v3902
    %4009 = vmatpush.msra.mxu0 %v3898
    %4010 = vmatpush.msra.mxu0 %v3894
    %4011 = vmatpush.msra.mxu0 %v3890
    %4012 = vmatpush.msra.mxu0 %v3886
    %4013 = vmatpush.msra.mxu0 %v3882
    %4014 = vmatpush.msra.mxu0 %v3878
    %4015 = vmatmul.f32.gmra.mxu0 %v3869
    %v4016 = vpop.f32.mrf.mxu0
    %v4017 = vadd.f32 0.0, %v4016
    %4018 = vdwg.mxu0
    %v4019 = vadd.f32 %v3871, %v3957
    %v4020 = vadd.f32 %v3872, %v3977
    %v4021 = vadd.f32 %v3873, %v3997
    %v4022 = vadd.f32 %v3874, %v4017
    %v4023 = vxor.u32 %v4019, 2147483648
    %v4024 = vmul.f32 %v4023, 1.442695
    %v4025 = vpow.pop %v4024
    %v4026 = vadd.f32 %v4025, 1.0
    %v4027 = vrcp.pop %v4026
    %v4028 = vmul.f32 %v4026, %v4027
    %v4029 = vsub.f32 1.0, %v4028
    %v4030 = vmul.f32 %v4027, %v4029
    %v4031 = vadd.f32 %v4027, %v4030
    %vm4032 = vweird.f32 %v4026
    %vm4033 = vweird.f32 %v4027
    %vm4034 = vmor %vm4032, %vm4033
    %v4035 = vsel %vm4034, %v4027, %v4031
    %v4036 = vand.u32 2147483647, %v4026
    %vm4037 = vcmp.eq.f32.partialorder %v4036, 8.507059e+37
    %v4038 = vand.u32 %v4026, 2147483648
    %v4039 = vor.u32 1.1754944e-38, %v4038
    %v4040 = vsel %vm4037, %v4039, %v4035
    %v4041 = vmul.f32 1.0, %v4040
    %v4042 = vxor.u32 %v4020, 2147483648
    %v4043 = vmul.f32 %v4042, 1.442695
    %v4044 = vpow.pop %v4043
    %v4045 = vadd.f32 %v4044, 1.0
    %v4046 = vrcp.pop %v4045
    %v4047 = vmul.f32 %v4045, %v4046
    %v4048 = vsub.f32 1.0, %v4047
    %v4049 = vmul.f32 %v4046, %v4048
    %v4050 = vadd.f32 %v4046, %v4049
    %vm4051 = vweird.f32 %v4045
    %vm4052 = vweird.f32 %v4046
    %vm4053 = vmor %vm4051, %vm4052
    %v4054 = vsel %vm4053, %v4046, %v4050
    %v4055 = vand.u32 2147483647, %v4045
    %vm4056 = vcmp.eq.f32.partialorder %v4055, 8.507059e+37
    %v4057 = vand.u32 %v4045, 2147483648
    %v4058 = vor.u32 1.1754944e-38, %v4057
    %v4059 = vsel %vm4056, %v4058, %v4054
    %v4060 = vmul.f32 1.0, %v4059
    %v4061 = vtanh.pop %v4021
    %v4062 = vxor.u32 %v4022, 2147483648
    %v4063 = vmul.f32 %v4062, 1.442695
    %v4064 = vpow.pop %v4063
    %v4065 = vadd.f32 %v4064, 1.0
    %v4066 = vrcp.pop %v4065
    %v4067 = vmul.f32 %v4065, %v4066
    %v4068 = vsub.f32 1.0, %v4067
    %v4069 = vmul.f32 %v4066, %v4068
    %v4070 = vadd.f32 %v4066, %v4069
    %vm4071 = vweird.f32 %v4065
    %vm4072 = vweird.f32 %v4066
    %vm4073 = vmor %vm4071, %vm4072
    %v4074 = vsel %vm4073, %v4066, %v4070
    %v4075 = vand.u32 2147483647, %v4065
    %vm4076 = vcmp.eq.f32.partialorder %v4075, 8.507059e+37
    %v4077 = vand.u32 %v4065, 2147483648
    %v4078 = vor.u32 1.1754944e-38, %v4077
    %v4079 = vsel %vm4076, %v4078, %v4074
    %v4080 = vmul.f32 1.0, %v4079
    %v4081 = vmul.f32 %v4060, %v3867
    %v4082 = vmul.f32 %v4041, %v4061
    %v4083 = vadd.f32 %v4081, %v4082
    %v4084 = vtanh.pop %v4083
    %v4085 = vmul.f32 %v4080, %v4084
    %4086 = vst [vmem:[#allocation3 + $0x20] sm:$0xff] %v4085
    %v4087 = vld [vmem:[#allocation2 + $0xa0] sm:$0xff]
    %v4088 = vld [vmem:[#allocation2 + $0xa8] sm:$0xff]
    %v4089 = vld [vmem:[#allocation2 + $0xb0] sm:$0xff]
    %v4090 = vld [vmem:[#allocation2 + $0xb8] sm:$0xff]
    %v4091 = vld [vmem:[#allocation13] sm:$0xff]
    %v4092 = vld [vmem:[#allocation13 + $0x8] sm:$0xff]
    %v4093 = vld [vmem:[#allocation13 + $0x10] sm:$0xff]
    %v4094 = vld [vmem:[#allocation13 + $0x18] sm:$0xff]
    %v4095 = vld [vmem:[#allocation13 + $0x20] sm:$0xff]
    %v4096 = vld [vmem:[#allocation13 + $0x28] sm:$0xff]
    %v4097 = vld [vmem:[#allocation13 + $0x30] sm:$0xff]
    %v4098 = vld [vmem:[#allocation13 + $0x38] sm:$0xff]
    %v4099 = vld [vmem:[#allocation13 + $0x40] sm:$0xff]
    %v4100 = vld [vmem:[#allocation13 + $0x48] sm:$0xff]
    %v4101 = vld [vmem:[#allocation13 + $0x50] sm:$0xff]
    %v4102 = vld [vmem:[#allocation13 + $0x58] sm:$0xff]
    %v4103 = vld [vmem:[#allocation13 + $0x60] sm:$0xff]
    %v4104 = vld [vmem:[#allocation13 + $0x68] sm:$0xff]
    %v4105 = vld [vmem:[#allocation13 + $0x70] sm:$0xff]
    %v4106 = vld [vmem:[#allocation13 + $0x78] sm:$0xff]
    %v4107 = vld [vmem:[#allocation13 + $0x80] sm:$0xff]
    %v4108 = vld [vmem:[#allocation13 + $0x88] sm:$0xff]
    %v4109 = vld [vmem:[#allocation13 + $0x90] sm:$0xff]
    %v4110 = vld [vmem:[#allocation13 + $0x98] sm:$0xff]
    %v4111 = vld [vmem:[#allocation13 + $0xa0] sm:$0xff]
    %v4112 = vld [vmem:[#allocation13 + $0xa8] sm:$0xff]
    %v4113 = vld [vmem:[#allocation13 + $0xb0] sm:$0xff]
    %v4114 = vld [vmem:[#allocation13 + $0xb8] sm:$0xff]
    %v4115 = vld [vmem:[#allocation13 + $0xc0] sm:$0xff]
    %v4116 = vld [vmem:[#allocation13 + $0xc8] sm:$0xff]
    %v4117 = vld [vmem:[#allocation13 + $0xd0] sm:$0xff]
    %v4118 = vld [vmem:[#allocation13 + $0xd8] sm:$0xff]
    %v4119 = vld [vmem:[#allocation13 + $0xe0] sm:$0xff]
    %v4120 = vld [vmem:[#allocation13 + $0xe8] sm:$0xff]
    %v4121 = vld [vmem:[#allocation13 + $0xf0] sm:$0xff]
    %v4122 = vld [vmem:[#allocation13 + $0xf8] sm:$0xff]
    %v4123 = vld [vmem:[#allocation13 + $0x100] sm:$0xff]
    %v4124 = vld [vmem:[#allocation13 + $0x108] sm:$0xff]
    %v4125 = vld [vmem:[#allocation13 + $0x110] sm:$0xff]
    %v4126 = vld [vmem:[#allocation13 + $0x118] sm:$0xff]
    %v4127 = vld [vmem:[#allocation13 + $0x120] sm:$0xff]
    %v4128 = vld [vmem:[#allocation13 + $0x128] sm:$0xff]
    %v4129 = vld [vmem:[#allocation13 + $0x130] sm:$0xff]
    %v4130 = vld [vmem:[#allocation13 + $0x138] sm:$0xff]
    %v4131 = vld [vmem:[#allocation13 + $0x140] sm:$0xff]
    %v4132 = vld [vmem:[#allocation13 + $0x148] sm:$0xff]
    %v4133 = vld [vmem:[#allocation13 + $0x150] sm:$0xff]
    %v4134 = vld [vmem:[#allocation13 + $0x158] sm:$0xff]
    %v4135 = vld [vmem:[#allocation13 + $0x160] sm:$0xff]
    %v4136 = vld [vmem:[#allocation13 + $0x168] sm:$0xff]
    %v4137 = vld [vmem:[#allocation13 + $0x170] sm:$0xff]
    %v4138 = vld [vmem:[#allocation13 + $0x178] sm:$0xff]
    %v4139 = vld [vmem:[#allocation13 + $0x180] sm:$0xff]
    %v4140 = vld [vmem:[#allocation13 + $0x188] sm:$0xff]
    %v4141 = vld [vmem:[#allocation13 + $0x190] sm:$0xff]
    %v4142 = vld [vmem:[#allocation13 + $0x198] sm:$0xff]
    %v4143 = vld [vmem:[#allocation13 + $0x1a0] sm:$0xff]
    %v4144 = vld [vmem:[#allocation13 + $0x1a8] sm:$0xff]
    %v4145 = vld [vmem:[#allocation13 + $0x1b0] sm:$0xff]
    %v4146 = vld [vmem:[#allocation13 + $0x1b8] sm:$0xff]
    %v4147 = vld [vmem:[#allocation13 + $0x1c0] sm:$0xff]
    %v4148 = vld [vmem:[#allocation13 + $0x1c8] sm:$0xff]
    %v4149 = vld [vmem:[#allocation13 + $0x1d0] sm:$0xff]
    %v4150 = vld [vmem:[#allocation13 + $0x1d8] sm:$0xff]
    %v4151 = vld [vmem:[#allocation13 + $0x1e0] sm:$0xff]
    %v4152 = vld [vmem:[#allocation13 + $0x1e8] sm:$0xff]
    %v4153 = vld [vmem:[#allocation13 + $0x1f0] sm:$0xff]
    %v4154 = vld [vmem:[#allocation13 + $0x1f8] sm:$0xff]
    %4155 = vmatpush.msra.mxu0 %v4151
    %4156 = vmatpush.msra.mxu0 %v4147
    %4157 = vmatpush.msra.mxu0 %v4143
    %4158 = vmatpush.msra.mxu0 %v4139
    %4159 = vmatpush.msra.mxu0 %v4135
    %4160 = vmatpush.msra.mxu0 %v4131
    %4161 = vmatpush.msra.mxu0 %v4127
    %4162 = vmatpush.msra.mxu0 %v4123
    %4163 = vmatpush.msra.mxu0 %v4119
    %4164 = vmatpush.msra.mxu0 %v4115
    %4165 = vmatpush.msra.mxu0 %v4111
    %4166 = vmatpush.msra.mxu0 %v4107
    %4167 = vmatpush.msra.mxu0 %v4103
    %4168 = vmatpush.msra.mxu0 %v4099
    %4169 = vmatpush.msra.mxu0 %v4095
    %4170 = vmatpush.msra.mxu0 %v4091
    %4171 = vmatmul.f32.gmra.mxu0 %v4085
    %v4172 = vpop.f32.mrf.mxu0
    %v4173 = vadd.f32 0.0, %v4172
    %4174 = vdwg.mxu0
    %4175 = vmatpush.msra.mxu0 %v4152
    %4176 = vmatpush.msra.mxu0 %v4148
    %4177 = vmatpush.msra.mxu0 %v4144
    %4178 = vmatpush.msra.mxu0 %v4140
    %4179 = vmatpush.msra.mxu0 %v4136
    %4180 = vmatpush.msra.mxu0 %v4132
    %4181 = vmatpush.msra.mxu0 %v4128
    %4182 = vmatpush.msra.mxu0 %v4124
    %4183 = vmatpush.msra.mxu0 %v4120
    %4184 = vmatpush.msra.mxu0 %v4116
    %4185 = vmatpush.msra.mxu0 %v4112
    %4186 = vmatpush.msra.mxu0 %v4108
    %4187 = vmatpush.msra.mxu0 %v4104
    %4188 = vmatpush.msra.mxu0 %v4100
    %4189 = vmatpush.msra.mxu0 %v4096
    %4190 = vmatpush.msra.mxu0 %v4092
    %4191 = vmatmul.f32.gmra.mxu0 %v4085
    %v4192 = vpop.f32.mrf.mxu0
    %v4193 = vadd.f32 0.0, %v4192
    %4194 = vdwg.mxu0
    %4195 = vmatpush.msra.mxu0 %v4153
    %4196 = vmatpush.msra.mxu0 %v4149
    %4197 = vmatpush.msra.mxu0 %v4145
    %4198 = vmatpush.msra.mxu0 %v4141
    %4199 = vmatpush.msra.mxu0 %v4137
    %4200 = vmatpush.msra.mxu0 %v4133
    %4201 = vmatpush.msra.mxu0 %v4129
    %4202 = vmatpush.msra.mxu0 %v4125
    %4203 = vmatpush.msra.mxu0 %v4121
    %4204 = vmatpush.msra.mxu0 %v4117
    %4205 = vmatpush.msra.mxu0 %v4113
    %4206 = vmatpush.msra.mxu0 %v4109
    %4207 = vmatpush.msra.mxu0 %v4105
    %4208 = vmatpush.msra.mxu0 %v4101
    %4209 = vmatpush.msra.mxu0 %v4097
    %4210 = vmatpush.msra.mxu0 %v4093
    %4211 = vmatmul.f32.gmra.mxu0 %v4085
    %v4212 = vpop.f32.mrf.mxu0
    %v4213 = vadd.f32 0.0, %v4212
    %4214 = vdwg.mxu0
    %4215 = vmatpush.msra.mxu0 %v4154
    %4216 = vmatpush.msra.mxu0 %v4150
    %4217 = vmatpush.msra.mxu0 %v4146
    %4218 = vmatpush.msra.mxu0 %v4142
    %4219 = vmatpush.msra.mxu0 %v4138
    %4220 = vmatpush.msra.mxu0 %v4134
    %4221 = vmatpush.msra.mxu0 %v4130
    %4222 = vmatpush.msra.mxu0 %v4126
    %4223 = vmatpush.msra.mxu0 %v4122
    %4224 = vmatpush.msra.mxu0 %v4118
    %4225 = vmatpush.msra.mxu0 %v4114
    %4226 = vmatpush.msra.mxu0 %v4110
    %4227 = vmatpush.msra.mxu0 %v4106
    %4228 = vmatpush.msra.mxu0 %v4102
    %4229 = vmatpush.msra.mxu0 %v4098
    %4230 = vmatpush.msra.mxu0 %v4094
    %4231 = vmatmul.f32.gmra.mxu0 %v4085
    %v4232 = vpop.f32.mrf.mxu0
    %v4233 = vadd.f32 0.0, %v4232
    %4234 = vdwg.mxu0
    %v4235 = vadd.f32 %v4087, %v4173
    %v4236 = vadd.f32 %v4088, %v4193
    %v4237 = vadd.f32 %v4089, %v4213
    %v4238 = vadd.f32 %v4090, %v4233
    %v4239 = vxor.u32 %v4235, 2147483648
    %v4240 = vmul.f32 %v4239, 1.442695
    %v4241 = vpow.pop %v4240
    %v4242 = vadd.f32 %v4241, 1.0
    %v4243 = vrcp.pop %v4242
    %v4244 = vmul.f32 %v4242, %v4243
    %v4245 = vsub.f32 1.0, %v4244
    %v4246 = vmul.f32 %v4243, %v4245
    %v4247 = vadd.f32 %v4243, %v4246
    %vm4248 = vweird.f32 %v4242
    %vm4249 = vweird.f32 %v4243
    %vm4250 = vmor %vm4248, %vm4249
    %v4251 = vsel %vm4250, %v4243, %v4247
    %v4252 = vand.u32 2147483647, %v4242
    %vm4253 = vcmp.eq.f32.partialorder %v4252, 8.507059e+37
    %v4254 = vand.u32 %v4242, 2147483648
    %v4255 = vor.u32 1.1754944e-38, %v4254
    %v4256 = vsel %vm4253, %v4255, %v4251
    %v4257 = vmul.f32 1.0, %v4256
    %v4258 = vxor.u32 %v4236, 2147483648
    %v4259 = vmul.f32 %v4258, 1.442695
    %v4260 = vpow.pop %v4259
    %v4261 = vadd.f32 %v4260, 1.0
    %v4262 = vrcp.pop %v4261
    %v4263 = vmul.f32 %v4261, %v4262
    %v4264 = vsub.f32 1.0, %v4263
    %v4265 = vmul.f32 %v4262, %v4264
    %v4266 = vadd.f32 %v4262, %v4265
    %vm4267 = vweird.f32 %v4261
    %vm4268 = vweird.f32 %v4262
    %vm4269 = vmor %vm4267, %vm4268
    %v4270 = vsel %vm4269, %v4262, %v4266
    %v4271 = vand.u32 2147483647, %v4261
    %vm4272 = vcmp.eq.f32.partialorder %v4271, 8.507059e+37
    %v4273 = vand.u32 %v4261, 2147483648
    %v4274 = vor.u32 1.1754944e-38, %v4273
    %v4275 = vsel %vm4272, %v4274, %v4270
    %v4276 = vmul.f32 1.0, %v4275
    %v4277 = vtanh.pop %v4237
    %v4278 = vxor.u32 %v4238, 2147483648
    %v4279 = vmul.f32 %v4278, 1.442695
    %v4280 = vpow.pop %v4279
    %v4281 = vadd.f32 %v4280, 1.0
    %v4282 = vrcp.pop %v4281
    %v4283 = vmul.f32 %v4281, %v4282
    %v4284 = vsub.f32 1.0, %v4283
    %v4285 = vmul.f32 %v4282, %v4284
    %v4286 = vadd.f32 %v4282, %v4285
    %vm4287 = vweird.f32 %v4281
    %vm4288 = vweird.f32 %v4282
    %vm4289 = vmor %vm4287, %vm4288
    %v4290 = vsel %vm4289, %v4282, %v4286
    %v4291 = vand.u32 2147483647, %v4281
    %vm4292 = vcmp.eq.f32.partialorder %v4291, 8.507059e+37
    %v4293 = vand.u32 %v4281, 2147483648
    %v4294 = vor.u32 1.1754944e-38, %v4293
    %v4295 = vsel %vm4292, %v4294, %v4290
    %v4296 = vmul.f32 1.0, %v4295
    %v4297 = vmul.f32 %v4276, %v4083
    %v4298 = vmul.f32 %v4257, %v4277
    %v4299 = vadd.f32 %v4297, %v4298
    %v4300 = vtanh.pop %v4299
    %v4301 = vmul.f32 %v4296, %v4300
    %4302 = vst [vmem:[#allocation3 + $0x28] sm:$0xff] %v4301
    %v4303 = vld [vmem:[#allocation2 + $0xc0] sm:$0xff]
    %v4304 = vld [vmem:[#allocation2 + $0xc8] sm:$0xff]
    %v4305 = vld [vmem:[#allocation2 + $0xd0] sm:$0xff]
    %v4306 = vld [vmem:[#allocation2 + $0xd8] sm:$0xff]
    %v4307 = vld [vmem:[#allocation13] sm:$0xff]
    %v4308 = vld [vmem:[#allocation13 + $0x8] sm:$0xff]
    %v4309 = vld [vmem:[#allocation13 + $0x10] sm:$0xff]
    %v4310 = vld [vmem:[#allocation13 + $0x18] sm:$0xff]
    %v4311 = vld [vmem:[#allocation13 + $0x20] sm:$0xff]
    %v4312 = vld [vmem:[#allocation13 + $0x28] sm:$0xff]
    %v4313 = vld [vmem:[#allocation13 + $0x30] sm:$0xff]
    %v4314 = vld [vmem:[#allocation13 + $0x38] sm:$0xff]
    %v4315 = vld [vmem:[#allocation13 + $0x40] sm:$0xff]
    %v4316 = vld [vmem:[#allocation13 + $0x48] sm:$0xff]
    %v4317 = vld [vmem:[#allocation13 + $0x50] sm:$0xff]
    %v4318 = vld [vmem:[#allocation13 + $0x58] sm:$0xff]
    %v4319 = vld [vmem:[#allocation13 + $0x60] sm:$0xff]
    %v4320 = vld [vmem:[#allocation13 + $0x68] sm:$0xff]
    %v4321 = vld [vmem:[#allocation13 + $0x70] sm:$0xff]
    %v4322 = vld [vmem:[#allocation13 + $0x78] sm:$0xff]
    %v4323 = vld [vmem:[#allocation13 + $0x80] sm:$0xff]
    %v4324 = vld [vmem:[#allocation13 + $0x88] sm:$0xff]
    %v4325 = vld [vmem:[#allocation13 + $0x90] sm:$0xff]
    %v4326 = vld [vmem:[#allocation13 + $0x98] sm:$0xff]
    %v4327 = vld [vmem:[#allocation13 + $0xa0] sm:$0xff]
    %v4328 = vld [vmem:[#allocation13 + $0xa8] sm:$0xff]
    %v4329 = vld [vmem:[#allocation13 + $0xb0] sm:$0xff]
    %v4330 = vld [vmem:[#allocation13 + $0xb8] sm:$0xff]
    %v4331 = vld [vmem:[#allocation13 + $0xc0] sm:$0xff]
    %v4332 = vld [vmem:[#allocation13 + $0xc8] sm:$0xff]
    %v4333 = vld [vmem:[#allocation13 + $0xd0] sm:$0xff]
    %v4334 = vld [vmem:[#allocation13 + $0xd8] sm:$0xff]
    %v4335 = vld [vmem:[#allocation13 + $0xe0] sm:$0xff]
    %v4336 = vld [vmem:[#allocation13 + $0xe8] sm:$0xff]
    %v4337 = vld [vmem:[#allocation13 + $0xf0] sm:$0xff]
    %v4338 = vld [vmem:[#allocation13 + $0xf8] sm:$0xff]
    %v4339 = vld [vmem:[#allocation13 + $0x100] sm:$0xff]
    %v4340 = vld [vmem:[#allocation13 + $0x108] sm:$0xff]
    %v4341 = vld [vmem:[#allocation13 + $0x110] sm:$0xff]
    %v4342 = vld [vmem:[#allocation13 + $0x118] sm:$0xff]
    %v4343 = vld [vmem:[#allocation13 + $0x120] sm:$0xff]
    %v4344 = vld [vmem:[#allocation13 + $0x128] sm:$0xff]
    %v4345 = vld [vmem:[#allocation13 + $0x130] sm:$0xff]
    %v4346 = vld [vmem:[#allocation13 + $0x138] sm:$0xff]
    %v4347 = vld [vmem:[#allocation13 + $0x140] sm:$0xff]
    %v4348 = vld [vmem:[#allocation13 + $0x148] sm:$0xff]
    %v4349 = vld [vmem:[#allocation13 + $0x150] sm:$0xff]
    %v4350 = vld [vmem:[#allocation13 + $0x158] sm:$0xff]
    %v4351 = vld [vmem:[#allocation13 + $0x160] sm:$0xff]
    %v4352 = vld [vmem:[#allocation13 + $0x168] sm:$0xff]
    %v4353 = vld [vmem:[#allocation13 + $0x170] sm:$0xff]
    %v4354 = vld [vmem:[#allocation13 + $0x178] sm:$0xff]
    %v4355 = vld [vmem:[#allocation13 + $0x180] sm:$0xff]
    %v4356 = vld [vmem:[#allocation13 + $0x188] sm:$0xff]
    %v4357 = vld [vmem:[#allocation13 + $0x190] sm:$0xff]
    %v4358 = vld [vmem:[#allocation13 + $0x198] sm:$0xff]
    %v4359 = vld [vmem:[#allocation13 + $0x1a0] sm:$0xff]
    %v4360 = vld [vmem:[#allocation13 + $0x1a8] sm:$0xff]
    %v4361 = vld [vmem:[#allocation13 + $0x1b0] sm:$0xff]
    %v4362 = vld [vmem:[#allocation13 + $0x1b8] sm:$0xff]
    %v4363 = vld [vmem:[#allocation13 + $0x1c0] sm:$0xff]
    %v4364 = vld [vmem:[#allocation13 + $0x1c8] sm:$0xff]
    %v4365 = vld [vmem:[#allocation13 + $0x1d0] sm:$0xff]
    %v4366 = vld [vmem:[#allocation13 + $0x1d8] sm:$0xff]
    %v4367 = vld [vmem:[#allocation13 + $0x1e0] sm:$0xff]
    %v4368 = vld [vmem:[#allocation13 + $0x1e8] sm:$0xff]
    %v4369 = vld [vmem:[#allocation13 + $0x1f0] sm:$0xff]
    %v4370 = vld [vmem:[#allocation13 + $0x1f8] sm:$0xff]
    %4371 = vmatpush.msra.mxu0 %v4367
    %4372 = vmatpush.msra.mxu0 %v4363
    %4373 = vmatpush.msra.mxu0 %v4359
    %4374 = vmatpush.msra.mxu0 %v4355
    %4375 = vmatpush.msra.mxu0 %v4351
    %4376 = vmatpush.msra.mxu0 %v4347
    %4377 = vmatpush.msra.mxu0 %v4343
    %4378 = vmatpush.msra.mxu0 %v4339
    %4379 = vmatpush.msra.mxu0 %v4335
    %4380 = vmatpush.msra.mxu0 %v4331
    %4381 = vmatpush.msra.mxu0 %v4327
    %4382 = vmatpush.msra.mxu0 %v4323
    %4383 = vmatpush.msra.mxu0 %v4319
    %4384 = vmatpush.msra.mxu0 %v4315
    %4385 = vmatpush.msra.mxu0 %v4311
    %4386 = vmatpush.msra.mxu0 %v4307
    %4387 = vmatmul.f32.gmra.mxu0 %v4301
    %v4388 = vpop.f32.mrf.mxu0
    %v4389 = vadd.f32 0.0, %v4388
    %4390 = vdwg.mxu0
    %4391 = vmatpush.msra.mxu0 %v4368
    %4392 = vmatpush.msra.mxu0 %v4364
    %4393 = vmatpush.msra.mxu0 %v4360
    %4394 = vmatpush.msra.mxu0 %v4356
    %4395 = vmatpush.msra.mxu0 %v4352
    %4396 = vmatpush.msra.mxu0 %v4348
    %4397 = vmatpush.msra.mxu0 %v4344
    %4398 = vmatpush.msra.mxu0 %v4340
    %4399 = vmatpush.msra.mxu0 %v4336
    %4400 = vmatpush.msra.mxu0 %v4332
    %4401 = vmatpush.msra.mxu0 %v4328
    %4402 = vmatpush.msra.mxu0 %v4324
    %4403 = vmatpush.msra.mxu0 %v4320
    %4404 = vmatpush.msra.mxu0 %v4316
    %4405 = vmatpush.msra.mxu0 %v4312
    %4406 = vmatpush.msra.mxu0 %v4308
    %4407 = vmatmul.f32.gmra.mxu0 %v4301
    %v4408 = vpop.f32.mrf.mxu0
    %v4409 = vadd.f32 0.0, %v4408
    %4410 = vdwg.mxu0
    %4411 = vmatpush.msra.mxu0 %v4369
    %4412 = vmatpush.msra.mxu0 %v4365
    %4413 = vmatpush.msra.mxu0 %v4361
    %4414 = vmatpush.msra.mxu0 %v4357
    %4415 = vmatpush.msra.mxu0 %v4353
    %4416 = vmatpush.msra.mxu0 %v4349
    %4417 = vmatpush.msra.mxu0 %v4345
    %4418 = vmatpush.msra.mxu0 %v4341
    %4419 = vmatpush.msra.mxu0 %v4337
    %4420 = vmatpush.msra.mxu0 %v4333
    %4421 = vmatpush.msra.mxu0 %v4329
    %4422 = vmatpush.msra.mxu0 %v4325
    %4423 = vmatpush.msra.mxu0 %v4321
    %4424 = vmatpush.msra.mxu0 %v4317
    %4425 = vmatpush.msra.mxu0 %v4313
    %4426 = vmatpush.msra.mxu0 %v4309
    %4427 = vmatmul.f32.gmra.mxu0 %v4301
    %v4428 = vpop.f32.mrf.mxu0
    %v4429 = vadd.f32 0.0, %v4428
    %4430 = vdwg.mxu0
    %4431 = vmatpush.msra.mxu0 %v4370
    %4432 = vmatpush.msra.mxu0 %v4366
    %4433 = vmatpush.msra.mxu0 %v4362
    %4434 = vmatpush.msra.mxu0 %v4358
    %4435 = vmatpush.msra.mxu0 %v4354
    %4436 = vmatpush.msra.mxu0 %v4350
    %4437 = vmatpush.msra.mxu0 %v4346
    %4438 = vmatpush.msra.mxu0 %v4342
    %4439 = vmatpush.msra.mxu0 %v4338
    %4440 = vmatpush.msra.mxu0 %v4334
    %4441 = vmatpush.msra.mxu0 %v4330
    %4442 = vmatpush.msra.mxu0 %v4326
    %4443 = vmatpush.msra.mxu0 %v4322
    %4444 = vmatpush.msra.mxu0 %v4318
    %4445 = vmatpush.msra.mxu0 %v4314
    %4446 = vmatpush.msra.mxu0 %v4310
    %4447 = vmatmul.f32.gmra.mxu0 %v4301
    %v4448 = vpop.f32.mrf.mxu0
    %v4449 = vadd.f32 0.0, %v4448
    %4450 = vdwg.mxu0
    %v4451 = vadd.f32 %v4303, %v4389
    %v4452 = vadd.f32 %v4304, %v4409
    %v4453 = vadd.f32 %v4305, %v4429
    %v4454 = vadd.f32 %v4306, %v4449
    %v4455 = vxor.u32 %v4451, 2147483648
    %v4456 = vmul.f32 %v4455, 1.442695
    %v4457 = vpow.pop %v4456
    %v4458 = vadd.f32 %v4457, 1.0
    %v4459 = vrcp.pop %v4458
    %v4460 = vmul.f32 %v4458, %v4459
    %v4461 = vsub.f32 1.0, %v4460
    %v4462 = vmul.f32 %v4459, %v4461
    %v4463 = vadd.f32 %v4459, %v4462
    %vm4464 = vweird.f32 %v4458
    %vm4465 = vweird.f32 %v4459
    %vm4466 = vmor %vm4464, %vm4465
    %v4467 = vsel %vm4466, %v4459, %v4463
    %v4468 = vand.u32 2147483647, %v4458
    %vm4469 = vcmp.eq.f32.partialorder %v4468, 8.507059e+37
    %v4470 = vand.u32 %v4458, 2147483648
    %v4471 = vor.u32 1.1754944e-38, %v4470
    %v4472 = vsel %vm4469, %v4471, %v4467
    %v4473 = vmul.f32 1.0, %v4472
    %v4474 = vxor.u32 %v4452, 2147483648
    %v4475 = vmul.f32 %v4474, 1.442695
    %v4476 = vpow.pop %v4475
    %v4477 = vadd.f32 %v4476, 1.0
    %v4478 = vrcp.pop %v4477
    %v4479 = vmul.f32 %v4477, %v4478
    %v4480 = vsub.f32 1.0, %v4479
    %v4481 = vmul.f32 %v4478, %v4480
    %v4482 = vadd.f32 %v4478, %v4481
    %vm4483 = vweird.f32 %v4477
    %vm4484 = vweird.f32 %v4478
    %vm4485 = vmor %vm4483, %vm4484
    %v4486 = vsel %vm4485, %v4478, %v4482
    %v4487 = vand.u32 2147483647, %v4477
    %vm4488 = vcmp.eq.f32.partialorder %v4487, 8.507059e+37
    %v4489 = vand.u32 %v4477, 2147483648
    %v4490 = vor.u32 1.1754944e-38, %v4489
    %v4491 = vsel %vm4488, %v4490, %v4486
    %v4492 = vmul.f32 1.0, %v4491
    %v4493 = vtanh.pop %v4453
    %v4494 = vxor.u32 %v4454, 2147483648
    %v4495 = vmul.f32 %v4494, 1.442695
    %v4496 = vpow.pop %v4495
    %v4497 = vadd.f32 %v4496, 1.0
    %v4498 = vrcp.pop %v4497
    %v4499 = vmul.f32 %v4497, %v4498
    %v4500 = vsub.f32 1.0, %v4499
    %v4501 = vmul.f32 %v4498, %v4500
    %v4502 = vadd.f32 %v4498, %v4501
    %vm4503 = vweird.f32 %v4497
    %vm4504 = vweird.f32 %v4498
    %vm4505 = vmor %vm4503, %vm4504
    %v4506 = vsel %vm4505, %v4498, %v4502
    %v4507 = vand.u32 2147483647, %v4497
    %vm4508 = vcmp.eq.f32.partialorder %v4507, 8.507059e+37
    %v4509 = vand.u32 %v4497, 2147483648
    %v4510 = vor.u32 1.1754944e-38, %v4509
    %v4511 = vsel %vm4508, %v4510, %v4506
    %v4512 = vmul.f32 1.0, %v4511
    %v4513 = vmul.f32 %v4492, %v4299
    %v4514 = vmul.f32 %v4473, %v4493
    %v4515 = vadd.f32 %v4513, %v4514
    %v4516 = vtanh.pop %v4515
    %v4517 = vmul.f32 %v4512, %v4516
    %4518 = vst [vmem:[#allocation3 + $0x30] sm:$0xff] %v4517
    %v4519 = vld [vmem:[#allocation2 + $0xe0] sm:$0xff]
    %v4520 = vld [vmem:[#allocation2 + $0xe8] sm:$0xff]
    %v4521 = vld [vmem:[#allocation2 + $0xf0] sm:$0xff]
    %v4522 = vld [vmem:[#allocation2 + $0xf8] sm:$0xff]
    %v4523 = vld [vmem:[#allocation13] sm:$0xff]
    %v4524 = vld [vmem:[#allocation13 + $0x8] sm:$0xff]
    %v4525 = vld [vmem:[#allocation13 + $0x10] sm:$0xff]
    %v4526 = vld [vmem:[#allocation13 + $0x18] sm:$0xff]
    %v4527 = vld [vmem:[#allocation13 + $0x20] sm:$0xff]
    %v4528 = vld [vmem:[#allocation13 + $0x28] sm:$0xff]
    %v4529 = vld [vmem:[#allocation13 + $0x30] sm:$0xff]
    %v4530 = vld [vmem:[#allocation13 + $0x38] sm:$0xff]
    %v4531 = vld [vmem:[#allocation13 + $0x40] sm:$0xff]
    %v4532 = vld [vmem:[#allocation13 + $0x48] sm:$0xff]
    %v4533 = vld [vmem:[#allocation13 + $0x50] sm:$0xff]
    %v4534 = vld [vmem:[#allocation13 + $0x58] sm:$0xff]
    %v4535 = vld [vmem:[#allocation13 + $0x60] sm:$0xff]
    %v4536 = vld [vmem:[#allocation13 + $0x68] sm:$0xff]
    %v4537 = vld [vmem:[#allocation13 + $0x70] sm:$0xff]
    %v4538 = vld [vmem:[#allocation13 + $0x78] sm:$0xff]
    %v4539 = vld [vmem:[#allocation13 + $0x80] sm:$0xff]
    %v4540 = vld [vmem:[#allocation13 + $0x88] sm:$0xff]
    %v4541 = vld [vmem:[#allocation13 + $0x90] sm:$0xff]
    %v4542 = vld [vmem:[#allocation13 + $0x98] sm:$0xff]
    %v4543 = vld [vmem:[#allocation13 + $0xa0] sm:$0xff]
    %v4544 = vld [vmem:[#allocation13 + $0xa8] sm:$0xff]
    %v4545 = vld [vmem:[#allocation13 + $0xb0] sm:$0xff]
    %v4546 = vld [vmem:[#allocation13 + $0xb8] sm:$0xff]
    %v4547 = vld [vmem:[#allocation13 + $0xc0] sm:$0xff]
    %v4548 = vld [vmem:[#allocation13 + $0xc8] sm:$0xff]
    %v4549 = vld [vmem:[#allocation13 + $0xd0] sm:$0xff]
    %v4550 = vld [vmem:[#allocation13 + $0xd8] sm:$0xff]
    %v4551 = vld [vmem:[#allocation13 + $0xe0] sm:$0xff]
    %v4552 = vld [vmem:[#allocation13 + $0xe8] sm:$0xff]
    %v4553 = vld [vmem:[#allocation13 + $0xf0] sm:$0xff]
    %v4554 = vld [vmem:[#allocation13 + $0xf8] sm:$0xff]
    %v4555 = vld [vmem:[#allocation13 + $0x100] sm:$0xff]
    %v4556 = vld [vmem:[#allocation13 + $0x108] sm:$0xff]
    %v4557 = vld [vmem:[#allocation13 + $0x110] sm:$0xff]
    %v4558 = vld [vmem:[#allocation13 + $0x118] sm:$0xff]
    %v4559 = vld [vmem:[#allocation13 + $0x120] sm:$0xff]
    %v4560 = vld [vmem:[#allocation13 + $0x128] sm:$0xff]
    %v4561 = vld [vmem:[#allocation13 + $0x130] sm:$0xff]
    %v4562 = vld [vmem:[#allocation13 + $0x138] sm:$0xff]
    %v4563 = vld [vmem:[#allocation13 + $0x140] sm:$0xff]
    %v4564 = vld [vmem:[#allocation13 + $0x148] sm:$0xff]
    %v4565 = vld [vmem:[#allocation13 + $0x150] sm:$0xff]
    %v4566 = vld [vmem:[#allocation13 + $0x158] sm:$0xff]
    %v4567 = vld [vmem:[#allocation13 + $0x160] sm:$0xff]
    %v4568 = vld [vmem:[#allocation13 + $0x168] sm:$0xff]
    %v4569 = vld [vmem:[#allocation13 + $0x170] sm:$0xff]
    %v4570 = vld [vmem:[#allocation13 + $0x178] sm:$0xff]
    %v4571 = vld [vmem:[#allocation13 + $0x180] sm:$0xff]
    %v4572 = vld [vmem:[#allocation13 + $0x188] sm:$0xff]
    %v4573 = vld [vmem:[#allocation13 + $0x190] sm:$0xff]
    %v4574 = vld [vmem:[#allocation13 + $0x198] sm:$0xff]
    %v4575 = vld [vmem:[#allocation13 + $0x1a0] sm:$0xff]
    %v4576 = vld [vmem:[#allocation13 + $0x1a8] sm:$0xff]
    %v4577 = vld [vmem:[#allocation13 + $0x1b0] sm:$0xff]
    %v4578 = vld [vmem:[#allocation13 + $0x1b8] sm:$0xff]
    %v4579 = vld [vmem:[#allocation13 + $0x1c0] sm:$0xff]
    %v4580 = vld [vmem:[#allocation13 + $0x1c8] sm:$0xff]
    %v4581 = vld [vmem:[#allocation13 + $0x1d0] sm:$0xff]
    %v4582 = vld [vmem:[#allocation13 + $0x1d8] sm:$0xff]
    %v4583 = vld [vmem:[#allocation13 + $0x1e0] sm:$0xff]
    %v4584 = vld [vmem:[#allocation13 + $0x1e8] sm:$0xff]
    %v4585 = vld [vmem:[#allocation13 + $0x1f0] sm:$0xff]
    %v4586 = vld [vmem:[#allocation13 + $0x1f8] sm:$0xff]
    %4587 = vmatpush.msra.mxu0 %v4583
    %4588 = vmatpush.msra.mxu0 %v4579
    %4589 = vmatpush.msra.mxu0 %v4575
    %4590 = vmatpush.msra.mxu0 %v4571
    %4591 = vmatpush.msra.mxu0 %v4567
    %4592 = vmatpush.msra.mxu0 %v4563
    %4593 = vmatpush.msra.mxu0 %v4559
    %4594 = vmatpush.msra.mxu0 %v4555
    %4595 = vmatpush.msra.mxu0 %v4551
    %4596 = vmatpush.msra.mxu0 %v4547
    %4597 = vmatpush.msra.mxu0 %v4543
    %4598 = vmatpush.msra.mxu0 %v4539
    %4599 = vmatpush.msra.mxu0 %v4535
    %4600 = vmatpush.msra.mxu0 %v4531
    %4601 = vmatpush.msra.mxu0 %v4527
    %4602 = vmatpush.msra.mxu0 %v4523
    %4603 = vmatmul.f32.gmra.mxu0 %v4517
    %v4604 = vpop.f32.mrf.mxu0
    %v4605 = vadd.f32 0.0, %v4604
    %4606 = vdwg.mxu0
    %4607 = vmatpush.msra.mxu0 %v4584
    %4608 = vmatpush.msra.mxu0 %v4580
    %4609 = vmatpush.msra.mxu0 %v4576
    %4610 = vmatpush.msra.mxu0 %v4572
    %4611 = vmatpush.msra.mxu0 %v4568
    %4612 = vmatpush.msra.mxu0 %v4564
    %4613 = vmatpush.msra.mxu0 %v4560
    %4614 = vmatpush.msra.mxu0 %v4556
    %4615 = vmatpush.msra.mxu0 %v4552
    %4616 = vmatpush.msra.mxu0 %v4548
    %4617 = vmatpush.msra.mxu0 %v4544
    %4618 = vmatpush.msra.mxu0 %v4540
    %4619 = vmatpush.msra.mxu0 %v4536
    %4620 = vmatpush.msra.mxu0 %v4532
    %4621 = vmatpush.msra.mxu0 %v4528
    %4622 = vmatpush.msra.mxu0 %v4524
    %4623 = vmatmul.f32.gmra.mxu0 %v4517
    %v4624 = vpop.f32.mrf.mxu0
    %v4625 = vadd.f32 0.0, %v4624
    %4626 = vdwg.mxu0
    %4627 = vmatpush.msra.mxu0 %v4585
    %4628 = vmatpush.msra.mxu0 %v4581
    %4629 = vmatpush.msra.mxu0 %v4577
    %4630 = vmatpush.msra.mxu0 %v4573
    %4631 = vmatpush.msra.mxu0 %v4569
    %4632 = vmatpush.msra.mxu0 %v4565
    %4633 = vmatpush.msra.mxu0 %v4561
    %4634 = vmatpush.msra.mxu0 %v4557
    %4635 = vmatpush.msra.mxu0 %v4553
    %4636 = vmatpush.msra.mxu0 %v4549
    %4637 = vmatpush.msra.mxu0 %v4545
    %4638 = vmatpush.msra.mxu0 %v4541
    %4639 = vmatpush.msra.mxu0 %v4537
    %4640 = vmatpush.msra.mxu0 %v4533
    %4641 = vmatpush.msra.mxu0 %v4529
    %4642 = vmatpush.msra.mxu0 %v4525
    %4643 = vmatmul.f32.gmra.mxu0 %v4517
    %v4644 = vpop.f32.mrf.mxu0
    %v4645 = vadd.f32 0.0, %v4644
    %4646 = vdwg.mxu0
    %4647 = vmatpush.msra.mxu0 %v4586
    %4648 = vmatpush.msra.mxu0 %v4582
    %4649 = vmatpush.msra.mxu0 %v4578
    %4650 = vmatpush.msra.mxu0 %v4574
    %4651 = vmatpush.msra.mxu0 %v4570
    %4652 = vmatpush.msra.mxu0 %v4566
    %4653 = vmatpush.msra.mxu0 %v4562
    %4654 = vmatpush.msra.mxu0 %v4558
    %4655 = vmatpush.msra.mxu0 %v4554
    %4656 = vmatpush.msra.mxu0 %v4550
    %4657 = vmatpush.msra.mxu0 %v4546
    %4658 = vmatpush.msra.mxu0 %v4542
    %4659 = vmatpush.msra.mxu0 %v4538
    %4660 = vmatpush.msra.mxu0 %v4534
    %4661 = vmatpush.msra.mxu0 %v4530
    %4662 = vmatpush.msra.mxu0 %v4526
    %4663 = vmatmul.f32.gmra.mxu0 %v4517
    %v4664 = vpop.f32.mrf.mxu0
    %v4665 = vadd.f32 0.0, %v4664
    %4666 = vdwg.mxu0
    %v4667 = vadd.f32 %v4519, %v4605
    %v4668 = vadd.f32 %v4520, %v4625
    %v4669 = vadd.f32 %v4521, %v4645
    %v4670 = vadd.f32 %v4522, %v4665
    %v4671 = vxor.u32 %v4667, 2147483648
    %v4672 = vmul.f32 %v4671, 1.442695
    %v4673 = vpow.pop %v4672
    %v4674 = vadd.f32 %v4673, 1.0
    %v4675 = vrcp.pop %v4674
    %v4676 = vmul.f32 %v4674, %v4675
    %v4677 = vsub.f32 1.0, %v4676
    %v4678 = vmul.f32 %v4675, %v4677
    %v4679 = vadd.f32 %v4675, %v4678
    %vm4680 = vweird.f32 %v4674
    %vm4681 = vweird.f32 %v4675
    %vm4682 = vmor %vm4680, %vm4681
    %v4683 = vsel %vm4682, %v4675, %v4679
    %v4684 = vand.u32 2147483647, %v4674
    %vm4685 = vcmp.eq.f32.partialorder %v4684, 8.507059e+37
    %v4686 = vand.u32 %v4674, 2147483648
    %v4687 = vor.u32 1.1754944e-38, %v4686
    %v4688 = vsel %vm4685, %v4687, %v4683
    %v4689 = vmul.f32 1.0, %v4688
    %v4690 = vxor.u32 %v4668, 2147483648
    %v4691 = vmul.f32 %v4690, 1.442695
    %v4692 = vpow.pop %v4691
    %v4693 = vadd.f32 %v4692, 1.0
    %v4694 = vrcp.pop %v4693
    %v4695 = vmul.f32 %v4693, %v4694
    %v4696 = vsub.f32 1.0, %v4695
    %v4697 = vmul.f32 %v4694, %v4696
    %v4698 = vadd.f32 %v4694, %v4697
    %vm4699 = vweird.f32 %v4693
    %vm4700 = vweird.f32 %v4694
    %vm4701 = vmor %vm4699, %vm4700
    %v4702 = vsel %vm4701, %v4694, %v4698
    %v4703 = vand.u32 2147483647, %v4693
    %vm4704 = vcmp.eq.f32.partialorder %v4703, 8.507059e+37
    %v4705 = vand.u32 %v4693, 2147483648
    %v4706 = vor.u32 1.1754944e-38, %v4705
    %v4707 = vsel %vm4704, %v4706, %v4702
    %v4708 = vmul.f32 1.0, %v4707
    %v4709 = vtanh.pop %v4669
    %v4710 = vxor.u32 %v4670, 2147483648
    %v4711 = vmul.f32 %v4710, 1.442695
    %v4712 = vpow.pop %v4711
    %v4713 = vadd.f32 %v4712, 1.0
    %v4714 = vrcp.pop %v4713
    %v4715 = vmul.f32 %v4713, %v4714
    %v4716 = vsub.f32 1.0, %v4715
    %v4717 = vmul.f32 %v4714, %v4716
    %v4718 = vadd.f32 %v4714, %v4717
    %vm4719 = vweird.f32 %v4713
    %vm4720 = vweird.f32 %v4714
    %vm4721 = vmor %vm4719, %vm4720
    %v4722 = vsel %vm4721, %v4714, %v4718
    %v4723 = vand.u32 2147483647, %v4713
    %vm4724 = vcmp.eq.f32.partialorder %v4723, 8.507059e+37
    %v4725 = vand.u32 %v4713, 2147483648
    %v4726 = vor.u32 1.1754944e-38, %v4725
    %v4727 = vsel %vm4724, %v4726, %v4722
    %v4728 = vmul.f32 1.0, %v4727
    %v4729 = vmul.f32 %v4708, %v4515
    %v4730 = vmul.f32 %v4689, %v4709
    %v4731 = vadd.f32 %v4729, %v4730
    %v4732 = vtanh.pop %v4731
    %v4733 = vmul.f32 %v4728, %v4732
    %4734 = vst [vmem:[#allocation3 + $0x38] sm:$0xff] %v4733
    %s4735 = scalar_lea.vmem [#allocation25], 8
    %4736 = vst [vmem:[%s4735] sm:$0xff] %v4733
    %s4737 = scalar_lea.vmem [#allocation27], 8
    %4738 = vst [vmem:[%s4737] sm:$0xff] %v4731
    %v4739 = vld [vmem:[#allocation3] sm:$0xff]
    %v4740 = vld [vmem:[#allocation3 + $0x8] sm:$0xff]
    %v4741 = vld [vmem:[#allocation3 + $0x10] sm:$0xff]
    %v4742 = vld [vmem:[#allocation3 + $0x18] sm:$0xff]
    %v4743 = vld [vmem:[#allocation3 + $0x20] sm:$0xff]
    %v4744 = vld [vmem:[#allocation3 + $0x28] sm:$0xff]
    %v4745 = vld [vmem:[#allocation3 + $0x30] sm:$0xff]
    %v4746 = vld [vmem:[#allocation3 + $0x38] sm:$0xff]
    %v4747 = vld [vmem:[#allocation15] sm:$0xff]
    %v4748 = vld [vmem:[#allocation15 + $0x8] sm:$0xff]
    %v4749 = vld [vmem:[#allocation15 + $0x10] sm:$0xff]
    %v4750 = vld [vmem:[#allocation15 + $0x18] sm:$0xff]
    %v4751 = vld [vmem:[#allocation15 + $0x20] sm:$0xff]
    %v4752 = vld [vmem:[#allocation15 + $0x28] sm:$0xff]
    %v4753 = vld [vmem:[#allocation15 + $0x30] sm:$0xff]
    %v4754 = vld [vmem:[#allocation15 + $0x38] sm:$0xff]
    %v4755 = vld [vmem:[#allocation15 + $0x40] sm:$0xff]
    %v4756 = vld [vmem:[#allocation15 + $0x48] sm:$0xff]
    %v4757 = vld [vmem:[#allocation15 + $0x50] sm:$0xff]
    %v4758 = vld [vmem:[#allocation15 + $0x58] sm:$0xff]
    %v4759 = vld [vmem:[#allocation15 + $0x60] sm:$0xff]
    %v4760 = vld [vmem:[#allocation15 + $0x68] sm:$0xff]
    %v4761 = vld [vmem:[#allocation15 + $0x70] sm:$0xff]
    %v4762 = vld [vmem:[#allocation15 + $0x78] sm:$0xff]
    %v4763 = vld [vmem:[#allocation15 + $0x80] sm:$0xff]
    %v4764 = vld [vmem:[#allocation15 + $0x88] sm:$0xff]
    %v4765 = vld [vmem:[#allocation15 + $0x90] sm:$0xff]
    %v4766 = vld [vmem:[#allocation15 + $0x98] sm:$0xff]
    %v4767 = vld [vmem:[#allocation15 + $0xa0] sm:$0xff]
    %v4768 = vld [vmem:[#allocation15 + $0xa8] sm:$0xff]
    %v4769 = vld [vmem:[#allocation15 + $0xb0] sm:$0xff]
    %v4770 = vld [vmem:[#allocation15 + $0xb8] sm:$0xff]
    %v4771 = vld [vmem:[#allocation15 + $0xc0] sm:$0xff]
    %v4772 = vld [vmem:[#allocation15 + $0xc8] sm:$0xff]
    %v4773 = vld [vmem:[#allocation15 + $0xd0] sm:$0xff]
    %v4774 = vld [vmem:[#allocation15 + $0xd8] sm:$0xff]
    %v4775 = vld [vmem:[#allocation15 + $0xe0] sm:$0xff]
    %v4776 = vld [vmem:[#allocation15 + $0xe8] sm:$0xff]
    %v4777 = vld [vmem:[#allocation15 + $0xf0] sm:$0xff]
    %v4778 = vld [vmem:[#allocation15 + $0xf8] sm:$0xff]
    %v4779 = vld [vmem:[#allocation15 + $0x100] sm:$0xff]
    %v4780 = vld [vmem:[#allocation15 + $0x108] sm:$0xff]
    %v4781 = vld [vmem:[#allocation15 + $0x110] sm:$0xff]
    %v4782 = vld [vmem:[#allocation15 + $0x118] sm:$0xff]
    %v4783 = vld [vmem:[#allocation15 + $0x120] sm:$0xff]
    %v4784 = vld [vmem:[#allocation15 + $0x128] sm:$0xff]
    %v4785 = vld [vmem:[#allocation15 + $0x130] sm:$0xff]
    %v4786 = vld [vmem:[#allocation15 + $0x138] sm:$0xff]
    %v4787 = vld [vmem:[#allocation15 + $0x140] sm:$0xff]
    %v4788 = vld [vmem:[#allocation15 + $0x148] sm:$0xff]
    %v4789 = vld [vmem:[#allocation15 + $0x150] sm:$0xff]
    %v4790 = vld [vmem:[#allocation15 + $0x158] sm:$0xff]
    %v4791 = vld [vmem:[#allocation15 + $0x160] sm:$0xff]
    %v4792 = vld [vmem:[#allocation15 + $0x168] sm:$0xff]
    %v4793 = vld [vmem:[#allocation15 + $0x170] sm:$0xff]
    %v4794 = vld [vmem:[#allocation15 + $0x178] sm:$0xff]
    %v4795 = vld [vmem:[#allocation15 + $0x180] sm:$0xff]
    %v4796 = vld [vmem:[#allocation15 + $0x188] sm:$0xff]
    %v4797 = vld [vmem:[#allocation15 + $0x190] sm:$0xff]
    %v4798 = vld [vmem:[#allocation15 + $0x198] sm:$0xff]
    %v4799 = vld [vmem:[#allocation15 + $0x1a0] sm:$0xff]
    %v4800 = vld [vmem:[#allocation15 + $0x1a8] sm:$0xff]
    %v4801 = vld [vmem:[#allocation15 + $0x1b0] sm:$0xff]
    %v4802 = vld [vmem:[#allocation15 + $0x1b8] sm:$0xff]
    %v4803 = vld [vmem:[#allocation15 + $0x1c0] sm:$0xff]
    %v4804 = vld [vmem:[#allocation15 + $0x1c8] sm:$0xff]
    %v4805 = vld [vmem:[#allocation15 + $0x1d0] sm:$0xff]
    %v4806 = vld [vmem:[#allocation15 + $0x1d8] sm:$0xff]
    %v4807 = vld [vmem:[#allocation15 + $0x1e0] sm:$0xff]
    %v4808 = vld [vmem:[#allocation15 + $0x1e8] sm:$0xff]
    %v4809 = vld [vmem:[#allocation15 + $0x1f0] sm:$0xff]
    %v4810 = vld [vmem:[#allocation15 + $0x1f8] sm:$0xff]
    %v4811 = vld [vmem:[%s9] sm:$0xf]
    %v4813 = vperm.slane %v4811, 0
    %v4814 = vperm.slane %v4811, 1
    %v4815 = vperm.slane %v4811, 2
    %v4816 = vperm.slane %v4811, 3
    %4821 = vmatpush.msra.mxu0 %v4807
    %4822 = vmatpush.msra.mxu0 %v4803
    %4823 = vmatpush.msra.mxu0 %v4799
    %4824 = vmatpush.msra.mxu0 %v4795
    %4825 = vmatpush.msra.mxu0 %v4791
    %4826 = vmatpush.msra.mxu0 %v4787
    %4827 = vmatpush.msra.mxu0 %v4783
    %4828 = vmatpush.msra.mxu0 %v4779
    %4829 = vmatpush.msra.mxu0 %v4775
    %4830 = vmatpush.msra.mxu0 %v4771
    %4831 = vmatpush.msra.mxu0 %v4767
    %4832 = vmatpush.msra.mxu0 %v4763
    %4833 = vmatpush.msra.mxu0 %v4759
    %4834 = vmatpush.msra.mxu0 %v4755
    %4835 = vmatpush.msra.mxu0 %v4751
    %4836 = vmatpush.msra.mxu0 %v4747
    %4837 = vmatmul.f32.gmra.mxu0 %v4739
    %v4838 = vpop.f32.mrf.mxu0
    %v4839 = vadd.f32 %v4813, %v4838
    %4840 = vmatmul.f32.gmra.mxu0 %v4740
    %v4841 = vpop.f32.mrf.mxu0
    %v4842 = vadd.f32 %v4813, %v4841
    %4843 = vmatmul.f32.gmra.mxu0 %v4741
    %v4844 = vpop.f32.mrf.mxu0
    %v4845 = vadd.f32 %v4813, %v4844
    %4846 = vmatmul.f32.gmra.mxu0 %v4742
    %v4847 = vpop.f32.mrf.mxu0
    %v4848 = vadd.f32 %v4813, %v4847
    %4849 = vmatmul.f32.gmra.mxu0 %v4743
    %v4850 = vpop.f32.mrf.mxu0
    %v4851 = vadd.f32 %v4813, %v4850
    %4852 = vmatmul.f32.gmra.mxu0 %v4744
    %v4853 = vpop.f32.mrf.mxu0
    %v4854 = vadd.f32 %v4813, %v4853
    %4855 = vmatmul.f32.gmra.mxu0 %v4745
    %v4856 = vpop.f32.mrf.mxu0
    %v4857 = vadd.f32 %v4813, %v4856
    %4858 = vmatmul.f32.gmra.mxu0 %v4746
    %v4859 = vpop.f32.mrf.mxu0
    %v4860 = vadd.f32 %v4813, %v4859
    %4861 = vdwg.mxu0
    %4862 = vmatpush.msra.mxu0 %v4808
    %4863 = vmatpush.msra.mxu0 %v4804
    %4864 = vmatpush.msra.mxu0 %v4800
    %4865 = vmatpush.msra.mxu0 %v4796
    %4866 = vmatpush.msra.mxu0 %v4792
    %4867 = vmatpush.msra.mxu0 %v4788
    %4868 = vmatpush.msra.mxu0 %v4784
    %4869 = vmatpush.msra.mxu0 %v4780
    %4870 = vmatpush.msra.mxu0 %v4776
    %4871 = vmatpush.msra.mxu0 %v4772
    %4872 = vmatpush.msra.mxu0 %v4768
    %4873 = vmatpush.msra.mxu0 %v4764
    %4874 = vmatpush.msra.mxu0 %v4760
    %4875 = vmatpush.msra.mxu0 %v4756
    %4876 = vmatpush.msra.mxu0 %v4752
    %4877 = vmatpush.msra.mxu0 %v4748
    %4878 = vmatmul.f32.gmra.mxu0 %v4739
    %v4879 = vpop.f32.mrf.mxu0
    %v4880 = vadd.f32 %v4814, %v4879
    %4881 = vmatmul.f32.gmra.mxu0 %v4740
    %v4882 = vpop.f32.mrf.mxu0
    %v4883 = vadd.f32 %v4814, %v4882
    %4884 = vmatmul.f32.gmra.mxu0 %v4741
    %v4885 = vpop.f32.mrf.mxu0
    %v4886 = vadd.f32 %v4814, %v4885
    %4887 = vmatmul.f32.gmra.mxu0 %v4742
    %v4888 = vpop.f32.mrf.mxu0
    %v4889 = vadd.f32 %v4814, %v4888
    %4890 = vmatmul.f32.gmra.mxu0 %v4743
    %v4891 = vpop.f32.mrf.mxu0
    %v4892 = vadd.f32 %v4814, %v4891
    %4893 = vmatmul.f32.gmra.mxu0 %v4744
    %v4894 = vpop.f32.mrf.mxu0
    %v4895 = vadd.f32 %v4814, %v4894
    %4896 = vmatmul.f32.gmra.mxu0 %v4745
    %v4897 = vpop.f32.mrf.mxu0
    %v4898 = vadd.f32 %v4814, %v4897
    %4899 = vmatmul.f32.gmra.mxu0 %v4746
    %v4900 = vpop.f32.mrf.mxu0
    %v4901 = vadd.f32 %v4814, %v4900
    %4902 = vdwg.mxu0
    %4903 = vmatpush.msra.mxu0 %v4809
    %4904 = vmatpush.msra.mxu0 %v4805
    %4905 = vmatpush.msra.mxu0 %v4801
    %4906 = vmatpush.msra.mxu0 %v4797
    %4907 = vmatpush.msra.mxu0 %v4793
    %4908 = vmatpush.msra.mxu0 %v4789
    %4909 = vmatpush.msra.mxu0 %v4785
    %4910 = vmatpush.msra.mxu0 %v4781
    %4911 = vmatpush.msra.mxu0 %v4777
    %4912 = vmatpush.msra.mxu0 %v4773
    %4913 = vmatpush.msra.mxu0 %v4769
    %4914 = vmatpush.msra.mxu0 %v4765
    %4915 = vmatpush.msra.mxu0 %v4761
    %4916 = vmatpush.msra.mxu0 %v4757
    %4917 = vmatpush.msra.mxu0 %v4753
    %4918 = vmatpush.msra.mxu0 %v4749
    %4919 = vmatmul.f32.gmra.mxu0 %v4739
    %v4920 = vpop.f32.mrf.mxu0
    %v4921 = vadd.f32 %v4815, %v4920
    %4922 = vmatmul.f32.gmra.mxu0 %v4740
    %v4923 = vpop.f32.mrf.mxu0
    %v4924 = vadd.f32 %v4815, %v4923
    %4925 = vmatmul.f32.gmra.mxu0 %v4741
    %v4926 = vpop.f32.mrf.mxu0
    %v4927 = vadd.f32 %v4815, %v4926
    %4928 = vmatmul.f32.gmra.mxu0 %v4742
    %v4929 = vpop.f32.mrf.mxu0
    %v4930 = vadd.f32 %v4815, %v4929
    %4931 = vmatmul.f32.gmra.mxu0 %v4743
    %v4932 = vpop.f32.mrf.mxu0
    %v4933 = vadd.f32 %v4815, %v4932
    %4934 = vmatmul.f32.gmra.mxu0 %v4744
    %v4935 = vpop.f32.mrf.mxu0
    %v4936 = vadd.f32 %v4815, %v4935
    %4937 = vmatmul.f32.gmra.mxu0 %v4745
    %v4938 = vpop.f32.mrf.mxu0
    %v4939 = vadd.f32 %v4815, %v4938
    %4940 = vmatmul.f32.gmra.mxu0 %v4746
    %v4941 = vpop.f32.mrf.mxu0
    %v4942 = vadd.f32 %v4815, %v4941
    %4943 = vdwg.mxu0
    %4944 = vmatpush.msra.mxu0 %v4810
    %4945 = vmatpush.msra.mxu0 %v4806
    %4946 = vmatpush.msra.mxu0 %v4802
    %4947 = vmatpush.msra.mxu0 %v4798
    %4948 = vmatpush.msra.mxu0 %v4794
    %4949 = vmatpush.msra.mxu0 %v4790
    %4950 = vmatpush.msra.mxu0 %v4786
    %4951 = vmatpush.msra.mxu0 %v4782
    %4952 = vmatpush.msra.mxu0 %v4778
    %4953 = vmatpush.msra.mxu0 %v4774
    %4954 = vmatpush.msra.mxu0 %v4770
    %4955 = vmatpush.msra.mxu0 %v4766
    %4956 = vmatpush.msra.mxu0 %v4762
    %4957 = vmatpush.msra.mxu0 %v4758
    %4958 = vmatpush.msra.mxu0 %v4754
    %4959 = vmatpush.msra.mxu0 %v4750
    %4960 = vmatmul.f32.gmra.mxu0 %v4739
    %v4961 = vpop.f32.mrf.mxu0
    %v4962 = vadd.f32 %v4816, %v4961
    %4963 = vmatmul.f32.gmra.mxu0 %v4740
    %v4964 = vpop.f32.mrf.mxu0
    %v4965 = vadd.f32 %v4816, %v4964
    %4966 = vmatmul.f32.gmra.mxu0 %v4741
    %v4967 = vpop.f32.mrf.mxu0
    %v4968 = vadd.f32 %v4816, %v4967
    %4969 = vmatmul.f32.gmra.mxu0 %v4742
    %v4970 = vpop.f32.mrf.mxu0
    %v4971 = vadd.f32 %v4816, %v4970
    %4972 = vmatmul.f32.gmra.mxu0 %v4743
    %v4973 = vpop.f32.mrf.mxu0
    %v4974 = vadd.f32 %v4816, %v4973
    %4975 = vmatmul.f32.gmra.mxu0 %v4744
    %v4976 = vpop.f32.mrf.mxu0
    %v4977 = vadd.f32 %v4816, %v4976
    %4978 = vmatmul.f32.gmra.mxu0 %v4745
    %v4979 = vpop.f32.mrf.mxu0
    %v4980 = vadd.f32 %v4816, %v4979
    %4981 = vmatmul.f32.gmra.mxu0 %v4746
    %v4982 = vpop.f32.mrf.mxu0
    %v4983 = vadd.f32 %v4816, %v4982
    %4984 = vdwg.mxu0
    %4985 = vst [vmem:[#allocation2] sm:$0xff] %v4839
    %4986 = vst [vmem:[#allocation2 + $0x8] sm:$0xff] %v4880
    %4987 = vst [vmem:[#allocation2 + $0x10] sm:$0xff] %v4921
    %4988 = vst [vmem:[#allocation2 + $0x18] sm:$0xff] %v4962
    %4989 = vst [vmem:[#allocation2 + $0x20] sm:$0xff] %v4842
    %4990 = vst [vmem:[#allocation2 + $0x28] sm:$0xff] %v4883
    %4991 = vst [vmem:[#allocation2 + $0x30] sm:$0xff] %v4924
    %4992 = vst [vmem:[#allocation2 + $0x38] sm:$0xff] %v4965
    %4993 = vst [vmem:[#allocation2 + $0x40] sm:$0xff] %v4845
    %4994 = vst [vmem:[#allocation2 + $0x48] sm:$0xff] %v4886
    %4995 = vst [vmem:[#allocation2 + $0x50] sm:$0xff] %v4927
    %4996 = vst [vmem:[#allocation2 + $0x58] sm:$0xff] %v4968
    %4997 = vst [vmem:[#allocation2 + $0x60] sm:$0xff] %v4848
    %4998 = vst [vmem:[#allocation2 + $0x68] sm:$0xff] %v4889
    %4999 = vst [vmem:[#allocation2 + $0x70] sm:$0xff] %v4930
    %5000 = vst [vmem:[#allocation2 + $0x78] sm:$0xff] %v4971
    %5001 = vst [vmem:[#allocation2 + $0x80] sm:$0xff] %v4851
    %5002 = vst [vmem:[#allocation2 + $0x88] sm:$0xff] %v4892
    %5003 = vst [vmem:[#allocation2 + $0x90] sm:$0xff] %v4933
    %5004 = vst [vmem:[#allocation2 + $0x98] sm:$0xff] %v4974
    %5005 = vst [vmem:[#allocation2 + $0xa0] sm:$0xff] %v4854
    %5006 = vst [vmem:[#allocation2 + $0xa8] sm:$0xff] %v4895
    %5007 = vst [vmem:[#allocation2 + $0xb0] sm:$0xff] %v4936
    %5008 = vst [vmem:[#allocation2 + $0xb8] sm:$0xff] %v4977
    %5009 = vst [vmem:[#allocation2 + $0xc0] sm:$0xff] %v4857
    %5010 = vst [vmem:[#allocation2 + $0xc8] sm:$0xff] %v4898
    %5011 = vst [vmem:[#allocation2 + $0xd0] sm:$0xff] %v4939
    %5012 = vst [vmem:[#allocation2 + $0xd8] sm:$0xff] %v4980
    %5013 = vst [vmem:[#allocation2 + $0xe0] sm:$0xff] %v4860
    %5014 = vst [vmem:[#allocation2 + $0xe8] sm:$0xff] %v4901
    %5015 = vst [vmem:[#allocation2 + $0xf0] sm:$0xff] %v4942
    %5016 = vst [vmem:[#allocation2 + $0xf8] sm:$0xff] %v4983
    %s5017 = scalar_lea.vmem [#allocation18], 16
    %v5018 = vld [vmem:[%s5017] sm:$0xff]
    %s5019 = scalar_lea.vmem [#allocation19], 16
    %v5020 = vld [vmem:[%s5019] sm:$0xff]
    %v5021 = vld [vmem:[#allocation2] sm:$0xff]
    %v5022 = vld [vmem:[#allocation2 + $0x8] sm:$0xff]
    %v5023 = vld [vmem:[#allocation2 + $0x10] sm:$0xff]
    %v5024 = vld [vmem:[#allocation2 + $0x18] sm:$0xff]
    %v5025 = vld [vmem:[#allocation16] sm:$0xff]
    %v5026 = vld [vmem:[#allocation16 + $0x8] sm:$0xff]
    %v5027 = vld [vmem:[#allocation16 + $0x10] sm:$0xff]
    %v5028 = vld [vmem:[#allocation16 + $0x18] sm:$0xff]
    %v5029 = vld [vmem:[#allocation16 + $0x20] sm:$0xff]
    %v5030 = vld [vmem:[#allocation16 + $0x28] sm:$0xff]
    %v5031 = vld [vmem:[#allocation16 + $0x30] sm:$0xff]
    %v5032 = vld [vmem:[#allocation16 + $0x38] sm:$0xff]
    %v5033 = vld [vmem:[#allocation16 + $0x40] sm:$0xff]
    %v5034 = vld [vmem:[#allocation16 + $0x48] sm:$0xff]
    %v5035 = vld [vmem:[#allocation16 + $0x50] sm:$0xff]
    %v5036 = vld [vmem:[#allocation16 + $0x58] sm:$0xff]
    %v5037 = vld [vmem:[#allocation16 + $0x60] sm:$0xff]
    %v5038 = vld [vmem:[#allocation16 + $0x68] sm:$0xff]
    %v5039 = vld [vmem:[#allocation16 + $0x70] sm:$0xff]
    %v5040 = vld [vmem:[#allocation16 + $0x78] sm:$0xff]
    %v5041 = vld [vmem:[#allocation16 + $0x80] sm:$0xff]
    %v5042 = vld [vmem:[#allocation16 + $0x88] sm:$0xff]
    %v5043 = vld [vmem:[#allocation16 + $0x90] sm:$0xff]
    %v5044 = vld [vmem:[#allocation16 + $0x98] sm:$0xff]
    %v5045 = vld [vmem:[#allocation16 + $0xa0] sm:$0xff]
    %v5046 = vld [vmem:[#allocation16 + $0xa8] sm:$0xff]
    %v5047 = vld [vmem:[#allocation16 + $0xb0] sm:$0xff]
    %v5048 = vld [vmem:[#allocation16 + $0xb8] sm:$0xff]
    %v5049 = vld [vmem:[#allocation16 + $0xc0] sm:$0xff]
    %v5050 = vld [vmem:[#allocation16 + $0xc8] sm:$0xff]
    %v5051 = vld [vmem:[#allocation16 + $0xd0] sm:$0xff]
    %v5052 = vld [vmem:[#allocation16 + $0xd8] sm:$0xff]
    %v5053 = vld [vmem:[#allocation16 + $0xe0] sm:$0xff]
    %v5054 = vld [vmem:[#allocation16 + $0xe8] sm:$0xff]
    %v5055 = vld [vmem:[#allocation16 + $0xf0] sm:$0xff]
    %v5056 = vld [vmem:[#allocation16 + $0xf8] sm:$0xff]
    %v5057 = vld [vmem:[#allocation16 + $0x100] sm:$0xff]
    %v5058 = vld [vmem:[#allocation16 + $0x108] sm:$0xff]
    %v5059 = vld [vmem:[#allocation16 + $0x110] sm:$0xff]
    %v5060 = vld [vmem:[#allocation16 + $0x118] sm:$0xff]
    %v5061 = vld [vmem:[#allocation16 + $0x120] sm:$0xff]
    %v5062 = vld [vmem:[#allocation16 + $0x128] sm:$0xff]
    %v5063 = vld [vmem:[#allocation16 + $0x130] sm:$0xff]
    %v5064 = vld [vmem:[#allocation16 + $0x138] sm:$0xff]
    %v5065 = vld [vmem:[#allocation16 + $0x140] sm:$0xff]
    %v5066 = vld [vmem:[#allocation16 + $0x148] sm:$0xff]
    %v5067 = vld [vmem:[#allocation16 + $0x150] sm:$0xff]
    %v5068 = vld [vmem:[#allocation16 + $0x158] sm:$0xff]
    %v5069 = vld [vmem:[#allocation16 + $0x160] sm:$0xff]
    %v5070 = vld [vmem:[#allocation16 + $0x168] sm:$0xff]
    %v5071 = vld [vmem:[#allocation16 + $0x170] sm:$0xff]
    %v5072 = vld [vmem:[#allocation16 + $0x178] sm:$0xff]
    %v5073 = vld [vmem:[#allocation16 + $0x180] sm:$0xff]
    %v5074 = vld [vmem:[#allocation16 + $0x188] sm:$0xff]
    %v5075 = vld [vmem:[#allocation16 + $0x190] sm:$0xff]
    %v5076 = vld [vmem:[#allocation16 + $0x198] sm:$0xff]
    %v5077 = vld [vmem:[#allocation16 + $0x1a0] sm:$0xff]
    %v5078 = vld [vmem:[#allocation16 + $0x1a8] sm:$0xff]
    %v5079 = vld [vmem:[#allocation16 + $0x1b0] sm:$0xff]
    %v5080 = vld [vmem:[#allocation16 + $0x1b8] sm:$0xff]
    %v5081 = vld [vmem:[#allocation16 + $0x1c0] sm:$0xff]
    %v5082 = vld [vmem:[#allocation16 + $0x1c8] sm:$0xff]
    %v5083 = vld [vmem:[#allocation16 + $0x1d0] sm:$0xff]
    %v5084 = vld [vmem:[#allocation16 + $0x1d8] sm:$0xff]
    %v5085 = vld [vmem:[#allocation16 + $0x1e0] sm:$0xff]
    %v5086 = vld [vmem:[#allocation16 + $0x1e8] sm:$0xff]
    %v5087 = vld [vmem:[#allocation16 + $0x1f0] sm:$0xff]
    %v5088 = vld [vmem:[#allocation16 + $0x1f8] sm:$0xff]
    %5089 = vmatpush.msra.mxu0 %v5085
    %5090 = vmatpush.msra.mxu0 %v5081
    %5091 = vmatpush.msra.mxu0 %v5077
    %5092 = vmatpush.msra.mxu0 %v5073
    %5093 = vmatpush.msra.mxu0 %v5069
    %5094 = vmatpush.msra.mxu0 %v5065
    %5095 = vmatpush.msra.mxu0 %v5061
    %5096 = vmatpush.msra.mxu0 %v5057
    %5097 = vmatpush.msra.mxu0 %v5053
    %5098 = vmatpush.msra.mxu0 %v5049
    %5099 = vmatpush.msra.mxu0 %v5045
    %5100 = vmatpush.msra.mxu0 %v5041
    %5101 = vmatpush.msra.mxu0 %v5037
    %5102 = vmatpush.msra.mxu0 %v5033
    %5103 = vmatpush.msra.mxu0 %v5029
    %5104 = vmatpush.msra.mxu0 %v5025
    %5105 = vmatmul.f32.gmra.mxu0 %v5018
    %v5106 = vpop.f32.mrf.mxu0
    %v5107 = vadd.f32 0.0, %v5106
    %5108 = vdwg.mxu0
    %5109 = vmatpush.msra.mxu0 %v5086
    %5110 = vmatpush.msra.mxu0 %v5082
    %5111 = vmatpush.msra.mxu0 %v5078
    %5112 = vmatpush.msra.mxu0 %v5074
    %5113 = vmatpush.msra.mxu0 %v5070
    %5114 = vmatpush.msra.mxu0 %v5066
    %5115 = vmatpush.msra.mxu0 %v5062
    %5116 = vmatpush.msra.mxu0 %v5058
    %5117 = vmatpush.msra.mxu0 %v5054
    %5118 = vmatpush.msra.mxu0 %v5050
    %5119 = vmatpush.msra.mxu0 %v5046
    %5120 = vmatpush.msra.mxu0 %v5042
    %5121 = vmatpush.msra.mxu0 %v5038
    %5122 = vmatpush.msra.mxu0 %v5034
    %5123 = vmatpush.msra.mxu0 %v5030
    %5124 = vmatpush.msra.mxu0 %v5026
    %5125 = vmatmul.f32.gmra.mxu0 %v5018
    %v5126 = vpop.f32.mrf.mxu0
    %v5127 = vadd.f32 0.0, %v5126
    %5128 = vdwg.mxu0
    %5129 = vmatpush.msra.mxu0 %v5087
    %5130 = vmatpush.msra.mxu0 %v5083
    %5131 = vmatpush.msra.mxu0 %v5079
    %5132 = vmatpush.msra.mxu0 %v5075
    %5133 = vmatpush.msra.mxu0 %v5071
    %5134 = vmatpush.msra.mxu0 %v5067
    %5135 = vmatpush.msra.mxu0 %v5063
    %5136 = vmatpush.msra.mxu0 %v5059
    %5137 = vmatpush.msra.mxu0 %v5055
    %5138 = vmatpush.msra.mxu0 %v5051
    %5139 = vmatpush.msra.mxu0 %v5047
    %5140 = vmatpush.msra.mxu0 %v5043
    %5141 = vmatpush.msra.mxu0 %v5039
    %5142 = vmatpush.msra.mxu0 %v5035
    %5143 = vmatpush.msra.mxu0 %v5031
    %5144 = vmatpush.msra.mxu0 %v5027
    %5145 = vmatmul.f32.gmra.mxu0 %v5018
    %v5146 = vpop.f32.mrf.mxu0
    %v5147 = vadd.f32 0.0, %v5146
    %5148 = vdwg.mxu0
    %5149 = vmatpush.msra.mxu0 %v5088
    %5150 = vmatpush.msra.mxu0 %v5084
    %5151 = vmatpush.msra.mxu0 %v5080
    %5152 = vmatpush.msra.mxu0 %v5076
    %5153 = vmatpush.msra.mxu0 %v5072
    %5154 = vmatpush.msra.mxu0 %v5068
    %5155 = vmatpush.msra.mxu0 %v5064
    %5156 = vmatpush.msra.mxu0 %v5060
    %5157 = vmatpush.msra.mxu0 %v5056
    %5158 = vmatpush.msra.mxu0 %v5052
    %5159 = vmatpush.msra.mxu0 %v5048
    %5160 = vmatpush.msra.mxu0 %v5044
    %5161 = vmatpush.msra.mxu0 %v5040
    %5162 = vmatpush.msra.mxu0 %v5036
    %5163 = vmatpush.msra.mxu0 %v5032
    %5164 = vmatpush.msra.mxu0 %v5028
    %5165 = vmatmul.f32.gmra.mxu0 %v5018
    %v5166 = vpop.f32.mrf.mxu0
    %v5167 = vadd.f32 0.0, %v5166
    %5168 = vdwg.mxu0
    %v5169 = vadd.f32 %v5021, %v5107
    %v5170 = vadd.f32 %v5022, %v5127
    %v5171 = vadd.f32 %v5023, %v5147
    %v5172 = vadd.f32 %v5024, %v5167
    %v5173 = vxor.u32 %v5169, 2147483648
    %v5174 = vmul.f32 %v5173, 1.442695
    %v5175 = vpow.pop %v5174
    %v5176 = vadd.f32 %v5175, 1.0
    %v5177 = vrcp.pop %v5176
    %v5178 = vmul.f32 %v5176, %v5177
    %v5179 = vsub.f32 1.0, %v5178
    %v5180 = vmul.f32 %v5177, %v5179
    %v5181 = vadd.f32 %v5177, %v5180
    %vm5182 = vweird.f32 %v5176
    %vm5183 = vweird.f32 %v5177
    %vm5184 = vmor %vm5182, %vm5183
    %v5185 = vsel %vm5184, %v5177, %v5181
    %v5186 = vand.u32 2147483647, %v5176
    %vm5187 = vcmp.eq.f32.partialorder %v5186, 8.507059e+37
    %v5188 = vand.u32 %v5176, 2147483648
    %v5189 = vor.u32 1.1754944e-38, %v5188
    %v5190 = vsel %vm5187, %v5189, %v5185
    %v5191 = vmul.f32 1.0, %v5190
    %v5192 = vxor.u32 %v5170, 2147483648
    %v5193 = vmul.f32 %v5192, 1.442695
    %v5194 = vpow.pop %v5193
    %v5195 = vadd.f32 %v5194, 1.0
    %v5196 = vrcp.pop %v5195
    %v5197 = vmul.f32 %v5195, %v5196
    %v5198 = vsub.f32 1.0, %v5197
    %v5199 = vmul.f32 %v5196, %v5198
    %v5200 = vadd.f32 %v5196, %v5199
    %vm5201 = vweird.f32 %v5195
    %vm5202 = vweird.f32 %v5196
    %vm5203 = vmor %vm5201, %vm5202
    %v5204 = vsel %vm5203, %v5196, %v5200
    %v5205 = vand.u32 2147483647, %v5195
    %vm5206 = vcmp.eq.f32.partialorder %v5205, 8.507059e+37
    %v5207 = vand.u32 %v5195, 2147483648
    %v5208 = vor.u32 1.1754944e-38, %v5207
    %v5209 = vsel %vm5206, %v5208, %v5204
    %v5210 = vmul.f32 1.0, %v5209
    %v5211 = vtanh.pop %v5171
    %v5212 = vxor.u32 %v5172, 2147483648
    %v5213 = vmul.f32 %v5212, 1.442695
    %v5214 = vpow.pop %v5213
    %v5215 = vadd.f32 %v5214, 1.0
    %v5216 = vrcp.pop %v5215
    %v5217 = vmul.f32 %v5215, %v5216
    %v5218 = vsub.f32 1.0, %v5217
    %v5219 = vmul.f32 %v5216, %v5218
    %v5220 = vadd.f32 %v5216, %v5219
    %vm5221 = vweird.f32 %v5215
    %vm5222 = vweird.f32 %v5216
    %vm5223 = vmor %vm5221, %vm5222
    %v5224 = vsel %vm5223, %v5216, %v5220
    %v5225 = vand.u32 2147483647, %v5215
    %vm5226 = vcmp.eq.f32.partialorder %v5225, 8.507059e+37
    %v5227 = vand.u32 %v5215, 2147483648
    %v5228 = vor.u32 1.1754944e-38, %v5227
    %v5229 = vsel %vm5226, %v5228, %v5224
    %v5230 = vmul.f32 1.0, %v5229
    %v5231 = vmul.f32 %v5210, %v5020
    %v5232 = vmul.f32 %v5191, %v5211
    %v5233 = vadd.f32 %v5231, %v5232
    %v5234 = vtanh.pop %v5233
    %v5235 = vmul.f32 %v5230, %v5234
    %v5236 = vld [vmem:[#allocation2 + $0x20] sm:$0xff]
    %v5237 = vld [vmem:[#allocation2 + $0x28] sm:$0xff]
    %v5238 = vld [vmem:[#allocation2 + $0x30] sm:$0xff]
    %v5239 = vld [vmem:[#allocation2 + $0x38] sm:$0xff]
    %5240 = vmatpush.msra.mxu0 %v5085
    %5241 = vmatpush.msra.mxu0 %v5081
    %5242 = vmatpush.msra.mxu0 %v5077
    %5243 = vmatpush.msra.mxu0 %v5073
    %5244 = vmatpush.msra.mxu0 %v5069
    %5245 = vmatpush.msra.mxu0 %v5065
    %5246 = vmatpush.msra.mxu0 %v5061
    %5247 = vmatpush.msra.mxu0 %v5057
    %5248 = vmatpush.msra.mxu0 %v5053
    %5249 = vmatpush.msra.mxu0 %v5049
    %5250 = vmatpush.msra.mxu0 %v5045
    %5251 = vmatpush.msra.mxu0 %v5041
    %5252 = vmatpush.msra.mxu0 %v5037
    %5253 = vmatpush.msra.mxu0 %v5033
    %5254 = vmatpush.msra.mxu0 %v5029
    %5255 = vmatpush.msra.mxu0 %v5025
    %5256 = vmatmul.f32.gmra.mxu0 %v5235
    %v5257 = vpop.f32.mrf.mxu0
    %v5258 = vadd.f32 0.0, %v5257
    %5259 = vdwg.mxu0
    %5260 = vmatpush.msra.mxu0 %v5086
    %5261 = vmatpush.msra.mxu0 %v5082
    %5262 = vmatpush.msra.mxu0 %v5078
    %5263 = vmatpush.msra.mxu0 %v5074
    %5264 = vmatpush.msra.mxu0 %v5070
    %5265 = vmatpush.msra.mxu0 %v5066
    %5266 = vmatpush.msra.mxu0 %v5062
    %5267 = vmatpush.msra.mxu0 %v5058
    %5268 = vmatpush.msra.mxu0 %v5054
    %5269 = vmatpush.msra.mxu0 %v5050
    %5270 = vmatpush.msra.mxu0 %v5046
    %5271 = vmatpush.msra.mxu0 %v5042
    %5272 = vmatpush.msra.mxu0 %v5038
    %5273 = vmatpush.msra.mxu0 %v5034
    %5274 = vmatpush.msra.mxu0 %v5030
    %5275 = vmatpush.msra.mxu0 %v5026
    %5276 = vmatmul.f32.gmra.mxu0 %v5235
    %v5277 = vpop.f32.mrf.mxu0
    %v5278 = vadd.f32 0.0, %v5277
    %5279 = vdwg.mxu0
    %5280 = vmatpush.msra.mxu0 %v5087
    %5281 = vmatpush.msra.mxu0 %v5083
    %5282 = vmatpush.msra.mxu0 %v5079
    %5283 = vmatpush.msra.mxu0 %v5075
    %5284 = vmatpush.msra.mxu0 %v5071
    %5285 = vmatpush.msra.mxu0 %v5067
    %5286 = vmatpush.msra.mxu0 %v5063
    %5287 = vmatpush.msra.mxu0 %v5059
    %5288 = vmatpush.msra.mxu0 %v5055
    %5289 = vmatpush.msra.mxu0 %v5051
    %5290 = vmatpush.msra.mxu0 %v5047
    %5291 = vmatpush.msra.mxu0 %v5043
    %5292 = vmatpush.msra.mxu0 %v5039
    %5293 = vmatpush.msra.mxu0 %v5035
    %5294 = vmatpush.msra.mxu0 %v5031
    %5295 = vmatpush.msra.mxu0 %v5027
    %5296 = vmatmul.f32.gmra.mxu0 %v5235
    %v5297 = vpop.f32.mrf.mxu0
    %v5298 = vadd.f32 0.0, %v5297
    %5299 = vdwg.mxu0
    %5300 = vmatpush.msra.mxu0 %v5088
    %5301 = vmatpush.msra.mxu0 %v5084
    %5302 = vmatpush.msra.mxu0 %v5080
    %5303 = vmatpush.msra.mxu0 %v5076
    %5304 = vmatpush.msra.mxu0 %v5072
    %5305 = vmatpush.msra.mxu0 %v5068
    %5306 = vmatpush.msra.mxu0 %v5064
    %5307 = vmatpush.msra.mxu0 %v5060
    %5308 = vmatpush.msra.mxu0 %v5056
    %5309 = vmatpush.msra.mxu0 %v5052
    %5310 = vmatpush.msra.mxu0 %v5048
    %5311 = vmatpush.msra.mxu0 %v5044
    %5312 = vmatpush.msra.mxu0 %v5040
    %5313 = vmatpush.msra.mxu0 %v5036
    %5314 = vmatpush.msra.mxu0 %v5032
    %5315 = vmatpush.msra.mxu0 %v5028
    %5316 = vmatmul.f32.gmra.mxu0 %v5235
    %v5317 = vpop.f32.mrf.mxu0
    %v5318 = vadd.f32 0.0, %v5317
    %5319 = vdwg.mxu0
    %v5320 = vadd.f32 %v5236, %v5258
    %v5321 = vadd.f32 %v5237, %v5278
    %v5322 = vadd.f32 %v5238, %v5298
    %v5323 = vadd.f32 %v5239, %v5318
    %v5324 = vxor.u32 %v5320, 2147483648
    %v5325 = vmul.f32 %v5324, 1.442695
    %v5326 = vpow.pop %v5325
    %v5327 = vadd.f32 %v5326, 1.0
    %v5328 = vrcp.pop %v5327
    %v5329 = vmul.f32 %v5327, %v5328
    %v5330 = vsub.f32 1.0, %v5329
    %v5331 = vmul.f32 %v5328, %v5330
    %v5332 = vadd.f32 %v5328, %v5331
    %vm5333 = vweird.f32 %v5327
    %vm5334 = vweird.f32 %v5328
    %vm5335 = vmor %vm5333, %vm5334
    %v5336 = vsel %vm5335, %v5328, %v5332
    %v5337 = vand.u32 2147483647, %v5327
    %vm5338 = vcmp.eq.f32.partialorder %v5337, 8.507059e+37
    %v5339 = vand.u32 %v5327, 2147483648
    %v5340 = vor.u32 1.1754944e-38, %v5339
    %v5341 = vsel %vm5338, %v5340, %v5336
    %v5342 = vmul.f32 1.0, %v5341
    %v5343 = vxor.u32 %v5321, 2147483648
    %v5344 = vmul.f32 %v5343, 1.442695
    %v5345 = vpow.pop %v5344
    %v5346 = vadd.f32 %v5345, 1.0
    %v5347 = vrcp.pop %v5346
    %v5348 = vmul.f32 %v5346, %v5347
    %v5349 = vsub.f32 1.0, %v5348
    %v5350 = vmul.f32 %v5347, %v5349
    %v5351 = vadd.f32 %v5347, %v5350
    %vm5352 = vweird.f32 %v5346
    %vm5353 = vweird.f32 %v5347
    %vm5354 = vmor %vm5352, %vm5353
    %v5355 = vsel %vm5354, %v5347, %v5351
    %v5356 = vand.u32 2147483647, %v5346
    %vm5357 = vcmp.eq.f32.partialorder %v5356, 8.507059e+37
    %v5358 = vand.u32 %v5346, 2147483648
    %v5359 = vor.u32 1.1754944e-38, %v5358
    %v5360 = vsel %vm5357, %v5359, %v5355
    %v5361 = vmul.f32 1.0, %v5360
    %v5362 = vtanh.pop %v5322
    %v5363 = vxor.u32 %v5323, 2147483648
    %v5364 = vmul.f32 %v5363, 1.442695
    %v5365 = vpow.pop %v5364
    %v5366 = vadd.f32 %v5365, 1.0
    %v5367 = vrcp.pop %v5366
    %v5368 = vmul.f32 %v5366, %v5367
    %v5369 = vsub.f32 1.0, %v5368
    %v5370 = vmul.f32 %v5367, %v5369
    %v5371 = vadd.f32 %v5367, %v5370
    %vm5372 = vweird.f32 %v5366
    %vm5373 = vweird.f32 %v5367
    %vm5374 = vmor %vm5372, %vm5373
    %v5375 = vsel %vm5374, %v5367, %v5371
    %v5376 = vand.u32 2147483647, %v5366
    %vm5377 = vcmp.eq.f32.partialorder %v5376, 8.507059e+37
    %v5378 = vand.u32 %v5366, 2147483648
    %v5379 = vor.u32 1.1754944e-38, %v5378
    %v5380 = vsel %vm5377, %v5379, %v5375
    %v5381 = vmul.f32 1.0, %v5380
    %v5382 = vmul.f32 %v5361, %v5233
    %v5383 = vmul.f32 %v5342, %v5362
    %v5384 = vadd.f32 %v5382, %v5383
    %v5385 = vtanh.pop %v5384
    %v5386 = vmul.f32 %v5381, %v5385
    %v5387 = vld [vmem:[#allocation2 + $0x40] sm:$0xff]
    %v5388 = vld [vmem:[#allocation2 + $0x48] sm:$0xff]
    %v5389 = vld [vmem:[#allocation2 + $0x50] sm:$0xff]
    %v5390 = vld [vmem:[#allocation2 + $0x58] sm:$0xff]
    %5391 = vmatpush.msra.mxu0 %v5085
    %5392 = vmatpush.msra.mxu0 %v5081
    %5393 = vmatpush.msra.mxu0 %v5077
    %5394 = vmatpush.msra.mxu0 %v5073
    %5395 = vmatpush.msra.mxu0 %v5069
    %5396 = vmatpush.msra.mxu0 %v5065
    %5397 = vmatpush.msra.mxu0 %v5061
    %5398 = vmatpush.msra.mxu0 %v5057
    %5399 = vmatpush.msra.mxu0 %v5053
    %5400 = vmatpush.msra.mxu0 %v5049
    %5401 = vmatpush.msra.mxu0 %v5045
    %5402 = vmatpush.msra.mxu0 %v5041
    %5403 = vmatpush.msra.mxu0 %v5037
    %5404 = vmatpush.msra.mxu0 %v5033
    %5405 = vmatpush.msra.mxu0 %v5029
    %5406 = vmatpush.msra.mxu0 %v5025
    %5407 = vmatmul.f32.gmra.mxu0 %v5386
    %v5408 = vpop.f32.mrf.mxu0
    %v5409 = vadd.f32 0.0, %v5408
    %5410 = vdwg.mxu0
    %5411 = vmatpush.msra.mxu0 %v5086
    %5412 = vmatpush.msra.mxu0 %v5082
    %5413 = vmatpush.msra.mxu0 %v5078
    %5414 = vmatpush.msra.mxu0 %v5074
    %5415 = vmatpush.msra.mxu0 %v5070
    %5416 = vmatpush.msra.mxu0 %v5066
    %5417 = vmatpush.msra.mxu0 %v5062
    %5418 = vmatpush.msra.mxu0 %v5058
    %5419 = vmatpush.msra.mxu0 %v5054
    %5420 = vmatpush.msra.mxu0 %v5050
    %5421 = vmatpush.msra.mxu0 %v5046
    %5422 = vmatpush.msra.mxu0 %v5042
    %5423 = vmatpush.msra.mxu0 %v5038
    %5424 = vmatpush.msra.mxu0 %v5034
    %5425 = vmatpush.msra.mxu0 %v5030
    %5426 = vmatpush.msra.mxu0 %v5026
    %5427 = vmatmul.f32.gmra.mxu0 %v5386
    %v5428 = vpop.f32.mrf.mxu0
    %v5429 = vadd.f32 0.0, %v5428
    %5430 = vdwg.mxu0
    %5431 = vmatpush.msra.mxu0 %v5087
    %5432 = vmatpush.msra.mxu0 %v5083
    %5433 = vmatpush.msra.mxu0 %v5079
    %5434 = vmatpush.msra.mxu0 %v5075
    %5435 = vmatpush.msra.mxu0 %v5071
    %5436 = vmatpush.msra.mxu0 %v5067
    %5437 = vmatpush.msra.mxu0 %v5063
    %5438 = vmatpush.msra.mxu0 %v5059
    %5439 = vmatpush.msra.mxu0 %v5055
    %5440 = vmatpush.msra.mxu0 %v5051
    %5441 = vmatpush.msra.mxu0 %v5047
    %5442 = vmatpush.msra.mxu0 %v5043
    %5443 = vmatpush.msra.mxu0 %v5039
    %5444 = vmatpush.msra.mxu0 %v5035
    %5445 = vmatpush.msra.mxu0 %v5031
    %5446 = vmatpush.msra.mxu0 %v5027
    %5447 = vmatmul.f32.gmra.mxu0 %v5386
    %v5448 = vpop.f32.mrf.mxu0
    %v5449 = vadd.f32 0.0, %v5448
    %5450 = vdwg.mxu0
    %5451 = vmatpush.msra.mxu0 %v5088
    %5452 = vmatpush.msra.mxu0 %v5084
    %5453 = vmatpush.msra.mxu0 %v5080
    %5454 = vmatpush.msra.mxu0 %v5076
    %5455 = vmatpush.msra.mxu0 %v5072
    %5456 = vmatpush.msra.mxu0 %v5068
    %5457 = vmatpush.msra.mxu0 %v5064
    %5458 = vmatpush.msra.mxu0 %v5060
    %5459 = vmatpush.msra.mxu0 %v5056
    %5460 = vmatpush.msra.mxu0 %v5052
    %5461 = vmatpush.msra.mxu0 %v5048
    %5462 = vmatpush.msra.mxu0 %v5044
    %5463 = vmatpush.msra.mxu0 %v5040
    %5464 = vmatpush.msra.mxu0 %v5036
    %5465 = vmatpush.msra.mxu0 %v5032
    %5466 = vmatpush.msra.mxu0 %v5028
    %5467 = vmatmul.f32.gmra.mxu0 %v5386
    %v5468 = vpop.f32.mrf.mxu0
    %v5469 = vadd.f32 0.0, %v5468
    %5470 = vdwg.mxu0
    %v5471 = vadd.f32 %v5387, %v5409
    %v5472 = vadd.f32 %v5388, %v5429
    %v5473 = vadd.f32 %v5389, %v5449
    %v5474 = vadd.f32 %v5390, %v5469
    %v5475 = vxor.u32 %v5471, 2147483648
    %v5476 = vmul.f32 %v5475, 1.442695
    %v5477 = vpow.pop %v5476
    %v5478 = vadd.f32 %v5477, 1.0
    %v5479 = vrcp.pop %v5478
    %v5480 = vmul.f32 %v5478, %v5479
    %v5481 = vsub.f32 1.0, %v5480
    %v5482 = vmul.f32 %v5479, %v5481
    %v5483 = vadd.f32 %v5479, %v5482
    %vm5484 = vweird.f32 %v5478
    %vm5485 = vweird.f32 %v5479
    %vm5486 = vmor %vm5484, %vm5485
    %v5487 = vsel %vm5486, %v5479, %v5483
    %v5488 = vand.u32 2147483647, %v5478
    %vm5489 = vcmp.eq.f32.partialorder %v5488, 8.507059e+37
    %v5490 = vand.u32 %v5478, 2147483648
    %v5491 = vor.u32 1.1754944e-38, %v5490
    %v5492 = vsel %vm5489, %v5491, %v5487
    %v5493 = vmul.f32 1.0, %v5492
    %v5494 = vxor.u32 %v5472, 2147483648
    %v5495 = vmul.f32 %v5494, 1.442695
    %v5496 = vpow.pop %v5495
    %v5497 = vadd.f32 %v5496, 1.0
    %v5498 = vrcp.pop %v5497
    %v5499 = vmul.f32 %v5497, %v5498
    %v5500 = vsub.f32 1.0, %v5499
    %v5501 = vmul.f32 %v5498, %v5500
    %v5502 = vadd.f32 %v5498, %v5501
    %vm5503 = vweird.f32 %v5497
    %vm5504 = vweird.f32 %v5498
    %vm5505 = vmor %vm5503, %vm5504
    %v5506 = vsel %vm5505, %v5498, %v5502
    %v5507 = vand.u32 2147483647, %v5497
    %vm5508 = vcmp.eq.f32.partialorder %v5507, 8.507059e+37
    %v5509 = vand.u32 %v5497, 2147483648
    %v5510 = vor.u32 1.1754944e-38, %v5509
    %v5511 = vsel %vm5508, %v5510, %v5506
    %v5512 = vmul.f32 1.0, %v5511
    %v5513 = vtanh.pop %v5473
    %v5514 = vxor.u32 %v5474, 2147483648
    %v5515 = vmul.f32 %v5514, 1.442695
    %v5516 = vpow.pop %v5515
    %v5517 = vadd.f32 %v5516, 1.0
    %v5518 = vrcp.pop %v5517
    %v5519 = vmul.f32 %v5517, %v5518
    %v5520 = vsub.f32 1.0, %v5519
    %v5521 = vmul.f32 %v5518, %v5520
    %v5522 = vadd.f32 %v5518, %v5521
    %vm5523 = vweird.f32 %v5517
    %vm5524 = vweird.f32 %v5518
    %vm5525 = vmor %vm5523, %vm5524
    %v5526 = vsel %vm5525, %v5518, %v5522
    %v5527 = vand.u32 2147483647, %v5517
    %vm5528 = vcmp.eq.f32.partialorder %v5527, 8.507059e+37
    %v5529 = vand.u32 %v5517, 2147483648
    %v5530 = vor.u32 1.1754944e-38, %v5529
    %v5531 = vsel %vm5528, %v5530, %v5526
    %v5532 = vmul.f32 1.0, %v5531
    %v5533 = vmul.f32 %v5512, %v5384
    %v5534 = vmul.f32 %v5493, %v5513
    %v5535 = vadd.f32 %v5533, %v5534
    %v5536 = vtanh.pop %v5535
    %v5537 = vmul.f32 %v5532, %v5536
    %v5538 = vld [vmem:[#allocation2 + $0x60] sm:$0xff]
    %v5539 = vld [vmem:[#allocation2 + $0x68] sm:$0xff]
    %v5540 = vld [vmem:[#allocation2 + $0x70] sm:$0xff]
    %v5541 = vld [vmem:[#allocation2 + $0x78] sm:$0xff]
    %5542 = vmatpush.msra.mxu0 %v5085
    %5543 = vmatpush.msra.mxu0 %v5081
    %5544 = vmatpush.msra.mxu0 %v5077
    %5545 = vmatpush.msra.mxu0 %v5073
    %5546 = vmatpush.msra.mxu0 %v5069
    %5547 = vmatpush.msra.mxu0 %v5065
    %5548 = vmatpush.msra.mxu0 %v5061
    %5549 = vmatpush.msra.mxu0 %v5057
    %5550 = vmatpush.msra.mxu0 %v5053
    %5551 = vmatpush.msra.mxu0 %v5049
    %5552 = vmatpush.msra.mxu0 %v5045
    %5553 = vmatpush.msra.mxu0 %v5041
    %5554 = vmatpush.msra.mxu0 %v5037
    %5555 = vmatpush.msra.mxu0 %v5033
    %5556 = vmatpush.msra.mxu0 %v5029
    %5557 = vmatpush.msra.mxu0 %v5025
    %5558 = vmatmul.f32.gmra.mxu0 %v5537
    %v5559 = vpop.f32.mrf.mxu0
    %v5560 = vadd.f32 0.0, %v5559
    %5561 = vdwg.mxu0
    %5562 = vmatpush.msra.mxu0 %v5086
    %5563 = vmatpush.msra.mxu0 %v5082
    %5564 = vmatpush.msra.mxu0 %v5078
    %5565 = vmatpush.msra.mxu0 %v5074
    %5566 = vmatpush.msra.mxu0 %v5070
    %5567 = vmatpush.msra.mxu0 %v5066
    %5568 = vmatpush.msra.mxu0 %v5062
    %5569 = vmatpush.msra.mxu0 %v5058
    %5570 = vmatpush.msra.mxu0 %v5054
    %5571 = vmatpush.msra.mxu0 %v5050
    %5572 = vmatpush.msra.mxu0 %v5046
    %5573 = vmatpush.msra.mxu0 %v5042
    %5574 = vmatpush.msra.mxu0 %v5038
    %5575 = vmatpush.msra.mxu0 %v5034
    %5576 = vmatpush.msra.mxu0 %v5030
    %5577 = vmatpush.msra.mxu0 %v5026
    %5578 = vmatmul.f32.gmra.mxu0 %v5537
    %v5579 = vpop.f32.mrf.mxu0
    %v5580 = vadd.f32 0.0, %v5579
    %5581 = vdwg.mxu0
    %5582 = vmatpush.msra.mxu0 %v5087
    %5583 = vmatpush.msra.mxu0 %v5083
    %5584 = vmatpush.msra.mxu0 %v5079
    %5585 = vmatpush.msra.mxu0 %v5075
    %5586 = vmatpush.msra.mxu0 %v5071
    %5587 = vmatpush.msra.mxu0 %v5067
    %5588 = vmatpush.msra.mxu0 %v5063
    %5589 = vmatpush.msra.mxu0 %v5059
    %5590 = vmatpush.msra.mxu0 %v5055
    %5591 = vmatpush.msra.mxu0 %v5051
    %5592 = vmatpush.msra.mxu0 %v5047
    %5593 = vmatpush.msra.mxu0 %v5043
    %5594 = vmatpush.msra.mxu0 %v5039
    %5595 = vmatpush.msra.mxu0 %v5035
    %5596 = vmatpush.msra.mxu0 %v5031
    %5597 = vmatpush.msra.mxu0 %v5027
    %5598 = vmatmul.f32.gmra.mxu0 %v5537
    %v5599 = vpop.f32.mrf.mxu0
    %v5600 = vadd.f32 0.0, %v5599
    %5601 = vdwg.mxu0
    %5602 = vmatpush.msra.mxu0 %v5088
    %5603 = vmatpush.msra.mxu0 %v5084
    %5604 = vmatpush.msra.mxu0 %v5080
    %5605 = vmatpush.msra.mxu0 %v5076
    %5606 = vmatpush.msra.mxu0 %v5072
    %5607 = vmatpush.msra.mxu0 %v5068
    %5608 = vmatpush.msra.mxu0 %v5064
    %5609 = vmatpush.msra.mxu0 %v5060
    %5610 = vmatpush.msra.mxu0 %v5056
    %5611 = vmatpush.msra.mxu0 %v5052
    %5612 = vmatpush.msra.mxu0 %v5048
    %5613 = vmatpush.msra.mxu0 %v5044
    %5614 = vmatpush.msra.mxu0 %v5040
    %5615 = vmatpush.msra.mxu0 %v5036
    %5616 = vmatpush.msra.mxu0 %v5032
    %5617 = vmatpush.msra.mxu0 %v5028
    %5618 = vmatmul.f32.gmra.mxu0 %v5537
    %v5619 = vpop.f32.mrf.mxu0
    %v5620 = vadd.f32 0.0, %v5619
    %5621 = vdwg.mxu0
    %v5622 = vadd.f32 %v5538, %v5560
    %v5623 = vadd.f32 %v5539, %v5580
    %v5624 = vadd.f32 %v5540, %v5600
    %v5625 = vadd.f32 %v5541, %v5620
    %v5626 = vxor.u32 %v5622, 2147483648
    %v5627 = vmul.f32 %v5626, 1.442695
    %v5628 = vpow.pop %v5627
    %v5629 = vadd.f32 %v5628, 1.0
    %v5630 = vrcp.pop %v5629
    %v5631 = vmul.f32 %v5629, %v5630
    %v5632 = vsub.f32 1.0, %v5631
    %v5633 = vmul.f32 %v5630, %v5632
    %v5634 = vadd.f32 %v5630, %v5633
    %vm5635 = vweird.f32 %v5629
    %vm5636 = vweird.f32 %v5630
    %vm5637 = vmor %vm5635, %vm5636
    %v5638 = vsel %vm5637, %v5630, %v5634
    %v5639 = vand.u32 2147483647, %v5629
    %vm5640 = vcmp.eq.f32.partialorder %v5639, 8.507059e+37
    %v5641 = vand.u32 %v5629, 2147483648
    %v5642 = vor.u32 1.1754944e-38, %v5641
    %v5643 = vsel %vm5640, %v5642, %v5638
    %v5644 = vmul.f32 1.0, %v5643
    %v5645 = vxor.u32 %v5623, 2147483648
    %v5646 = vmul.f32 %v5645, 1.442695
    %v5647 = vpow.pop %v5646
    %v5648 = vadd.f32 %v5647, 1.0
    %v5649 = vrcp.pop %v5648
    %v5650 = vmul.f32 %v5648, %v5649
    %v5651 = vsub.f32 1.0, %v5650
    %v5652 = vmul.f32 %v5649, %v5651
    %v5653 = vadd.f32 %v5649, %v5652
    %vm5654 = vweird.f32 %v5648
    %vm5655 = vweird.f32 %v5649
    %vm5656 = vmor %vm5654, %vm5655
    %v5657 = vsel %vm5656, %v5649, %v5653
    %v5658 = vand.u32 2147483647, %v5648
    %vm5659 = vcmp.eq.f32.partialorder %v5658, 8.507059e+37
    %v5660 = vand.u32 %v5648, 2147483648
    %v5661 = vor.u32 1.1754944e-38, %v5660
    %v5662 = vsel %vm5659, %v5661, %v5657
    %v5663 = vmul.f32 1.0, %v5662
    %v5664 = vtanh.pop %v5624
    %v5665 = vxor.u32 %v5625, 2147483648
    %v5666 = vmul.f32 %v5665, 1.442695
    %v5667 = vpow.pop %v5666
    %v5668 = vadd.f32 %v5667, 1.0
    %v5669 = vrcp.pop %v5668
    %v5670 = vmul.f32 %v5668, %v5669
    %v5671 = vsub.f32 1.0, %v5670
    %v5672 = vmul.f32 %v5669, %v5671
    %v5673 = vadd.f32 %v5669, %v5672
    %vm5674 = vweird.f32 %v5668
    %vm5675 = vweird.f32 %v5669
    %vm5676 = vmor %vm5674, %vm5675
    %v5677 = vsel %vm5676, %v5669, %v5673
    %v5678 = vand.u32 2147483647, %v5668
    %vm5679 = vcmp.eq.f32.partialorder %v5678, 8.507059e+37
    %v5680 = vand.u32 %v5668, 2147483648
    %v5681 = vor.u32 1.1754944e-38, %v5680
    %v5682 = vsel %vm5679, %v5681, %v5677
    %v5683 = vmul.f32 1.0, %v5682
    %v5684 = vmul.f32 %v5663, %v5535
    %v5685 = vmul.f32 %v5644, %v5664
    %v5686 = vadd.f32 %v5684, %v5685
    %v5687 = vtanh.pop %v5686
    %v5688 = vmul.f32 %v5683, %v5687
    %v5689 = vld [vmem:[#allocation2 + $0x80] sm:$0xff]
    %v5690 = vld [vmem:[#allocation2 + $0x88] sm:$0xff]
    %v5691 = vld [vmem:[#allocation2 + $0x90] sm:$0xff]
    %v5692 = vld [vmem:[#allocation2 + $0x98] sm:$0xff]
    %5693 = vmatpush.msra.mxu0 %v5085
    %5694 = vmatpush.msra.mxu0 %v5081
    %5695 = vmatpush.msra.mxu0 %v5077
    %5696 = vmatpush.msra.mxu0 %v5073
    %5697 = vmatpush.msra.mxu0 %v5069
    %5698 = vmatpush.msra.mxu0 %v5065
    %5699 = vmatpush.msra.mxu0 %v5061
    %5700 = vmatpush.msra.mxu0 %v5057
    %5701 = vmatpush.msra.mxu0 %v5053
    %5702 = vmatpush.msra.mxu0 %v5049
    %5703 = vmatpush.msra.mxu0 %v5045
    %5704 = vmatpush.msra.mxu0 %v5041
    %5705 = vmatpush.msra.mxu0 %v5037
    %5706 = vmatpush.msra.mxu0 %v5033
    %5707 = vmatpush.msra.mxu0 %v5029
    %5708 = vmatpush.msra.mxu0 %v5025
    %5709 = vmatmul.f32.gmra.mxu0 %v5688
    %v5710 = vpop.f32.mrf.mxu0
    %v5711 = vadd.f32 0.0, %v5710
    %5712 = vdwg.mxu0
    %5713 = vmatpush.msra.mxu0 %v5086
    %5714 = vmatpush.msra.mxu0 %v5082
    %5715 = vmatpush.msra.mxu0 %v5078
    %5716 = vmatpush.msra.mxu0 %v5074
    %5717 = vmatpush.msra.mxu0 %v5070
    %5718 = vmatpush.msra.mxu0 %v5066
    %5719 = vmatpush.msra.mxu0 %v5062
    %5720 = vmatpush.msra.mxu0 %v5058
    %5721 = vmatpush.msra.mxu0 %v5054
    %5722 = vmatpush.msra.mxu0 %v5050
    %5723 = vmatpush.msra.mxu0 %v5046
    %5724 = vmatpush.msra.mxu0 %v5042
    %5725 = vmatpush.msra.mxu0 %v5038
    %5726 = vmatpush.msra.mxu0 %v5034
    %5727 = vmatpush.msra.mxu0 %v5030
    %5728 = vmatpush.msra.mxu0 %v5026
    %5729 = vmatmul.f32.gmra.mxu0 %v5688
    %v5730 = vpop.f32.mrf.mxu0
    %v5731 = vadd.f32 0.0, %v5730
    %5732 = vdwg.mxu0
    %5733 = vmatpush.msra.mxu0 %v5087
    %5734 = vmatpush.msra.mxu0 %v5083
    %5735 = vmatpush.msra.mxu0 %v5079
    %5736 = vmatpush.msra.mxu0 %v5075
    %5737 = vmatpush.msra.mxu0 %v5071
    %5738 = vmatpush.msra.mxu0 %v5067
    %5739 = vmatpush.msra.mxu0 %v5063
    %5740 = vmatpush.msra.mxu0 %v5059
    %5741 = vmatpush.msra.mxu0 %v5055
    %5742 = vmatpush.msra.mxu0 %v5051
    %5743 = vmatpush.msra.mxu0 %v5047
    %5744 = vmatpush.msra.mxu0 %v5043
    %5745 = vmatpush.msra.mxu0 %v5039
    %5746 = vmatpush.msra.mxu0 %v5035
    %5747 = vmatpush.msra.mxu0 %v5031
    %5748 = vmatpush.msra.mxu0 %v5027
    %5749 = vmatmul.f32.gmra.mxu0 %v5688
    %v5750 = vpop.f32.mrf.mxu0
    %v5751 = vadd.f32 0.0, %v5750
    %5752 = vdwg.mxu0
    %5753 = vmatpush.msra.mxu0 %v5088
    %5754 = vmatpush.msra.mxu0 %v5084
    %5755 = vmatpush.msra.mxu0 %v5080
    %5756 = vmatpush.msra.mxu0 %v5076
    %5757 = vmatpush.msra.mxu0 %v5072
    %5758 = vmatpush.msra.mxu0 %v5068
    %5759 = vmatpush.msra.mxu0 %v5064
    %5760 = vmatpush.msra.mxu0 %v5060
    %5761 = vmatpush.msra.mxu0 %v5056
    %5762 = vmatpush.msra.mxu0 %v5052
    %5763 = vmatpush.msra.mxu0 %v5048
    %5764 = vmatpush.msra.mxu0 %v5044
    %5765 = vmatpush.msra.mxu0 %v5040
    %5766 = vmatpush.msra.mxu0 %v5036
    %5767 = vmatpush.msra.mxu0 %v5032
    %5768 = vmatpush.msra.mxu0 %v5028
    %5769 = vmatmul.f32.gmra.mxu0 %v5688
    %v5770 = vpop.f32.mrf.mxu0
    %v5771 = vadd.f32 0.0, %v5770
    %5772 = vdwg.mxu0
    %v5773 = vadd.f32 %v5689, %v5711
    %v5774 = vadd.f32 %v5690, %v5731
    %v5775 = vadd.f32 %v5691, %v5751
    %v5776 = vadd.f32 %v5692, %v5771
    %v5777 = vxor.u32 %v5773, 2147483648
    %v5778 = vmul.f32 %v5777, 1.442695
    %v5779 = vpow.pop %v5778
    %v5780 = vadd.f32 %v5779, 1.0
    %v5781 = vrcp.pop %v5780
    %v5782 = vmul.f32 %v5780, %v5781
    %v5783 = vsub.f32 1.0, %v5782
    %v5784 = vmul.f32 %v5781, %v5783
    %v5785 = vadd.f32 %v5781, %v5784
    %vm5786 = vweird.f32 %v5780
    %vm5787 = vweird.f32 %v5781
    %vm5788 = vmor %vm5786, %vm5787
    %v5789 = vsel %vm5788, %v5781, %v5785
    %v5790 = vand.u32 2147483647, %v5780
    %vm5791 = vcmp.eq.f32.partialorder %v5790, 8.507059e+37
    %v5792 = vand.u32 %v5780, 2147483648
    %v5793 = vor.u32 1.1754944e-38, %v5792
    %v5794 = vsel %vm5791, %v5793, %v5789
    %v5795 = vmul.f32 1.0, %v5794
    %v5796 = vxor.u32 %v5774, 2147483648
    %v5797 = vmul.f32 %v5796, 1.442695
    %v5798 = vpow.pop %v5797
    %v5799 = vadd.f32 %v5798, 1.0
    %v5800 = vrcp.pop %v5799
    %v5801 = vmul.f32 %v5799, %v5800
    %v5802 = vsub.f32 1.0, %v5801
    %v5803 = vmul.f32 %v5800, %v5802
    %v5804 = vadd.f32 %v5800, %v5803
    %vm5805 = vweird.f32 %v5799
    %vm5806 = vweird.f32 %v5800
    %vm5807 = vmor %vm5805, %vm5806
    %v5808 = vsel %vm5807, %v5800, %v5804
    %v5809 = vand.u32 2147483647, %v5799
    %vm5810 = vcmp.eq.f32.partialorder %v5809, 8.507059e+37
    %v5811 = vand.u32 %v5799, 2147483648
    %v5812 = vor.u32 1.1754944e-38, %v5811
    %v5813 = vsel %vm5810, %v5812, %v5808
    %v5814 = vmul.f32 1.0, %v5813
    %v5815 = vtanh.pop %v5775
    %v5816 = vxor.u32 %v5776, 2147483648
    %v5817 = vmul.f32 %v5816, 1.442695
    %v5818 = vpow.pop %v5817
    %v5819 = vadd.f32 %v5818, 1.0
    %v5820 = vrcp.pop %v5819
    %v5821 = vmul.f32 %v5819, %v5820
    %v5822 = vsub.f32 1.0, %v5821
    %v5823 = vmul.f32 %v5820, %v5822
    %v5824 = vadd.f32 %v5820, %v5823
    %vm5825 = vweird.f32 %v5819
    %vm5826 = vweird.f32 %v5820
    %vm5827 = vmor %vm5825, %vm5826
    %v5828 = vsel %vm5827, %v5820, %v5824
    %v5829 = vand.u32 2147483647, %v5819
    %vm5830 = vcmp.eq.f32.partialorder %v5829, 8.507059e+37
    %v5831 = vand.u32 %v5819, 2147483648
    %v5832 = vor.u32 1.1754944e-38, %v5831
    %v5833 = vsel %vm5830, %v5832, %v5828
    %v5834 = vmul.f32 1.0, %v5833
    %v5835 = vmul.f32 %v5814, %v5686
    %v5836 = vmul.f32 %v5795, %v5815
    %v5837 = vadd.f32 %v5835, %v5836
    %v5838 = vtanh.pop %v5837
    %v5839 = vmul.f32 %v5834, %v5838
    %v5840 = vld [vmem:[#allocation2 + $0xa0] sm:$0xff]
    %v5841 = vld [vmem:[#allocation2 + $0xa8] sm:$0xff]
    %v5842 = vld [vmem:[#allocation2 + $0xb0] sm:$0xff]
    %v5843 = vld [vmem:[#allocation2 + $0xb8] sm:$0xff]
    %5844 = vmatpush.msra.mxu0 %v5085
    %5845 = vmatpush.msra.mxu0 %v5081
    %5846 = vmatpush.msra.mxu0 %v5077
    %5847 = vmatpush.msra.mxu0 %v5073
    %5848 = vmatpush.msra.mxu0 %v5069
    %5849 = vmatpush.msra.mxu0 %v5065
    %5850 = vmatpush.msra.mxu0 %v5061
    %5851 = vmatpush.msra.mxu0 %v5057
    %5852 = vmatpush.msra.mxu0 %v5053
    %5853 = vmatpush.msra.mxu0 %v5049
    %5854 = vmatpush.msra.mxu0 %v5045
    %5855 = vmatpush.msra.mxu0 %v5041
    %5856 = vmatpush.msra.mxu0 %v5037
    %5857 = vmatpush.msra.mxu0 %v5033
    %5858 = vmatpush.msra.mxu0 %v5029
    %5859 = vmatpush.msra.mxu0 %v5025
    %5860 = vmatmul.f32.gmra.mxu0 %v5839
    %v5861 = vpop.f32.mrf.mxu0
    %v5862 = vadd.f32 0.0, %v5861
    %5863 = vdwg.mxu0
    %5864 = vmatpush.msra.mxu0 %v5086
    %5865 = vmatpush.msra.mxu0 %v5082
    %5866 = vmatpush.msra.mxu0 %v5078
    %5867 = vmatpush.msra.mxu0 %v5074
    %5868 = vmatpush.msra.mxu0 %v5070
    %5869 = vmatpush.msra.mxu0 %v5066
    %5870 = vmatpush.msra.mxu0 %v5062
    %5871 = vmatpush.msra.mxu0 %v5058
    %5872 = vmatpush.msra.mxu0 %v5054
    %5873 = vmatpush.msra.mxu0 %v5050
    %5874 = vmatpush.msra.mxu0 %v5046
    %5875 = vmatpush.msra.mxu0 %v5042
    %5876 = vmatpush.msra.mxu0 %v5038
    %5877 = vmatpush.msra.mxu0 %v5034
    %5878 = vmatpush.msra.mxu0 %v5030
    %5879 = vmatpush.msra.mxu0 %v5026
    %5880 = vmatmul.f32.gmra.mxu0 %v5839
    %v5881 = vpop.f32.mrf.mxu0
    %v5882 = vadd.f32 0.0, %v5881
    %5883 = vdwg.mxu0
    %5884 = vmatpush.msra.mxu0 %v5087
    %5885 = vmatpush.msra.mxu0 %v5083
    %5886 = vmatpush.msra.mxu0 %v5079
    %5887 = vmatpush.msra.mxu0 %v5075
    %5888 = vmatpush.msra.mxu0 %v5071
    %5889 = vmatpush.msra.mxu0 %v5067
    %5890 = vmatpush.msra.mxu0 %v5063
    %5891 = vmatpush.msra.mxu0 %v5059
    %5892 = vmatpush.msra.mxu0 %v5055
    %5893 = vmatpush.msra.mxu0 %v5051
    %5894 = vmatpush.msra.mxu0 %v5047
    %5895 = vmatpush.msra.mxu0 %v5043
    %5896 = vmatpush.msra.mxu0 %v5039
    %5897 = vmatpush.msra.mxu0 %v5035
    %5898 = vmatpush.msra.mxu0 %v5031
    %5899 = vmatpush.msra.mxu0 %v5027
    %5900 = vmatmul.f32.gmra.mxu0 %v5839
    %v5901 = vpop.f32.mrf.mxu0
    %v5902 = vadd.f32 0.0, %v5901
    %5903 = vdwg.mxu0
    %5904 = vmatpush.msra.mxu0 %v5088
    %5905 = vmatpush.msra.mxu0 %v5084
    %5906 = vmatpush.msra.mxu0 %v5080
    %5907 = vmatpush.msra.mxu0 %v5076
    %5908 = vmatpush.msra.mxu0 %v5072
    %5909 = vmatpush.msra.mxu0 %v5068
    %5910 = vmatpush.msra.mxu0 %v5064
    %5911 = vmatpush.msra.mxu0 %v5060
    %5912 = vmatpush.msra.mxu0 %v5056
    %5913 = vmatpush.msra.mxu0 %v5052
    %5914 = vmatpush.msra.mxu0 %v5048
    %5915 = vmatpush.msra.mxu0 %v5044
    %5916 = vmatpush.msra.mxu0 %v5040
    %5917 = vmatpush.msra.mxu0 %v5036
    %5918 = vmatpush.msra.mxu0 %v5032
    %5919 = vmatpush.msra.mxu0 %v5028
    %5920 = vmatmul.f32.gmra.mxu0 %v5839
    %v5921 = vpop.f32.mrf.mxu0
    %v5922 = vadd.f32 0.0, %v5921
    %5923 = vdwg.mxu0
    %v5924 = vadd.f32 %v5840, %v5862
    %v5925 = vadd.f32 %v5841, %v5882
    %v5926 = vadd.f32 %v5842, %v5902
    %v5927 = vadd.f32 %v5843, %v5922
    %v5928 = vxor.u32 %v5924, 2147483648
    %v5929 = vmul.f32 %v5928, 1.442695
    %v5930 = vpow.pop %v5929
    %v5931 = vadd.f32 %v5930, 1.0
    %v5932 = vrcp.pop %v5931
    %v5933 = vmul.f32 %v5931, %v5932
    %v5934 = vsub.f32 1.0, %v5933
    %v5935 = vmul.f32 %v5932, %v5934
    %v5936 = vadd.f32 %v5932, %v5935
    %vm5937 = vweird.f32 %v5931
    %vm5938 = vweird.f32 %v5932
    %vm5939 = vmor %vm5937, %vm5938
    %v5940 = vsel %vm5939, %v5932, %v5936
    %v5941 = vand.u32 2147483647, %v5931
    %vm5942 = vcmp.eq.f32.partialorder %v5941, 8.507059e+37
    %v5943 = vand.u32 %v5931, 2147483648
    %v5944 = vor.u32 1.1754944e-38, %v5943
    %v5945 = vsel %vm5942, %v5944, %v5940
    %v5946 = vmul.f32 1.0, %v5945
    %v5947 = vxor.u32 %v5925, 2147483648
    %v5948 = vmul.f32 %v5947, 1.442695
    %v5949 = vpow.pop %v5948
    %v5950 = vadd.f32 %v5949, 1.0
    %v5951 = vrcp.pop %v5950
    %v5952 = vmul.f32 %v5950, %v5951
    %v5953 = vsub.f32 1.0, %v5952
    %v5954 = vmul.f32 %v5951, %v5953
    %v5955 = vadd.f32 %v5951, %v5954
    %vm5956 = vweird.f32 %v5950
    %vm5957 = vweird.f32 %v5951
    %vm5958 = vmor %vm5956, %vm5957
    %v5959 = vsel %vm5958, %v5951, %v5955
    %v5960 = vand.u32 2147483647, %v5950
    %vm5961 = vcmp.eq.f32.partialorder %v5960, 8.507059e+37
    %v5962 = vand.u32 %v5950, 2147483648
    %v5963 = vor.u32 1.1754944e-38, %v5962
    %v5964 = vsel %vm5961, %v5963, %v5959
    %v5965 = vmul.f32 1.0, %v5964
    %v5966 = vtanh.pop %v5926
    %v5967 = vxor.u32 %v5927, 2147483648
    %v5968 = vmul.f32 %v5967, 1.442695
    %v5969 = vpow.pop %v5968
    %v5970 = vadd.f32 %v5969, 1.0
    %v5971 = vrcp.pop %v5970
    %v5972 = vmul.f32 %v5970, %v5971
    %v5973 = vsub.f32 1.0, %v5972
    %v5974 = vmul.f32 %v5971, %v5973
    %v5975 = vadd.f32 %v5971, %v5974
    %vm5976 = vweird.f32 %v5970
    %vm5977 = vweird.f32 %v5971
    %vm5978 = vmor %vm5976, %vm5977
    %v5979 = vsel %vm5978, %v5971, %v5975
    %v5980 = vand.u32 2147483647, %v5970
    %vm5981 = vcmp.eq.f32.partialorder %v5980, 8.507059e+37
    %v5982 = vand.u32 %v5970, 2147483648
    %v5983 = vor.u32 1.1754944e-38, %v5982
    %v5984 = vsel %vm5981, %v5983, %v5979
    %v5985 = vmul.f32 1.0, %v5984
    %v5986 = vmul.f32 %v5965, %v5837
    %v5987 = vmul.f32 %v5946, %v5966
    %v5988 = vadd.f32 %v5986, %v5987
    %v5989 = vtanh.pop %v5988
    %v5990 = vmul.f32 %v5985, %v5989
    %v5991 = vld [vmem:[#allocation2 + $0xc0] sm:$0xff]
    %v5992 = vld [vmem:[#allocation2 + $0xc8] sm:$0xff]
    %v5993 = vld [vmem:[#allocation2 + $0xd0] sm:$0xff]
    %v5994 = vld [vmem:[#allocation2 + $0xd8] sm:$0xff]
    %5995 = vmatpush.msra.mxu0 %v5085
    %5996 = vmatpush.msra.mxu0 %v5081
    %5997 = vmatpush.msra.mxu0 %v5077
    %5998 = vmatpush.msra.mxu0 %v5073
    %5999 = vmatpush.msra.mxu0 %v5069
    %6000 = vmatpush.msra.mxu0 %v5065
    %6001 = vmatpush.msra.mxu0 %v5061
    %6002 = vmatpush.msra.mxu0 %v5057
    %6003 = vmatpush.msra.mxu0 %v5053
    %6004 = vmatpush.msra.mxu0 %v5049
    %6005 = vmatpush.msra.mxu0 %v5045
    %6006 = vmatpush.msra.mxu0 %v5041
    %6007 = vmatpush.msra.mxu0 %v5037
    %6008 = vmatpush.msra.mxu0 %v5033
    %6009 = vmatpush.msra.mxu0 %v5029
    %6010 = vmatpush.msra.mxu0 %v5025
    %6011 = vmatmul.f32.gmra.mxu0 %v5990
    %v6012 = vpop.f32.mrf.mxu0
    %v6013 = vadd.f32 0.0, %v6012
    %6014 = vdwg.mxu0
    %6015 = vmatpush.msra.mxu0 %v5086
    %6016 = vmatpush.msra.mxu0 %v5082
    %6017 = vmatpush.msra.mxu0 %v5078
    %6018 = vmatpush.msra.mxu0 %v5074
    %6019 = vmatpush.msra.mxu0 %v5070
    %6020 = vmatpush.msra.mxu0 %v5066
    %6021 = vmatpush.msra.mxu0 %v5062
    %6022 = vmatpush.msra.mxu0 %v5058
    %6023 = vmatpush.msra.mxu0 %v5054
    %6024 = vmatpush.msra.mxu0 %v5050
    %6025 = vmatpush.msra.mxu0 %v5046
    %6026 = vmatpush.msra.mxu0 %v5042
    %6027 = vmatpush.msra.mxu0 %v5038
    %6028 = vmatpush.msra.mxu0 %v5034
    %6029 = vmatpush.msra.mxu0 %v5030
    %6030 = vmatpush.msra.mxu0 %v5026
    %6031 = vmatmul.f32.gmra.mxu0 %v5990
    %v6032 = vpop.f32.mrf.mxu0
    %v6033 = vadd.f32 0.0, %v6032
    %6034 = vdwg.mxu0
    %6035 = vmatpush.msra.mxu0 %v5087
    %6036 = vmatpush.msra.mxu0 %v5083
    %6037 = vmatpush.msra.mxu0 %v5079
    %6038 = vmatpush.msra.mxu0 %v5075
    %6039 = vmatpush.msra.mxu0 %v5071
    %6040 = vmatpush.msra.mxu0 %v5067
    %6041 = vmatpush.msra.mxu0 %v5063
    %6042 = vmatpush.msra.mxu0 %v5059
    %6043 = vmatpush.msra.mxu0 %v5055
    %6044 = vmatpush.msra.mxu0 %v5051
    %6045 = vmatpush.msra.mxu0 %v5047
    %6046 = vmatpush.msra.mxu0 %v5043
    %6047 = vmatpush.msra.mxu0 %v5039
    %6048 = vmatpush.msra.mxu0 %v5035
    %6049 = vmatpush.msra.mxu0 %v5031
    %6050 = vmatpush.msra.mxu0 %v5027
    %6051 = vmatmul.f32.gmra.mxu0 %v5990
    %v6052 = vpop.f32.mrf.mxu0
    %v6053 = vadd.f32 0.0, %v6052
    %6054 = vdwg.mxu0
    %6055 = vmatpush.msra.mxu0 %v5088
    %6056 = vmatpush.msra.mxu0 %v5084
    %6057 = vmatpush.msra.mxu0 %v5080
    %6058 = vmatpush.msra.mxu0 %v5076
    %6059 = vmatpush.msra.mxu0 %v5072
    %6060 = vmatpush.msra.mxu0 %v5068
    %6061 = vmatpush.msra.mxu0 %v5064
    %6062 = vmatpush.msra.mxu0 %v5060
    %6063 = vmatpush.msra.mxu0 %v5056
    %6064 = vmatpush.msra.mxu0 %v5052
    %6065 = vmatpush.msra.mxu0 %v5048
    %6066 = vmatpush.msra.mxu0 %v5044
    %6067 = vmatpush.msra.mxu0 %v5040
    %6068 = vmatpush.msra.mxu0 %v5036
    %6069 = vmatpush.msra.mxu0 %v5032
    %6070 = vmatpush.msra.mxu0 %v5028
    %6071 = vmatmul.f32.gmra.mxu0 %v5990
    %v6072 = vpop.f32.mrf.mxu0
    %v6073 = vadd.f32 0.0, %v6072
    %6074 = vdwg.mxu0
    %v6075 = vadd.f32 %v5991, %v6013
    %v6076 = vadd.f32 %v5992, %v6033
    %v6077 = vadd.f32 %v5993, %v6053
    %v6078 = vadd.f32 %v5994, %v6073
    %v6079 = vxor.u32 %v6075, 2147483648
    %v6080 = vmul.f32 %v6079, 1.442695
    %v6081 = vpow.pop %v6080
    %v6082 = vadd.f32 %v6081, 1.0
    %v6083 = vrcp.pop %v6082
    %v6084 = vmul.f32 %v6082, %v6083
    %v6085 = vsub.f32 1.0, %v6084
    %v6086 = vmul.f32 %v6083, %v6085
    %v6087 = vadd.f32 %v6083, %v6086
    %vm6088 = vweird.f32 %v6082
    %vm6089 = vweird.f32 %v6083
    %vm6090 = vmor %vm6088, %vm6089
    %v6091 = vsel %vm6090, %v6083, %v6087
    %v6092 = vand.u32 2147483647, %v6082
    %vm6093 = vcmp.eq.f32.partialorder %v6092, 8.507059e+37
    %v6094 = vand.u32 %v6082, 2147483648
    %v6095 = vor.u32 1.1754944e-38, %v6094
    %v6096 = vsel %vm6093, %v6095, %v6091
    %v6097 = vmul.f32 1.0, %v6096
    %v6098 = vxor.u32 %v6076, 2147483648
    %v6099 = vmul.f32 %v6098, 1.442695
    %v6100 = vpow.pop %v6099
    %v6101 = vadd.f32 %v6100, 1.0
    %v6102 = vrcp.pop %v6101
    %v6103 = vmul.f32 %v6101, %v6102
    %v6104 = vsub.f32 1.0, %v6103
    %v6105 = vmul.f32 %v6102, %v6104
    %v6106 = vadd.f32 %v6102, %v6105
    %vm6107 = vweird.f32 %v6101
    %vm6108 = vweird.f32 %v6102
    %vm6109 = vmor %vm6107, %vm6108
    %v6110 = vsel %vm6109, %v6102, %v6106
    %v6111 = vand.u32 2147483647, %v6101
    %vm6112 = vcmp.eq.f32.partialorder %v6111, 8.507059e+37
    %v6113 = vand.u32 %v6101, 2147483648
    %v6114 = vor.u32 1.1754944e-38, %v6113
    %v6115 = vsel %vm6112, %v6114, %v6110
    %v6116 = vmul.f32 1.0, %v6115
    %v6117 = vtanh.pop %v6077
    %v6118 = vxor.u32 %v6078, 2147483648
    %v6119 = vmul.f32 %v6118, 1.442695
    %v6120 = vpow.pop %v6119
    %v6121 = vadd.f32 %v6120, 1.0
    %v6122 = vrcp.pop %v6121
    %v6123 = vmul.f32 %v6121, %v6122
    %v6124 = vsub.f32 1.0, %v6123
    %v6125 = vmul.f32 %v6122, %v6124
    %v6126 = vadd.f32 %v6122, %v6125
    %vm6127 = vweird.f32 %v6121
    %vm6128 = vweird.f32 %v6122
    %vm6129 = vmor %vm6127, %vm6128
    %v6130 = vsel %vm6129, %v6122, %v6126
    %v6131 = vand.u32 2147483647, %v6121
    %vm6132 = vcmp.eq.f32.partialorder %v6131, 8.507059e+37
    %v6133 = vand.u32 %v6121, 2147483648
    %v6134 = vor.u32 1.1754944e-38, %v6133
    %v6135 = vsel %vm6132, %v6134, %v6130
    %v6136 = vmul.f32 1.0, %v6135
    %v6137 = vmul.f32 %v6116, %v5988
    %v6138 = vmul.f32 %v6097, %v6117
    %v6139 = vadd.f32 %v6137, %v6138
    %v6140 = vtanh.pop %v6139
    %v6141 = vmul.f32 %v6136, %v6140
    %v6142 = vld [vmem:[#allocation2 + $0xe0] sm:$0xff]
    %v6143 = vld [vmem:[#allocation2 + $0xe8] sm:$0xff]
    %v6144 = vld [vmem:[#allocation2 + $0xf0] sm:$0xff]
    %v6145 = vld [vmem:[#allocation2 + $0xf8] sm:$0xff]
    %6146 = vmatpush.msra.mxu0 %v5085
    %6147 = vmatpush.msra.mxu0 %v5081
    %6148 = vmatpush.msra.mxu0 %v5077
    %6149 = vmatpush.msra.mxu0 %v5073
    %6150 = vmatpush.msra.mxu0 %v5069
    %6151 = vmatpush.msra.mxu0 %v5065
    %6152 = vmatpush.msra.mxu0 %v5061
    %6153 = vmatpush.msra.mxu0 %v5057
    %6154 = vmatpush.msra.mxu0 %v5053
    %6155 = vmatpush.msra.mxu0 %v5049
    %6156 = vmatpush.msra.mxu0 %v5045
    %6157 = vmatpush.msra.mxu0 %v5041
    %6158 = vmatpush.msra.mxu0 %v5037
    %6159 = vmatpush.msra.mxu0 %v5033
    %6160 = vmatpush.msra.mxu0 %v5029
    %6161 = vmatpush.msra.mxu0 %v5025
    %6162 = vmatmul.f32.gmra.mxu0 %v6141
    %v6163 = vpop.f32.mrf.mxu0
    %v6164 = vadd.f32 0.0, %v6163
    %6165 = vdwg.mxu0
    %6166 = vmatpush.msra.mxu0 %v5086
    %6167 = vmatpush.msra.mxu0 %v5082
    %6168 = vmatpush.msra.mxu0 %v5078
    %6169 = vmatpush.msra.mxu0 %v5074
    %6170 = vmatpush.msra.mxu0 %v5070
    %6171 = vmatpush.msra.mxu0 %v5066
    %6172 = vmatpush.msra.mxu0 %v5062
    %6173 = vmatpush.msra.mxu0 %v5058
    %6174 = vmatpush.msra.mxu0 %v5054
    %6175 = vmatpush.msra.mxu0 %v5050
    %6176 = vmatpush.msra.mxu0 %v5046
    %6177 = vmatpush.msra.mxu0 %v5042
    %6178 = vmatpush.msra.mxu0 %v5038
    %6179 = vmatpush.msra.mxu0 %v5034
    %6180 = vmatpush.msra.mxu0 %v5030
    %6181 = vmatpush.msra.mxu0 %v5026
    %6182 = vmatmul.f32.gmra.mxu0 %v6141
    %v6183 = vpop.f32.mrf.mxu0
    %v6184 = vadd.f32 0.0, %v6183
    %6185 = vdwg.mxu0
    %6186 = vmatpush.msra.mxu0 %v5087
    %6187 = vmatpush.msra.mxu0 %v5083
    %6188 = vmatpush.msra.mxu0 %v5079
    %6189 = vmatpush.msra.mxu0 %v5075
    %6190 = vmatpush.msra.mxu0 %v5071
    %6191 = vmatpush.msra.mxu0 %v5067
    %6192 = vmatpush.msra.mxu0 %v5063
    %6193 = vmatpush.msra.mxu0 %v5059
    %6194 = vmatpush.msra.mxu0 %v5055
    %6195 = vmatpush.msra.mxu0 %v5051
    %6196 = vmatpush.msra.mxu0 %v5047
    %6197 = vmatpush.msra.mxu0 %v5043
    %6198 = vmatpush.msra.mxu0 %v5039
    %6199 = vmatpush.msra.mxu0 %v5035
    %6200 = vmatpush.msra.mxu0 %v5031
    %6201 = vmatpush.msra.mxu0 %v5027
    %6202 = vmatmul.f32.gmra.mxu0 %v6141
    %v6203 = vpop.f32.mrf.mxu0
    %v6204 = vadd.f32 0.0, %v6203
    %6205 = vdwg.mxu0
    %6206 = vmatpush.msra.mxu0 %v5088
    %6207 = vmatpush.msra.mxu0 %v5084
    %6208 = vmatpush.msra.mxu0 %v5080
    %6209 = vmatpush.msra.mxu0 %v5076
    %6210 = vmatpush.msra.mxu0 %v5072
    %6211 = vmatpush.msra.mxu0 %v5068
    %6212 = vmatpush.msra.mxu0 %v5064
    %6213 = vmatpush.msra.mxu0 %v5060
    %6214 = vmatpush.msra.mxu0 %v5056
    %6215 = vmatpush.msra.mxu0 %v5052
    %6216 = vmatpush.msra.mxu0 %v5048
    %6217 = vmatpush.msra.mxu0 %v5044
    %6218 = vmatpush.msra.mxu0 %v5040
    %6219 = vmatpush.msra.mxu0 %v5036
    %6220 = vmatpush.msra.mxu0 %v5032
    %6221 = vmatpush.msra.mxu0 %v5028
    %6222 = vmatmul.f32.gmra.mxu0 %v6141
    %v6223 = vpop.f32.mrf.mxu0
    %v6224 = vadd.f32 0.0, %v6223
    %6225 = vdwg.mxu0
    %v6226 = vadd.f32 %v6142, %v6164
    %v6227 = vadd.f32 %v6143, %v6184
    %v6228 = vadd.f32 %v6144, %v6204
    %v6229 = vadd.f32 %v6145, %v6224
    %v6230 = vxor.u32 %v6226, 2147483648
    %v6231 = vmul.f32 %v6230, 1.442695
    %v6232 = vpow.pop %v6231
    %v6233 = vadd.f32 %v6232, 1.0
    %v6234 = vrcp.pop %v6233
    %v6235 = vmul.f32 %v6233, %v6234
    %v6236 = vsub.f32 1.0, %v6235
    %v6237 = vmul.f32 %v6234, %v6236
    %v6238 = vadd.f32 %v6234, %v6237
    %vm6239 = vweird.f32 %v6233
    %vm6240 = vweird.f32 %v6234
    %vm6241 = vmor %vm6239, %vm6240
    %v6242 = vsel %vm6241, %v6234, %v6238
    %v6243 = vand.u32 2147483647, %v6233
    %vm6244 = vcmp.eq.f32.partialorder %v6243, 8.507059e+37
    %v6245 = vand.u32 %v6233, 2147483648
    %v6246 = vor.u32 1.1754944e-38, %v6245
    %v6247 = vsel %vm6244, %v6246, %v6242
    %v6248 = vmul.f32 1.0, %v6247
    %v6249 = vxor.u32 %v6227, 2147483648
    %v6250 = vmul.f32 %v6249, 1.442695
    %v6251 = vpow.pop %v6250
    %v6252 = vadd.f32 %v6251, 1.0
    %v6253 = vrcp.pop %v6252
    %v6254 = vmul.f32 %v6252, %v6253
    %v6255 = vsub.f32 1.0, %v6254
    %v6256 = vmul.f32 %v6253, %v6255
    %v6257 = vadd.f32 %v6253, %v6256
    %vm6258 = vweird.f32 %v6252
    %vm6259 = vweird.f32 %v6253
    %vm6260 = vmor %vm6258, %vm6259
    %v6261 = vsel %vm6260, %v6253, %v6257
    %v6262 = vand.u32 2147483647, %v6252
    %vm6263 = vcmp.eq.f32.partialorder %v6262, 8.507059e+37
    %v6264 = vand.u32 %v6252, 2147483648
    %v6265 = vor.u32 1.1754944e-38, %v6264
    %v6266 = vsel %vm6263, %v6265, %v6261
    %v6267 = vmul.f32 1.0, %v6266
    %v6268 = vtanh.pop %v6228
    %v6269 = vxor.u32 %v6229, 2147483648
    %v6270 = vmul.f32 %v6269, 1.442695
    %v6271 = vpow.pop %v6270
    %v6272 = vadd.f32 %v6271, 1.0
    %v6273 = vrcp.pop %v6272
    %v6274 = vmul.f32 %v6272, %v6273
    %v6275 = vsub.f32 1.0, %v6274
    %v6276 = vmul.f32 %v6273, %v6275
    %v6277 = vadd.f32 %v6273, %v6276
    %vm6278 = vweird.f32 %v6272
    %vm6279 = vweird.f32 %v6273
    %vm6280 = vmor %vm6278, %vm6279
    %v6281 = vsel %vm6280, %v6273, %v6277
    %v6282 = vand.u32 2147483647, %v6272
    %vm6283 = vcmp.eq.f32.partialorder %v6282, 8.507059e+37
    %v6284 = vand.u32 %v6272, 2147483648
    %v6285 = vor.u32 1.1754944e-38, %v6284
    %v6286 = vsel %vm6283, %v6285, %v6281
    %v6287 = vmul.f32 1.0, %v6286
    %v6288 = vmul.f32 %v6267, %v6139
    %v6289 = vmul.f32 %v6248, %v6268
    %v6290 = vadd.f32 %v6288, %v6289
    %v6291 = vtanh.pop %v6290
    %v6292 = vmul.f32 %v6287, %v6291
    %s6293 = scalar_lea.vmem [#allocation25], 16
    %6294 = vst [vmem:[%s6293] sm:$0xff] %v6292
    %s6295 = scalar_lea.vmem [#allocation27], 16
    %6296 = vst [vmem:[%s6295] sm:$0xff] %v6290
    %v6297 = vld [vmem:[#allocation21] sm:$0xff]
    %v6298 = vld [vmem:[#allocation21 + $0x8] sm:$0xff]
    %v6299 = vld [vmem:[#allocation21 + $0x10] sm:$0xff]
    %v6300 = vld [vmem:[#allocation21 + $0x18] sm:$0xff]
    %v6301 = vld [vmem:[#allocation21 + $0x20] sm:$0xff]
    %v6302 = vld [vmem:[#allocation21 + $0x28] sm:$0xff]
    %v6303 = vld [vmem:[#allocation21 + $0x30] sm:$0xff]
    %v6304 = vld [vmem:[#allocation21 + $0x38] sm:$0xff]
    %v6305 = vld [vmem:[#allocation21 + $0x40] sm:$0xff]
    %v6306 = vld [vmem:[#allocation21 + $0x48] sm:$0xff]
    %v6307 = vld [vmem:[#allocation21 + $0x50] sm:$0xff]
    %v6308 = vld [vmem:[#allocation21 + $0x58] sm:$0xff]
    %v6309 = vld [vmem:[#allocation21 + $0x60] sm:$0xff]
    %v6310 = vld [vmem:[#allocation21 + $0x68] sm:$0xff]
    %v6311 = vld [vmem:[#allocation21 + $0x70] sm:$0xff]
    %v6312 = vld [vmem:[#allocation21 + $0x78] sm:$0xff]
    %v6313 = vld [vmem:[%s13] sm:$0x1]
    %v6315 = vperm.slane %v6313, 0
    %6317 = vmatpush.msra.mxu0 %v6312
    %6318 = vmatpush.msra.mxu0 %v6311
    %6319 = vmatpush.msra.mxu0 %v6310
    %6320 = vmatpush.msra.mxu0 %v6309
    %6321 = vmatpush.msra.mxu0 %v6308
    %6322 = vmatpush.msra.mxu0 %v6307
    %6323 = vmatpush.msra.mxu0 %v6306
    %6324 = vmatpush.msra.mxu0 %v6305
    %6325 = vmatpush.msra.mxu0 %v6304
    %6326 = vmatpush.msra.mxu0 %v6303
    %6327 = vmatpush.msra.mxu0 %v6302
    %6328 = vmatpush.msra.mxu0 %v6301
    %6329 = vmatpush.msra.mxu0 %v6300
    %6330 = vmatpush.msra.mxu0 %v6299
    %6331 = vmatpush.msra.mxu0 %v6298
    %6332 = vmatpush.msra.mxu0 %v6297
    %6333 = vmatmul.f32.gmra.mxu0 %v6292
    %v6334 = vpop.f32.mrf.mxu0
    %v6335 = vadd.f32 %v6315, %v6334
    %6336 = vdwg.mxu0
    %v6337 = vmax.f32 %v6335, 0.0
    %v6338 = vld [vmem:[#allocation22] sm:$0xff]
    %v6339 = vld [vmem:[#allocation22 + $0x8] sm:$0xff]
    %v6340 = vld [vmem:[#allocation22 + $0x10] sm:$0xff]
    %v6341 = vld [vmem:[#allocation22 + $0x18] sm:$0xff]
    %v6342 = vld [vmem:[#allocation22 + $0x20] sm:$0xff]
    %v6343 = vld [vmem:[#allocation22 + $0x28] sm:$0xff]
    %v6344 = vld [vmem:[#allocation22 + $0x30] sm:$0xff]
    %v6345 = vld [vmem:[#allocation22 + $0x38] sm:$0xff]
    %v6346 = vld [vmem:[#allocation22 + $0x40] sm:$0xff]
    %v6347 = vld [vmem:[#allocation22 + $0x48] sm:$0xff]
    %v6348 = vld [vmem:[#allocation22 + $0x50] sm:$0xff]
    %v6349 = vld [vmem:[#allocation22 + $0x58] sm:$0xff]
    %v6350 = vld [vmem:[#allocation22 + $0x60] sm:$0xff]
    %v6351 = vld [vmem:[#allocation22 + $0x68] sm:$0xff]
    %v6352 = vld [vmem:[#allocation22 + $0x70] sm:$0xff]
    %v6353 = vld [vmem:[#allocation22 + $0x78] sm:$0xff]
    %v6354 = vld [vmem:[%s15] sm:$0x1]
    %v6356 = vperm.slane %v6354, 0
    %6358 = vmatpush.msra.mxu0 %v6353
    %6359 = vmatpush.msra.mxu0 %v6352
    %6360 = vmatpush.msra.mxu0 %v6351
    %6361 = vmatpush.msra.mxu0 %v6350
    %6362 = vmatpush.msra.mxu0 %v6349
    %6363 = vmatpush.msra.mxu0 %v6348
    %6364 = vmatpush.msra.mxu0 %v6347
    %6365 = vmatpush.msra.mxu0 %v6346
    %6366 = vmatpush.msra.mxu0 %v6345
    %6367 = vmatpush.msra.mxu0 %v6344
    %6368 = vmatpush.msra.mxu0 %v6343
    %6369 = vmatpush.msra.mxu0 %v6342
    %6370 = vmatpush.msra.mxu0 %v6341
    %6371 = vmatpush.msra.mxu0 %v6340
    %6372 = vmatpush.msra.mxu0 %v6339
    %6373 = vmatpush.msra.mxu0 %v6338
    %6374 = vmatmul.f32.gmra.mxu0 %v6337
    %v6375 = vpop.f32.mrf.mxu0
    %v6376 = vadd.f32 %v6356, %v6375
    %6377 = vdwg.mxu0
    %6378 = vst [vmem:[#allocation24] sm:$0xff] %v6376
    // Predicated region
    $region114: #{tpu_custom_call.1} parent=1 // pred_check
      _
    $region115: #{tpu_custom_call.1} parent=1 // pred_check_branch
      %6380 = sbr.rel (0) target = $region117
    $region116: #{tpu_custom_call.1} parent=1 // pred_region
      %6382 = vsyncadd [#allocation6], 0
      %s6384 = sshll.u32 [#allocation24], 4
      %s6385 = int_to_ptr.vmem [resolvable:$true] %s6384
      %s6386 = sshll.u32 %s16, 4
      %s6387 = int_to_ptr.hbm [resolvable:$true] %s6386
      %6389 = dma.vmem_to_hbm [thread:$0]  %s6385, 128, %s6387, [#allocation6]
    $region117: #{tpu_custom_call.1} parent=1 // pred_fallthru
      _
    // Predicated region
    $region118: #{tpu_custom_call.1} parent=1 // pred_check
      _
    $region119: #{tpu_custom_call.1} parent=1 // pred_check_branch
      %6391 = sbr.rel (0) target = $region121
    $region120: #{tpu_custom_call.1} parent=1 // pred_region
      %6393 = vsyncadd [#allocation26], 0
      %s6394 = sshll.u32 [#allocation25], 4
      %s6395 = int_to_ptr.vmem [resolvable:$true] %s6394
      %s6396 = sshll.u32 %s17, 4
      %s6397 = int_to_ptr.hbm [resolvable:$true] %s6396
      %6402 = dma.vmem_to_hbm [thread:$0]  %s6395, 384, %s6397, [#allocation26], 128, 128, 8
    $region121: #{tpu_custom_call.1} parent=1 // pred_fallthru
      _
    // Predicated region
    $region122: #{tpu_custom_call.1} parent=1 // pred_check
      _
    $region123: #{tpu_custom_call.1} parent=1 // pred_check_branch
      %6404 = sbr.rel (0) target = $region125
    $region124: #{tpu_custom_call.1} parent=1 // pred_region
      %6406 = vsyncadd [#allocation26], 0
      %s6407 = sshll.u32 [#allocation27], 4
      %s6408 = int_to_ptr.vmem [resolvable:$true] %s6407
      %s6409 = sshll.u32 %s18, 4
      %s6410 = int_to_ptr.hbm [resolvable:$true] %s6409
      %6415 = dma.vmem_to_hbm [thread:$0]  %s6408, 384, %s6410, [#allocation26], 128, 128, 8
    $region125: #{tpu_custom_call.1} parent=1 // pred_fallthru
      _
    // Predicated region
    $region126: #{tpu_custom_call.1} parent=1 // pred_check
      _
    $region127: #{tpu_custom_call.1} parent=1 // pred_check_branch
      %6417 = sbr.rel (0) target = $region129
    $region128: #{tpu_custom_call.1} parent=1 // pred_region
      %6419 = dma.done [#allocation6], 128
    $region129: #{tpu_custom_call.1} parent=1 // pred_fallthru
      _
    // Predicated region
    $region130: #{tpu_custom_call.1} parent=1 // pred_check
      _
    $region131: #{tpu_custom_call.1} parent=1 // pred_check_branch
      %6421 = sbr.rel (0) target = $region133
    $region132: #{tpu_custom_call.1} parent=1 // pred_region
      %6423 = dma.done [#allocation26], 384
    $region133: #{tpu_custom_call.1} parent=1 // pred_fallthru
      _
    // Predicated region
    $region134: #{tpu_custom_call.1} parent=1 // pred_check
      _
    $region135: #{tpu_custom_call.1} parent=1 // pred_check_branch
      %6425 = sbr.rel (0) target = $region137
    $region136: #{tpu_custom_call.1} parent=1 // pred_region
      %6427 = dma.done [#allocation26], 384
    $region137: #{tpu_custom_call.1} parent=1 // pred_fallthru
      _
    %6428 = vsyncpa [#allocation5], 1
    %6429 = vsyncpa [#allocation8], 1
    %6430 = vsyncpa [#allocation11], 1
    %6431 = vsyncpa [#allocation14], 1
    %6432 = vsyncpa [#allocation17], 1
    %6433 = vsyncpa [#allocation20], 1
    %6434 = vsyncpa [#allocation23], 1
    %6435 = vsyncpa [#allocation6], 1
    %6436 = vsyncpa [#allocation26], 1

</llo_original>
